<compile_context>
chip_gen: v7x
topology: tpu7x:2x2x1
jax: 0.10.0
libtpu: 0.0.40
codegen_flags: <defaults>
</compile_context>

<pallas_src>
import jax
import jax.numpy as jnp
from jax.experimental import pallas as pl
from jax.experimental.pallas import tpu as pltpu

IMAGE_SIZE = 96
PATCH = 16
IN_CH = 3
N_PATCH = (IMAGE_SIZE // PATCH) ** 2          # 36
PATCH_DIM = IN_CH * PATCH * PATCH             # 768
EMBED = 128                                    # scaled-down stand-in for ViT-Base's 768
DEPTH = 2                                      # scaled-down stand-in for 12 blocks
HEADS = 4
HEAD_DIM = EMBED // HEADS                      # 32
MLP_DIM = 4 * EMBED
N_TOK = N_PATCH + 1                            # 37 (CLS + patches)
N_TOKP = 40                                    # token axis padded to a sublane multiple
NUM_CLASSES = 7
LOGIT_PAD = 128                                # lane-dense logits output
LN_EPS = 1e-6
BN_EPS = 1e-5
MAX_TB = 32                                    # images per grid step


def _gelu(x):
    # TODO(synk): PyTorch nn.GELU() default is exact (erf) GELU; tanh approximation used.
    c = 0.7978845608028654
    return 0.5 * x * (1.0 + jnp.tanh(c * (x + 0.044715 * x * x * x)))


def _layernorm(x, g, b):
    mu = jnp.mean(x, axis=-1, keepdims=True)
    var = jnp.mean((x - mu) ** 2, axis=-1, keepdims=True)
    return (x - mu) * jax.lax.rsqrt(var + LN_EPS) * g + b


def _softmax(x):
    m = jnp.max(x, axis=-1, keepdims=True)
    e = jnp.exp(x - m)
    return e * pl.reciprocal(jnp.sum(e, axis=-1, keepdims=True), approx=True)


def emotion_kernel(patches_ref, wp_ref, base_ref,
                   ln1g_ref, ln1b_ref, wqkv_ref, bqkv_ref, wproj_ref, bproj_ref,
                   ln2g_ref, ln2b_ref, wfc1_ref, bfc1_ref, wfc2_ref, bfc2_ref,
                   lnfg_ref, lnfb_ref,
                   hw1_ref, hb1_ref, hs1_ref, hsh1_ref,
                   hw2_ref, hb2_ref, hs2_ref, hsh2_ref,
                   hw3_ref, hb3_ref,
                   out_ref):
    TB = patches_ref.shape[0]
    scale = 1.0 / (HEAD_DIM ** 0.5)

    # --- token pad 36 -> 40 via a tiny selection matmul (keeps every reshape
    #     sublane-aligned; token 0 = CLS slot, tokens 1..36 = patches, 37..39 pad) ---
    t_ids = jax.lax.broadcasted_iota(jnp.int32, (TB, N_TOKP, N_PATCH), 1)
    s_ids = jax.lax.broadcasted_iota(jnp.int32, (TB, N_TOKP, N_PATCH), 2)
    sel = (t_ids == s_ids + 1).astype(jnp.bfloat16)              # (TB, 40, 36)
    p_pad = jnp.einsum('bts,bsd->btd', sel, patches_ref[...],
                       preferred_element_type=jnp.float32)        # (TB, 40, 768)
    p_pad = p_pad.astype(jnp.bfloat16)

    # --- patch embedding: one (TB*40, 768) x (768, 128) MXU matmul per grid step ---
    x = jnp.dot(p_pad.reshape(TB * N_TOKP, PATCH_DIM), wp_ref[...],
                preferred_element_type=jnp.float32)
    # base folds CLS token, positional embedding and the patch-embed bias.
    tok = x.reshape(TB, N_TOKP, EMBED) + base_ref[...]

    # masks hoisted out of the depth loop
    key_ids = jax.lax.broadcasted_iota(jnp.int32, (1, 1, N_TOKP), 2)
    key_bias = jnp.where(key_ids < N_TOK,
                         jnp.float32(0.0), jnp.float32(-1e30))    # (1, 1, 40)
    lane_ids = jax.lax.broadcasted_iota(jnp.int32, (1, 1, EMBED), 2)
    head_hit = [(lane_ids >= h * HEAD_DIM) & (lane_ids < (h + 1) * HEAD_DIM)
                for h in range(HEADS)]
    # attention scale folded into the (bf16) query masks
    q_masks = [jnp.where(hm, jnp.float32(scale), jnp.float32(0.0)).astype(jnp.bfloat16)
               for hm in head_hit]
    o_masks = [hm.astype(jnp.float32) for hm in head_hit]

    for d in range(DEPTH):
        # --- multi-head self-attention (pre-LN) ---
        h_ln = _layernorm(tok, ln1g_ref[d], ln1b_ref[d])
        h2d = h_ln.reshape(TB * N_TOKP, EMBED).astype(jnp.bfloat16)
        qkv = jnp.dot(h2d, wqkv_ref[d],
                      preferred_element_type=jnp.float32) + bqkv_ref[d]
        q3 = qkv[:, 0 * EMBED:1 * EMBED].reshape(TB, N_TOKP, EMBED).astype(jnp.bfloat16)
        k3 = qkv[:, 1 * EMBED:2 * EMBED].reshape(TB, N_TOKP, EMBED).astype(jnp.bfloat16)
        v3 = qkv[:, 2 * EMBED:3 * EMBED].reshape(TB, N_TOKP, EMBED).astype(jnp.bfloat16)

        # Stack the 4 heads' (pre-scaled, lane-masked) queries along the sublane axis:
        #   (q*scale*m_h).k^T == scale * q_h.k_h^T   ->  ONE (TB,160,128)x(TB,40,128)
        # score matmul and ONE (TB,160,40)x(TB,40,128) PV matmul per block instead of
        # 8 tiny per-head matmuls; softmax runs once over (TB,160,40).
        qstack = jnp.concatenate([q3 * qm for qm in q_masks], axis=1)   # (TB, 160, 128)
        s = jnp.einsum('bsd,bkd->bsk', qstack, k3,
                       preferred_element_type=jnp.float32)
        s = s + key_bias                                   # mask padded key columns
        p_att = _softmax(s).astype(jnp.bfloat16)           # (TB, 160, 40)
        pv = jnp.einsum('bsk,bkd->bsd', p_att, v3,
                        preferred_element_type=jnp.float32)  # (TB, 160, 128)
        # P_h.(V*m_h) == (P_h.V)*m_h  -> pick each head's lanes from its sublane block.
        ctx = pv[:, 0:N_TOKP, :] * o_masks[0]
        for h in range(1, HEADS):
            ctx = ctx + pv[:, h * N_TOKP:(h + 1) * N_TOKP, :] * o_masks[h]

        ctx2d = ctx.reshape(TB * N_TOKP, EMBED).astype(jnp.bfloat16)
        attn_out = jnp.dot(ctx2d, wproj_ref[d],
                           preferred_element_type=jnp.float32) + bproj_ref[d]
        tok = tok + attn_out.reshape(TB, N_TOKP, EMBED)

        # --- MLP (pre-LN) ---
        h2 = _layernorm(tok, ln2g_ref[d], ln2b_ref[d])
        h2 = h2.reshape(TB * N_TOKP, EMBED).astype(jnp.bfloat16)
        m = jnp.dot(h2, wfc1_ref[d],
                    preferred_element_type=jnp.float32) + bfc1_ref[d]
        m = _gelu(m).astype(jnp.bfloat16)
        m = jnp.dot(m, wfc2_ref[d],
                    preferred_element_type=jnp.float32) + bfc2_ref[d]
        tok = tok + m.reshape(TB, N_TOKP, EMBED)

    # --- final LN + CLS-token pooling ---
    tok = _layernorm(tok, lnfg_ref[...], lnfb_ref[...])
    feats = tok[:, 0:1, :].reshape(TB, EMBED)

    # --- classifier head (fused): Linear -> BN(eval) -> GELU -> Linear -> BN -> GELU -> Linear ---
    # TODO(synk): Dropout is stochastic in train mode; eval-mode forward -> identity.
    y = jnp.dot(feats.astype(jnp.bfloat16), hw1_ref[...],
                preferred_element_type=jnp.float32) + hb1_ref[...]
    y = _gelu(y * hs1_ref[...] + hsh1_ref[...])
    y = jnp.dot(y.astype(jnp.bfloat16), hw2_ref[...],
                preferred_element_type=jnp.float32) + hb2_ref[...]
    y = _gelu(y * hs2_ref[...] + hsh2_ref[...])
    out_ref[...] = jnp.dot(y.astype(jnp.bfloat16), hw3_ref[...],
                           preferred_element_type=jnp.float32) + hb3_ref[...]


def emotion_forward(x_nchw, params):
    B = x_nchw.shape[0]
    g = IMAGE_SIZE // PATCH
    (wp, bp, cls_tok, pos, ln1g, ln1b, wqkv, bqkv, wproj, bproj,
     ln2g, ln2b, wfc1, bfc1, wfc2, bfc2, lnfg, lnfb) = params["backbone"]
    (hw1, hb1, hg1, hbe1, hm1, hv1,
     hw2, hb2, hg2, hbe2, hm2, hv2, hw3, hb3) = params["head"]

    # NCHW -> (B, 36, 768), channel-major inside each patch (Conv2d weight order).
    # No token padding / zeros+scatter pass here: the 36->40 pad happens in-kernel.
    patches = x_nchw.reshape(B, IN_CH, g, PATCH, g, PATCH)
    patches = patches.transpose(0, 2, 4, 1, 3, 5).reshape(B, N_PATCH, PATCH_DIM)
    patches = patches.astype(jnp.bfloat16)

    # Batch tile: as large as possible (amortize grid-step overhead / fill MXU rows),
    # but keep >= 2 grid steps so the parallel batch axis can use both v7x TensorCores.
    TB = max(1, min(MAX_TB, pl.cdiv(B, 2)))
    n_tiles = pl.cdiv(B, TB)
    B_pad = n_tiles * TB
    if B_pad != B:
        patches = jnp.pad(patches, ((0, B_pad - B), (0, 0), (0, 0)))

    # fold CLS token, positional embedding and patch-embed bias into one base slab
    base = jnp.zeros((1, N_TOKP, EMBED), jnp.float32)
    base = base.at[:, 0, :].set(cls_tok[0] + pos[0])
    base = base.at[:, 1:N_TOK, :].set(pos[1:N_TOK] + bp)

    # fold eval-mode BatchNorm1d into scale/shift
    hs1 = hg1 * jax.lax.rsqrt(hv1 + BN_EPS)
    hsh1 = hbe1 - hm1 * hs1
    hs2 = hg2 * jax.lax.rsqrt(hv2 + BN_EPS)
    hsh2 = hbe2 - hm2 * hs2

    # pad the final classifier to a lane-dense (256, 128) output
    hw3p = jnp.zeros((256, LOGIT_PAD), jnp.float32).at[:, :NUM_CLASSES].set(hw3)
    hb3p = jnp.zeros((1, LOGIT_PAD), jnp.float32).at[:, :NUM_CLASSES].set(hb3)

    bf = lambda a: a.astype(jnp.bfloat16)
    weights = (
        bf(wp), base,
        ln1g, ln1b, bf(wqkv), bqkv, bf(wproj), bproj,
        ln2g, ln2b, bf(wfc1), bfc1, bf(wfc2), bfc2,
        lnfg, lnfb,
        bf(hw1), hb1, hs1, hsh1,
        bf(hw2), hb2, hs2, hsh2,
        bf(hw3p), hb3p,
    )

    def const_spec(a):
        nd = a.ndim
        # Grid-invariant weights: single-buffered (double buffering only burns VMEM).
        return pl.BlockSpec(a.shape, lambda i, _n=nd: (0,) * _n,
                            pipeline_mode=pl.Buffered(1))

    in_specs = [pl.BlockSpec((TB, N_PATCH, PATCH_DIM), lambda i: (i, 0, 0))]
    in_specs += [const_spec(w) for w in weights]

    logits_p = pl.pallas_call(
        emotion_kernel,
        out_shape=jax.ShapeDtypeStruct((n_tiles, TB, LOGIT_PAD), jnp.float32),
        grid=(n_tiles,),
        in_specs=in_specs,
        out_specs=pl.BlockSpec((None, TB, LOGIT_PAD), lambda i: (i, 0, 0)),
        compiler_params=pltpu.CompilerParams(
            dimension_semantics=("parallel",),
            vmem_limit_bytes=64 * 1024 * 1024),
    )(patches, *weights)

    return logits_p.reshape(B_pad, LOGIT_PAD)[:B, :NUM_CLASSES]


def init_params(key):
    keys = jax.random.split(key, 32)
    it = iter(keys)

    def nrm(shape, s=0.02):
        return (s * jax.random.normal(next(it), shape)).astype(jnp.float32)

    backbone = (
        nrm((PATCH_DIM, EMBED)),                        # patch-embed weight
        nrm((1, EMBED)),                                # patch-embed bias
        nrm((1, EMBED)),                                # CLS token
        nrm((N_TOK, EMBED)),                            # positional embedding
        jnp.ones((DEPTH, 1, EMBED), jnp.float32),       # ln1 gamma
        jnp.zeros((DEPTH, 1, EMBED), jnp.float32),      # ln1 beta
        nrm((DEPTH, EMBED, 3 * EMBED)),                 # qkv weight
        nrm((DEPTH, 1, 3 * EMBED)),                     # qkv bias
        nrm((DEPTH, EMBED, EMBED)),                     # attn proj weight
        nrm((DEPTH, 1, EMBED)),                         # attn proj bias
        jnp.ones((DEPTH, 1, EMBED), jnp.float32),       # ln2 gamma
        jnp.zeros((DEPTH, 1, EMBED), jnp.float32),      # ln2 beta
        nrm((DEPTH, EMBED, MLP_DIM)),                   # mlp fc1 weight
        nrm((DEPTH, 1, MLP_DIM)),                       # mlp fc1 bias
        nrm((DEPTH, MLP_DIM, EMBED)),                   # mlp fc2 weight
        nrm((DEPTH, 1, EMBED)),                         # mlp fc2 bias
        jnp.ones((1, EMBED), jnp.float32),              # final LN gamma
        jnp.zeros((1, EMBED), jnp.float32),             # final LN beta
    )
    head = (
        nrm((EMBED, 512)), nrm((1, 512)),               # Linear(feat, 512)
        jnp.ones((1, 512), jnp.float32), jnp.zeros((1, 512), jnp.float32),  # BN1 gamma/beta
        nrm((1, 512)), jnp.abs(nrm((1, 512))) + 1.0,    # BN1 running mean/var
        nrm((512, 256)), nrm((1, 256)),                 # Linear(512, 256)
        jnp.ones((1, 256), jnp.float32), jnp.zeros((1, 256), jnp.float32),  # BN2 gamma/beta
        nrm((1, 256)), jnp.abs(nrm((1, 256))) + 1.0,    # BN2 running mean/var
        nrm((256, NUM_CLASSES)), nrm((1, NUM_CLASSES)),  # Linear(256, num_classes)
    )
    return {"backbone": backbone, "head": head}


if __name__ == "__main__":
    key = jax.random.PRNGKey(0)
    pkey, xkey = jax.random.split(key)
    params = init_params(pkey)
    x = jax.random.normal(xkey, (2, IN_CH, IMAGE_SIZE, IMAGE_SIZE), dtype=jnp.float32)

    logits = jax.jit(emotion_forward)(x, params)
    logits = jax.block_until_ready(logits)

    assert logits.shape == (2, NUM_CLASSES), logits.shape
    assert bool(jnp.all(jnp.isfinite(logits)))
    print("KERNEL_OK")
</pallas_src>

<mosaic_0001>
module attributes {stable_mosaic.version = 11 : i64} {
  func.func @emotion_kernel(%arg0: i32, %arg1: memref<1x36x768xbf16, #tpu.memory_space<vmem>>, %arg2: memref<768x128xbf16, #tpu.memory_space<vmem>>, %arg3: memref<1x40x128xf32, #tpu.memory_space<vmem>>, %arg4: memref<2x1x128xf32, #tpu.memory_space<vmem>>, %arg5: memref<2x1x128xf32, #tpu.memory_space<vmem>>, %arg6: memref<2x128x384xbf16, #tpu.memory_space<vmem>>, %arg7: memref<2x1x384xf32, #tpu.memory_space<vmem>>, %arg8: memref<2x128x128xbf16, #tpu.memory_space<vmem>>, %arg9: memref<2x1x128xf32, #tpu.memory_space<vmem>>, %arg10: memref<2x1x128xf32, #tpu.memory_space<vmem>>, %arg11: memref<2x1x128xf32, #tpu.memory_space<vmem>>, %arg12: memref<2x128x512xbf16, #tpu.memory_space<vmem>>, %arg13: memref<2x1x512xf32, #tpu.memory_space<vmem>>, %arg14: memref<2x512x128xbf16, #tpu.memory_space<vmem>>, %arg15: memref<2x1x128xf32, #tpu.memory_space<vmem>>, %arg16: memref<1x128xf32, #tpu.memory_space<vmem>>, %arg17: memref<1x128xf32, #tpu.memory_space<vmem>>, %arg18: memref<128x512xbf16, #tpu.memory_space<vmem>>, %arg19: memref<1x512xf32, #tpu.memory_space<vmem>>, %arg20: memref<1x512xf32, #tpu.memory_space<vmem>>, %arg21: memref<1x512xf32, #tpu.memory_space<vmem>>, %arg22: memref<512x256xbf16, #tpu.memory_space<vmem>>, %arg23: memref<1x256xf32, #tpu.memory_space<vmem>>, %arg24: memref<1x256xf32, #tpu.memory_space<vmem>>, %arg25: memref<1x256xf32, #tpu.memory_space<vmem>>, %arg26: memref<256x128xbf16, #tpu.memory_space<vmem>>, %arg27: memref<1x128xf32, #tpu.memory_space<vmem>>, %arg28: memref<1x1x128xf32, #tpu.memory_space<vmem>>) attributes {dimension_semantics = [#tpu.dimension_semantics<parallel>], iteration_bounds = array<i64: 2>, scalar_prefetch = 0 : i64, scratch_operands = 0 : i64, tpu.core_type = #tpu.core_type<tc>, window_params = [{transform_indices = @transform_0, window_bounds = array<i64: 1, 36, 768>}, {pipeline_mode = #tpu.pipeline_mode<synchronous>, transform_indices = @transform_1, window_bounds = array<i64: 768, 128>}, {pipeline_mode = #tpu.pipeline_mode<synchronous>, transform_indices = @transform_2, window_bounds = array<i64: 1, 40, 128>}, {pipeline_mode = #tpu.pipeline_mode<synchronous>, transform_indices = @transform_3, window_bounds = array<i64: 2, 1, 128>}, {pipeline_mode = #tpu.pipeline_mode<synchronous>, transform_indices = @transform_4, window_bounds = array<i64: 2, 1, 128>}, {pipeline_mode = #tpu.pipeline_mode<synchronous>, transform_indices = @transform_5, window_bounds = array<i64: 2, 128, 384>}, {pipeline_mode = #tpu.pipeline_mode<synchronous>, transform_indices = @transform_6, window_bounds = array<i64: 2, 1, 384>}, {pipeline_mode = #tpu.pipeline_mode<synchronous>, transform_indices = @transform_7, window_bounds = array<i64: 2, 128, 128>}, {pipeline_mode = #tpu.pipeline_mode<synchronous>, transform_indices = @transform_8, window_bounds = array<i64: 2, 1, 128>}, {pipeline_mode = #tpu.pipeline_mode<synchronous>, transform_indices = @transform_9, window_bounds = array<i64: 2, 1, 128>}, {pipeline_mode = #tpu.pipeline_mode<synchronous>, transform_indices = @transform_10, window_bounds = array<i64: 2, 1, 128>}, {pipeline_mode = #tpu.pipeline_mode<synchronous>, transform_indices = @transform_11, window_bounds = array<i64: 2, 128, 512>}, {pipeline_mode = #tpu.pipeline_mode<synchronous>, transform_indices = @transform_12, window_bounds = array<i64: 2, 1, 512>}, {pipeline_mode = #tpu.pipeline_mode<synchronous>, transform_indices = @transform_13, window_bounds = array<i64: 2, 512, 128>}, {pipeline_mode = #tpu.pipeline_mode<synchronous>, transform_indices = @transform_14, window_bounds = array<i64: 2, 1, 128>}, {pipeline_mode = #tpu.pipeline_mode<synchronous>, transform_indices = @transform_15, window_bounds = array<i64: 1, 128>}, {pipeline_mode = #tpu.pipeline_mode<synchronous>, transform_indices = @transform_16, window_bounds = array<i64: 1, 128>}, {pipeline_mode = #tpu.pipeline_mode<synchronous>, transform_indices = @transform_17, window_bounds = array<i64: 128, 512>}, {pipeline_mode = #tpu.pipeline_mode<synchronous>, transform_indices = @transform_18, window_bounds = array<i64: 1, 512>}, {pipeline_mode = #tpu.pipeline_mode<synchronous>, transform_indices = @transform_19, window_bounds = array<i64: 1, 512>}, {pipeline_mode = #tpu.pipeline_mode<synchronous>, transform_indices = @transform_20, window_bounds = array<i64: 1, 512>}, {pipeline_mode = #tpu.pipeline_mode<synchronous>, transform_indices = @transform_21, window_bounds = array<i64: 512, 256>}, {pipeline_mode = #tpu.pipeline_mode<synchronous>, transform_indices = @transform_22, window_bounds = array<i64: 1, 256>}, {pipeline_mode = #tpu.pipeline_mode<synchronous>, transform_indices = @transform_23, window_bounds = array<i64: 1, 256>}, {pipeline_mode = #tpu.pipeline_mode<synchronous>, transform_indices = @transform_24, window_bounds = array<i64: 1, 256>}, {pipeline_mode = #tpu.pipeline_mode<synchronous>, transform_indices = @transform_25, window_bounds = array<i64: 256, 128>}, {pipeline_mode = #tpu.pipeline_mode<synchronous>, transform_indices = @transform_26, window_bounds = array<i64: 1, 128>}, {transform_indices = @transform_27, window_bounds = array<i64: 1, 1, 128>}]} {
    %0 = tpu.iota {dimensions = array<i32: 1>} : vector<1x40x36xi32>
    %1 = tpu.iota {dimensions = array<i32: 2>} : vector<1x40x36xi32>
    %c1_i32 = arith.constant 1 : i32
    %2 = vector.broadcast %c1_i32 : i32 to vector<1x40x36xi32>
    %3 = arith.addi %1, %2 : vector<1x40x36xi32>
    %4 = arith.cmpi eq, %0, %3 : vector<1x40x36xi32>
    %5 = arith.extui %4 : vector<1x40x36xi1> to vector<1x40x36xi32>
    %6 = arith.sitofp %5 : vector<1x40x36xi32> to vector<1x40x36xf32>
    %7 = arith.truncf %6 : vector<1x40x36xf32> to vector<1x40x36xbf16>
    %c0 = arith.constant 0 : index
    %c0_0 = arith.constant 0 : index
    %c0_1 = arith.constant 0 : index
    %8 = vector.load %arg1[%c0, %c0_0, %c0_1] : memref<1x36x768xbf16, #tpu.memory_space<vmem>>, vector<1x36x768xbf16>
    "tpu.trace_start"() <{level = 10 : i32, message = "bts,bsd->btd"}> : () -> ()
    %cst = arith.constant dense<0.000000e+00> : vector<1x40x768xf32>
    %9 = tpu.matmul %7, %8, %cst {dimension_numbers = #tpu.dot_dimension_numbers<[2], [1], [1], [2], [0, 0, 0, 1, 1, 2], [0], [0]>} : vector<1x40x36xbf16>, vector<1x36x768xbf16>, vector<1x40x768xf32> -> vector<1x40x768xf32>
    "tpu.trace_stop"() : () -> ()
    %10 = arith.truncf %9 : vector<1x40x768xf32> to vector<1x40x768xbf16>
    %11 = vector.shape_cast %10 : vector<1x40x768xbf16> to vector<40x768xbf16>
    %c0_2 = arith.constant 0 : index
    %c0_3 = arith.constant 0 : index
    %12 = vector.load %arg2[%c0_2, %c0_3] : memref<768x128xbf16, #tpu.memory_space<vmem>>, vector<768x128xbf16>
    %cst_4 = arith.constant dense<0.000000e+00> : vector<40x128xf32>
    %13 = tpu.matmul %11, %12, %cst_4 {dimension_numbers = #tpu.dot_dimension_numbers<[1], [0], [0], [1], [0, 0, 1, 1], [], []>} : vector<40x768xbf16>, vector<768x128xbf16>, vector<40x128xf32> -> vector<40x128xf32>
    %14 = vector.shape_cast %13 : vector<40x128xf32> to vector<1x40x128xf32>
    %c0_5 = arith.constant 0 : index
    %c0_6 = arith.constant 0 : index
    %c0_7 = arith.constant 0 : index
    %15 = vector.load %arg3[%c0_5, %c0_6, %c0_7] : memref<1x40x128xf32, #tpu.memory_space<vmem>>, vector<1x40x128xf32>
    %16 = arith.addf %14, %15 : vector<1x40x128xf32>
    %17 = tpu.iota {dimensions = array<i32: 2>} : vector<1x1x40xi32>
    %c37_i32 = arith.constant 37 : i32
    %18 = vector.broadcast %c37_i32 : i32 to vector<1x1x40xi32>
    %19 = arith.cmpi slt, %17, %18 : vector<1x1x40xi32>
    %cst_8 = arith.constant 0.000000e+00 : f32
    %cst_9 = arith.constant -1.000000e+30 : f32
    %20 = vector.broadcast %cst_8 : f32 to vector<1x1x40xf32>
    %21 = vector.broadcast %cst_9 : f32 to vector<1x1x40xf32>
    %22 = arith.select %19, %20, %21 : vector<1x1x40xi1>, vector<1x1x40xf32>
    %23 = tpu.iota {dimensions = array<i32: 2>} : vector<1x1x128xi32>
    %c0_i32 = arith.constant 0 : i32
    %24 = vector.broadcast %c0_i32 : i32 to vector<1x1x128xi32>
    %25 = arith.cmpi sge, %23, %24 : vector<1x1x128xi32>
    %c32_i32 = arith.constant 32 : i32
    %26 = vector.broadcast %c32_i32 : i32 to vector<1x1x128xi32>
    %27 = arith.cmpi slt, %23, %26 : vector<1x1x128xi32>
    %28 = arith.andi %25, %27 : vector<1x1x128xi1>
    %c32_i32_10 = arith.constant 32 : i32
    %29 = vector.broadcast %c32_i32_10 : i32 to vector<1x1x128xi32>
    %30 = arith.cmpi sge, %23, %29 : vector<1x1x128xi32>
    %c64_i32 = arith.constant 64 : i32
    %31 = vector.broadcast %c64_i32 : i32 to vector<1x1x128xi32>
    %32 = arith.cmpi slt, %23, %31 : vector<1x1x128xi32>
    %33 = arith.andi %30, %32 : vector<1x1x128xi1>
    %c64_i32_11 = arith.constant 64 : i32
    %34 = vector.broadcast %c64_i32_11 : i32 to vector<1x1x128xi32>
    %35 = arith.cmpi sge, %23, %34 : vector<1x1x128xi32>
    %c96_i32 = arith.constant 96 : i32
    %36 = vector.broadcast %c96_i32 : i32 to vector<1x1x128xi32>
    %37 = arith.cmpi slt, %23, %36 : vector<1x1x128xi32>
    %38 = arith.andi %35, %37 : vector<1x1x128xi1>
    %c96_i32_12 = arith.constant 96 : i32
    %39 = vector.broadcast %c96_i32_12 : i32 to vector<1x1x128xi32>
    %40 = arith.cmpi sge, %23, %39 : vector<1x1x128xi32>
    %c128_i32 = arith.constant 128 : i32
    %41 = vector.broadcast %c128_i32 : i32 to vector<1x1x128xi32>
    %42 = arith.cmpi slt, %23, %41 : vector<1x1x128xi32>
    %43 = arith.andi %40, %42 : vector<1x1x128xi1>
    %cst_13 = arith.constant 0.176776692 : f32
    %cst_14 = arith.constant 0.000000e+00 : f32
    %44 = vector.broadcast %cst_13 : f32 to vector<1x1x128xf32>
    %45 = vector.broadcast %cst_14 : f32 to vector<1x1x128xf32>
    %46 = arith.select %28, %44, %45 : vector<1x1x128xi1>, vector<1x1x128xf32>
    %47 = arith.truncf %46 : vector<1x1x128xf32> to vector<1x1x128xbf16>
    %cst_15 = arith.constant 0.176776692 : f32
    %cst_16 = arith.constant 0.000000e+00 : f32
    %48 = vector.broadcast %cst_15 : f32 to vector<1x1x128xf32>
    %49 = vector.broadcast %cst_16 : f32 to vector<1x1x128xf32>
    %50 = arith.select %33, %48, %49 : vector<1x1x128xi1>, vector<1x1x128xf32>
    %51 = arith.truncf %50 : vector<1x1x128xf32> to vector<1x1x128xbf16>
    %cst_17 = arith.constant 0.176776692 : f32
    %cst_18 = arith.constant 0.000000e+00 : f32
    %52 = vector.broadcast %cst_17 : f32 to vector<1x1x128xf32>
    %53 = vector.broadcast %cst_18 : f32 to vector<1x1x128xf32>
    %54 = arith.select %38, %52, %53 : vector<1x1x128xi1>, vector<1x1x128xf32>
    %55 = arith.truncf %54 : vector<1x1x128xf32> to vector<1x1x128xbf16>
    %cst_19 = arith.constant 0.176776692 : f32
    %cst_20 = arith.constant 0.000000e+00 : f32
    %56 = vector.broadcast %cst_19 : f32 to vector<1x1x128xf32>
    %57 = vector.broadcast %cst_20 : f32 to vector<1x1x128xf32>
    %58 = arith.select %43, %56, %57 : vector<1x1x128xi1>, vector<1x1x128xf32>
    %59 = arith.truncf %58 : vector<1x1x128xf32> to vector<1x1x128xbf16>
    %60 = arith.extui %28 : vector<1x1x128xi1> to vector<1x1x128xi32>
    %61 = arith.sitofp %60 : vector<1x1x128xi32> to vector<1x1x128xf32>
    %62 = arith.extui %33 : vector<1x1x128xi1> to vector<1x1x128xi32>
    %63 = arith.sitofp %62 : vector<1x1x128xi32> to vector<1x1x128xf32>
    %64 = arith.extui %38 : vector<1x1x128xi1> to vector<1x1x128xi32>
    %65 = arith.sitofp %64 : vector<1x1x128xi32> to vector<1x1x128xf32>
    %66 = arith.extui %43 : vector<1x1x128xi1> to vector<1x1x128xi32>
    %67 = arith.sitofp %66 : vector<1x1x128xi32> to vector<1x1x128xf32>
    %c0_21 = arith.constant 0 : index
    %c0_22 = arith.constant 0 : index
    %c0_23 = arith.constant 0 : index
    %68 = vector.load %arg4[%c0_21, %c0_22, %c0_23] : memref<2x1x128xf32, #tpu.memory_space<vmem>>, vector<1x1x128xf32>
    %69 = vector.shape_cast %68 : vector<1x1x128xf32> to vector<1x128xf32>
    %c0_24 = arith.constant 0 : index
    %c0_25 = arith.constant 0 : index
    %c0_26 = arith.constant 0 : index
    %70 = vector.load %arg5[%c0_24, %c0_25, %c0_26] : memref<2x1x128xf32, #tpu.memory_space<vmem>>, vector<1x1x128xf32>
    %71 = vector.shape_cast %70 : vector<1x1x128xf32> to vector<1x128xf32>
    %cst_27 = arith.constant dense<0.000000e+00> : vector<1x40xf32>
    %72 = vector.multi_reduction <add>, %16, %cst_27 [2] : vector<1x40x128xf32> to vector<1x40xf32>
    %73 = vector.shape_cast %72 : vector<1x40xf32> to vector<1x40x1xf32>
    %cst_28 = arith.constant 1.280000e+02 : f32
    %74 = vector.broadcast %cst_28 : f32 to vector<1x40x1xf32>
    %75 = arith.divf %73, %74 : vector<1x40x1xf32>
    %76 = vector.broadcast %75 : vector<1x40x1xf32> to vector<1x40x128xf32>
    %77 = arith.subf %16, %76 : vector<1x40x128xf32>
    %78 = arith.mulf %77, %77 : vector<1x40x128xf32>
    %cst_29 = arith.constant dense<0.000000e+00> : vector<1x40xf32>
    %79 = vector.multi_reduction <add>, %78, %cst_29 [2] : vector<1x40x128xf32> to vector<1x40xf32>
    %80 = vector.shape_cast %79 : vector<1x40xf32> to vector<1x40x1xf32>
    %cst_30 = arith.constant 1.280000e+02 : f32
    %81 = vector.broadcast %cst_30 : f32 to vector<1x40x1xf32>
    %82 = arith.divf %80, %81 : vector<1x40x1xf32>
    %83 = vector.broadcast %75 : vector<1x40x1xf32> to vector<1x40x128xf32>
    %84 = arith.subf %16, %83 : vector<1x40x128xf32>
    %cst_31 = arith.constant 9.99999997E-7 : f32
    %85 = vector.broadcast %cst_31 : f32 to vector<1x40x1xf32>
    %86 = arith.addf %82, %85 : vector<1x40x1xf32>
    %87 = math.rsqrt %86 : vector<1x40x1xf32>
    %88 = vector.broadcast %87 : vector<1x40x1xf32> to vector<1x40x128xf32>
    %89 = arith.mulf %84, %88 : vector<1x40x128xf32>
    %90 = vector.shape_cast %69 : vector<1x128xf32> to vector<1x1x128xf32>
    %91 = vector.broadcast %90 : vector<1x1x128xf32> to vector<1x40x128xf32>
    %92 = arith.mulf %89, %91 : vector<1x40x128xf32>
    %93 = vector.shape_cast %71 : vector<1x128xf32> to vector<1x1x128xf32>
    %94 = vector.broadcast %93 : vector<1x1x128xf32> to vector<1x40x128xf32>
    %95 = arith.addf %92, %94 : vector<1x40x128xf32>
    %96 = vector.shape_cast %95 : vector<1x40x128xf32> to vector<40x128xf32>
    %97 = arith.truncf %96 : vector<40x128xf32> to vector<40x128xbf16>
    %c0_32 = arith.constant 0 : index
    %c0_33 = arith.constant 0 : index
    %c0_34 = arith.constant 0 : index
    %98 = vector.load %arg6[%c0_32, %c0_33, %c0_34] : memref<2x128x384xbf16, #tpu.memory_space<vmem>>, vector<1x128x384xbf16>
    %99 = vector.shape_cast %98 : vector<1x128x384xbf16> to vector<128x384xbf16>
    %cst_35 = arith.constant dense<0.000000e+00> : vector<40x384xf32>
    %100 = tpu.matmul %97, %99, %cst_35 {dimension_numbers = #tpu.dot_dimension_numbers<[1], [0], [0], [1], [0, 0, 1, 1], [], []>} : vector<40x128xbf16>, vector<128x384xbf16>, vector<40x384xf32> -> vector<40x384xf32>
    %c0_36 = arith.constant 0 : index
    %c0_37 = arith.constant 0 : index
    %c0_38 = arith.constant 0 : index
    %101 = vector.load %arg7[%c0_36, %c0_37, %c0_38] : memref<2x1x384xf32, #tpu.memory_space<vmem>>, vector<1x1x384xf32>
    %102 = vector.shape_cast %101 : vector<1x1x384xf32> to vector<1x384xf32>
    %103 = vector.broadcast %102 : vector<1x384xf32> to vector<40x384xf32>
    %104 = arith.addf %100, %103 : vector<40x384xf32>
    %105 = vector.extract_strided_slice %104 {offsets = [0, 0], sizes = [40, 128], strides = [1, 1]} : vector<40x384xf32> to vector<40x128xf32>
    %106 = vector.shape_cast %105 : vector<40x128xf32> to vector<1x40x128xf32>
    %107 = arith.truncf %106 : vector<1x40x128xf32> to vector<1x40x128xbf16>
    %108 = vector.extract_strided_slice %104 {offsets = [0, 128], sizes = [40, 128], strides = [1, 1]} : vector<40x384xf32> to vector<40x128xf32>
    %109 = vector.shape_cast %108 : vector<40x128xf32> to vector<1x40x128xf32>
    %110 = arith.truncf %109 : vector<1x40x128xf32> to vector<1x40x128xbf16>
    %111 = vector.extract_strided_slice %104 {offsets = [0, 256], sizes = [40, 128], strides = [1, 1]} : vector<40x384xf32> to vector<40x128xf32>
    %112 = vector.shape_cast %111 : vector<40x128xf32> to vector<1x40x128xf32>
    %113 = arith.truncf %112 : vector<1x40x128xf32> to vector<1x40x128xbf16>
    %114 = vector.broadcast %47 : vector<1x1x128xbf16> to vector<1x40x128xbf16>
    %115 = arith.mulf %107, %114 : vector<1x40x128xbf16>
    %116 = vector.broadcast %51 : vector<1x1x128xbf16> to vector<1x40x128xbf16>
    %117 = arith.mulf %107, %116 : vector<1x40x128xbf16>
    %118 = vector.broadcast %55 : vector<1x1x128xbf16> to vector<1x40x128xbf16>
    %119 = arith.mulf %107, %118 : vector<1x40x128xbf16>
    %120 = vector.broadcast %59 : vector<1x1x128xbf16> to vector<1x40x128xbf16>
    %121 = arith.mulf %107, %120 : vector<1x40x128xbf16>
    %122 = tpu.concatenate %115, %117, %119, %121 in 1 : vector<1x40x128xbf16>, vector<1x40x128xbf16>, vector<1x40x128xbf16>, vector<1x40x128xbf16> -> vector<1x160x128xbf16>
    "tpu.trace_start"() <{level = 10 : i32, message = "bsd,bkd->bsk"}> : () -> ()
    %cst_39 = arith.constant dense<0.000000e+00> : vector<1x160x40xf32>
    %123 = tpu.matmul %122, %110, %cst_39 {dimension_numbers = #tpu.dot_dimension_numbers<[2], [2], [1], [1], [0, 0, 0, 1, 1, 1], [0], [0]>} : vector<1x160x128xbf16>, vector<1x40x128xbf16>, vector<1x160x40xf32> -> vector<1x160x40xf32>
    "tpu.trace_stop"() : () -> ()
    %124 = vector.broadcast %22 : vector<1x1x40xf32> to vector<1x160x40xf32>
    %125 = arith.addf %123, %124 : vector<1x160x40xf32>
    %cst_40 = arith.constant dense<0xFF800000> : vector<1x160xf32>
    %126 = vector.multi_reduction <maximumf>, %125, %cst_40 [2] : vector<1x160x40xf32> to vector<1x160xf32>
    %127 = vector.shape_cast %126 : vector<1x160xf32> to vector<1x160x1xf32>
    %128 = vector.broadcast %127 : vector<1x160x1xf32> to vector<1x160x40xf32>
    %129 = arith.subf %125, %128 : vector<1x160x40xf32>
    %130 = math.exp %129 : vector<1x160x40xf32>
    %cst_41 = arith.constant dense<0.000000e+00> : vector<1x160xf32>
    %131 = vector.multi_reduction <add>, %130, %cst_41 [2] : vector<1x160x40xf32> to vector<1x160xf32>
    %132 = vector.shape_cast %131 : vector<1x160xf32> to vector<1x160x1xf32>
    %133 = tpu.reciprocal %132 {approx = true} : vector<1x160x1xf32> -> vector<1x160x1xf32>
    %134 = vector.broadcast %133 : vector<1x160x1xf32> to vector<1x160x40xf32>
    %135 = arith.mulf %130, %134 : vector<1x160x40xf32>
    %136 = arith.truncf %135 : vector<1x160x40xf32> to vector<1x160x40xbf16>
    "tpu.trace_start"() <{level = 10 : i32, message = "bsk,bkd->bsd"}> : () -> ()
    %cst_42 = arith.constant dense<0.000000e+00> : vector<1x160x128xf32>
    %137 = tpu.matmul %136, %113, %cst_42 {dimension_numbers = #tpu.dot_dimension_numbers<[2], [1], [1], [2], [0, 0, 0, 1, 1, 2], [0], [0]>} : vector<1x160x40xbf16>, vector<1x40x128xbf16>, vector<1x160x128xf32> -> vector<1x160x128xf32>
    "tpu.trace_stop"() : () -> ()
    %138 = vector.extract_strided_slice %137 {offsets = [0, 0, 0], sizes = [1, 40, 128], strides = [1, 1, 1]} : vector<1x160x128xf32> to vector<1x40x128xf32>
    %139 = vector.broadcast %61 : vector<1x1x128xf32> to vector<1x40x128xf32>
    %140 = arith.mulf %138, %139 : vector<1x40x128xf32>
    %141 = vector.extract_strided_slice %137 {offsets = [0, 40, 0], sizes = [1, 40, 128], strides = [1, 1, 1]} : vector<1x160x128xf32> to vector<1x40x128xf32>
    %142 = vector.broadcast %63 : vector<1x1x128xf32> to vector<1x40x128xf32>
    %143 = arith.mulf %141, %142 : vector<1x40x128xf32>
    %144 = arith.addf %140, %143 : vector<1x40x128xf32>
    %145 = vector.extract_strided_slice %137 {offsets = [0, 80, 0], sizes = [1, 40, 128], strides = [1, 1, 1]} : vector<1x160x128xf32> to vector<1x40x128xf32>
    %146 = vector.broadcast %65 : vector<1x1x128xf32> to vector<1x40x128xf32>
    %147 = arith.mulf %145, %146 : vector<1x40x128xf32>
    %148 = arith.addf %144, %147 : vector<1x40x128xf32>
    %149 = vector.extract_strided_slice %137 {offsets = [0, 120, 0], sizes = [1, 40, 128], strides = [1, 1, 1]} : vector<1x160x128xf32> to vector<1x40x128xf32>
    %150 = vector.broadcast %67 : vector<1x1x128xf32> to vector<1x40x128xf32>
    %151 = arith.mulf %149, %150 : vector<1x40x128xf32>
    %152 = arith.addf %148, %151 : vector<1x40x128xf32>
    %153 = vector.shape_cast %152 : vector<1x40x128xf32> to vector<40x128xf32>
    %154 = arith.truncf %153 : vector<40x128xf32> to vector<40x128xbf16>
    %c0_43 = arith.constant 0 : index
    %c0_44 = arith.constant 0 : index
    %c0_45 = arith.constant 0 : index
    %155 = vector.load %arg8[%c0_43, %c0_44, %c0_45] : memref<2x128x128xbf16, #tpu.memory_space<vmem>>, vector<1x128x128xbf16>
    %156 = vector.shape_cast %155 : vector<1x128x128xbf16> to vector<128x128xbf16>
    %cst_46 = arith.constant dense<0.000000e+00> : vector<40x128xf32>
    %157 = tpu.matmul %154, %156, %cst_46 {dimension_numbers = #tpu.dot_dimension_numbers<[1], [0], [0], [1], [0, 0, 1, 1], [], []>} : vector<40x128xbf16>, vector<128x128xbf16>, vector<40x128xf32> -> vector<40x128xf32>
    %c0_47 = arith.constant 0 : index
    %c0_48 = arith.constant 0 : index
    %c0_49 = arith.constant 0 : index
    %158 = vector.load %arg9[%c0_47, %c0_48, %c0_49] : memref<2x1x128xf32, #tpu.memory_space<vmem>>, vector<1x1x128xf32>
    %159 = vector.shape_cast %158 : vector<1x1x128xf32> to vector<1x128xf32>
    %160 = vector.broadcast %159 : vector<1x128xf32> to vector<40x128xf32>
    %161 = arith.addf %157, %160 : vector<40x128xf32>
    %162 = vector.shape_cast %161 : vector<40x128xf32> to vector<1x40x128xf32>
    %163 = arith.addf %16, %162 : vector<1x40x128xf32>
    %c0_50 = arith.constant 0 : index
    %c0_51 = arith.constant 0 : index
    %c0_52 = arith.constant 0 : index
    %164 = vector.load %arg10[%c0_50, %c0_51, %c0_52] : memref<2x1x128xf32, #tpu.memory_space<vmem>>, vector<1x1x128xf32>
    %165 = vector.shape_cast %164 : vector<1x1x128xf32> to vector<1x128xf32>
    %c0_53 = arith.constant 0 : index
    %c0_54 = arith.constant 0 : index
    %c0_55 = arith.constant 0 : index
    %166 = vector.load %arg11[%c0_53, %c0_54, %c0_55] : memref<2x1x128xf32, #tpu.memory_space<vmem>>, vector<1x1x128xf32>
    %167 = vector.shape_cast %166 : vector<1x1x128xf32> to vector<1x128xf32>
    %cst_56 = arith.constant dense<0.000000e+00> : vector<1x40xf32>
    %168 = vector.multi_reduction <add>, %163, %cst_56 [2] : vector<1x40x128xf32> to vector<1x40xf32>
    %169 = vector.shape_cast %168 : vector<1x40xf32> to vector<1x40x1xf32>
    %cst_57 = arith.constant 1.280000e+02 : f32
    %170 = vector.broadcast %cst_57 : f32 to vector<1x40x1xf32>
    %171 = arith.divf %169, %170 : vector<1x40x1xf32>
    %172 = vector.broadcast %171 : vector<1x40x1xf32> to vector<1x40x128xf32>
    %173 = arith.subf %163, %172 : vector<1x40x128xf32>
    %174 = arith.mulf %173, %173 : vector<1x40x128xf32>
    %cst_58 = arith.constant dense<0.000000e+00> : vector<1x40xf32>
    %175 = vector.multi_reduction <add>, %174, %cst_58 [2] : vector<1x40x128xf32> to vector<1x40xf32>
    %176 = vector.shape_cast %175 : vector<1x40xf32> to vector<1x40x1xf32>
    %cst_59 = arith.constant 1.280000e+02 : f32
    %177 = vector.broadcast %cst_59 : f32 to vector<1x40x1xf32>
    %178 = arith.divf %176, %177 : vector<1x40x1xf32>
    %179 = vector.broadcast %171 : vector<1x40x1xf32> to vector<1x40x128xf32>
    %180 = arith.subf %163, %179 : vector<1x40x128xf32>
    %cst_60 = arith.constant 9.99999997E-7 : f32
    %181 = vector.broadcast %cst_60 : f32 to vector<1x40x1xf32>
    %182 = arith.addf %178, %181 : vector<1x40x1xf32>
    %183 = math.rsqrt %182 : vector<1x40x1xf32>
    %184 = vector.broadcast %183 : vector<1x40x1xf32> to vector<1x40x128xf32>
    %185 = arith.mulf %180, %184 : vector<1x40x128xf32>
    %186 = vector.shape_cast %165 : vector<1x128xf32> to vector<1x1x128xf32>
    %187 = vector.broadcast %186 : vector<1x1x128xf32> to vector<1x40x128xf32>
    %188 = arith.mulf %185, %187 : vector<1x40x128xf32>
    %189 = vector.shape_cast %167 : vector<1x128xf32> to vector<1x1x128xf32>
    %190 = vector.broadcast %189 : vector<1x1x128xf32> to vector<1x40x128xf32>
    %191 = arith.addf %188, %190 : vector<1x40x128xf32>
    %192 = vector.shape_cast %191 : vector<1x40x128xf32> to vector<40x128xf32>
    %193 = arith.truncf %192 : vector<40x128xf32> to vector<40x128xbf16>
    %c0_61 = arith.constant 0 : index
    %c0_62 = arith.constant 0 : index
    %c0_63 = arith.constant 0 : index
    %194 = vector.load %arg12[%c0_61, %c0_62, %c0_63] : memref<2x128x512xbf16, #tpu.memory_space<vmem>>, vector<1x128x512xbf16>
    %195 = vector.shape_cast %194 : vector<1x128x512xbf16> to vector<128x512xbf16>
    %cst_64 = arith.constant dense<0.000000e+00> : vector<40x512xf32>
    %196 = tpu.matmul %193, %195, %cst_64 {dimension_numbers = #tpu.dot_dimension_numbers<[1], [0], [0], [1], [0, 0, 1, 1], [], []>} : vector<40x128xbf16>, vector<128x512xbf16>, vector<40x512xf32> -> vector<40x512xf32>
    %c0_65 = arith.constant 0 : index
    %c0_66 = arith.constant 0 : index
    %c0_67 = arith.constant 0 : index
    %197 = vector.load %arg13[%c0_65, %c0_66, %c0_67] : memref<2x1x512xf32, #tpu.memory_space<vmem>>, vector<1x1x512xf32>
    %198 = vector.shape_cast %197 : vector<1x1x512xf32> to vector<1x512xf32>
    %199 = vector.broadcast %198 : vector<1x512xf32> to vector<40x512xf32>
    %200 = arith.addf %196, %199 : vector<40x512xf32>
    %cst_68 = arith.constant 5.000000e-01 : f32
    %201 = vector.broadcast %cst_68 : f32 to vector<40x512xf32>
    %202 = arith.mulf %201, %200 : vector<40x512xf32>
    %cst_69 = arith.constant 4.471500e-02 : f32
    %203 = vector.broadcast %cst_69 : f32 to vector<40x512xf32>
    %204 = arith.mulf %203, %200 : vector<40x512xf32>
    %205 = arith.mulf %204, %200 : vector<40x512xf32>
    %206 = arith.mulf %205, %200 : vector<40x512xf32>
    %207 = arith.addf %200, %206 : vector<40x512xf32>
    %cst_70 = arith.constant 0.797884583 : f32
    %208 = vector.broadcast %cst_70 : f32 to vector<40x512xf32>
    %209 = arith.mulf %208, %207 : vector<40x512xf32>
    %210 = math.tanh %209 : vector<40x512xf32>
    %cst_71 = arith.constant 1.000000e+00 : f32
    %211 = vector.broadcast %cst_71 : f32 to vector<40x512xf32>
    %212 = arith.addf %211, %210 : vector<40x512xf32>
    %213 = arith.mulf %202, %212 : vector<40x512xf32>
    %214 = arith.truncf %213 : vector<40x512xf32> to vector<40x512xbf16>
    %c0_72 = arith.constant 0 : index
    %c0_73 = arith.constant 0 : index
    %c0_74 = arith.constant 0 : index
    %215 = vector.load %arg14[%c0_72, %c0_73, %c0_74] : memref<2x512x128xbf16, #tpu.memory_space<vmem>>, vector<1x512x128xbf16>
    %216 = vector.shape_cast %215 : vector<1x512x128xbf16> to vector<512x128xbf16>
    %cst_75 = arith.constant dense<0.000000e+00> : vector<40x128xf32>
    %217 = tpu.matmul %214, %216, %cst_75 {dimension_numbers = #tpu.dot_dimension_numbers<[1], [0], [0], [1], [0, 0, 1, 1], [], []>} : vector<40x512xbf16>, vector<512x128xbf16>, vector<40x128xf32> -> vector<40x128xf32>
    %c0_76 = arith.constant 0 : index
    %c0_77 = arith.constant 0 : index
    %c0_78 = arith.constant 0 : index
    %218 = vector.load %arg15[%c0_76, %c0_77, %c0_78] : memref<2x1x128xf32, #tpu.memory_space<vmem>>, vector<1x1x128xf32>
    %219 = vector.shape_cast %218 : vector<1x1x128xf32> to vector<1x128xf32>
    %220 = vector.broadcast %219 : vector<1x128xf32> to vector<40x128xf32>
    %221 = arith.addf %217, %220 : vector<40x128xf32>
    %222 = vector.shape_cast %221 : vector<40x128xf32> to vector<1x40x128xf32>
    %223 = arith.addf %163, %222 : vector<1x40x128xf32>
    %c1 = arith.constant 1 : index
    %c0_79 = arith.constant 0 : index
    %c0_80 = arith.constant 0 : index
    %224 = vector.load %arg4[%c1, %c0_79, %c0_80] : memref<2x1x128xf32, #tpu.memory_space<vmem>>, vector<1x1x128xf32>
    %225 = vector.shape_cast %224 : vector<1x1x128xf32> to vector<1x128xf32>
    %c1_81 = arith.constant 1 : index
    %c0_82 = arith.constant 0 : index
    %c0_83 = arith.constant 0 : index
    %226 = vector.load %arg5[%c1_81, %c0_82, %c0_83] : memref<2x1x128xf32, #tpu.memory_space<vmem>>, vector<1x1x128xf32>
    %227 = vector.shape_cast %226 : vector<1x1x128xf32> to vector<1x128xf32>
    %cst_84 = arith.constant dense<0.000000e+00> : vector<1x40xf32>
    %228 = vector.multi_reduction <add>, %223, %cst_84 [2] : vector<1x40x128xf32> to vector<1x40xf32>
    %229 = vector.shape_cast %228 : vector<1x40xf32> to vector<1x40x1xf32>
    %cst_85 = arith.constant 1.280000e+02 : f32
    %230 = vector.broadcast %cst_85 : f32 to vector<1x40x1xf32>
    %231 = arith.divf %229, %230 : vector<1x40x1xf32>
    %232 = vector.broadcast %231 : vector<1x40x1xf32> to vector<1x40x128xf32>
    %233 = arith.subf %223, %232 : vector<1x40x128xf32>
    %234 = arith.mulf %233, %233 : vector<1x40x128xf32>
    %cst_86 = arith.constant dense<0.000000e+00> : vector<1x40xf32>
    %235 = vector.multi_reduction <add>, %234, %cst_86 [2] : vector<1x40x128xf32> to vector<1x40xf32>
    %236 = vector.shape_cast %235 : vector<1x40xf32> to vector<1x40x1xf32>
    %cst_87 = arith.constant 1.280000e+02 : f32
    %237 = vector.broadcast %cst_87 : f32 to vector<1x40x1xf32>
    %238 = arith.divf %236, %237 : vector<1x40x1xf32>
    %239 = vector.broadcast %231 : vector<1x40x1xf32> to vector<1x40x128xf32>
    %240 = arith.subf %223, %239 : vector<1x40x128xf32>
    %cst_88 = arith.constant 9.99999997E-7 : f32
    %241 = vector.broadcast %cst_88 : f32 to vector<1x40x1xf32>
    %242 = arith.addf %238, %241 : vector<1x40x1xf32>
    %243 = math.rsqrt %242 : vector<1x40x1xf32>
    %244 = vector.broadcast %243 : vector<1x40x1xf32> to vector<1x40x128xf32>
    %245 = arith.mulf %240, %244 : vector<1x40x128xf32>
    %246 = vector.shape_cast %225 : vector<1x128xf32> to vector<1x1x128xf32>
    %247 = vector.broadcast %246 : vector<1x1x128xf32> to vector<1x40x128xf32>
    %248 = arith.mulf %245, %247 : vector<1x40x128xf32>
    %249 = vector.shape_cast %227 : vector<1x128xf32> to vector<1x1x128xf32>
    %250 = vector.broadcast %249 : vector<1x1x128xf32> to vector<1x40x128xf32>
    %251 = arith.addf %248, %250 : vector<1x40x128xf32>
    %252 = vector.shape_cast %251 : vector<1x40x128xf32> to vector<40x128xf32>
    %253 = arith.truncf %252 : vector<40x128xf32> to vector<40x128xbf16>
    %c1_89 = arith.constant 1 : index
    %c0_90 = arith.constant 0 : index
    %c0_91 = arith.constant 0 : index
    %254 = vector.load %arg6[%c1_89, %c0_90, %c0_91] : memref<2x128x384xbf16, #tpu.memory_space<vmem>>, vector<1x128x384xbf16>
    %255 = vector.shape_cast %254 : vector<1x128x384xbf16> to vector<128x384xbf16>
    %cst_92 = arith.constant dense<0.000000e+00> : vector<40x384xf32>
    %256 = tpu.matmul %253, %255, %cst_92 {dimension_numbers = #tpu.dot_dimension_numbers<[1], [0], [0], [1], [0, 0, 1, 1], [], []>} : vector<40x128xbf16>, vector<128x384xbf16>, vector<40x384xf32> -> vector<40x384xf32>
    %c1_93 = arith.constant 1 : index
    %c0_94 = arith.constant 0 : index
    %c0_95 = arith.constant 0 : index
    %257 = vector.load %arg7[%c1_93, %c0_94, %c0_95] : memref<2x1x384xf32, #tpu.memory_space<vmem>>, vector<1x1x384xf32>
    %258 = vector.shape_cast %257 : vector<1x1x384xf32> to vector<1x384xf32>
    %259 = vector.broadcast %258 : vector<1x384xf32> to vector<40x384xf32>
    %260 = arith.addf %256, %259 : vector<40x384xf32>
    %261 = vector.extract_strided_slice %260 {offsets = [0, 0], sizes = [40, 128], strides = [1, 1]} : vector<40x384xf32> to vector<40x128xf32>
    %262 = vector.shape_cast %261 : vector<40x128xf32> to vector<1x40x128xf32>
    %263 = arith.truncf %262 : vector<1x40x128xf32> to vector<1x40x128xbf16>
    %264 = vector.extract_strided_slice %260 {offsets = [0, 128], sizes = [40, 128], strides = [1, 1]} : vector<40x384xf32> to vector<40x128xf32>
    %265 = vector.shape_cast %264 : vector<40x128xf32> to vector<1x40x128xf32>
    %266 = arith.truncf %265 : vector<1x40x128xf32> to vector<1x40x128xbf16>
    %267 = vector.extract_strided_slice %260 {offsets = [0, 256], sizes = [40, 128], strides = [1, 1]} : vector<40x384xf32> to vector<40x128xf32>
    %268 = vector.shape_cast %267 : vector<40x128xf32> to vector<1x40x128xf32>
    %269 = arith.truncf %268 : vector<1x40x128xf32> to vector<1x40x128xbf16>
    %270 = vector.broadcast %47 : vector<1x1x128xbf16> to vector<1x40x128xbf16>
    %271 = arith.mulf %263, %270 : vector<1x40x128xbf16>
    %272 = vector.broadcast %51 : vector<1x1x128xbf16> to vector<1x40x128xbf16>
    %273 = arith.mulf %263, %272 : vector<1x40x128xbf16>
    %274 = vector.broadcast %55 : vector<1x1x128xbf16> to vector<1x40x128xbf16>
    %275 = arith.mulf %263, %274 : vector<1x40x128xbf16>
    %276 = vector.broadcast %59 : vector<1x1x128xbf16> to vector<1x40x128xbf16>
    %277 = arith.mulf %263, %276 : vector<1x40x128xbf16>
    %278 = tpu.concatenate %271, %273, %275, %277 in 1 : vector<1x40x128xbf16>, vector<1x40x128xbf16>, vector<1x40x128xbf16>, vector<1x40x128xbf16> -> vector<1x160x128xbf16>
    "tpu.trace_start"() <{level = 10 : i32, message = "bsd,bkd->bsk"}> : () -> ()
    %cst_96 = arith.constant dense<0.000000e+00> : vector<1x160x40xf32>
    %279 = tpu.matmul %278, %266, %cst_96 {dimension_numbers = #tpu.dot_dimension_numbers<[2], [2], [1], [1], [0, 0, 0, 1, 1, 1], [0], [0]>} : vector<1x160x128xbf16>, vector<1x40x128xbf16>, vector<1x160x40xf32> -> vector<1x160x40xf32>
    "tpu.trace_stop"() : () -> ()
    %280 = vector.broadcast %22 : vector<1x1x40xf32> to vector<1x160x40xf32>
    %281 = arith.addf %279, %280 : vector<1x160x40xf32>
    %cst_97 = arith.constant dense<0xFF800000> : vector<1x160xf32>
    %282 = vector.multi_reduction <maximumf>, %281, %cst_97 [2] : vector<1x160x40xf32> to vector<1x160xf32>
    %283 = vector.shape_cast %282 : vector<1x160xf32> to vector<1x160x1xf32>
    %284 = vector.broadcast %283 : vector<1x160x1xf32> to vector<1x160x40xf32>
    %285 = arith.subf %281, %284 : vector<1x160x40xf32>
    %286 = math.exp %285 : vector<1x160x40xf32>
    %cst_98 = arith.constant dense<0.000000e+00> : vector<1x160xf32>
    %287 = vector.multi_reduction <add>, %286, %cst_98 [2] : vector<1x160x40xf32> to vector<1x160xf32>
    %288 = vector.shape_cast %287 : vector<1x160xf32> to vector<1x160x1xf32>
    %289 = tpu.reciprocal %288 {approx = true} : vector<1x160x1xf32> -> vector<1x160x1xf32>
    %290 = vector.broadcast %289 : vector<1x160x1xf32> to vector<1x160x40xf32>
    %291 = arith.mulf %286, %290 : vector<1x160x40xf32>
    %292 = arith.truncf %291 : vector<1x160x40xf32> to vector<1x160x40xbf16>
    "tpu.trace_start"() <{level = 10 : i32, message = "bsk,bkd->bsd"}> : () -> ()
    %cst_99 = arith.constant dense<0.000000e+00> : vector<1x160x128xf32>
    %293 = tpu.matmul %292, %269, %cst_99 {dimension_numbers = #tpu.dot_dimension_numbers<[2], [1], [1], [2], [0, 0, 0, 1, 1, 2], [0], [0]>} : vector<1x160x40xbf16>, vector<1x40x128xbf16>, vector<1x160x128xf32> -> vector<1x160x128xf32>
    "tpu.trace_stop"() : () -> ()
    %294 = vector.extract_strided_slice %293 {offsets = [0, 0, 0], sizes = [1, 40, 128], strides = [1, 1, 1]} : vector<1x160x128xf32> to vector<1x40x128xf32>
    %295 = vector.broadcast %61 : vector<1x1x128xf32> to vector<1x40x128xf32>
    %296 = arith.mulf %294, %295 : vector<1x40x128xf32>
    %297 = vector.extract_strided_slice %293 {offsets = [0, 40, 0], sizes = [1, 40, 128], strides = [1, 1, 1]} : vector<1x160x128xf32> to vector<1x40x128xf32>
    %298 = vector.broadcast %63 : vector<1x1x128xf32> to vector<1x40x128xf32>
    %299 = arith.mulf %297, %298 : vector<1x40x128xf32>
    %300 = arith.addf %296, %299 : vector<1x40x128xf32>
    %301 = vector.extract_strided_slice %293 {offsets = [0, 80, 0], sizes = [1, 40, 128], strides = [1, 1, 1]} : vector<1x160x128xf32> to vector<1x40x128xf32>
    %302 = vector.broadcast %65 : vector<1x1x128xf32> to vector<1x40x128xf32>
    %303 = arith.mulf %301, %302 : vector<1x40x128xf32>
    %304 = arith.addf %300, %303 : vector<1x40x128xf32>
    %305 = vector.extract_strided_slice %293 {offsets = [0, 120, 0], sizes = [1, 40, 128], strides = [1, 1, 1]} : vector<1x160x128xf32> to vector<1x40x128xf32>
    %306 = vector.broadcast %67 : vector<1x1x128xf32> to vector<1x40x128xf32>
    %307 = arith.mulf %305, %306 : vector<1x40x128xf32>
    %308 = arith.addf %304, %307 : vector<1x40x128xf32>
    %309 = vector.shape_cast %308 : vector<1x40x128xf32> to vector<40x128xf32>
    %310 = arith.truncf %309 : vector<40x128xf32> to vector<40x128xbf16>
    %c1_100 = arith.constant 1 : index
    %c0_101 = arith.constant 0 : index
    %c0_102 = arith.constant 0 : index
    %311 = vector.load %arg8[%c1_100, %c0_101, %c0_102] : memref<2x128x128xbf16, #tpu.memory_space<vmem>>, vector<1x128x128xbf16>
    %312 = vector.shape_cast %311 : vector<1x128x128xbf16> to vector<128x128xbf16>
    %cst_103 = arith.constant dense<0.000000e+00> : vector<40x128xf32>
    %313 = tpu.matmul %310, %312, %cst_103 {dimension_numbers = #tpu.dot_dimension_numbers<[1], [0], [0], [1], [0, 0, 1, 1], [], []>} : vector<40x128xbf16>, vector<128x128xbf16>, vector<40x128xf32> -> vector<40x128xf32>
    %c1_104 = arith.constant 1 : index
    %c0_105 = arith.constant 0 : index
    %c0_106 = arith.constant 0 : index
    %314 = vector.load %arg9[%c1_104, %c0_105, %c0_106] : memref<2x1x128xf32, #tpu.memory_space<vmem>>, vector<1x1x128xf32>
    %315 = vector.shape_cast %314 : vector<1x1x128xf32> to vector<1x128xf32>
    %316 = vector.broadcast %315 : vector<1x128xf32> to vector<40x128xf32>
    %317 = arith.addf %313, %316 : vector<40x128xf32>
    %318 = vector.shape_cast %317 : vector<40x128xf32> to vector<1x40x128xf32>
    %319 = arith.addf %223, %318 : vector<1x40x128xf32>
    %c1_107 = arith.constant 1 : index
    %c0_108 = arith.constant 0 : index
    %c0_109 = arith.constant 0 : index
    %320 = vector.load %arg10[%c1_107, %c0_108, %c0_109] : memref<2x1x128xf32, #tpu.memory_space<vmem>>, vector<1x1x128xf32>
    %321 = vector.shape_cast %320 : vector<1x1x128xf32> to vector<1x128xf32>
    %c1_110 = arith.constant 1 : index
    %c0_111 = arith.constant 0 : index
    %c0_112 = arith.constant 0 : index
    %322 = vector.load %arg11[%c1_110, %c0_111, %c0_112] : memref<2x1x128xf32, #tpu.memory_space<vmem>>, vector<1x1x128xf32>
    %323 = vector.shape_cast %322 : vector<1x1x128xf32> to vector<1x128xf32>
    %cst_113 = arith.constant dense<0.000000e+00> : vector<1x40xf32>
    %324 = vector.multi_reduction <add>, %319, %cst_113 [2] : vector<1x40x128xf32> to vector<1x40xf32>
    %325 = vector.shape_cast %324 : vector<1x40xf32> to vector<1x40x1xf32>
    %cst_114 = arith.constant 1.280000e+02 : f32
    %326 = vector.broadcast %cst_114 : f32 to vector<1x40x1xf32>
    %327 = arith.divf %325, %326 : vector<1x40x1xf32>
    %328 = vector.broadcast %327 : vector<1x40x1xf32> to vector<1x40x128xf32>
    %329 = arith.subf %319, %328 : vector<1x40x128xf32>
    %330 = arith.mulf %329, %329 : vector<1x40x128xf32>
    %cst_115 = arith.constant dense<0.000000e+00> : vector<1x40xf32>
    %331 = vector.multi_reduction <add>, %330, %cst_115 [2] : vector<1x40x128xf32> to vector<1x40xf32>
    %332 = vector.shape_cast %331 : vector<1x40xf32> to vector<1x40x1xf32>
    %cst_116 = arith.constant 1.280000e+02 : f32
    %333 = vector.broadcast %cst_116 : f32 to vector<1x40x1xf32>
    %334 = arith.divf %332, %333 : vector<1x40x1xf32>
    %335 = vector.broadcast %327 : vector<1x40x1xf32> to vector<1x40x128xf32>
    %336 = arith.subf %319, %335 : vector<1x40x128xf32>
    %cst_117 = arith.constant 9.99999997E-7 : f32
    %337 = vector.broadcast %cst_117 : f32 to vector<1x40x1xf32>
    %338 = arith.addf %334, %337 : vector<1x40x1xf32>
    %339 = math.rsqrt %338 : vector<1x40x1xf32>
    %340 = vector.broadcast %339 : vector<1x40x1xf32> to vector<1x40x128xf32>
    %341 = arith.mulf %336, %340 : vector<1x40x128xf32>
    %342 = vector.shape_cast %321 : vector<1x128xf32> to vector<1x1x128xf32>
    %343 = vector.broadcast %342 : vector<1x1x128xf32> to vector<1x40x128xf32>
    %344 = arith.mulf %341, %343 : vector<1x40x128xf32>
    %345 = vector.shape_cast %323 : vector<1x128xf32> to vector<1x1x128xf32>
    %346 = vector.broadcast %345 : vector<1x1x128xf32> to vector<1x40x128xf32>
    %347 = arith.addf %344, %346 : vector<1x40x128xf32>
    %348 = vector.shape_cast %347 : vector<1x40x128xf32> to vector<40x128xf32>
    %349 = arith.truncf %348 : vector<40x128xf32> to vector<40x128xbf16>
    %c1_118 = arith.constant 1 : index
    %c0_119 = arith.constant 0 : index
    %c0_120 = arith.constant 0 : index
    %350 = vector.load %arg12[%c1_118, %c0_119, %c0_120] : memref<2x128x512xbf16, #tpu.memory_space<vmem>>, vector<1x128x512xbf16>
    %351 = vector.shape_cast %350 : vector<1x128x512xbf16> to vector<128x512xbf16>
    %cst_121 = arith.constant dense<0.000000e+00> : vector<40x512xf32>
    %352 = tpu.matmul %349, %351, %cst_121 {dimension_numbers = #tpu.dot_dimension_numbers<[1], [0], [0], [1], [0, 0, 1, 1], [], []>} : vector<40x128xbf16>, vector<128x512xbf16>, vector<40x512xf32> -> vector<40x512xf32>
    %c1_122 = arith.constant 1 : index
    %c0_123 = arith.constant 0 : index
    %c0_124 = arith.constant 0 : index
    %353 = vector.load %arg13[%c1_122, %c0_123, %c0_124] : memref<2x1x512xf32, #tpu.memory_space<vmem>>, vector<1x1x512xf32>
    %354 = vector.shape_cast %353 : vector<1x1x512xf32> to vector<1x512xf32>
    %355 = vector.broadcast %354 : vector<1x512xf32> to vector<40x512xf32>
    %356 = arith.addf %352, %355 : vector<40x512xf32>
    %cst_125 = arith.constant 5.000000e-01 : f32
    %357 = vector.broadcast %cst_125 : f32 to vector<40x512xf32>
    %358 = arith.mulf %357, %356 : vector<40x512xf32>
    %cst_126 = arith.constant 4.471500e-02 : f32
    %359 = vector.broadcast %cst_126 : f32 to vector<40x512xf32>
    %360 = arith.mulf %359, %356 : vector<40x512xf32>
    %361 = arith.mulf %360, %356 : vector<40x512xf32>
    %362 = arith.mulf %361, %356 : vector<40x512xf32>
    %363 = arith.addf %356, %362 : vector<40x512xf32>
    %cst_127 = arith.constant 0.797884583 : f32
    %364 = vector.broadcast %cst_127 : f32 to vector<40x512xf32>
    %365 = arith.mulf %364, %363 : vector<40x512xf32>
    %366 = math.tanh %365 : vector<40x512xf32>
    %cst_128 = arith.constant 1.000000e+00 : f32
    %367 = vector.broadcast %cst_128 : f32 to vector<40x512xf32>
    %368 = arith.addf %367, %366 : vector<40x512xf32>
    %369 = arith.mulf %358, %368 : vector<40x512xf32>
    %370 = arith.truncf %369 : vector<40x512xf32> to vector<40x512xbf16>
    %c1_129 = arith.constant 1 : index
    %c0_130 = arith.constant 0 : index
    %c0_131 = arith.constant 0 : index
    %371 = vector.load %arg14[%c1_129, %c0_130, %c0_131] : memref<2x512x128xbf16, #tpu.memory_space<vmem>>, vector<1x512x128xbf16>
    %372 = vector.shape_cast %371 : vector<1x512x128xbf16> to vector<512x128xbf16>
    %cst_132 = arith.constant dense<0.000000e+00> : vector<40x128xf32>
    %373 = tpu.matmul %370, %372, %cst_132 {dimension_numbers = #tpu.dot_dimension_numbers<[1], [0], [0], [1], [0, 0, 1, 1], [], []>} : vector<40x512xbf16>, vector<512x128xbf16>, vector<40x128xf32> -> vector<40x128xf32>
    %c1_133 = arith.constant 1 : index
    %c0_134 = arith.constant 0 : index
    %c0_135 = arith.constant 0 : index
    %374 = vector.load %arg15[%c1_133, %c0_134, %c0_135] : memref<2x1x128xf32, #tpu.memory_space<vmem>>, vector<1x1x128xf32>
    %375 = vector.shape_cast %374 : vector<1x1x128xf32> to vector<1x128xf32>
    %376 = vector.broadcast %375 : vector<1x128xf32> to vector<40x128xf32>
    %377 = arith.addf %373, %376 : vector<40x128xf32>
    %378 = vector.shape_cast %377 : vector<40x128xf32> to vector<1x40x128xf32>
    %379 = arith.addf %319, %378 : vector<1x40x128xf32>
    %c0_136 = arith.constant 0 : index
    %c0_137 = arith.constant 0 : index
    %380 = vector.load %arg16[%c0_136, %c0_137] : memref<1x128xf32, #tpu.memory_space<vmem>>, vector<1x128xf32>
    %c0_138 = arith.constant 0 : index
    %c0_139 = arith.constant 0 : index
    %381 = vector.load %arg17[%c0_138, %c0_139] : memref<1x128xf32, #tpu.memory_space<vmem>>, vector<1x128xf32>
    %cst_140 = arith.constant dense<0.000000e+00> : vector<1x40xf32>
    %382 = vector.multi_reduction <add>, %379, %cst_140 [2] : vector<1x40x128xf32> to vector<1x40xf32>
    %383 = vector.shape_cast %382 : vector<1x40xf32> to vector<1x40x1xf32>
    %cst_141 = arith.constant 1.280000e+02 : f32
    %384 = vector.broadcast %cst_141 : f32 to vector<1x40x1xf32>
    %385 = arith.divf %383, %384 : vector<1x40x1xf32>
    %386 = vector.broadcast %385 : vector<1x40x1xf32> to vector<1x40x128xf32>
    %387 = arith.subf %379, %386 : vector<1x40x128xf32>
    %388 = arith.mulf %387, %387 : vector<1x40x128xf32>
    %cst_142 = arith.constant dense<0.000000e+00> : vector<1x40xf32>
    %389 = vector.multi_reduction <add>, %388, %cst_142 [2] : vector<1x40x128xf32> to vector<1x40xf32>
    %390 = vector.shape_cast %389 : vector<1x40xf32> to vector<1x40x1xf32>
    %cst_143 = arith.constant 1.280000e+02 : f32
    %391 = vector.broadcast %cst_143 : f32 to vector<1x40x1xf32>
    %392 = arith.divf %390, %391 : vector<1x40x1xf32>
    %393 = vector.broadcast %385 : vector<1x40x1xf32> to vector<1x40x128xf32>
    %394 = arith.subf %379, %393 : vector<1x40x128xf32>
    %cst_144 = arith.constant 9.99999997E-7 : f32
    %395 = vector.broadcast %cst_144 : f32 to vector<1x40x1xf32>
    %396 = arith.addf %392, %395 : vector<1x40x1xf32>
    %397 = math.rsqrt %396 : vector<1x40x1xf32>
    %398 = vector.broadcast %397 : vector<1x40x1xf32> to vector<1x40x128xf32>
    %399 = arith.mulf %394, %398 : vector<1x40x128xf32>
    %400 = vector.shape_cast %380 : vector<1x128xf32> to vector<1x1x128xf32>
    %401 = vector.broadcast %400 : vector<1x1x128xf32> to vector<1x40x128xf32>
    %402 = arith.mulf %399, %401 : vector<1x40x128xf32>
    %403 = vector.shape_cast %381 : vector<1x128xf32> to vector<1x1x128xf32>
    %404 = vector.broadcast %403 : vector<1x1x128xf32> to vector<1x40x128xf32>
    %405 = arith.addf %402, %404 : vector<1x40x128xf32>
    %406 = vector.extract_strided_slice %405 {offsets = [0, 0, 0], sizes = [1, 1, 128], strides = [1, 1, 1]} : vector<1x40x128xf32> to vector<1x1x128xf32>
    %407 = vector.shape_cast %406 : vector<1x1x128xf32> to vector<1x128xf32>
    %408 = arith.truncf %407 : vector<1x128xf32> to vector<1x128xbf16>
    %c0_145 = arith.constant 0 : index
    %c0_146 = arith.constant 0 : index
    %409 = vector.load %arg18[%c0_145, %c0_146] : memref<128x512xbf16, #tpu.memory_space<vmem>>, vector<128x512xbf16>
    %cst_147 = arith.constant dense<0.000000e+00> : vector<1x512xf32>
    %410 = tpu.matmul %408, %409, %cst_147 {dimension_numbers = #tpu.dot_dimension_numbers<[1], [0], [0], [1], [0, 0, 1, 1], [], []>} : vector<1x128xbf16>, vector<128x512xbf16>, vector<1x512xf32> -> vector<1x512xf32>
    %c0_148 = arith.constant 0 : index
    %c0_149 = arith.constant 0 : index
    %411 = vector.load %arg19[%c0_148, %c0_149] : memref<1x512xf32, #tpu.memory_space<vmem>>, vector<1x512xf32>
    %412 = arith.addf %410, %411 : vector<1x512xf32>
    %c0_150 = arith.constant 0 : index
    %c0_151 = arith.constant 0 : index
    %413 = vector.load %arg20[%c0_150, %c0_151] : memref<1x512xf32, #tpu.memory_space<vmem>>, vector<1x512xf32>
    %414 = arith.mulf %412, %413 : vector<1x512xf32>
    %c0_152 = arith.constant 0 : index
    %c0_153 = arith.constant 0 : index
    %415 = vector.load %arg21[%c0_152, %c0_153] : memref<1x512xf32, #tpu.memory_space<vmem>>, vector<1x512xf32>
    %416 = arith.addf %414, %415 : vector<1x512xf32>
    %cst_154 = arith.constant 5.000000e-01 : f32
    %417 = vector.broadcast %cst_154 : f32 to vector<1x512xf32>
    %418 = arith.mulf %417, %416 : vector<1x512xf32>
    %cst_155 = arith.constant 4.471500e-02 : f32
    %419 = vector.broadcast %cst_155 : f32 to vector<1x512xf32>
    %420 = arith.mulf %419, %416 : vector<1x512xf32>
    %421 = arith.mulf %420, %416 : vector<1x512xf32>
    %422 = arith.mulf %421, %416 : vector<1x512xf32>
    %423 = arith.addf %416, %422 : vector<1x512xf32>
    %cst_156 = arith.constant 0.797884583 : f32
    %424 = vector.broadcast %cst_156 : f32 to vector<1x512xf32>
    %425 = arith.mulf %424, %423 : vector<1x512xf32>
    %426 = math.tanh %425 : vector<1x512xf32>
    %cst_157 = arith.constant 1.000000e+00 : f32
    %427 = vector.broadcast %cst_157 : f32 to vector<1x512xf32>
    %428 = arith.addf %427, %426 : vector<1x512xf32>
    %429 = arith.mulf %418, %428 : vector<1x512xf32>
    %430 = arith.truncf %429 : vector<1x512xf32> to vector<1x512xbf16>
    %c0_158 = arith.constant 0 : index
    %c0_159 = arith.constant 0 : index
    %431 = vector.load %arg22[%c0_158, %c0_159] : memref<512x256xbf16, #tpu.memory_space<vmem>>, vector<512x256xbf16>
    %cst_160 = arith.constant dense<0.000000e+00> : vector<1x256xf32>
    %432 = tpu.matmul %430, %431, %cst_160 {dimension_numbers = #tpu.dot_dimension_numbers<[1], [0], [0], [1], [0, 0, 1, 1], [], []>} : vector<1x512xbf16>, vector<512x256xbf16>, vector<1x256xf32> -> vector<1x256xf32>
    %c0_161 = arith.constant 0 : index
    %c0_162 = arith.constant 0 : index
    %433 = vector.load %arg23[%c0_161, %c0_162] : memref<1x256xf32, #tpu.memory_space<vmem>>, vector<1x256xf32>
    %434 = arith.addf %432, %433 : vector<1x256xf32>
    %c0_163 = arith.constant 0 : index
    %c0_164 = arith.constant 0 : index
    %435 = vector.load %arg24[%c0_163, %c0_164] : memref<1x256xf32, #tpu.memory_space<vmem>>, vector<1x256xf32>
    %436 = arith.mulf %434, %435 : vector<1x256xf32>
    %c0_165 = arith.constant 0 : index
    %c0_166 = arith.constant 0 : index
    %437 = vector.load %arg25[%c0_165, %c0_166] : memref<1x256xf32, #tpu.memory_space<vmem>>, vector<1x256xf32>
    %438 = arith.addf %436, %437 : vector<1x256xf32>
    %cst_167 = arith.constant 5.000000e-01 : f32
    %439 = vector.broadcast %cst_167 : f32 to vector<1x256xf32>
    %440 = arith.mulf %439, %438 : vector<1x256xf32>
    %cst_168 = arith.constant 4.471500e-02 : f32
    %441 = vector.broadcast %cst_168 : f32 to vector<1x256xf32>
    %442 = arith.mulf %441, %438 : vector<1x256xf32>
    %443 = arith.mulf %442, %438 : vector<1x256xf32>
    %444 = arith.mulf %443, %438 : vector<1x256xf32>
    %445 = arith.addf %438, %444 : vector<1x256xf32>
    %cst_169 = arith.constant 0.797884583 : f32
    %446 = vector.broadcast %cst_169 : f32 to vector<1x256xf32>
    %447 = arith.mulf %446, %445 : vector<1x256xf32>
    %448 = math.tanh %447 : vector<1x256xf32>
    %cst_170 = arith.constant 1.000000e+00 : f32
    %449 = vector.broadcast %cst_170 : f32 to vector<1x256xf32>
    %450 = arith.addf %449, %448 : vector<1x256xf32>
    %451 = arith.mulf %440, %450 : vector<1x256xf32>
    %452 = arith.truncf %451 : vector<1x256xf32> to vector<1x256xbf16>
    %c0_171 = arith.constant 0 : index
    %c0_172 = arith.constant 0 : index
    %453 = vector.load %arg26[%c0_171, %c0_172] : memref<256x128xbf16, #tpu.memory_space<vmem>>, vector<256x128xbf16>
    %cst_173 = arith.constant dense<0.000000e+00> : vector<1x128xf32>
    %454 = tpu.matmul %452, %453, %cst_173 {dimension_numbers = #tpu.dot_dimension_numbers<[1], [0], [0], [1], [0, 0, 1, 1], [], []>} : vector<1x256xbf16>, vector<256x128xbf16>, vector<1x128xf32> -> vector<1x128xf32>
    %c0_174 = arith.constant 0 : index
    %c0_175 = arith.constant 0 : index
    %455 = vector.load %arg27[%c0_174, %c0_175] : memref<1x128xf32, #tpu.memory_space<vmem>>, vector<1x128xf32>
    %456 = arith.addf %454, %455 : vector<1x128xf32>
    %c0_176 = arith.constant 0 : index
    %c0_177 = arith.constant 0 : index
    %c0_178 = arith.constant 0 : index
    %457 = vector.load %arg28[%c0_176, %c0_177, %c0_178] : memref<1x1x128xf32, #tpu.memory_space<vmem>>, vector<1x1x128xf32>
    %458 = vector.shape_cast %457 : vector<1x1x128xf32> to vector<1x128xf32>
    %459 = vector.shape_cast %456 : vector<1x128xf32> to vector<1x1x128xf32>
    tpu.vector_store %arg28[%c0_176, %c0_177, %c0_178], %459 {strides = array<i32>} : memref<1x1x128xf32, #tpu.memory_space<vmem>>, vector<1x1x128xf32>,
    return
  }
  func.func @transform_0(%arg0: i32) -> (i32, i32, i32) {
    %c0_i32 = arith.constant 0 : i32
    %c0_i32_0 = arith.constant 0 : i32
    %c0_i32_1 = arith.constant 0 : i32
    return %arg0, %c0_i32, %c0_i32_0 : i32, i32, i32
  }
  func.func @transform_1(%arg0: i32) -> (i32, i32) {
    %c0_i32 = arith.constant 0 : i32
    %c0_i32_0 = arith.constant 0 : i32
    %c0_i32_1 = arith.constant 0 : i32
    return %c0_i32, %c0_i32_0 : i32, i32
  }
  func.func @transform_2(%arg0: i32) -> (i32, i32, i32) {
    %c0_i32 = arith.constant 0 : i32
    %c0_i32_0 = arith.constant 0 : i32
    %c0_i32_1 = arith.constant 0 : i32
    %c0_i32_2 = arith.constant 0 : i32
    return %c0_i32, %c0_i32_0, %c0_i32_1 : i32, i32, i32
  }
  func.func @transform_3(%arg0: i32) -> (i32, i32, i32) {
    %c0_i32 = arith.constant 0 : i32
    %c0_i32_0 = arith.constant 0 : i32
    %c0_i32_1 = arith.constant 0 : i32
    %c0_i32_2 = arith.constant 0 : i32
    return %c0_i32, %c0_i32_0, %c0_i32_1 : i32, i32, i32
  }
  func.func @transform_4(%arg0: i32) -> (i32, i32, i32) {
    %c0_i32 = arith.constant 0 : i32
    %c0_i32_0 = arith.constant 0 : i32
    %c0_i32_1 = arith.constant 0 : i32
    %c0_i32_2 = arith.constant 0 : i32
    return %c0_i32, %c0_i32_0, %c0_i32_1 : i32, i32, i32
  }
  func.func @transform_5(%arg0: i32) -> (i32, i32, i32) {
    %c0_i32 = arith.constant 0 : i32
    %c0_i32_0 = arith.constant 0 : i32
    %c0_i32_1 = arith.constant 0 : i32
    %c0_i32_2 = arith.constant 0 : i32
    return %c0_i32, %c0_i32_0, %c0_i32_1 : i32, i32, i32
  }
  func.func @transform_6(%arg0: i32) -> (i32, i32, i32) {
    %c0_i32 = arith.constant 0 : i32
    %c0_i32_0 = arith.constant 0 : i32
    %c0_i32_1 = arith.constant 0 : i32
    %c0_i32_2 = arith.constant 0 : i32
    return %c0_i32, %c0_i32_0, %c0_i32_1 : i32, i32, i32
  }
  func.func @transform_7(%arg0: i32) -> (i32, i32, i32) {
    %c0_i32 = arith.constant 0 : i32
    %c0_i32_0 = arith.constant 0 : i32
    %c0_i32_1 = arith.constant 0 : i32
    %c0_i32_2 = arith.constant 0 : i32
    return %c0_i32, %c0_i32_0, %c0_i32_1 : i32, i32, i32
  }
  func.func @transform_8(%arg0: i32) -> (i32, i32, i32) {
    %c0_i32 = arith.constant 0 : i32
    %c0_i32_0 = arith.constant 0 : i32
    %c0_i32_1 = arith.constant 0 : i32
    %c0_i32_2 = arith.constant 0 : i32
    return %c0_i32, %c0_i32_0, %c0_i32_1 : i32, i32, i32
  }
  func.func @transform_9(%arg0: i32) -> (i32, i32, i32) {
    %c0_i32 = arith.constant 0 : i32
    %c0_i32_0 = arith.constant 0 : i32
    %c0_i32_1 = arith.constant 0 : i32
    %c0_i32_2 = arith.constant 0 : i32
    return %c0_i32, %c0_i32_0, %c0_i32_1 : i32, i32, i32
  }
  func.func @transform_10(%arg0: i32) -> (i32, i32, i32) {
    %c0_i32 = arith.constant 0 : i32
    %c0_i32_0 = arith.constant 0 : i32
    %c0_i32_1 = arith.constant 0 : i32
    %c0_i32_2 = arith.constant 0 : i32
    return %c0_i32, %c0_i32_0, %c0_i32_1 : i32, i32, i32
  }
  func.func @transform_11(%arg0: i32) -> (i32, i32, i32) {
    %c0_i32 = arith.constant 0 : i32
    %c0_i32_0 = arith.constant 0 : i32
    %c0_i32_1 = arith.constant 0 : i32
    %c0_i32_2 = arith.constant 0 : i32
    return %c0_i32, %c0_i32_0, %c0_i32_1 : i32, i32, i32
  }
  func.func @transform_12(%arg0: i32) -> (i32, i32, i32) {
    %c0_i32 = arith.constant 0 : i32
    %c0_i32_0 = arith.constant 0 : i32
    %c0_i32_1 = arith.constant 0 : i32
    %c0_i32_2 = arith.constant 0 : i32
    return %c0_i32, %c0_i32_0, %c0_i32_1 : i32, i32, i32
  }
  func.func @transform_13(%arg0: i32) -> (i32, i32, i32) {
    %c0_i32 = arith.constant 0 : i32
    %c0_i32_0 = arith.constant 0 : i32
    %c0_i32_1 = arith.constant 0 : i32
    %c0_i32_2 = arith.constant 0 : i32
    return %c0_i32, %c0_i32_0, %c0_i32_1 : i32, i32, i32
  }
  func.func @transform_14(%arg0: i32) -> (i32, i32, i32) {
    %c0_i32 = arith.constant 0 : i32
    %c0_i32_0 = arith.constant 0 : i32
    %c0_i32_1 = arith.constant 0 : i32
    %c0_i32_2 = arith.constant 0 : i32
    return %c0_i32, %c0_i32_0, %c0_i32_1 : i32, i32, i32
  }
  func.func @transform_15(%arg0: i32) -> (i32, i32) {
    %c0_i32 = arith.constant 0 : i32
    %c0_i32_0 = arith.constant 0 : i32
    %c0_i32_1 = arith.constant 0 : i32
    return %c0_i32, %c0_i32_0 : i32, i32
  }
  func.func @transform_16(%arg0: i32) -> (i32, i32) {
    %c0_i32 = arith.constant 0 : i32
    %c0_i32_0 = arith.constant 0 : i32
    %c0_i32_1 = arith.constant 0 : i32
    return %c0_i32, %c0_i32_0 : i32, i32
  }
  func.func @transform_17(%arg0: i32) -> (i32, i32) {
    %c0_i32 = arith.constant 0 : i32
    %c0_i32_0 = arith.constant 0 : i32
    %c0_i32_1 = arith.constant 0 : i32
    return %c0_i32, %c0_i32_0 : i32, i32
  }
  func.func @transform_18(%arg0: i32) -> (i32, i32) {
    %c0_i32 = arith.constant 0 : i32
    %c0_i32_0 = arith.constant 0 : i32
    %c0_i32_1 = arith.constant 0 : i32
    return %c0_i32, %c0_i32_0 : i32, i32
  }
  func.func @transform_19(%arg0: i32) -> (i32, i32) {
    %c0_i32 = arith.constant 0 : i32
    %c0_i32_0 = arith.constant 0 : i32
    %c0_i32_1 = arith.constant 0 : i32
    return %c0_i32, %c0_i32_0 : i32, i32
  }
  func.func @transform_20(%arg0: i32) -> (i32, i32) {
    %c0_i32 = arith.constant 0 : i32
    %c0_i32_0 = arith.constant 0 : i32
    %c0_i32_1 = arith.constant 0 : i32
    return %c0_i32, %c0_i32_0 : i32, i32
  }
  func.func @transform_21(%arg0: i32) -> (i32, i32) {
    %c0_i32 = arith.constant 0 : i32
    %c0_i32_0 = arith.constant 0 : i32
    %c0_i32_1 = arith.constant 0 : i32
    return %c0_i32, %c0_i32_0 : i32, i32
  }
  func.func @transform_22(%arg0: i32) -> (i32, i32) {
    %c0_i32 = arith.constant 0 : i32
    %c0_i32_0 = arith.constant 0 : i32
    %c0_i32_1 = arith.constant 0 : i32
    return %c0_i32, %c0_i32_0 : i32, i32
  }
  func.func @transform_23(%arg0: i32) -> (i32, i32) {
    %c0_i32 = arith.constant 0 : i32
    %c0_i32_0 = arith.constant 0 : i32
    %c0_i32_1 = arith.constant 0 : i32
    return %c0_i32, %c0_i32_0 : i32, i32
  }
  func.func @transform_24(%arg0: i32) -> (i32, i32) {
    %c0_i32 = arith.constant 0 : i32
    %c0_i32_0 = arith.constant 0 : i32
    %c0_i32_1 = arith.constant 0 : i32
    return %c0_i32, %c0_i32_0 : i32, i32
  }
  func.func @transform_25(%arg0: i32) -> (i32, i32) {
    %c0_i32 = arith.constant 0 : i32
    %c0_i32_0 = arith.constant 0 : i32
    %c0_i32_1 = arith.constant 0 : i32
    return %c0_i32, %c0_i32_0 : i32, i32
  }
  func.func @transform_26(%arg0: i32) -> (i32, i32) {
    %c0_i32 = arith.constant 0 : i32
    %c0_i32_0 = arith.constant 0 : i32
    %c0_i32_1 = arith.constant 0 : i32
    return %c0_i32, %c0_i32_0 : i32, i32
  }
  func.func @transform_27(%arg0: i32) -> (i32, i32, i32) {
    %c0_i32 = arith.constant 0 : i32
    %c0_i32_0 = arith.constant 0 : i32
    %c0_i32_1 = arith.constant 0 : i32
    return %arg0, %c0_i32, %c0_i32_0 : i32, i32, i32
  }
}

</mosaic_0001>

<llo_original>
// kernel: emotion_forward.1
$region0: #{emotion_forward.1}
  #allocation0 [shape = 'u32[]', space=smem, size = 0x4, offset = 0x4, fixed_abs, tag = 'smem constant byte address 0x4 - core index']
  #allocation1 [shape = 'u32[144,128]{1,0:T(1,128)}', space=vmem, size = 0x12000, scoped, tag = 'internal scratch']
  %s0 = inlined_call_operand.hbm [shape: bf16[2,36,768], index: 0, kind: input, shape index: {}]
  %s1 = inlined_call_operand.hbm [shape: bf16[768,128], index: 1, kind: input, shape index: {}]
  %s2 = inlined_call_operand.hbm [shape: f32[1,40,128], index: 2, kind: input, shape index: {}]
  %s3 = inlined_call_operand.hbm [shape: f32[2,1,128], index: 3, kind: input, shape index: {}]
  %s4 = inlined_call_operand.hbm [shape: f32[2,1,128], index: 4, kind: input, shape index: {}]
  %s5 = inlined_call_operand.hbm [shape: bf16[2,128,384], index: 5, kind: input, shape index: {}]
  %s6 = inlined_call_operand.hbm [shape: f32[2,1,384], index: 6, kind: input, shape index: {}]
  %s7 = inlined_call_operand.hbm [shape: bf16[2,128,128], index: 7, kind: input, shape index: {}]
  %s8 = inlined_call_operand.hbm [shape: f32[2,1,128], index: 8, kind: input, shape index: {}]
  %s9 = inlined_call_operand.hbm [shape: f32[2,1,128], index: 9, kind: input, shape index: {}]
  %s10 = inlined_call_operand.hbm [shape: f32[2,1,128], index: 10, kind: input, shape index: {}]
  %s11 = inlined_call_operand.hbm [shape: bf16[2,128,512], index: 11, kind: input, shape index: {}]
  %s12 = inlined_call_operand.hbm [shape: f32[2,1,512], index: 12, kind: input, shape index: {}]
  %s13 = inlined_call_operand.hbm [shape: bf16[2,512,128], index: 13, kind: input, shape index: {}]
  %s14 = inlined_call_operand.hbm [shape: f32[2,1,128], index: 14, kind: input, shape index: {}]
  %s15 = inlined_call_operand.hbm [shape: f32[1,128], index: 15, kind: input, shape index: {}]
  %s16 = inlined_call_operand.hbm [shape: f32[1,128], index: 16, kind: input, shape index: {}]
  %s17 = inlined_call_operand.hbm [shape: bf16[128,512], index: 17, kind: input, shape index: {}]
  %s18 = inlined_call_operand.hbm [shape: f32[1,512], index: 18, kind: input, shape index: {}]
  %s19 = inlined_call_operand.hbm [shape: f32[1,512], index: 19, kind: input, shape index: {}]
  %s20 = inlined_call_operand.hbm [shape: f32[1,512], index: 20, kind: input, shape index: {}]
  %s21 = inlined_call_operand.hbm [shape: bf16[512,256], index: 21, kind: input, shape index: {}]
  %s22 = inlined_call_operand.hbm [shape: f32[1,256], index: 22, kind: input, shape index: {}]
  %s23 = inlined_call_operand.hbm [shape: f32[1,256], index: 23, kind: input, shape index: {}]
  %s24 = inlined_call_operand.hbm [shape: f32[1,256], index: 24, kind: input, shape index: {}]
  %s25 = inlined_call_operand.hbm [shape: bf16[256,128], index: 25, kind: input, shape index: {}]
  %s26 = inlined_call_operand.hbm [shape: f32[1,128], index: 26, kind: input, shape index: {}]
  %s27 = inlined_call_operand.hbm [shape: f32[2,1,128], index: 27, kind: output, shape index: {}]
  %s28 = sld [smem:[#allocation0]]
  $region249: #{emotion_forward.1} parent=0
    _
  %s30 = ssub.s32 1, %s28
  %s31 = scalar_select 0, %s30, %s28
  $region1: #{emotion_forward.1} parent=0
    #allocation2 [shape = 'u8[122880]{0}', space=vmem, size = 0x1e000, scoped, tag = 'input window, operand 0']
    #allocation3 [shape = 's32[2]{0}', space=sflag, size = 0x8, scoped, tag = 'scoped memory for emotion_forward.1']
    #allocation4 [shape = 's32[2]{0}', space=sflag, size = 0x8, scoped, tag = 'scoped memory for emotion_forward.1']
    #allocation5 [shape = 'u8[196608]{0}', space=vmem, size = 0x30000, scoped, tag = 'input window, operand 1, single buffered']
    #allocation6 [shape = 's32[1]{0}', space=sflag, size = 0x4, scoped, tag = 'scoped memory for emotion_forward.1']
    #allocation7 [shape = 'u8[20480]{0}', space=vmem, size = 0x5000, scoped, tag = 'input window, operand 2, single buffered']
    #allocation8 [shape = 'u8[1024]{0}', space=vmem, size = 0x400, scoped, tag = 'input window, operand 3, single buffered']
    #allocation9 [shape = 's32[1]{0}', space=sflag, size = 0x4, scoped, tag = 'scoped memory for emotion_forward.1']
    #allocation10 [shape = 'u8[1024]{0}', space=vmem, size = 0x400, scoped, tag = 'input window, operand 4, single buffered']
    #allocation11 [shape = 'u8[196608]{0}', space=vmem, size = 0x30000, scoped, tag = 'input window, operand 5, single buffered']
    #allocation12 [shape = 's32[1]{0}', space=sflag, size = 0x4, scoped, tag = 'scoped memory for emotion_forward.1']
    #allocation13 [shape = 'u8[3072]{0}', space=vmem, size = 0xc00, scoped, tag = 'input window, operand 6, single buffered']
    #allocation14 [shape = 'u8[65536]{0}', space=vmem, size = 0x10000, scoped, tag = 'input window, operand 7, single buffered']
    #allocation15 [shape = 's32[1]{0}', space=sflag, size = 0x4, scoped, tag = 'scoped memory for emotion_forward.1']
    #allocation16 [shape = 'u8[1024]{0}', space=vmem, size = 0x400, scoped, tag = 'input window, operand 8, single buffered']
    #allocation17 [shape = 'u8[1024]{0}', space=vmem, size = 0x400, scoped, tag = 'input window, operand 9, single buffered']
    #allocation18 [shape = 's32[1]{0}', space=sflag, size = 0x4, scoped, tag = 'scoped memory for emotion_forward.1']
    #allocation19 [shape = 'u8[1024]{0}', space=vmem, size = 0x400, scoped, tag = 'input window, operand 10, single buffered']
    #allocation20 [shape = 'u8[262144]{0}', space=vmem, size = 0x40000, scoped, tag = 'input window, operand 11, single buffered']
    #allocation21 [shape = 's32[1]{0}', space=sflag, size = 0x4, scoped, tag = 'scoped memory for emotion_forward.1']
    #allocation22 [shape = 'u8[4096]{0}', space=vmem, size = 0x1000, scoped, tag = 'input window, operand 12, single buffered']
    #allocation23 [shape = 'u8[262144]{0}', space=vmem, size = 0x40000, scoped, tag = 'input window, operand 13, single buffered']
    #allocation24 [shape = 's32[1]{0}', space=sflag, size = 0x4, scoped, tag = 'scoped memory for emotion_forward.1']
    #allocation25 [shape = 'u8[1024]{0}', space=vmem, size = 0x400, scoped, tag = 'input window, operand 14, single buffered']
    #allocation26 [shape = 'u8[512]{0}', space=vmem, size = 0x400, scoped, tag = 'input window, operand 15, single buffered']
    #allocation27 [shape = 's32[1]{0}', space=sflag, size = 0x4, scoped, tag = 'scoped memory for emotion_forward.1']
    #allocation28 [shape = 'u8[512]{0}', space=vmem, size = 0x400, scoped, tag = 'input window, operand 16, single buffered']
    #allocation29 [shape = 'u8[131072]{0}', space=vmem, size = 0x20000, scoped, tag = 'input window, operand 17, single buffered']
    #allocation30 [shape = 's32[1]{0}', space=sflag, size = 0x4, scoped, tag = 'scoped memory for emotion_forward.1']
    #allocation31 [shape = 'u8[2048]{0}', space=vmem, size = 0x800, scoped, tag = 'input window, operand 18, single buffered']
    #allocation32 [shape = 'u8[2048]{0}', space=vmem, size = 0x800, scoped, tag = 'input window, operand 19, single buffered']
    #allocation33 [shape = 's32[1]{0}', space=sflag, size = 0x4, scoped, tag = 'scoped memory for emotion_forward.1']
    #allocation34 [shape = 'u8[2048]{0}', space=vmem, size = 0x800, scoped, tag = 'input window, operand 20, single buffered']
    #allocation35 [shape = 'u8[262144]{0}', space=vmem, size = 0x40000, scoped, tag = 'input window, operand 21, single buffered']
    #allocation36 [shape = 's32[1]{0}', space=sflag, size = 0x4, scoped, tag = 'scoped memory for emotion_forward.1']
    #allocation37 [shape = 'u8[1024]{0}', space=vmem, size = 0x400, scoped, tag = 'input window, operand 22, single buffered']
    #allocation38 [shape = 'u8[1024]{0}', space=vmem, size = 0x400, scoped, tag = 'input window, operand 23, single buffered']
    #allocation39 [shape = 's32[1]{0}', space=sflag, size = 0x4, scoped, tag = 'scoped memory for emotion_forward.1']
    #allocation40 [shape = 'u8[1024]{0}', space=vmem, size = 0x400, scoped, tag = 'input window, operand 24, single buffered']
    #allocation41 [shape = 'u8[65536]{0}', space=vmem, size = 0x10000, scoped, tag = 'input window, operand 25, single buffered']
    #allocation42 [shape = 's32[1]{0}', space=sflag, size = 0x4, scoped, tag = 'scoped memory for emotion_forward.1']
    #allocation43 [shape = 'u8[512]{0}', space=vmem, size = 0x400, scoped, tag = 'input window, operand 26, single buffered']
    #allocation44 [shape = 'u8[1024]{0}', space=vmem, size = 0x400, scoped, tag = 'output window, operand 0']
    %32 = vsyncpa [#allocation3], 0
    %s33 = scalar_lea.sflag [#allocation3], 1
    %34 = vsyncpa %s33, 0
    %35 = vsyncpa [#allocation6], 0
    %36 = vsyncpa [#allocation9], 0
    %37 = vsyncpa [#allocation12], 0
    %38 = vsyncpa [#allocation15], 0
    %39 = vsyncpa [#allocation18], 0
    %40 = vsyncpa [#allocation21], 0
    %41 = vsyncpa [#allocation24], 0
    %42 = vsyncpa [#allocation27], 0
    %43 = vsyncpa [#allocation30], 0
    %44 = vsyncpa [#allocation33], 0
    %45 = vsyncpa [#allocation36], 0
    %46 = vsyncpa [#allocation39], 0
    %47 = vsyncpa [#allocation42], 0
    %48 = vsyncpa [#allocation4], 0
    %s49 = scalar_lea.sflag [#allocation4], 1
    %50 = vsyncpa %s49, 0
    loop: start=0, step=1, limit=4
    $region2: #{emotion_forward.1} parent=1 // loop_pre_header
      _
    $region3: #{emotion_forward.1} parent=1 // loop_header
      %s52 = sphi 0, %s56
      %p53 = scmp.ge.s32.totalorder %s52, 4
      %s62 = sphi 0, %s64
      %s65 = sphi 0, %s62
      %s66 = sphi 0, %s65
      %s82 = sphi 0, %s66
      %s86 = sphi 0, %s86
      %s88 = sphi 0, %s86
      %s89 = sphi 0, %s88
      %s103 = sphi 0, %s89
      %s107 = sphi 0, %s107
      %s109 = sphi 0, %s107
      %s110 = sphi 0, %s109
      %s124 = sphi 0, %s110
      %s128 = sphi 0, %s128
      %s130 = sphi 0, %s128
      %s131 = sphi 0, %s130
      %s145 = sphi 0, %s131
      %s149 = sphi 0, %s149
      %s151 = sphi 0, %s149
      %s152 = sphi 0, %s151
      %s166 = sphi 0, %s152
      %s170 = sphi 0, %s170
      %s172 = sphi 0, %s170
      %s173 = sphi 0, %s172
      %s187 = sphi 0, %s173
      %s191 = sphi 0, %s191
      %s193 = sphi 0, %s191
      %s194 = sphi 0, %s193
      %s208 = sphi 0, %s194
      %s212 = sphi 0, %s212
      %s214 = sphi 0, %s212
      %s215 = sphi 0, %s214
      %s229 = sphi 0, %s215
      %s233 = sphi 0, %s233
      %s235 = sphi 0, %s233
      %s236 = sphi 0, %s235
      %s250 = sphi 0, %s236
      %s254 = sphi 0, %s254
      %s256 = sphi 0, %s254
      %s257 = sphi 0, %s256
      %s271 = sphi 0, %s257
      %s275 = sphi 0, %s275
      %s277 = sphi 0, %s275
      %s278 = sphi 0, %s277
      %s292 = sphi 0, %s278
      %s296 = sphi 0, %s296
      %s298 = sphi 0, %s296
      %s299 = sphi 0, %s298
      %s313 = sphi 0, %s299
      %s317 = sphi 0, %s317
      %s319 = sphi 0, %s317
      %s320 = sphi 0, %s319
      %s334 = sphi 0, %s320
      %s338 = sphi 0, %s338
      %s340 = sphi 0, %s338
      %s341 = sphi 0, %s340
      %s355 = sphi 0, %s341
      %s359 = sphi 0, %s359
      %s361 = sphi 0, %s359
      %s362 = sphi 0, %s361
      %s376 = sphi 0, %s362
      %s380 = sphi 0, %s380
      %s382 = sphi 0, %s380
      %s383 = sphi 0, %s382
      %s397 = sphi 0, %s383
      %s401 = sphi 0, %s401
      %s403 = sphi 0, %s401
      %s404 = sphi 0, %s403
      %s418 = sphi 0, %s404
      %s422 = sphi 0, %s422
      %s424 = sphi 0, %s422
      %s425 = sphi 0, %s424
      %s439 = sphi 0, %s425
      %s443 = sphi 0, %s443
      %s445 = sphi 0, %s443
      %s446 = sphi 0, %s445
      %s460 = sphi 0, %s446
      %s464 = sphi 0, %s464
      %s466 = sphi 0, %s464
      %s467 = sphi 0, %s466
      %s481 = sphi 0, %s467
      %s485 = sphi 0, %s485
      %s487 = sphi 0, %s485
      %s488 = sphi 0, %s487
      %s502 = sphi 0, %s488
      %s506 = sphi 0, %s506
      %s508 = sphi 0, %s506
      %s509 = sphi 0, %s508
      %s523 = sphi 0, %s509
      %s527 = sphi 0, %s527
      %s529 = sphi 0, %s527
      %s530 = sphi 0, %s529
      %s544 = sphi 0, %s530
      %s548 = sphi 0, %s548
      %s550 = sphi 0, %s548
      %s551 = sphi 0, %s550
      %s565 = sphi 0, %s551
      %s569 = sphi 0, %s569
      %s571 = sphi 0, %s569
      %s572 = sphi 0, %s571
      %s586 = sphi 0, %s572
      %s590 = sphi 0, %s590
      %s592 = sphi 0, %s590
      %s593 = sphi 0, %s592
      %s607 = sphi 0, %s593
      %s611 = sphi 0, %s611
      %s613 = sphi 0, %s611
      %s614 = sphi 0, %s613
      %s628 = sphi 0, %s614
      %s634 = sphi 0, %s636
      %s637 = sphi 0, %s634
      %s638 = sphi 0, %s637
      %s654 = sphi 0, %s638
    $region4: #{emotion_forward.1} parent=1 // loop_header_branch
      %55 = sbr.rel (%p53) target = $region8
    $region5: #{emotion_forward.1} parent=1 // loop_body
      %s57 = ssub.s32 %s52, 1
      %s58 = ssub.s32 %s52, 2
      %s59 = sadd.s32 %s52, 1
      %s60 = ssub.s32 %s52, %s59
      %p61 = scmp.eq.s32.totalorder %s60, 0
      %s63 = sadd.s32 %s62, 1
      %s64 = scalar_select %p61, %s62, %s63
      %p67 = pneg %p61
      %p68 = scmp.eq.s32.totalorder %s52, 1
      %p69 = por %p67, %p68
      %p70 = scmp.ne.s32.totalorder %s62, %s65
      %p71 = scmp.eq.s32.totalorder %s52, 0
      %p72 = por %p70, %p71
      %p73 = scmp.ne.s32.totalorder %s62, %s65
      %p74 = scmp.eq.s32.totalorder %s57, 1
      %p75 = por %p73, %p74
      %p76 = scmp.ne.s32.totalorder %s65, %s66
      %p77 = scmp.eq.s32.totalorder %s57, 0
      %p78 = por %p76, %p77
      %p79 = scmp.ne.s32.totalorder %s65, %s66
      %p80 = scmp.eq.s32.totalorder %s58, 1
      %p81 = por %p79, %p80
      %p83 = scmp.ne.s32.totalorder %s66, %s82
      %p84 = scmp.eq.s32.totalorder %s58, 0
      %p85 = por %p83, %p84
      %s87 = sadd.s32 %s86, 1
      %p90 = scmp.eq.s32.totalorder %s52, 1
      %p91 = scmp.ne.s32.totalorder %s86, %s88
      %p92 = scmp.eq.s32.totalorder %s52, 0
      %p93 = por %p91, %p92
      %p94 = scmp.ne.s32.totalorder %s86, %s88
      %p95 = scmp.eq.s32.totalorder %s57, 1
      %p96 = por %p94, %p95
      %p97 = scmp.ne.s32.totalorder %s88, %s89
      %p98 = scmp.eq.s32.totalorder %s57, 0
      %p99 = por %p97, %p98
      %p100 = scmp.ne.s32.totalorder %s88, %s89
      %p101 = scmp.eq.s32.totalorder %s58, 1
      %p102 = por %p100, %p101
      %p104 = scmp.ne.s32.totalorder %s89, %s103
      %p105 = scmp.eq.s32.totalorder %s58, 0
      %p106 = por %p104, %p105
      %s108 = sadd.s32 %s107, 1
      %p111 = scmp.eq.s32.totalorder %s52, 1
      %p112 = scmp.ne.s32.totalorder %s107, %s109
      %p113 = scmp.eq.s32.totalorder %s52, 0
      %p114 = por %p112, %p113
      %p115 = scmp.ne.s32.totalorder %s107, %s109
      %p116 = scmp.eq.s32.totalorder %s57, 1
      %p117 = por %p115, %p116
      %p118 = scmp.ne.s32.totalorder %s109, %s110
      %p119 = scmp.eq.s32.totalorder %s57, 0
      %p120 = por %p118, %p119
      %p121 = scmp.ne.s32.totalorder %s109, %s110
      %p122 = scmp.eq.s32.totalorder %s58, 1
      %p123 = por %p121, %p122
      %p125 = scmp.ne.s32.totalorder %s110, %s124
      %p126 = scmp.eq.s32.totalorder %s58, 0
      %p127 = por %p125, %p126
      %s129 = sadd.s32 %s128, 1
      %p132 = scmp.eq.s32.totalorder %s52, 1
      %p133 = scmp.ne.s32.totalorder %s128, %s130
      %p134 = scmp.eq.s32.totalorder %s52, 0
      %p135 = por %p133, %p134
      %p136 = scmp.ne.s32.totalorder %s128, %s130
      %p137 = scmp.eq.s32.totalorder %s57, 1
      %p138 = por %p136, %p137
      %p139 = scmp.ne.s32.totalorder %s130, %s131
      %p140 = scmp.eq.s32.totalorder %s57, 0
      %p141 = por %p139, %p140
      %p142 = scmp.ne.s32.totalorder %s130, %s131
      %p143 = scmp.eq.s32.totalorder %s58, 1
      %p144 = por %p142, %p143
      %p146 = scmp.ne.s32.totalorder %s131, %s145
      %p147 = scmp.eq.s32.totalorder %s58, 0
      %p148 = por %p146, %p147
      %s150 = sadd.s32 %s149, 1
      %p153 = scmp.eq.s32.totalorder %s52, 1
      %p154 = scmp.ne.s32.totalorder %s149, %s151
      %p155 = scmp.eq.s32.totalorder %s52, 0
      %p156 = por %p154, %p155
      %p157 = scmp.ne.s32.totalorder %s149, %s151
      %p158 = scmp.eq.s32.totalorder %s57, 1
      %p159 = por %p157, %p158
      %p160 = scmp.ne.s32.totalorder %s151, %s152
      %p161 = scmp.eq.s32.totalorder %s57, 0
      %p162 = por %p160, %p161
      %p163 = scmp.ne.s32.totalorder %s151, %s152
      %p164 = scmp.eq.s32.totalorder %s58, 1
      %p165 = por %p163, %p164
      %p167 = scmp.ne.s32.totalorder %s152, %s166
      %p168 = scmp.eq.s32.totalorder %s58, 0
      %p169 = por %p167, %p168
      %s171 = sadd.s32 %s170, 1
      %p174 = scmp.eq.s32.totalorder %s52, 1
      %p175 = scmp.ne.s32.totalorder %s170, %s172
      %p176 = scmp.eq.s32.totalorder %s52, 0
      %p177 = por %p175, %p176
      %p178 = scmp.ne.s32.totalorder %s170, %s172
      %p179 = scmp.eq.s32.totalorder %s57, 1
      %p180 = por %p178, %p179
      %p181 = scmp.ne.s32.totalorder %s172, %s173
      %p182 = scmp.eq.s32.totalorder %s57, 0
      %p183 = por %p181, %p182
      %p184 = scmp.ne.s32.totalorder %s172, %s173
      %p185 = scmp.eq.s32.totalorder %s58, 1
      %p186 = por %p184, %p185
      %p188 = scmp.ne.s32.totalorder %s173, %s187
      %p189 = scmp.eq.s32.totalorder %s58, 0
      %p190 = por %p188, %p189
      %s192 = sadd.s32 %s191, 1
      %p195 = scmp.eq.s32.totalorder %s52, 1
      %p196 = scmp.ne.s32.totalorder %s191, %s193
      %p197 = scmp.eq.s32.totalorder %s52, 0
      %p198 = por %p196, %p197
      %p199 = scmp.ne.s32.totalorder %s191, %s193
      %p200 = scmp.eq.s32.totalorder %s57, 1
      %p201 = por %p199, %p200
      %p202 = scmp.ne.s32.totalorder %s193, %s194
      %p203 = scmp.eq.s32.totalorder %s57, 0
      %p204 = por %p202, %p203
      %p205 = scmp.ne.s32.totalorder %s193, %s194
      %p206 = scmp.eq.s32.totalorder %s58, 1
      %p207 = por %p205, %p206
      %p209 = scmp.ne.s32.totalorder %s194, %s208
      %p210 = scmp.eq.s32.totalorder %s58, 0
      %p211 = por %p209, %p210
      %s213 = sadd.s32 %s212, 1
      %p216 = scmp.eq.s32.totalorder %s52, 1
      %p217 = scmp.ne.s32.totalorder %s212, %s214
      %p218 = scmp.eq.s32.totalorder %s52, 0
      %p219 = por %p217, %p218
      %p220 = scmp.ne.s32.totalorder %s212, %s214
      %p221 = scmp.eq.s32.totalorder %s57, 1
      %p222 = por %p220, %p221
      %p223 = scmp.ne.s32.totalorder %s214, %s215
      %p224 = scmp.eq.s32.totalorder %s57, 0
      %p225 = por %p223, %p224
      %p226 = scmp.ne.s32.totalorder %s214, %s215
      %p227 = scmp.eq.s32.totalorder %s58, 1
      %p228 = por %p226, %p227
      %p230 = scmp.ne.s32.totalorder %s215, %s229
      %p231 = scmp.eq.s32.totalorder %s58, 0
      %p232 = por %p230, %p231
      %s234 = sadd.s32 %s233, 1
      %p237 = scmp.eq.s32.totalorder %s52, 1
      %p238 = scmp.ne.s32.totalorder %s233, %s235
      %p239 = scmp.eq.s32.totalorder %s52, 0
      %p240 = por %p238, %p239
      %p241 = scmp.ne.s32.totalorder %s233, %s235
      %p242 = scmp.eq.s32.totalorder %s57, 1
      %p243 = por %p241, %p242
      %p244 = scmp.ne.s32.totalorder %s235, %s236
      %p245 = scmp.eq.s32.totalorder %s57, 0
      %p246 = por %p244, %p245
      %p247 = scmp.ne.s32.totalorder %s235, %s236
      %p248 = scmp.eq.s32.totalorder %s58, 1
      %p249 = por %p247, %p248
      %p251 = scmp.ne.s32.totalorder %s236, %s250
      %p252 = scmp.eq.s32.totalorder %s58, 0
      %p253 = por %p251, %p252
      %s255 = sadd.s32 %s254, 1
      %p258 = scmp.eq.s32.totalorder %s52, 1
      %p259 = scmp.ne.s32.totalorder %s254, %s256
      %p260 = scmp.eq.s32.totalorder %s52, 0
      %p261 = por %p259, %p260
      %p262 = scmp.ne.s32.totalorder %s254, %s256
      %p263 = scmp.eq.s32.totalorder %s57, 1
      %p264 = por %p262, %p263
      %p265 = scmp.ne.s32.totalorder %s256, %s257
      %p266 = scmp.eq.s32.totalorder %s57, 0
      %p267 = por %p265, %p266
      %p268 = scmp.ne.s32.totalorder %s256, %s257
      %p269 = scmp.eq.s32.totalorder %s58, 1
      %p270 = por %p268, %p269
      %p272 = scmp.ne.s32.totalorder %s257, %s271
      %p273 = scmp.eq.s32.totalorder %s58, 0
      %p274 = por %p272, %p273
      %s276 = sadd.s32 %s275, 1
      %p279 = scmp.eq.s32.totalorder %s52, 1
      %p280 = scmp.ne.s32.totalorder %s275, %s277
      %p281 = scmp.eq.s32.totalorder %s52, 0
      %p282 = por %p280, %p281
      %p283 = scmp.ne.s32.totalorder %s275, %s277
      %p284 = scmp.eq.s32.totalorder %s57, 1
      %p285 = por %p283, %p284
      %p286 = scmp.ne.s32.totalorder %s277, %s278
      %p287 = scmp.eq.s32.totalorder %s57, 0
      %p288 = por %p286, %p287
      %p289 = scmp.ne.s32.totalorder %s277, %s278
      %p290 = scmp.eq.s32.totalorder %s58, 1
      %p291 = por %p289, %p290
      %p293 = scmp.ne.s32.totalorder %s278, %s292
      %p294 = scmp.eq.s32.totalorder %s58, 0
      %p295 = por %p293, %p294
      %s297 = sadd.s32 %s296, 1
      %p300 = scmp.eq.s32.totalorder %s52, 1
      %p301 = scmp.ne.s32.totalorder %s296, %s298
      %p302 = scmp.eq.s32.totalorder %s52, 0
      %p303 = por %p301, %p302
      %p304 = scmp.ne.s32.totalorder %s296, %s298
      %p305 = scmp.eq.s32.totalorder %s57, 1
      %p306 = por %p304, %p305
      %p307 = scmp.ne.s32.totalorder %s298, %s299
      %p308 = scmp.eq.s32.totalorder %s57, 0
      %p309 = por %p307, %p308
      %p310 = scmp.ne.s32.totalorder %s298, %s299
      %p311 = scmp.eq.s32.totalorder %s58, 1
      %p312 = por %p310, %p311
      %p314 = scmp.ne.s32.totalorder %s299, %s313
      %p315 = scmp.eq.s32.totalorder %s58, 0
      %p316 = por %p314, %p315
      %s318 = sadd.s32 %s317, 1
      %p321 = scmp.eq.s32.totalorder %s52, 1
      %p322 = scmp.ne.s32.totalorder %s317, %s319
      %p323 = scmp.eq.s32.totalorder %s52, 0
      %p324 = por %p322, %p323
      %p325 = scmp.ne.s32.totalorder %s317, %s319
      %p326 = scmp.eq.s32.totalorder %s57, 1
      %p327 = por %p325, %p326
      %p328 = scmp.ne.s32.totalorder %s319, %s320
      %p329 = scmp.eq.s32.totalorder %s57, 0
      %p330 = por %p328, %p329
      %p331 = scmp.ne.s32.totalorder %s319, %s320
      %p332 = scmp.eq.s32.totalorder %s58, 1
      %p333 = por %p331, %p332
      %p335 = scmp.ne.s32.totalorder %s320, %s334
      %p336 = scmp.eq.s32.totalorder %s58, 0
      %p337 = por %p335, %p336
      %s339 = sadd.s32 %s338, 1
      %p342 = scmp.eq.s32.totalorder %s52, 1
      %p343 = scmp.ne.s32.totalorder %s338, %s340
      %p344 = scmp.eq.s32.totalorder %s52, 0
      %p345 = por %p343, %p344
      %p346 = scmp.ne.s32.totalorder %s338, %s340
      %p347 = scmp.eq.s32.totalorder %s57, 1
      %p348 = por %p346, %p347
      %p349 = scmp.ne.s32.totalorder %s340, %s341
      %p350 = scmp.eq.s32.totalorder %s57, 0
      %p351 = por %p349, %p350
      %p352 = scmp.ne.s32.totalorder %s340, %s341
      %p353 = scmp.eq.s32.totalorder %s58, 1
      %p354 = por %p352, %p353
      %p356 = scmp.ne.s32.totalorder %s341, %s355
      %p357 = scmp.eq.s32.totalorder %s58, 0
      %p358 = por %p356, %p357
      %s360 = sadd.s32 %s359, 1
      %p363 = scmp.eq.s32.totalorder %s52, 1
      %p364 = scmp.ne.s32.totalorder %s359, %s361
      %p365 = scmp.eq.s32.totalorder %s52, 0
      %p366 = por %p364, %p365
      %p367 = scmp.ne.s32.totalorder %s359, %s361
      %p368 = scmp.eq.s32.totalorder %s57, 1
      %p369 = por %p367, %p368
      %p370 = scmp.ne.s32.totalorder %s361, %s362
      %p371 = scmp.eq.s32.totalorder %s57, 0
      %p372 = por %p370, %p371
      %p373 = scmp.ne.s32.totalorder %s361, %s362
      %p374 = scmp.eq.s32.totalorder %s58, 1
      %p375 = por %p373, %p374
      %p377 = scmp.ne.s32.totalorder %s362, %s376
      %p378 = scmp.eq.s32.totalorder %s58, 0
      %p379 = por %p377, %p378
      %s381 = sadd.s32 %s380, 1
      %p384 = scmp.eq.s32.totalorder %s52, 1
      %p385 = scmp.ne.s32.totalorder %s380, %s382
      %p386 = scmp.eq.s32.totalorder %s52, 0
      %p387 = por %p385, %p386
      %p388 = scmp.ne.s32.totalorder %s380, %s382
      %p389 = scmp.eq.s32.totalorder %s57, 1
      %p390 = por %p388, %p389
      %p391 = scmp.ne.s32.totalorder %s382, %s383
      %p392 = scmp.eq.s32.totalorder %s57, 0
      %p393 = por %p391, %p392
      %p394 = scmp.ne.s32.totalorder %s382, %s383
      %p395 = scmp.eq.s32.totalorder %s58, 1
      %p396 = por %p394, %p395
      %p398 = scmp.ne.s32.totalorder %s383, %s397
      %p399 = scmp.eq.s32.totalorder %s58, 0
      %p400 = por %p398, %p399
      %s402 = sadd.s32 %s401, 1
      %p405 = scmp.eq.s32.totalorder %s52, 1
      %p406 = scmp.ne.s32.totalorder %s401, %s403
      %p407 = scmp.eq.s32.totalorder %s52, 0
      %p408 = por %p406, %p407
      %p409 = scmp.ne.s32.totalorder %s401, %s403
      %p410 = scmp.eq.s32.totalorder %s57, 1
      %p411 = por %p409, %p410
      %p412 = scmp.ne.s32.totalorder %s403, %s404
      %p413 = scmp.eq.s32.totalorder %s57, 0
      %p414 = por %p412, %p413
      %p415 = scmp.ne.s32.totalorder %s403, %s404
      %p416 = scmp.eq.s32.totalorder %s58, 1
      %p417 = por %p415, %p416
      %p419 = scmp.ne.s32.totalorder %s404, %s418
      %p420 = scmp.eq.s32.totalorder %s58, 0
      %p421 = por %p419, %p420
      %s423 = sadd.s32 %s422, 1
      %p426 = scmp.eq.s32.totalorder %s52, 1
      %p427 = scmp.ne.s32.totalorder %s422, %s424
      %p428 = scmp.eq.s32.totalorder %s52, 0
      %p429 = por %p427, %p428
      %p430 = scmp.ne.s32.totalorder %s422, %s424
      %p431 = scmp.eq.s32.totalorder %s57, 1
      %p432 = por %p430, %p431
      %p433 = scmp.ne.s32.totalorder %s424, %s425
      %p434 = scmp.eq.s32.totalorder %s57, 0
      %p435 = por %p433, %p434
      %p436 = scmp.ne.s32.totalorder %s424, %s425
      %p437 = scmp.eq.s32.totalorder %s58, 1
      %p438 = por %p436, %p437
      %p440 = scmp.ne.s32.totalorder %s425, %s439
      %p441 = scmp.eq.s32.totalorder %s58, 0
      %p442 = por %p440, %p441
      %s444 = sadd.s32 %s443, 1
      %p447 = scmp.eq.s32.totalorder %s52, 1
      %p448 = scmp.ne.s32.totalorder %s443, %s445
      %p449 = scmp.eq.s32.totalorder %s52, 0
      %p450 = por %p448, %p449
      %p451 = scmp.ne.s32.totalorder %s443, %s445
      %p452 = scmp.eq.s32.totalorder %s57, 1
      %p453 = por %p451, %p452
      %p454 = scmp.ne.s32.totalorder %s445, %s446
      %p455 = scmp.eq.s32.totalorder %s57, 0
      %p456 = por %p454, %p455
      %p457 = scmp.ne.s32.totalorder %s445, %s446
      %p458 = scmp.eq.s32.totalorder %s58, 1
      %p459 = por %p457, %p458
      %p461 = scmp.ne.s32.totalorder %s446, %s460
      %p462 = scmp.eq.s32.totalorder %s58, 0
      %p463 = por %p461, %p462
      %s465 = sadd.s32 %s464, 1
      %p468 = scmp.eq.s32.totalorder %s52, 1
      %p469 = scmp.ne.s32.totalorder %s464, %s466
      %p470 = scmp.eq.s32.totalorder %s52, 0
      %p471 = por %p469, %p470
      %p472 = scmp.ne.s32.totalorder %s464, %s466
      %p473 = scmp.eq.s32.totalorder %s57, 1
      %p474 = por %p472, %p473
      %p475 = scmp.ne.s32.totalorder %s466, %s467
      %p476 = scmp.eq.s32.totalorder %s57, 0
      %p477 = por %p475, %p476
      %p478 = scmp.ne.s32.totalorder %s466, %s467
      %p479 = scmp.eq.s32.totalorder %s58, 1
      %p480 = por %p478, %p479
      %p482 = scmp.ne.s32.totalorder %s467, %s481
      %p483 = scmp.eq.s32.totalorder %s58, 0
      %p484 = por %p482, %p483
      %s486 = sadd.s32 %s485, 1
      %p489 = scmp.eq.s32.totalorder %s52, 1
      %p490 = scmp.ne.s32.totalorder %s485, %s487
      %p491 = scmp.eq.s32.totalorder %s52, 0
      %p492 = por %p490, %p491
      %p493 = scmp.ne.s32.totalorder %s485, %s487
      %p494 = scmp.eq.s32.totalorder %s57, 1
      %p495 = por %p493, %p494
      %p496 = scmp.ne.s32.totalorder %s487, %s488
      %p497 = scmp.eq.s32.totalorder %s57, 0
      %p498 = por %p496, %p497
      %p499 = scmp.ne.s32.totalorder %s487, %s488
      %p500 = scmp.eq.s32.totalorder %s58, 1
      %p501 = por %p499, %p500
      %p503 = scmp.ne.s32.totalorder %s488, %s502
      %p504 = scmp.eq.s32.totalorder %s58, 0
      %p505 = por %p503, %p504
      %s507 = sadd.s32 %s506, 1
      %p510 = scmp.eq.s32.totalorder %s52, 1
      %p511 = scmp.ne.s32.totalorder %s506, %s508
      %p512 = scmp.eq.s32.totalorder %s52, 0
      %p513 = por %p511, %p512
      %p514 = scmp.ne.s32.totalorder %s506, %s508
      %p515 = scmp.eq.s32.totalorder %s57, 1
      %p516 = por %p514, %p515
      %p517 = scmp.ne.s32.totalorder %s508, %s509
      %p518 = scmp.eq.s32.totalorder %s57, 0
      %p519 = por %p517, %p518
      %p520 = scmp.ne.s32.totalorder %s508, %s509
      %p521 = scmp.eq.s32.totalorder %s58, 1
      %p522 = por %p520, %p521
      %p524 = scmp.ne.s32.totalorder %s509, %s523
      %p525 = scmp.eq.s32.totalorder %s58, 0
      %p526 = por %p524, %p525
      %s528 = sadd.s32 %s527, 1
      %p531 = scmp.eq.s32.totalorder %s52, 1
      %p532 = scmp.ne.s32.totalorder %s527, %s529
      %p533 = scmp.eq.s32.totalorder %s52, 0
      %p534 = por %p532, %p533
      %p535 = scmp.ne.s32.totalorder %s527, %s529
      %p536 = scmp.eq.s32.totalorder %s57, 1
      %p537 = por %p535, %p536
      %p538 = scmp.ne.s32.totalorder %s529, %s530
      %p539 = scmp.eq.s32.totalorder %s57, 0
      %p540 = por %p538, %p539
      %p541 = scmp.ne.s32.totalorder %s529, %s530
      %p542 = scmp.eq.s32.totalorder %s58, 1
      %p543 = por %p541, %p542
      %p545 = scmp.ne.s32.totalorder %s530, %s544
      %p546 = scmp.eq.s32.totalorder %s58, 0
      %p547 = por %p545, %p546
      %s549 = sadd.s32 %s548, 1
      %p552 = scmp.eq.s32.totalorder %s52, 1
      %p553 = scmp.ne.s32.totalorder %s548, %s550
      %p554 = scmp.eq.s32.totalorder %s52, 0
      %p555 = por %p553, %p554
      %p556 = scmp.ne.s32.totalorder %s548, %s550
      %p557 = scmp.eq.s32.totalorder %s57, 1
      %p558 = por %p556, %p557
      %p559 = scmp.ne.s32.totalorder %s550, %s551
      %p560 = scmp.eq.s32.totalorder %s57, 0
      %p561 = por %p559, %p560
      %p562 = scmp.ne.s32.totalorder %s550, %s551
      %p563 = scmp.eq.s32.totalorder %s58, 1
      %p564 = por %p562, %p563
      %p566 = scmp.ne.s32.totalorder %s551, %s565
      %p567 = scmp.eq.s32.totalorder %s58, 0
      %p568 = por %p566, %p567
      %s570 = sadd.s32 %s569, 1
      %p573 = scmp.eq.s32.totalorder %s52, 1
      %p574 = scmp.ne.s32.totalorder %s569, %s571
      %p575 = scmp.eq.s32.totalorder %s52, 0
      %p576 = por %p574, %p575
      %p577 = scmp.ne.s32.totalorder %s569, %s571
      %p578 = scmp.eq.s32.totalorder %s57, 1
      %p579 = por %p577, %p578
      %p580 = scmp.ne.s32.totalorder %s571, %s572
      %p581 = scmp.eq.s32.totalorder %s57, 0
      %p582 = por %p580, %p581
      %p583 = scmp.ne.s32.totalorder %s571, %s572
      %p584 = scmp.eq.s32.totalorder %s58, 1
      %p585 = por %p583, %p584
      %p587 = scmp.ne.s32.totalorder %s572, %s586
      %p588 = scmp.eq.s32.totalorder %s58, 0
      %p589 = por %p587, %p588
      %s591 = sadd.s32 %s590, 1
      %p594 = scmp.eq.s32.totalorder %s52, 1
      %p595 = scmp.ne.s32.totalorder %s590, %s592
      %p596 = scmp.eq.s32.totalorder %s52, 0
      %p597 = por %p595, %p596
      %p598 = scmp.ne.s32.totalorder %s590, %s592
      %p599 = scmp.eq.s32.totalorder %s57, 1
      %p600 = por %p598, %p599
      %p601 = scmp.ne.s32.totalorder %s592, %s593
      %p602 = scmp.eq.s32.totalorder %s57, 0
      %p603 = por %p601, %p602
      %p604 = scmp.ne.s32.totalorder %s592, %s593
      %p605 = scmp.eq.s32.totalorder %s58, 1
      %p606 = por %p604, %p605
      %p608 = scmp.ne.s32.totalorder %s593, %s607
      %p609 = scmp.eq.s32.totalorder %s58, 0
      %p610 = por %p608, %p609
      %s612 = sadd.s32 %s611, 1
      %p615 = scmp.eq.s32.totalorder %s52, 1
      %p616 = scmp.ne.s32.totalorder %s611, %s613
      %p617 = scmp.eq.s32.totalorder %s52, 0
      %p618 = por %p616, %p617
      %p619 = scmp.ne.s32.totalorder %s611, %s613
      %p620 = scmp.eq.s32.totalorder %s57, 1
      %p621 = por %p619, %p620
      %p622 = scmp.ne.s32.totalorder %s613, %s614
      %p623 = scmp.eq.s32.totalorder %s57, 0
      %p624 = por %p622, %p623
      %p625 = scmp.ne.s32.totalorder %s613, %s614
      %p626 = scmp.eq.s32.totalorder %s58, 1
      %p627 = por %p625, %p626
      %p629 = scmp.ne.s32.totalorder %s614, %s628
      %p630 = scmp.eq.s32.totalorder %s58, 0
      %p631 = por %p629, %p630
      %s632 = ssub.s32 %s52, %s59
      %p633 = scmp.eq.s32.totalorder %s632, 0
      %s635 = sadd.s32 %s634, 1
      %s636 = scalar_select %p633, %s634, %s635
      %p639 = pneg %p633
      %p640 = scmp.eq.s32.totalorder %s52, 1
      %p641 = por %p639, %p640
      %p642 = scmp.ne.s32.totalorder %s634, %s637
      %p643 = scmp.eq.s32.totalorder %s52, 0
      %p644 = por %p642, %p643
      %p645 = scmp.ne.s32.totalorder %s634, %s637
      %p646 = scmp.eq.s32.totalorder %s57, 1
      %p647 = por %p645, %p646
      %p648 = scmp.ne.s32.totalorder %s637, %s638
      %p649 = scmp.eq.s32.totalorder %s57, 0
      %p650 = por %p648, %p649
      %p651 = scmp.ne.s32.totalorder %s637, %s638
      %p652 = scmp.eq.s32.totalorder %s58, 1
      %p653 = por %p651, %p652
      %p655 = scmp.ne.s32.totalorder %s638, %s654
      %p656 = scmp.eq.s32.totalorder %s58, 0
      %p657 = por %p655, %p656
      %p658 = scmp.le.s32.totalorder 1, %s52
      %p659 = scmp.lt.s32.totalorder %s52, 3
      %p660 = pnand %p658, %p659
      %p661 = pneg %p660
      // Predicated region
      $region9: #{emotion_forward.1} parent=5 // pred_check
        _
      $region10: #{emotion_forward.1} parent=5 // pred_check_branch
        %663 = sbr.rel (%p660) target = $region12
      $region11: #{emotion_forward.1} parent=5 // pred_region
        %s664 = ssub.s32 %s52, 1
        // Predicated region
        $region13: #{emotion_forward.1} parent=11 // pred_check
          %p665 = pneg %p99
        $region14: #{emotion_forward.1} parent=11 // pred_check_branch
          %667 = sbr.rel (%p665) target = $region16
        $region15: #{emotion_forward.1} parent=11 // pred_region
          %s669 = ssub.s32 6144, 6144
          %670 = vsyncadd [#allocation6], %s669
          %s671 = sshll.u32 [#allocation5], 4
          %s672 = int_to_ptr.vmem [resolvable:$true] %s671
          %677 = dma.hbm_to_vmem [thread:$0]  %s1, 6144, %s672, [#allocation6], 64, 64, 4
        $region16: #{emotion_forward.1} parent=11 // pred_fallthru
          _
        // Predicated region
        $region17: #{emotion_forward.1} parent=11 // pred_check
          %p678 = pneg %p120
        $region18: #{emotion_forward.1} parent=11 // pred_check_branch
          %680 = sbr.rel (%p678) target = $region20
        $region19: #{emotion_forward.1} parent=11 // pred_region
          %s682 = ssub.s32 640, 640
          %683 = vsyncadd [#allocation6], %s682
          %s684 = sshll.u32 [#allocation7], 4
          %s685 = int_to_ptr.vmem [resolvable:$true] %s684
          %690 = dma.hbm_to_vmem [thread:$0]  %s2, 640, %s685, [#allocation6], 128, 128, 8
        $region20: #{emotion_forward.1} parent=11 // pred_fallthru
          _
        // Predicated region
        $region21: #{emotion_forward.1} parent=11 // pred_check
          %p691 = pneg %p141
        $region22: #{emotion_forward.1} parent=11 // pred_check_branch
          %693 = sbr.rel (%p691) target = $region24
        $region23: #{emotion_forward.1} parent=11 // pred_region
          %s695 = ssub.s32 32, 32
          %696 = vsyncadd [#allocation9], %s695
          %s697 = sshll.u32 [#allocation8], 4
          %s698 = int_to_ptr.vmem [resolvable:$true] %s697
          %703 = dma.hbm_to_vmem [thread:$0]  %s3, 32, %s698, [#allocation9], 16, 16, 1
        $region24: #{emotion_forward.1} parent=11 // pred_fallthru
          _
        // Predicated region
        $region25: #{emotion_forward.1} parent=11 // pred_check
          %p704 = pneg %p162
        $region26: #{emotion_forward.1} parent=11 // pred_check_branch
          %706 = sbr.rel (%p704) target = $region28
        $region27: #{emotion_forward.1} parent=11 // pred_region
          %s708 = ssub.s32 32, 32
          %709 = vsyncadd [#allocation9], %s708
          %s710 = sshll.u32 [#allocation10], 4
          %s711 = int_to_ptr.vmem [resolvable:$true] %s710
          %716 = dma.hbm_to_vmem [thread:$0]  %s4, 32, %s711, [#allocation9], 16, 16, 1
        $region28: #{emotion_forward.1} parent=11 // pred_fallthru
          _
        // Predicated region
        $region29: #{emotion_forward.1} parent=11 // pred_check
          %p717 = pneg %p183
        $region30: #{emotion_forward.1} parent=11 // pred_check_branch
          %719 = sbr.rel (%p717) target = $region32
        $region31: #{emotion_forward.1} parent=11 // pred_region
          %s721 = ssub.s32 6144, 6144
          %722 = vsyncadd [#allocation12], %s721
          %s723 = sshll.u32 [#allocation11], 4
          %s724 = int_to_ptr.vmem [resolvable:$true] %s723
          %729 = dma.hbm_to_vmem [thread:$0]  %s5, 6144, %s724, [#allocation12], 192, 192, 12
        $region32: #{emotion_forward.1} parent=11 // pred_fallthru
          _
        // Predicated region
        $region33: #{emotion_forward.1} parent=11 // pred_check
          %p730 = pneg %p204
        $region34: #{emotion_forward.1} parent=11 // pred_check_branch
          %732 = sbr.rel (%p730) target = $region36
        $region35: #{emotion_forward.1} parent=11 // pred_region
          %s734 = ssub.s32 96, 96
          %735 = vsyncadd [#allocation12], %s734
          %s736 = sshll.u32 [#allocation13], 4
          %s737 = int_to_ptr.vmem [resolvable:$true] %s736
          %742 = dma.hbm_to_vmem [thread:$0]  %s6, 96, %s737, [#allocation12], 48, 48, 3
        $region36: #{emotion_forward.1} parent=11 // pred_fallthru
          _
        // Predicated region
        $region37: #{emotion_forward.1} parent=11 // pred_check
          %p743 = pneg %p225
        $region38: #{emotion_forward.1} parent=11 // pred_check_branch
          %745 = sbr.rel (%p743) target = $region40
        $region39: #{emotion_forward.1} parent=11 // pred_region
          %s747 = ssub.s32 2048, 2048
          %748 = vsyncadd [#allocation15], %s747
          %s749 = sshll.u32 [#allocation14], 4
          %s750 = int_to_ptr.vmem [resolvable:$true] %s749
          %755 = dma.hbm_to_vmem [thread:$0]  %s7, 2048, %s750, [#allocation15], 64, 64, 4
        $region40: #{emotion_forward.1} parent=11 // pred_fallthru
          _
        // Predicated region
        $region41: #{emotion_forward.1} parent=11 // pred_check
          %p756 = pneg %p246
        $region42: #{emotion_forward.1} parent=11 // pred_check_branch
          %758 = sbr.rel (%p756) target = $region44
        $region43: #{emotion_forward.1} parent=11 // pred_region
          %s760 = ssub.s32 32, 32
          %761 = vsyncadd [#allocation15], %s760
          %s762 = sshll.u32 [#allocation16], 4
          %s763 = int_to_ptr.vmem [resolvable:$true] %s762
          %768 = dma.hbm_to_vmem [thread:$0]  %s8, 32, %s763, [#allocation15], 16, 16, 1
        $region44: #{emotion_forward.1} parent=11 // pred_fallthru
          _
        // Predicated region
        $region45: #{emotion_forward.1} parent=11 // pred_check
          %p769 = pneg %p267
        $region46: #{emotion_forward.1} parent=11 // pred_check_branch
          %771 = sbr.rel (%p769) target = $region48
        $region47: #{emotion_forward.1} parent=11 // pred_region
          %s773 = ssub.s32 32, 32
          %774 = vsyncadd [#allocation18], %s773
          %s775 = sshll.u32 [#allocation17], 4
          %s776 = int_to_ptr.vmem [resolvable:$true] %s775
          %781 = dma.hbm_to_vmem [thread:$0]  %s9, 32, %s776, [#allocation18], 16, 16, 1
        $region48: #{emotion_forward.1} parent=11 // pred_fallthru
          _
        // Predicated region
        $region49: #{emotion_forward.1} parent=11 // pred_check
          %p782 = pneg %p288
        $region50: #{emotion_forward.1} parent=11 // pred_check_branch
          %784 = sbr.rel (%p782) target = $region52
        $region51: #{emotion_forward.1} parent=11 // pred_region
          %s786 = ssub.s32 32, 32
          %787 = vsyncadd [#allocation18], %s786
          %s788 = sshll.u32 [#allocation19], 4
          %s789 = int_to_ptr.vmem [resolvable:$true] %s788
          %794 = dma.hbm_to_vmem [thread:$0]  %s10, 32, %s789, [#allocation18], 16, 16, 1
        $region52: #{emotion_forward.1} parent=11 // pred_fallthru
          _
        // Predicated region
        $region53: #{emotion_forward.1} parent=11 // pred_check
          %p795 = pneg %p309
        $region54: #{emotion_forward.1} parent=11 // pred_check_branch
          %797 = sbr.rel (%p795) target = $region56
        $region55: #{emotion_forward.1} parent=11 // pred_region
          %s799 = ssub.s32 8192, 8192
          %800 = vsyncadd [#allocation21], %s799
          %s801 = sshll.u32 [#allocation20], 4
          %s802 = int_to_ptr.vmem [resolvable:$true] %s801
          %807 = dma.hbm_to_vmem [thread:$0]  %s11, 8192, %s802, [#allocation21], 256, 256, 16
        $region56: #{emotion_forward.1} parent=11 // pred_fallthru
          _
        // Predicated region
        $region57: #{emotion_forward.1} parent=11 // pred_check
          %p808 = pneg %p330
        $region58: #{emotion_forward.1} parent=11 // pred_check_branch
          %810 = sbr.rel (%p808) target = $region60
        $region59: #{emotion_forward.1} parent=11 // pred_region
          %s812 = ssub.s32 128, 128
          %813 = vsyncadd [#allocation21], %s812
          %s814 = sshll.u32 [#allocation22], 4
          %s815 = int_to_ptr.vmem [resolvable:$true] %s814
          %820 = dma.hbm_to_vmem [thread:$0]  %s12, 128, %s815, [#allocation21], 64, 64, 4
        $region60: #{emotion_forward.1} parent=11 // pred_fallthru
          _
        // Predicated region
        $region61: #{emotion_forward.1} parent=11 // pred_check
          %p821 = pneg %p351
        $region62: #{emotion_forward.1} parent=11 // pred_check_branch
          %823 = sbr.rel (%p821) target = $region64
        $region63: #{emotion_forward.1} parent=11 // pred_region
          %s825 = ssub.s32 8192, 8192
          %826 = vsyncadd [#allocation24], %s825
          %s827 = sshll.u32 [#allocation23], 4
          %s828 = int_to_ptr.vmem [resolvable:$true] %s827
          %833 = dma.hbm_to_vmem [thread:$0]  %s13, 8192, %s828, [#allocation24], 64, 64, 4
        $region64: #{emotion_forward.1} parent=11 // pred_fallthru
          _
        // Predicated region
        $region65: #{emotion_forward.1} parent=11 // pred_check
          %p834 = pneg %p372
        $region66: #{emotion_forward.1} parent=11 // pred_check_branch
          %836 = sbr.rel (%p834) target = $region68
        $region67: #{emotion_forward.1} parent=11 // pred_region
          %s838 = ssub.s32 32, 32
          %839 = vsyncadd [#allocation24], %s838
          %s840 = sshll.u32 [#allocation25], 4
          %s841 = int_to_ptr.vmem [resolvable:$true] %s840
          %846 = dma.hbm_to_vmem [thread:$0]  %s14, 32, %s841, [#allocation24], 16, 16, 1
        $region68: #{emotion_forward.1} parent=11 // pred_fallthru
          _
        // Predicated region
        $region69: #{emotion_forward.1} parent=11 // pred_check
          %p847 = pneg %p393
        $region70: #{emotion_forward.1} parent=11 // pred_check_branch
          %849 = sbr.rel (%p847) target = $region72
        $region71: #{emotion_forward.1} parent=11 // pred_region
          %s851 = ssub.s32 16, 16
          %852 = vsyncadd [#allocation27], %s851
          %s854 = sshll.u32 [#allocation26], 4
          %s855 = int_to_ptr.vmem [resolvable:$true] %s854
          %857 = dma.hbm_to_vmem [thread:$0]  %s15, 16, %s855, [#allocation27]
        $region72: #{emotion_forward.1} parent=11 // pred_fallthru
          _
        // Predicated region
        $region73: #{emotion_forward.1} parent=11 // pred_check
          %p858 = pneg %p414
        $region74: #{emotion_forward.1} parent=11 // pred_check_branch
          %860 = sbr.rel (%p858) target = $region76
        $region75: #{emotion_forward.1} parent=11 // pred_region
          %s862 = ssub.s32 16, 16
          %863 = vsyncadd [#allocation27], %s862
          %s865 = sshll.u32 [#allocation28], 4
          %s866 = int_to_ptr.vmem [resolvable:$true] %s865
          %868 = dma.hbm_to_vmem [thread:$0]  %s16, 16, %s866, [#allocation27]
        $region76: #{emotion_forward.1} parent=11 // pred_fallthru
          _
        // Predicated region
        $region77: #{emotion_forward.1} parent=11 // pred_check
          %p869 = pneg %p435
        $region78: #{emotion_forward.1} parent=11 // pred_check_branch
          %871 = sbr.rel (%p869) target = $region80
        $region79: #{emotion_forward.1} parent=11 // pred_region
          %s873 = ssub.s32 4096, 4096
          %874 = vsyncadd [#allocation30], %s873
          %s875 = sshll.u32 [#allocation29], 4
          %s876 = int_to_ptr.vmem [resolvable:$true] %s875
          %881 = dma.hbm_to_vmem [thread:$0]  %s17, 4096, %s876, [#allocation30], 256, 256, 16
        $region80: #{emotion_forward.1} parent=11 // pred_fallthru
          _
        // Predicated region
        $region81: #{emotion_forward.1} parent=11 // pred_check
          %p882 = pneg %p456
        $region82: #{emotion_forward.1} parent=11 // pred_check_branch
          %884 = sbr.rel (%p882) target = $region84
        $region83: #{emotion_forward.1} parent=11 // pred_region
          %s886 = ssub.s32 64, 64
          %887 = vsyncadd [#allocation30], %s886
          %s889 = sshll.u32 [#allocation31], 4
          %s890 = int_to_ptr.vmem [resolvable:$true] %s889
          %892 = dma.hbm_to_vmem [thread:$0]  %s18, 64, %s890, [#allocation30]
        $region84: #{emotion_forward.1} parent=11 // pred_fallthru
          _
        // Predicated region
        $region85: #{emotion_forward.1} parent=11 // pred_check
          %p893 = pneg %p477
        $region86: #{emotion_forward.1} parent=11 // pred_check_branch
          %895 = sbr.rel (%p893) target = $region88
        $region87: #{emotion_forward.1} parent=11 // pred_region
          %s897 = ssub.s32 64, 64
          %898 = vsyncadd [#allocation33], %s897
          %s900 = sshll.u32 [#allocation32], 4
          %s901 = int_to_ptr.vmem [resolvable:$true] %s900
          %903 = dma.hbm_to_vmem [thread:$0]  %s19, 64, %s901, [#allocation33]
        $region88: #{emotion_forward.1} parent=11 // pred_fallthru
          _
        // Predicated region
        $region89: #{emotion_forward.1} parent=11 // pred_check
          %p904 = pneg %p498
        $region90: #{emotion_forward.1} parent=11 // pred_check_branch
          %906 = sbr.rel (%p904) target = $region92
        $region91: #{emotion_forward.1} parent=11 // pred_region
          %s908 = ssub.s32 64, 64
          %909 = vsyncadd [#allocation33], %s908
          %s911 = sshll.u32 [#allocation34], 4
          %s912 = int_to_ptr.vmem [resolvable:$true] %s911
          %914 = dma.hbm_to_vmem [thread:$0]  %s20, 64, %s912, [#allocation33]
        $region92: #{emotion_forward.1} parent=11 // pred_fallthru
          _
        // Predicated region
        $region93: #{emotion_forward.1} parent=11 // pred_check
          %p915 = pneg %p519
        $region94: #{emotion_forward.1} parent=11 // pred_check_branch
          %917 = sbr.rel (%p915) target = $region96
        $region95: #{emotion_forward.1} parent=11 // pred_region
          %s919 = ssub.s32 8192, 8192
          %920 = vsyncadd [#allocation36], %s919
          %s921 = sshll.u32 [#allocation35], 4
          %s922 = int_to_ptr.vmem [resolvable:$true] %s921
          %927 = dma.hbm_to_vmem [thread:$0]  %s21, 8192, %s922, [#allocation36], 128, 128, 8
        $region96: #{emotion_forward.1} parent=11 // pred_fallthru
          _
        // Predicated region
        $region97: #{emotion_forward.1} parent=11 // pred_check
          %p928 = pneg %p540
        $region98: #{emotion_forward.1} parent=11 // pred_check_branch
          %930 = sbr.rel (%p928) target = $region100
        $region99: #{emotion_forward.1} parent=11 // pred_region
          %s932 = ssub.s32 32, 32
          %933 = vsyncadd [#allocation36], %s932
          %s935 = sshll.u32 [#allocation37], 4
          %s936 = int_to_ptr.vmem [resolvable:$true] %s935
          %938 = dma.hbm_to_vmem [thread:$0]  %s22, 32, %s936, [#allocation36]
        $region100: #{emotion_forward.1} parent=11 // pred_fallthru
          _
        // Predicated region
        $region101: #{emotion_forward.1} parent=11 // pred_check
          %p939 = pneg %p561
        $region102: #{emotion_forward.1} parent=11 // pred_check_branch
          %941 = sbr.rel (%p939) target = $region104
        $region103: #{emotion_forward.1} parent=11 // pred_region
          %s943 = ssub.s32 32, 32
          %944 = vsyncadd [#allocation39], %s943
          %s946 = sshll.u32 [#allocation38], 4
          %s947 = int_to_ptr.vmem [resolvable:$true] %s946
          %949 = dma.hbm_to_vmem [thread:$0]  %s23, 32, %s947, [#allocation39]
        $region104: #{emotion_forward.1} parent=11 // pred_fallthru
          _
        // Predicated region
        $region105: #{emotion_forward.1} parent=11 // pred_check
          %p950 = pneg %p582
        $region106: #{emotion_forward.1} parent=11 // pred_check_branch
          %952 = sbr.rel (%p950) target = $region108
        $region107: #{emotion_forward.1} parent=11 // pred_region
          %s954 = ssub.s32 32, 32
          %955 = vsyncadd [#allocation39], %s954
          %s957 = sshll.u32 [#allocation40], 4
          %s958 = int_to_ptr.vmem [resolvable:$true] %s957
          %960 = dma.hbm_to_vmem [thread:$0]  %s24, 32, %s958, [#allocation39]
        $region108: #{emotion_forward.1} parent=11 // pred_fallthru
          _
        // Predicated region
        $region109: #{emotion_forward.1} parent=11 // pred_check
          %p961 = pneg %p603
        $region110: #{emotion_forward.1} parent=11 // pred_check_branch
          %963 = sbr.rel (%p961) target = $region112
        $region111: #{emotion_forward.1} parent=11 // pred_region
          %s965 = ssub.s32 2048, 2048
          %966 = vsyncadd [#allocation42], %s965
          %s967 = sshll.u32 [#allocation41], 4
          %s968 = int_to_ptr.vmem [resolvable:$true] %s967
          %973 = dma.hbm_to_vmem [thread:$0]  %s25, 2048, %s968, [#allocation42], 64, 64, 4
        $region112: #{emotion_forward.1} parent=11 // pred_fallthru
          _
        // Predicated region
        $region113: #{emotion_forward.1} parent=11 // pred_check
          %p974 = pneg %p624
        $region114: #{emotion_forward.1} parent=11 // pred_check_branch
          %976 = sbr.rel (%p974) target = $region116
        $region115: #{emotion_forward.1} parent=11 // pred_region
          %s978 = ssub.s32 16, 16
          %979 = vsyncadd [#allocation42], %s978
          %s981 = sshll.u32 [#allocation43], 4
          %s982 = int_to_ptr.vmem [resolvable:$true] %s981
          %984 = dma.hbm_to_vmem [thread:$0]  %s26, 16, %s982, [#allocation42]
        $region116: #{emotion_forward.1} parent=11 // pred_fallthru
          _
      $region12: #{emotion_forward.1} parent=5 // pred_fallthru
        _
      %p985 = scmp.lt.s32.totalorder %s52, 2
      // Predicated region
      $region117: #{emotion_forward.1} parent=5 // pred_check
        %p986 = pneg %p985
      $region118: #{emotion_forward.1} parent=5 // pred_check_branch
        %988 = sbr.rel (%p986) target = $region120
      $region119: #{emotion_forward.1} parent=5 // pred_region
        // Predicated region
        $region121: #{emotion_forward.1} parent=119 // pred_check
          %p989 = pneg %p72
        $region122: #{emotion_forward.1} parent=119 // pred_check_branch
          %991 = sbr.rel (%p989) target = $region124
        $region123: #{emotion_forward.1} parent=119 // pred_region
          %s992 = sand.u32 %s62, 1
          %s993 = scalar_lea.sflag [#allocation3], %s992
          %s994 = sand.u32 %s62, 1
          %s995 = smul.addr %s994, 120
          %s996 = scalar_lea.vmem [#allocation2], %s995
          %s998 = ssub.s32 1920, 1920
          %999 = vsyncadd %s993, %s998
          %s1000 = smul.addr %s52, 30
          %s1001 = smul.addr %s1000, 64
          %s1002 = scalar_lea.hbm %s0, %s1001
          %s1003 = sshll.u32 %s996, 4
          %s1004 = int_to_ptr.vmem [resolvable:$true] %s1003
          %1009 = dma.hbm_to_vmem [thread:$0]  %s1002, 1920, %s1004, %s993, 384, 384, 24
        $region124: #{emotion_forward.1} parent=119 // pred_fallthru
          _
      $region120: #{emotion_forward.1} parent=5 // pred_fallthru
        _
      %p1010 = scmp.le.s32.totalorder 1, %s52
      %p1011 = scmp.lt.s32.totalorder %s52, 3
      %p1012 = pnand %p1010, %p1011
      %p1013 = pneg %p1012
      // Predicated region
      $region125: #{emotion_forward.1} parent=5 // pred_check
        _
      $region126: #{emotion_forward.1} parent=5 // pred_check_branch
        %1015 = sbr.rel (%p1012) target = $region128
      $region127: #{emotion_forward.1} parent=5 // pred_region
        %s1016 = ssub.s32 %s52, 1
        %s1017 = sand.u32 %s65, 1
        %s1018 = scalar_lea.sflag [#allocation3], %s1017
        %s1019 = sand.u32 %s65, 1
        %s1020 = smul.addr %s1019, 120
        %s1021 = scalar_lea.vmem [#allocation2], %s1020
        // Predicated region
        $region129: #{emotion_forward.1} parent=127 // pred_check
          %p1022 = pneg %p78
        $region130: #{emotion_forward.1} parent=127 // pred_check_branch
          %1024 = sbr.rel (%p1022) target = $region132
        $region131: #{emotion_forward.1} parent=127 // pred_region
          %1025 = dma.done %s1018, 1920
        $region132: #{emotion_forward.1} parent=127 // pred_fallthru
          _
        // Predicated region
        $region133: #{emotion_forward.1} parent=127 // pred_check
          %p1026 = pneg %p99
        $region134: #{emotion_forward.1} parent=127 // pred_check_branch
          %1028 = sbr.rel (%p1026) target = $region136
        $region135: #{emotion_forward.1} parent=127 // pred_region
          %1029 = dma.done [#allocation6], 6144
        $region136: #{emotion_forward.1} parent=127 // pred_fallthru
          _
        // Predicated region
        $region137: #{emotion_forward.1} parent=127 // pred_check
          %p1030 = pneg %p120
        $region138: #{emotion_forward.1} parent=127 // pred_check_branch
          %1032 = sbr.rel (%p1030) target = $region140
        $region139: #{emotion_forward.1} parent=127 // pred_region
          %1033 = dma.done [#allocation6], 640
        $region140: #{emotion_forward.1} parent=127 // pred_fallthru
          _
        // Predicated region
        $region141: #{emotion_forward.1} parent=127 // pred_check
          %p1034 = pneg %p141
        $region142: #{emotion_forward.1} parent=127 // pred_check_branch
          %1036 = sbr.rel (%p1034) target = $region144
        $region143: #{emotion_forward.1} parent=127 // pred_region
          %1037 = dma.done [#allocation9], 32
        $region144: #{emotion_forward.1} parent=127 // pred_fallthru
          _
        // Predicated region
        $region145: #{emotion_forward.1} parent=127 // pred_check
          %p1038 = pneg %p162
        $region146: #{emotion_forward.1} parent=127 // pred_check_branch
          %1040 = sbr.rel (%p1038) target = $region148
        $region147: #{emotion_forward.1} parent=127 // pred_region
          %1041 = dma.done [#allocation9], 32
        $region148: #{emotion_forward.1} parent=127 // pred_fallthru
          _
        // Predicated region
        $region149: #{emotion_forward.1} parent=127 // pred_check
          %p1042 = pneg %p183
        $region150: #{emotion_forward.1} parent=127 // pred_check_branch
          %1044 = sbr.rel (%p1042) target = $region152
        $region151: #{emotion_forward.1} parent=127 // pred_region
          %1045 = dma.done [#allocation12], 6144
        $region152: #{emotion_forward.1} parent=127 // pred_fallthru
          _
        // Predicated region
        $region153: #{emotion_forward.1} parent=127 // pred_check
          %p1046 = pneg %p204
        $region154: #{emotion_forward.1} parent=127 // pred_check_branch
          %1048 = sbr.rel (%p1046) target = $region156
        $region155: #{emotion_forward.1} parent=127 // pred_region
          %1049 = dma.done [#allocation12], 96
        $region156: #{emotion_forward.1} parent=127 // pred_fallthru
          _
        // Predicated region
        $region157: #{emotion_forward.1} parent=127 // pred_check
          %p1050 = pneg %p225
        $region158: #{emotion_forward.1} parent=127 // pred_check_branch
          %1052 = sbr.rel (%p1050) target = $region160
        $region159: #{emotion_forward.1} parent=127 // pred_region
          %1053 = dma.done [#allocation15], 2048
        $region160: #{emotion_forward.1} parent=127 // pred_fallthru
          _
        // Predicated region
        $region161: #{emotion_forward.1} parent=127 // pred_check
          %p1054 = pneg %p246
        $region162: #{emotion_forward.1} parent=127 // pred_check_branch
          %1056 = sbr.rel (%p1054) target = $region164
        $region163: #{emotion_forward.1} parent=127 // pred_region
          %1057 = dma.done [#allocation15], 32
        $region164: #{emotion_forward.1} parent=127 // pred_fallthru
          _
        // Predicated region
        $region165: #{emotion_forward.1} parent=127 // pred_check
          %p1058 = pneg %p267
        $region166: #{emotion_forward.1} parent=127 // pred_check_branch
          %1060 = sbr.rel (%p1058) target = $region168
        $region167: #{emotion_forward.1} parent=127 // pred_region
          %1061 = dma.done [#allocation18], 32
        $region168: #{emotion_forward.1} parent=127 // pred_fallthru
          _
        // Predicated region
        $region169: #{emotion_forward.1} parent=127 // pred_check
          %p1062 = pneg %p288
        $region170: #{emotion_forward.1} parent=127 // pred_check_branch
          %1064 = sbr.rel (%p1062) target = $region172
        $region171: #{emotion_forward.1} parent=127 // pred_region
          %1065 = dma.done [#allocation18], 32
        $region172: #{emotion_forward.1} parent=127 // pred_fallthru
          _
        // Predicated region
        $region173: #{emotion_forward.1} parent=127 // pred_check
          %p1066 = pneg %p309
        $region174: #{emotion_forward.1} parent=127 // pred_check_branch
          %1068 = sbr.rel (%p1066) target = $region176
        $region175: #{emotion_forward.1} parent=127 // pred_region
          %1069 = dma.done [#allocation21], 8192
        $region176: #{emotion_forward.1} parent=127 // pred_fallthru
          _
        // Predicated region
        $region177: #{emotion_forward.1} parent=127 // pred_check
          %p1070 = pneg %p330
        $region178: #{emotion_forward.1} parent=127 // pred_check_branch
          %1072 = sbr.rel (%p1070) target = $region180
        $region179: #{emotion_forward.1} parent=127 // pred_region
          %1073 = dma.done [#allocation21], 128
        $region180: #{emotion_forward.1} parent=127 // pred_fallthru
          _
        // Predicated region
        $region181: #{emotion_forward.1} parent=127 // pred_check
          %p1074 = pneg %p351
        $region182: #{emotion_forward.1} parent=127 // pred_check_branch
          %1076 = sbr.rel (%p1074) target = $region184
        $region183: #{emotion_forward.1} parent=127 // pred_region
          %1077 = dma.done [#allocation24], 8192
        $region184: #{emotion_forward.1} parent=127 // pred_fallthru
          _
        // Predicated region
        $region185: #{emotion_forward.1} parent=127 // pred_check
          %p1078 = pneg %p372
        $region186: #{emotion_forward.1} parent=127 // pred_check_branch
          %1080 = sbr.rel (%p1078) target = $region188
        $region187: #{emotion_forward.1} parent=127 // pred_region
          %1081 = dma.done [#allocation24], 32
        $region188: #{emotion_forward.1} parent=127 // pred_fallthru
          _
        // Predicated region
        $region189: #{emotion_forward.1} parent=127 // pred_check
          %p1082 = pneg %p393
        $region190: #{emotion_forward.1} parent=127 // pred_check_branch
          %1084 = sbr.rel (%p1082) target = $region192
        $region191: #{emotion_forward.1} parent=127 // pred_region
          %1085 = dma.done [#allocation27], 16
        $region192: #{emotion_forward.1} parent=127 // pred_fallthru
          _
        // Predicated region
        $region193: #{emotion_forward.1} parent=127 // pred_check
          %p1086 = pneg %p414
        $region194: #{emotion_forward.1} parent=127 // pred_check_branch
          %1088 = sbr.rel (%p1086) target = $region196
        $region195: #{emotion_forward.1} parent=127 // pred_region
          %1089 = dma.done [#allocation27], 16
        $region196: #{emotion_forward.1} parent=127 // pred_fallthru
          _
        // Predicated region
        $region197: #{emotion_forward.1} parent=127 // pred_check
          %p1090 = pneg %p435
        $region198: #{emotion_forward.1} parent=127 // pred_check_branch
          %1092 = sbr.rel (%p1090) target = $region200
        $region199: #{emotion_forward.1} parent=127 // pred_region
          %1093 = dma.done [#allocation30], 4096
        $region200: #{emotion_forward.1} parent=127 // pred_fallthru
          _
        // Predicated region
        $region201: #{emotion_forward.1} parent=127 // pred_check
          %p1094 = pneg %p456
        $region202: #{emotion_forward.1} parent=127 // pred_check_branch
          %1096 = sbr.rel (%p1094) target = $region204
        $region203: #{emotion_forward.1} parent=127 // pred_region
          %1097 = dma.done [#allocation30], 64
        $region204: #{emotion_forward.1} parent=127 // pred_fallthru
          _
        // Predicated region
        $region205: #{emotion_forward.1} parent=127 // pred_check
          %p1098 = pneg %p477
        $region206: #{emotion_forward.1} parent=127 // pred_check_branch
          %1100 = sbr.rel (%p1098) target = $region208
        $region207: #{emotion_forward.1} parent=127 // pred_region
          %1101 = dma.done [#allocation33], 64
        $region208: #{emotion_forward.1} parent=127 // pred_fallthru
          _
        // Predicated region
        $region209: #{emotion_forward.1} parent=127 // pred_check
          %p1102 = pneg %p498
        $region210: #{emotion_forward.1} parent=127 // pred_check_branch
          %1104 = sbr.rel (%p1102) target = $region212
        $region211: #{emotion_forward.1} parent=127 // pred_region
          %1105 = dma.done [#allocation33], 64
        $region212: #{emotion_forward.1} parent=127 // pred_fallthru
          _
        // Predicated region
        $region213: #{emotion_forward.1} parent=127 // pred_check
          %p1106 = pneg %p519
        $region214: #{emotion_forward.1} parent=127 // pred_check_branch
          %1108 = sbr.rel (%p1106) target = $region216
        $region215: #{emotion_forward.1} parent=127 // pred_region
          %1109 = dma.done [#allocation36], 8192
        $region216: #{emotion_forward.1} parent=127 // pred_fallthru
          _
        // Predicated region
        $region217: #{emotion_forward.1} parent=127 // pred_check
          %p1110 = pneg %p540
        $region218: #{emotion_forward.1} parent=127 // pred_check_branch
          %1112 = sbr.rel (%p1110) target = $region220
        $region219: #{emotion_forward.1} parent=127 // pred_region
          %1113 = dma.done [#allocation36], 32
        $region220: #{emotion_forward.1} parent=127 // pred_fallthru
          _
        // Predicated region
        $region221: #{emotion_forward.1} parent=127 // pred_check
          %p1114 = pneg %p561
        $region222: #{emotion_forward.1} parent=127 // pred_check_branch
          %1116 = sbr.rel (%p1114) target = $region224
        $region223: #{emotion_forward.1} parent=127 // pred_region
          %1117 = dma.done [#allocation39], 32
        $region224: #{emotion_forward.1} parent=127 // pred_fallthru
          _
        // Predicated region
        $region225: #{emotion_forward.1} parent=127 // pred_check
          %p1118 = pneg %p582
        $region226: #{emotion_forward.1} parent=127 // pred_check_branch
          %1120 = sbr.rel (%p1118) target = $region228
        $region227: #{emotion_forward.1} parent=127 // pred_region
          %1121 = dma.done [#allocation39], 32
        $region228: #{emotion_forward.1} parent=127 // pred_fallthru
          _
        // Predicated region
        $region229: #{emotion_forward.1} parent=127 // pred_check
          %p1122 = pneg %p603
        $region230: #{emotion_forward.1} parent=127 // pred_check_branch
          %1124 = sbr.rel (%p1122) target = $region232
        $region231: #{emotion_forward.1} parent=127 // pred_region
          %1125 = dma.done [#allocation42], 2048
        $region232: #{emotion_forward.1} parent=127 // pred_fallthru
          _
        // Predicated region
        $region233: #{emotion_forward.1} parent=127 // pred_check
          %p1126 = pneg %p624
        $region234: #{emotion_forward.1} parent=127 // pred_check_branch
          %1128 = sbr.rel (%p1126) target = $region236
        $region235: #{emotion_forward.1} parent=127 // pred_region
          %1129 = dma.done [#allocation42], 16
        $region236: #{emotion_forward.1} parent=127 // pred_fallthru
          _
        %s1130 = sand.u32 %s65, 1
        %s1131 = scalar_lea.sflag [#allocation3], %s1130
        %s1132 = sand.u32 %s65, 1
        %s1133 = smul.addr %s1132, 120
        %s1134 = scalar_lea.vmem [#allocation2], %s1133
        %p1135 = pneg %p78
        %p1136 = pneg %p75
        %p1137 = pneg %p99
        %p1138 = pneg %p96
        %p1139 = pneg %p120
        %p1140 = pneg %p117
        %p1141 = pneg %p141
        %p1142 = pneg %p138
        %p1143 = pneg %p162
        %p1144 = pneg %p159
        %p1145 = pneg %p183
        %p1146 = pneg %p180
        %p1147 = pneg %p204
        %p1148 = pneg %p201
        %p1149 = pneg %p225
        %p1150 = pneg %p222
        %p1151 = pneg %p246
        %p1152 = pneg %p243
        %p1153 = pneg %p267
        %p1154 = pneg %p264
        %p1155 = pneg %p288
        %p1156 = pneg %p285
        %p1157 = pneg %p309
        %p1158 = pneg %p306
        %p1159 = pneg %p330
        %p1160 = pneg %p327
        %p1161 = pneg %p351
        %p1162 = pneg %p348
        %p1163 = pneg %p372
        %p1164 = pneg %p369
        %p1165 = pneg %p393
        %p1166 = pneg %p390
        %p1167 = pneg %p414
        %p1168 = pneg %p411
        %p1169 = pneg %p435
        %p1170 = pneg %p432
        %p1171 = pneg %p456
        %p1172 = pneg %p453
        %p1173 = pneg %p477
        %p1174 = pneg %p474
        %p1175 = pneg %p498
        %p1176 = pneg %p495
        %p1177 = pneg %p519
        %p1178 = pneg %p516
        %p1179 = pneg %p540
        %p1180 = pneg %p537
        %p1181 = pneg %p561
        %p1182 = pneg %p558
        %p1183 = pneg %p582
        %p1184 = pneg %p579
        %p1185 = pneg %p603
        %p1186 = pneg %p600
        %p1187 = pneg %p624
        %p1188 = pneg %p621
        %p1189 = pneg %p650
        %p1190 = pneg %p647
        %s1191 = sand.u32 %s637, 1
        %s1192 = scalar_lea.sflag [#allocation4], %s1191
        %s1193 = sand.u32 %s637, 1
        %s1194 = scalar_lea.vmem [#allocation44], %s1193
        %v1196 = vlaneseq
        %v1197 = vshrl.u32 %v1196, 7
        %v1198 = vadd.s32 %v1197, 8
        %v1199 = vadd.s32 %v1197, 16
        %v1200 = vadd.s32 %v1197, 24
        %v1201 = vadd.s32 %v1197, 32
        %v1202 = vlaneseq
        %v1203 = vand.u32 %v1202, 127
        %v1204 = vadd.s32 %v1203, 1
        %vm1205 = vcmp.eq.s32.totalorder %v1197, %v1204
        %vm1206 = vcmp.eq.s32.totalorder %v1198, %v1204
        %vm1207 = vcmp.eq.s32.totalorder %v1199, %v1204
        %vm1208 = vcmp.eq.s32.totalorder %v1200, %v1204
        %vm1209 = vcmp.eq.s32.totalorder %v1201, %v1204
        %v1210 = vsel %vm1205, 1, 0
        %v1211 = vsel %vm1206, 1, 0
        %v1212 = vsel %vm1207, 1, 0
        %v1213 = vsel %vm1208, 1, 0
        %v1214 = vsel %vm1209, 1, 0
        %v1215 = vcvt.s32.f32 %v1210
        %v1216 = vcvt.s32.f32 %v1211
        %v1217 = vcvt.s32.f32 %v1212
        %v1218 = vcvt.s32.f32 %v1213
        %v1219 = vcvt.s32.f32 %v1214
        %v1220 = vpack.c.bf16 %v1216, %v1215
        %v1221 = vpack.c.bf16 %v1218, %v1217
        %v1222 = vpack.c.bf16 %v1219, %v1219
        %v1223 = vld [vmem:[%s1021] sm:$0xff]
        %v1224 = vld [vmem:[%s1021 + $0x8] sm:$0xff]
        %v1225 = vld [vmem:[%s1021 + $0x10] sm:$0xff]
        %v1226 = vld [vmem:[%s1021 + $0x18] sm:$0xff]
        %v1227 = vld [vmem:[%s1021 + $0x20] sm:$0xff]
        %v1228 = vld [vmem:[%s1021 + $0x28] sm:$0xff]
        %v1229 = vld [vmem:[%s1021 + $0x30] sm:$0xff]
        %v1230 = vld [vmem:[%s1021 + $0x38] sm:$0xff]
        %v1231 = vld [vmem:[%s1021 + $0x40] sm:$0xff]
        %v1232 = vld [vmem:[%s1021 + $0x48] sm:$0xff]
        %v1233 = vld [vmem:[%s1021 + $0x50] sm:$0xff]
        %v1234 = vld [vmem:[%s1021 + $0x58] sm:$0xff]
        %v1235 = vld [vmem:[%s1021 + $0x60] sm:$0x33]
        %v1236 = vld [vmem:[%s1021 + $0x68] sm:$0x33]
        %v1237 = vld [vmem:[%s1021 + $0x70] sm:$0x33]
        %v1253 = vunpack.c.l.b16 %v1223
        %v1254 = vunpack.c.h.b16 %v1223
        %v1255 = vunpack.c.l.b16 %v1224
        %v1256 = vunpack.c.h.b16 %v1224
        %v1257 = vunpack.c.l.b16 %v1225
        %v1258 = vunpack.c.h.b16 %v1225
        %v1259 = vunpack.c.l.b16 %v1226
        %v1260 = vunpack.c.h.b16 %v1226
        %v1261 = vunpack.c.l.b16 %v1227
        %v1262 = vunpack.c.h.b16 %v1227
        %v1263 = vunpack.c.l.b16 %v1228
        %v1264 = vunpack.c.h.b16 %v1228
        %v1265 = vunpack.c.l.b16 %v1229
        %v1266 = vunpack.c.h.b16 %v1229
        %v1267 = vunpack.c.l.b16 %v1230
        %v1268 = vunpack.c.h.b16 %v1230
        %v1269 = vunpack.c.l.b16 %v1231
        %v1270 = vunpack.c.h.b16 %v1231
        %v1271 = vunpack.c.l.b16 %v1232
        %v1272 = vunpack.c.h.b16 %v1232
        %v1273 = vunpack.c.l.b16 %v1233
        %v1274 = vunpack.c.h.b16 %v1233
        %v1275 = vunpack.c.l.b16 %v1234
        %v1276 = vunpack.c.h.b16 %v1234
        %v1277 = vunpack.c.l.b16 %v1235
        %v1278 = vunpack.c.h.b16 %v1235
        %v1279 = vunpack.c.l.b16 %v1236
        %v1280 = vunpack.c.h.b16 %v1236
        %v1281 = vunpack.c.l.b16 %v1237
        %v1282 = vunpack.c.h.b16 %v1237
        %v1283 = vpack.c.b16 %v1259, %v1253
        %v1284 = vpack.c.b16 %v1260, %v1254
        %v1285 = vpack.c.b16 %v1261, %v1255
        %v1286 = vpack.c.b16 %v1262, %v1256
        %v1287 = vpack.c.b16 %v1263, %v1257
        %v1288 = vpack.c.b16 %v1264, %v1258
        %v1289 = vpack.c.b16 %v1271, %v1265
        %v1290 = vpack.c.b16 %v1272, %v1266
        %v1291 = vpack.c.b16 %v1273, %v1267
        %v1292 = vpack.c.b16 %v1274, %v1268
        %v1293 = vpack.c.b16 %v1275, %v1269
        %v1294 = vpack.c.b16 %v1276, %v1270
        %v1295 = vpack.c.b16 %v1277, %v1277
        %v1296 = vpack.c.b16 %v1278, %v1278
        %v1297 = vpack.c.b16 %v1279, %v1279
        %v1298 = vpack.c.b16 %v1280, %v1280
        %v1299 = vpack.c.b16 %v1281, %v1281
        %v1300 = vpack.c.b16 %v1282, %v1282
        %vm1313 = vcmask 293888
        %v1315 = vsel %vm1313, %v1220, 0
        %v1318 = vsel %vm1313, %v1221, 0
        %v1321 = vsel %vm1313, %v1222, 0
        %vm1323 = vcmask 1041408
        %v1325 = vsel %vm1323, %v1295, 0
        %v1328 = vsel %vm1323, %v1296, 0
        %v1331 = vsel %vm1323, %v1297, 0
        %v1334 = vsel %vm1323, %v1298, 0
        %v1337 = vsel %vm1323, %v1299, 0
        %v1340 = vsel %vm1323, %v1300, 0
        %1342 = vmatprep.subr.bf16.mxu0 %v1284
        %1343 = vmatpush1.bf16.msra.mxu0 %v1283
        %1344 = vmatprep.subr.bf16.mxu0 %v1290
        %1345 = vmatpush1.bf16.msra.mxu0 %v1289
        %1346 = vmatprep.subr.bf16.mxu0 %v1328
        %1347 = vmatpush1.bf16.msra.mxu0 %v1325
        %1348 = vmatprep.subr.bf16.mxu0 0
        %1349 = vmatpush1.bf16.msra.mxu0 0
        %1350 = vmatprep.subr.bf16.mxu0 0
        %1351 = vmatpush1.bf16.msra.mxu0 0
        %1352 = vmatprep.subr.bf16.mxu0 0
        %1353 = vmatpush1.bf16.msra.mxu0 0
        %1354 = vmatprep.subr.bf16.mxu0 0
        %1355 = vmatpush1.bf16.msra.mxu0 0
        %1356 = vmatprep.subr.bf16.mxu0 0
        %1357 = vmatpush1.bf16.msra.mxu0 0
        %1358 = vmatprep.subr.bf16.mxu0 0
        %1359 = vmatpush1.bf16.msra.mxu0 0
        %1360 = vmatprep.subr.bf16.mxu0 0
        %1361 = vmatpush1.bf16.msra.mxu0 0
        %1362 = vmatprep.subr.bf16.mxu0 0
        %1363 = vmatpush1.bf16.msra.mxu0 0
        %1364 = vmatprep.subr.bf16.mxu0 0
        %1365 = vmatpush1.bf16.msra.mxu0 0
        %1366 = vmatprep.subr.bf16.mxu0 0
        %1367 = vmatpush1.bf16.msra.mxu0 0
        %1368 = vmatprep.subr.bf16.mxu0 0
        %1369 = vmatpush1.bf16.msra.mxu0 0
        %1370 = vmatprep.subr.bf16.mxu0 0
        %1371 = vmatpush1.bf16.msra.mxu0 0
        %1372 = vmatprep.subr.bf16.mxu0 0
        %1373 = vmatpush1.bf16.msra.mxu0 0
        %1374 = vmatprep.mubr.bf16.mxu0 0
        %1375 = vmatmul.mubr.bf16.gmra.mrb[0].mxu0 %v1315
        %v1376 = vpop.f32.mrb[0].mxu0
        %v1377 = vadd.f32 0.0, %v1376
        %v1378 = vpop.f32.mrb[0].mxu0
        %v1379 = vadd.f32 0.0, %v1378
        %v1380 = vpop.f32.mrb[0].mxu0
        %v1381 = vadd.f32 0.0, %v1380
        %v1382 = vpop.f32.mrb[0].mxu0
        %v1383 = vadd.f32 0.0, %v1382
        %1384 = vmatprep.mubr.bf16.mxu0 0
        %1385 = vmatmul.mubr.bf16.gmra.mrb[0].mxu0 %v1318
        %v1386 = vpop.f32.mrb[0].mxu0
        %v1387 = vadd.f32 0.0, %v1386
        %v1388 = vpop.f32.mrb[0].mxu0
        %v1389 = vadd.f32 0.0, %v1388
        %v1390 = vpop.f32.mrb[0].mxu0
        %v1391 = vadd.f32 0.0, %v1390
        %v1392 = vpop.f32.mrb[0].mxu0
        %v1393 = vadd.f32 0.0, %v1392
        %1394 = vmatprep.mubr.bf16.mxu0 0
        %1395 = vmatmul.mubr.bf16.gmra.mrb[0].mxu0 %v1321
        %v1396 = vpop.f32.mrb[0].mxu0
        %v1397 = vadd.f32 0.0, %v1396
        %v1398 = vpop.f32.mrb[0].mxu0
        %v1399 = vadd.f32 0.0, %v1398
        %v1400 = vpop.f32.mrb[0].mxu0
        %v1401 = vpop.f32.mrb[0].mxu0
        %1402 = vdwg.mxu0
        %1403 = vmatprep.subr.bf16.mxu0 %v1286
        %1404 = vmatpush1.bf16.msra.mxu0 %v1285
        %1405 = vmatprep.subr.bf16.mxu0 %v1292
        %1406 = vmatpush1.bf16.msra.mxu0 %v1291
        %1407 = vmatprep.subr.bf16.mxu0 %v1334
        %1408 = vmatpush1.bf16.msra.mxu0 %v1331
        %1409 = vmatprep.subr.bf16.mxu0 0
        %1410 = vmatpush1.bf16.msra.mxu0 0
        %1411 = vmatprep.subr.bf16.mxu0 0
        %1412 = vmatpush1.bf16.msra.mxu0 0
        %1413 = vmatprep.subr.bf16.mxu0 0
        %1414 = vmatpush1.bf16.msra.mxu0 0
        %1415 = vmatprep.subr.bf16.mxu0 0
        %1416 = vmatpush1.bf16.msra.mxu0 0
        %1417 = vmatprep.subr.bf16.mxu0 0
        %1418 = vmatpush1.bf16.msra.mxu0 0
        %1419 = vmatprep.subr.bf16.mxu0 0
        %1420 = vmatpush1.bf16.msra.mxu0 0
        %1421 = vmatprep.subr.bf16.mxu0 0
        %1422 = vmatpush1.bf16.msra.mxu0 0
        %1423 = vmatprep.subr.bf16.mxu0 0
        %1424 = vmatpush1.bf16.msra.mxu0 0
        %1425 = vmatprep.subr.bf16.mxu0 0
        %1426 = vmatpush1.bf16.msra.mxu0 0
        %1427 = vmatprep.subr.bf16.mxu0 0
        %1428 = vmatpush1.bf16.msra.mxu0 0
        %1429 = vmatprep.subr.bf16.mxu0 0
        %1430 = vmatpush1.bf16.msra.mxu0 0
        %1431 = vmatprep.subr.bf16.mxu0 0
        %1432 = vmatpush1.bf16.msra.mxu0 0
        %1433 = vmatprep.subr.bf16.mxu0 0
        %1434 = vmatpush1.bf16.msra.mxu0 0
        %1435 = vmatprep.mubr.bf16.mxu0 0
        %1436 = vmatmul.mubr.bf16.gmra.mrb[0].mxu0 %v1315
        %v1437 = vpop.f32.mrb[0].mxu0
        %v1438 = vadd.f32 0.0, %v1437
        %v1439 = vpop.f32.mrb[0].mxu0
        %v1440 = vadd.f32 0.0, %v1439
        %v1441 = vpop.f32.mrb[0].mxu0
        %v1442 = vadd.f32 0.0, %v1441
        %v1443 = vpop.f32.mrb[0].mxu0
        %v1444 = vadd.f32 0.0, %v1443
        %1445 = vmatprep.mubr.bf16.mxu0 0
        %1446 = vmatmul.mubr.bf16.gmra.mrb[0].mxu0 %v1318
        %v1447 = vpop.f32.mrb[0].mxu0
        %v1448 = vadd.f32 0.0, %v1447
        %v1449 = vpop.f32.mrb[0].mxu0
        %v1450 = vadd.f32 0.0, %v1449
        %v1451 = vpop.f32.mrb[0].mxu0
        %v1452 = vadd.f32 0.0, %v1451
        %v1453 = vpop.f32.mrb[0].mxu0
        %v1454 = vadd.f32 0.0, %v1453
        %1455 = vmatprep.mubr.bf16.mxu0 0
        %1456 = vmatmul.mubr.bf16.gmra.mrb[0].mxu0 %v1321
        %v1457 = vpop.f32.mrb[0].mxu0
        %v1458 = vadd.f32 0.0, %v1457
        %v1459 = vpop.f32.mrb[0].mxu0
        %v1460 = vadd.f32 0.0, %v1459
        %v1461 = vpop.f32.mrb[0].mxu0
        %v1462 = vpop.f32.mrb[0].mxu0
        %1463 = vdwg.mxu0
        %1464 = vmatprep.subr.bf16.mxu0 %v1288
        %1465 = vmatpush1.bf16.msra.mxu0 %v1287
        %1466 = vmatprep.subr.bf16.mxu0 %v1294
        %1467 = vmatpush1.bf16.msra.mxu0 %v1293
        %1468 = vmatprep.subr.bf16.mxu0 %v1340
        %1469 = vmatpush1.bf16.msra.mxu0 %v1337
        %1470 = vmatprep.subr.bf16.mxu0 0
        %1471 = vmatpush1.bf16.msra.mxu0 0
        %1472 = vmatprep.subr.bf16.mxu0 0
        %1473 = vmatpush1.bf16.msra.mxu0 0
        %1474 = vmatprep.subr.bf16.mxu0 0
        %1475 = vmatpush1.bf16.msra.mxu0 0
        %1476 = vmatprep.subr.bf16.mxu0 0
        %1477 = vmatpush1.bf16.msra.mxu0 0
        %1478 = vmatprep.subr.bf16.mxu0 0
        %1479 = vmatpush1.bf16.msra.mxu0 0
        %1480 = vmatprep.subr.bf16.mxu0 0
        %1481 = vmatpush1.bf16.msra.mxu0 0
        %1482 = vmatprep.subr.bf16.mxu0 0
        %1483 = vmatpush1.bf16.msra.mxu0 0
        %1484 = vmatprep.subr.bf16.mxu0 0
        %1485 = vmatpush1.bf16.msra.mxu0 0
        %1486 = vmatprep.subr.bf16.mxu0 0
        %1487 = vmatpush1.bf16.msra.mxu0 0
        %1488 = vmatprep.subr.bf16.mxu0 0
        %1489 = vmatpush1.bf16.msra.mxu0 0
        %1490 = vmatprep.subr.bf16.mxu0 0
        %1491 = vmatpush1.bf16.msra.mxu0 0
        %1492 = vmatprep.subr.bf16.mxu0 0
        %1493 = vmatpush1.bf16.msra.mxu0 0
        %1494 = vmatprep.subr.bf16.mxu0 0
        %1495 = vmatpush1.bf16.msra.mxu0 0
        %1496 = vmatprep.mubr.bf16.mxu0 0
        %1497 = vmatmul.mubr.bf16.gmra.mrb[0].mxu0 %v1315
        %v1498 = vpop.f32.mrb[0].mxu0
        %v1499 = vadd.f32 0.0, %v1498
        %v1500 = vpop.f32.mrb[0].mxu0
        %v1501 = vadd.f32 0.0, %v1500
        %v1502 = vpop.f32.mrb[0].mxu0
        %v1503 = vadd.f32 0.0, %v1502
        %v1504 = vpop.f32.mrb[0].mxu0
        %v1505 = vadd.f32 0.0, %v1504
        %1506 = vmatprep.mubr.bf16.mxu0 0
        %1507 = vmatmul.mubr.bf16.gmra.mrb[0].mxu0 %v1318
        %v1508 = vpop.f32.mrb[0].mxu0
        %v1509 = vadd.f32 0.0, %v1508
        %v1510 = vpop.f32.mrb[0].mxu0
        %v1511 = vadd.f32 0.0, %v1510
        %v1512 = vpop.f32.mrb[0].mxu0
        %v1513 = vadd.f32 0.0, %v1512
        %v1514 = vpop.f32.mrb[0].mxu0
        %v1515 = vadd.f32 0.0, %v1514
        %1516 = vmatprep.mubr.bf16.mxu0 0
        %1517 = vmatmul.mubr.bf16.gmra.mrb[0].mxu0 %v1321
        %v1518 = vpop.f32.mrb[0].mxu0
        %v1519 = vadd.f32 0.0, %v1518
        %v1520 = vpop.f32.mrb[0].mxu0
        %v1521 = vadd.f32 0.0, %v1520
        %v1522 = vpop.f32.mrb[0].mxu0
        %v1523 = vpop.f32.mrb[0].mxu0
        %1524 = vdwg.mxu0
        %v1525 = vpack.c.bf16 %v1381, %v1377
        %v1526 = vpack.c.bf16 %v1383, %v1379
        %v1527 = vpack.c.bf16 %v1442, %v1438
        %v1528 = vpack.c.bf16 %v1444, %v1440
        %v1529 = vpack.c.bf16 %v1503, %v1499
        %v1530 = vpack.c.bf16 %v1505, %v1501
        %v1531 = vpack.c.bf16 %v1391, %v1387
        %v1532 = vpack.c.bf16 %v1393, %v1389
        %v1533 = vpack.c.bf16 %v1452, %v1448
        %v1534 = vpack.c.bf16 %v1454, %v1450
        %v1535 = vpack.c.bf16 %v1513, %v1509
        %v1536 = vpack.c.bf16 %v1515, %v1511
        %v1537 = vpack.c.bf16 %v1397, %v1397
        %v1538 = vpack.c.bf16 %v1399, %v1399
        %v1539 = vpack.c.bf16 %v1458, %v1458
        %v1540 = vpack.c.bf16 %v1460, %v1460
        %v1541 = vpack.c.bf16 %v1519, %v1519
        %v1542 = vpack.c.bf16 %v1521, %v1521
        %v1543 = vld [vmem:[#allocation5] sm:$0xf]
        %v1544 = vld [vmem:[#allocation5 + $0x4] sm:$0xf]
        %v1545 = vld [vmem:[#allocation5 + $0x8] sm:$0xf]
        %v1546 = vld [vmem:[#allocation5 + $0xc] sm:$0xf]
        %v1547 = vld [vmem:[#allocation5 + $0x10] sm:$0xf]
        %v1548 = vld [vmem:[#allocation5 + $0x14] sm:$0xf]
        %v1549 = vld [vmem:[#allocation5 + $0x18] sm:$0xf]
        %v1550 = vld [vmem:[#allocation5 + $0x1c] sm:$0xf]
        %v1551 = vld [vmem:[#allocation5 + $0x20] sm:$0xf]
        %v1552 = vld [vmem:[#allocation5 + $0x24] sm:$0xf]
        %v1553 = vld [vmem:[#allocation5 + $0x28] sm:$0xf]
        %v1554 = vld [vmem:[#allocation5 + $0x2c] sm:$0xf]
        %v1555 = vld [vmem:[#allocation5 + $0x30] sm:$0xf]
        %v1556 = vld [vmem:[#allocation5 + $0x34] sm:$0xf]
        %v1557 = vld [vmem:[#allocation5 + $0x38] sm:$0xf]
        %v1558 = vld [vmem:[#allocation5 + $0x3c] sm:$0xf]
        %v1559 = vld [vmem:[#allocation5 + $0x40] sm:$0xf]
        %v1560 = vld [vmem:[#allocation5 + $0x44] sm:$0xf]
        %v1561 = vld [vmem:[#allocation5 + $0x48] sm:$0xf]
        %v1562 = vld [vmem:[#allocation5 + $0x4c] sm:$0xf]
        %v1563 = vld [vmem:[#allocation5 + $0x50] sm:$0xf]
        %v1564 = vld [vmem:[#allocation5 + $0x54] sm:$0xf]
        %v1565 = vld [vmem:[#allocation5 + $0x58] sm:$0xf]
        %v1566 = vld [vmem:[#allocation5 + $0x5c] sm:$0xf]
        %v1567 = vld [vmem:[#allocation5 + $0x60] sm:$0xf]
        %v1568 = vld [vmem:[#allocation5 + $0x64] sm:$0xf]
        %v1569 = vld [vmem:[#allocation5 + $0x68] sm:$0xf]
        %v1570 = vld [vmem:[#allocation5 + $0x6c] sm:$0xf]
        %v1571 = vld [vmem:[#allocation5 + $0x70] sm:$0xf]
        %v1572 = vld [vmem:[#allocation5 + $0x74] sm:$0xf]
        %v1573 = vld [vmem:[#allocation5 + $0x78] sm:$0xf]
        %v1574 = vld [vmem:[#allocation5 + $0x7c] sm:$0xf]
        %v1575 = vld [vmem:[#allocation5 + $0x80] sm:$0xf]
        %v1576 = vld [vmem:[#allocation5 + $0x84] sm:$0xf]
        %v1577 = vld [vmem:[#allocation5 + $0x88] sm:$0xf]
        %v1578 = vld [vmem:[#allocation5 + $0x8c] sm:$0xf]
        %v1579 = vld [vmem:[#allocation5 + $0x90] sm:$0xf]
        %v1580 = vld [vmem:[#allocation5 + $0x94] sm:$0xf]
        %v1581 = vld [vmem:[#allocation5 + $0x98] sm:$0xf]
        %v1582 = vld [vmem:[#allocation5 + $0x9c] sm:$0xf]
        %v1583 = vld [vmem:[#allocation5 + $0xa0] sm:$0xf]
        %v1584 = vld [vmem:[#allocation5 + $0xa4] sm:$0xf]
        %v1585 = vld [vmem:[#allocation5 + $0xa8] sm:$0xf]
        %v1586 = vld [vmem:[#allocation5 + $0xac] sm:$0xf]
        %v1587 = vld [vmem:[#allocation5 + $0xb0] sm:$0xf]
        %v1588 = vld [vmem:[#allocation5 + $0xb4] sm:$0xf]
        %v1589 = vld [vmem:[#allocation5 + $0xb8] sm:$0xf]
        %v1590 = vld [vmem:[#allocation5 + $0xbc] sm:$0xf]
        %v1591 = vld [vmem:[#allocation5 + $0xc0] sm:$0xf]
        %v1592 = vld [vmem:[#allocation5 + $0xc4] sm:$0xf]
        %v1593 = vld [vmem:[#allocation5 + $0xc8] sm:$0xf]
        %v1594 = vld [vmem:[#allocation5 + $0xcc] sm:$0xf]
        %v1595 = vld [vmem:[#allocation5 + $0xd0] sm:$0xf]
        %v1596 = vld [vmem:[#allocation5 + $0xd4] sm:$0xf]
        %v1597 = vld [vmem:[#allocation5 + $0xd8] sm:$0xf]
        %v1598 = vld [vmem:[#allocation5 + $0xdc] sm:$0xf]
        %v1599 = vld [vmem:[#allocation5 + $0xe0] sm:$0xf]
        %v1600 = vld [vmem:[#allocation5 + $0xe4] sm:$0xf]
        %v1601 = vld [vmem:[#allocation5 + $0xe8] sm:$0xf]
        %v1602 = vld [vmem:[#allocation5 + $0xec] sm:$0xf]
        %v1603 = vld [vmem:[#allocation5 + $0xf0] sm:$0xf]
        %v1604 = vld [vmem:[#allocation5 + $0xf4] sm:$0xf]
        %v1605 = vld [vmem:[#allocation5 + $0xf8] sm:$0xf]
        %v1606 = vld [vmem:[#allocation5 + $0xfc] sm:$0xf]
        %v1607 = vld [vmem:[#allocation5 + $0x100] sm:$0xf]
        %v1608 = vld [vmem:[#allocation5 + $0x104] sm:$0xf]
        %v1609 = vld [vmem:[#allocation5 + $0x108] sm:$0xf]
        %v1610 = vld [vmem:[#allocation5 + $0x10c] sm:$0xf]
        %v1611 = vld [vmem:[#allocation5 + $0x110] sm:$0xf]
        %v1612 = vld [vmem:[#allocation5 + $0x114] sm:$0xf]
        %v1613 = vld [vmem:[#allocation5 + $0x118] sm:$0xf]
        %v1614 = vld [vmem:[#allocation5 + $0x11c] sm:$0xf]
        %v1615 = vld [vmem:[#allocation5 + $0x120] sm:$0xf]
        %v1616 = vld [vmem:[#allocation5 + $0x124] sm:$0xf]
        %v1617 = vld [vmem:[#allocation5 + $0x128] sm:$0xf]
        %v1618 = vld [vmem:[#allocation5 + $0x12c] sm:$0xf]
        %v1619 = vld [vmem:[#allocation5 + $0x130] sm:$0xf]
        %v1620 = vld [vmem:[#allocation5 + $0x134] sm:$0xf]
        %v1621 = vld [vmem:[#allocation5 + $0x138] sm:$0xf]
        %v1622 = vld [vmem:[#allocation5 + $0x13c] sm:$0xf]
        %v1623 = vld [vmem:[#allocation5 + $0x140] sm:$0xf]
        %v1624 = vld [vmem:[#allocation5 + $0x144] sm:$0xf]
        %v1625 = vld [vmem:[#allocation5 + $0x148] sm:$0xf]
        %v1626 = vld [vmem:[#allocation5 + $0x14c] sm:$0xf]
        %v1627 = vld [vmem:[#allocation5 + $0x150] sm:$0xf]
        %v1628 = vld [vmem:[#allocation5 + $0x154] sm:$0xf]
        %v1629 = vld [vmem:[#allocation5 + $0x158] sm:$0xf]
        %v1630 = vld [vmem:[#allocation5 + $0x15c] sm:$0xf]
        %v1631 = vld [vmem:[#allocation5 + $0x160] sm:$0xf]
        %v1632 = vld [vmem:[#allocation5 + $0x164] sm:$0xf]
        %v1633 = vld [vmem:[#allocation5 + $0x168] sm:$0xf]
        %v1634 = vld [vmem:[#allocation5 + $0x16c] sm:$0xf]
        %v1635 = vld [vmem:[#allocation5 + $0x170] sm:$0xf]
        %v1636 = vld [vmem:[#allocation5 + $0x174] sm:$0xf]
        %v1637 = vld [vmem:[#allocation5 + $0x178] sm:$0xf]
        %v1638 = vld [vmem:[#allocation5 + $0x17c] sm:$0xf]
        %v1735 = vunpack.c.l.b16 %v1543
        %v1736 = vunpack.c.l.b16 %v1544
        %v1737 = vunpack.c.l.b16 %v1545
        %v1738 = vunpack.c.l.b16 %v1546
        %v1739 = vunpack.c.l.b16 %v1547
        %v1740 = vunpack.c.l.b16 %v1548
        %v1741 = vunpack.c.l.b16 %v1549
        %v1742 = vunpack.c.l.b16 %v1550
        %v1743 = vunpack.c.l.b16 %v1551
        %v1744 = vunpack.c.l.b16 %v1552
        %v1745 = vunpack.c.l.b16 %v1553
        %v1746 = vunpack.c.l.b16 %v1554
        %v1747 = vunpack.c.l.b16 %v1555
        %v1748 = vunpack.c.l.b16 %v1556
        %v1749 = vunpack.c.l.b16 %v1557
        %v1750 = vunpack.c.l.b16 %v1558
        %v1751 = vunpack.c.l.b16 %v1559
        %v1752 = vunpack.c.l.b16 %v1560
        %v1753 = vunpack.c.l.b16 %v1561
        %v1754 = vunpack.c.l.b16 %v1562
        %v1755 = vunpack.c.l.b16 %v1563
        %v1756 = vunpack.c.l.b16 %v1564
        %v1757 = vunpack.c.l.b16 %v1565
        %v1758 = vunpack.c.l.b16 %v1566
        %v1759 = vunpack.c.l.b16 %v1567
        %v1760 = vunpack.c.l.b16 %v1568
        %v1761 = vunpack.c.l.b16 %v1569
        %v1762 = vunpack.c.l.b16 %v1570
        %v1763 = vunpack.c.l.b16 %v1571
        %v1764 = vunpack.c.l.b16 %v1572
        %v1765 = vunpack.c.l.b16 %v1573
        %v1766 = vunpack.c.l.b16 %v1574
        %v1767 = vunpack.c.l.b16 %v1575
        %v1768 = vunpack.c.l.b16 %v1576
        %v1769 = vunpack.c.l.b16 %v1577
        %v1770 = vunpack.c.l.b16 %v1578
        %v1771 = vunpack.c.l.b16 %v1579
        %v1772 = vunpack.c.l.b16 %v1580
        %v1773 = vunpack.c.l.b16 %v1581
        %v1774 = vunpack.c.l.b16 %v1582
        %v1775 = vunpack.c.l.b16 %v1583
        %v1776 = vunpack.c.l.b16 %v1584
        %v1777 = vunpack.c.l.b16 %v1585
        %v1778 = vunpack.c.l.b16 %v1586
        %v1779 = vunpack.c.l.b16 %v1587
        %v1780 = vunpack.c.l.b16 %v1588
        %v1781 = vunpack.c.l.b16 %v1589
        %v1782 = vunpack.c.l.b16 %v1590
        %v1783 = vunpack.c.l.b16 %v1591
        %v1784 = vunpack.c.l.b16 %v1592
        %v1785 = vunpack.c.l.b16 %v1593
        %v1786 = vunpack.c.l.b16 %v1594
        %v1787 = vunpack.c.l.b16 %v1595
        %v1788 = vunpack.c.l.b16 %v1596
        %v1789 = vunpack.c.l.b16 %v1597
        %v1790 = vunpack.c.l.b16 %v1598
        %v1791 = vunpack.c.l.b16 %v1599
        %v1792 = vunpack.c.l.b16 %v1600
        %v1793 = vunpack.c.l.b16 %v1601
        %v1794 = vunpack.c.l.b16 %v1602
        %v1795 = vunpack.c.l.b16 %v1603
        %v1796 = vunpack.c.l.b16 %v1604
        %v1797 = vunpack.c.l.b16 %v1605
        %v1798 = vunpack.c.l.b16 %v1606
        %v1799 = vunpack.c.l.b16 %v1607
        %v1800 = vunpack.c.l.b16 %v1608
        %v1801 = vunpack.c.l.b16 %v1609
        %v1802 = vunpack.c.l.b16 %v1610
        %v1803 = vunpack.c.l.b16 %v1611
        %v1804 = vunpack.c.l.b16 %v1612
        %v1805 = vunpack.c.l.b16 %v1613
        %v1806 = vunpack.c.l.b16 %v1614
        %v1807 = vunpack.c.l.b16 %v1615
        %v1808 = vunpack.c.l.b16 %v1616
        %v1809 = vunpack.c.l.b16 %v1617
        %v1810 = vunpack.c.l.b16 %v1618
        %v1811 = vunpack.c.l.b16 %v1619
        %v1812 = vunpack.c.l.b16 %v1620
        %v1813 = vunpack.c.l.b16 %v1621
        %v1814 = vunpack.c.l.b16 %v1622
        %v1815 = vunpack.c.l.b16 %v1623
        %v1816 = vunpack.c.l.b16 %v1624
        %v1817 = vunpack.c.l.b16 %v1625
        %v1818 = vunpack.c.l.b16 %v1626
        %v1819 = vunpack.c.l.b16 %v1627
        %v1820 = vunpack.c.l.b16 %v1628
        %v1821 = vunpack.c.l.b16 %v1629
        %v1822 = vunpack.c.l.b16 %v1630
        %v1823 = vunpack.c.l.b16 %v1631
        %v1824 = vunpack.c.l.b16 %v1632
        %v1825 = vunpack.c.l.b16 %v1633
        %v1826 = vunpack.c.l.b16 %v1634
        %v1827 = vunpack.c.l.b16 %v1635
        %v1828 = vunpack.c.l.b16 %v1636
        %v1829 = vunpack.c.l.b16 %v1637
        %v1830 = vunpack.c.l.b16 %v1638
        %v1831 = vpack.c.b16 %v1736, %v1735
        %v1832 = vpack.c.b16 %v1738, %v1737
        %v1833 = vpack.c.b16 %v1740, %v1739
        %v1834 = vpack.c.b16 %v1742, %v1741
        %v1835 = vpack.c.b16 %v1744, %v1743
        %v1836 = vpack.c.b16 %v1746, %v1745
        %v1837 = vpack.c.b16 %v1748, %v1747
        %v1838 = vpack.c.b16 %v1750, %v1749
        %v1839 = vpack.c.b16 %v1752, %v1751
        %v1840 = vpack.c.b16 %v1754, %v1753
        %v1841 = vpack.c.b16 %v1756, %v1755
        %v1842 = vpack.c.b16 %v1758, %v1757
        %v1843 = vpack.c.b16 %v1760, %v1759
        %v1844 = vpack.c.b16 %v1762, %v1761
        %v1845 = vpack.c.b16 %v1764, %v1763
        %v1846 = vpack.c.b16 %v1766, %v1765
        %v1847 = vpack.c.b16 %v1768, %v1767
        %v1848 = vpack.c.b16 %v1770, %v1769
        %v1849 = vpack.c.b16 %v1772, %v1771
        %v1850 = vpack.c.b16 %v1774, %v1773
        %v1851 = vpack.c.b16 %v1776, %v1775
        %v1852 = vpack.c.b16 %v1778, %v1777
        %v1853 = vpack.c.b16 %v1780, %v1779
        %v1854 = vpack.c.b16 %v1782, %v1781
        %v1855 = vpack.c.b16 %v1784, %v1783
        %v1856 = vpack.c.b16 %v1786, %v1785
        %v1857 = vpack.c.b16 %v1788, %v1787
        %v1858 = vpack.c.b16 %v1790, %v1789
        %v1859 = vpack.c.b16 %v1792, %v1791
        %v1860 = vpack.c.b16 %v1794, %v1793
        %v1861 = vpack.c.b16 %v1796, %v1795
        %v1862 = vpack.c.b16 %v1798, %v1797
        %v1863 = vpack.c.b16 %v1800, %v1799
        %v1864 = vpack.c.b16 %v1802, %v1801
        %v1865 = vpack.c.b16 %v1804, %v1803
        %v1866 = vpack.c.b16 %v1806, %v1805
        %v1867 = vpack.c.b16 %v1808, %v1807
        %v1868 = vpack.c.b16 %v1810, %v1809
        %v1869 = vpack.c.b16 %v1812, %v1811
        %v1870 = vpack.c.b16 %v1814, %v1813
        %v1871 = vpack.c.b16 %v1816, %v1815
        %v1872 = vpack.c.b16 %v1818, %v1817
        %v1873 = vpack.c.b16 %v1820, %v1819
        %v1874 = vpack.c.b16 %v1822, %v1821
        %v1875 = vpack.c.b16 %v1824, %v1823
        %v1876 = vpack.c.b16 %v1826, %v1825
        %v1877 = vpack.c.b16 %v1828, %v1827
        %v1878 = vpack.c.b16 %v1830, %v1829
        %1927 = vmatprep.subr.bf16.mxu0 0
        %1928 = vmatpush1.bf16.msra.mxu0 %v1831
        %1929 = vmatprep.subr.bf16.mxu0 0
        %1930 = vmatpush1.bf16.msra.mxu0 %v1832
        %1931 = vmatprep.subr.bf16.mxu0 0
        %1932 = vmatpush1.bf16.msra.mxu0 %v1833
        %1933 = vmatprep.subr.bf16.mxu0 0
        %1934 = vmatpush1.bf16.msra.mxu0 %v1834
        %1935 = vmatprep.subr.bf16.mxu0 0
        %1936 = vmatpush1.bf16.msra.mxu0 %v1835
        %1937 = vmatprep.subr.bf16.mxu0 0
        %1938 = vmatpush1.bf16.msra.mxu0 %v1836
        %1939 = vmatprep.subr.bf16.mxu0 0
        %1940 = vmatpush1.bf16.msra.mxu0 %v1837
        %1941 = vmatprep.subr.bf16.mxu0 0
        %1942 = vmatpush1.bf16.msra.mxu0 %v1838
        %1943 = vmatprep.subr.bf16.mxu0 0
        %1944 = vmatpush1.bf16.msra.mxu0 %v1839
        %1945 = vmatprep.subr.bf16.mxu0 0
        %1946 = vmatpush1.bf16.msra.mxu0 %v1840
        %1947 = vmatprep.subr.bf16.mxu0 0
        %1948 = vmatpush1.bf16.msra.mxu0 %v1841
        %1949 = vmatprep.subr.bf16.mxu0 0
        %1950 = vmatpush1.bf16.msra.mxu0 %v1842
        %1951 = vmatprep.subr.bf16.mxu0 0
        %1952 = vmatpush1.bf16.msra.mxu0 %v1843
        %1953 = vmatprep.subr.bf16.mxu0 0
        %1954 = vmatpush1.bf16.msra.mxu0 %v1844
        %1955 = vmatprep.subr.bf16.mxu0 0
        %1956 = vmatpush1.bf16.msra.mxu0 %v1845
        %1957 = vmatprep.subr.bf16.mxu0 0
        %1958 = vmatpush1.bf16.msra.mxu0 %v1846
        %1959 = vmatprep.mubr.bf16.mxu0 %v1526
        %1960 = vmatmul.mubr.bf16.gmra.mrb[0].mxu0 %v1525
        %v1961 = vpop.f32.mrb[0].mxu0
        %v1962 = vadd.f32 0.0, %v1961
        %v1963 = vpop.f32.mrb[0].mxu0
        %v1964 = vpop.f32.mrb[0].mxu0
        %v1965 = vadd.f32 0.0, %v1964
        %v1966 = vpop.f32.mrb[0].mxu0
        %1967 = vmatprep.mubr.bf16.mxu0 %v1532
        %1968 = vmatmul.mubr.bf16.gmra.mrb[0].mxu0 %v1531
        %v1969 = vpop.f32.mrb[0].mxu0
        %v1970 = vadd.f32 0.0, %v1969
        %v1971 = vpop.f32.mrb[0].mxu0
        %v1972 = vpop.f32.mrb[0].mxu0
        %v1973 = vadd.f32 0.0, %v1972
        %v1974 = vpop.f32.mrb[0].mxu0
        %1975 = vmatprep.mubr.bf16.mxu0 %v1538
        %1976 = vmatmul.mubr.bf16.gmra.mrb[0].mxu0 %v1537
        %v1977 = vpop.f32.mrb[0].mxu0
        %v1978 = vadd.f32 0.0, %v1977
        %v1979 = vpop.f32.mrb[0].mxu0
        %v1980 = vpop.f32.mrb[0].mxu0
        %v1981 = vpop.f32.mrb[0].mxu0
        %1982 = vdwg.mxu0
        %1983 = vmatprep.subr.bf16.mxu0 0
        %1984 = vmatpush1.bf16.msra.mxu0 %v1847
        %1985 = vmatprep.subr.bf16.mxu0 0
        %1986 = vmatpush1.bf16.msra.mxu0 %v1848
        %1987 = vmatprep.subr.bf16.mxu0 0
        %1988 = vmatpush1.bf16.msra.mxu0 %v1849
        %1989 = vmatprep.subr.bf16.mxu0 0
        %1990 = vmatpush1.bf16.msra.mxu0 %v1850
        %1991 = vmatprep.subr.bf16.mxu0 0
        %1992 = vmatpush1.bf16.msra.mxu0 %v1851
        %1993 = vmatprep.subr.bf16.mxu0 0
        %1994 = vmatpush1.bf16.msra.mxu0 %v1852
        %1995 = vmatprep.subr.bf16.mxu0 0
        %1996 = vmatpush1.bf16.msra.mxu0 %v1853
        %1997 = vmatprep.subr.bf16.mxu0 0
        %1998 = vmatpush1.bf16.msra.mxu0 %v1854
        %1999 = vmatprep.subr.bf16.mxu0 0
        %2000 = vmatpush1.bf16.msra.mxu0 %v1855
        %2001 = vmatprep.subr.bf16.mxu0 0
        %2002 = vmatpush1.bf16.msra.mxu0 %v1856
        %2003 = vmatprep.subr.bf16.mxu0 0
        %2004 = vmatpush1.bf16.msra.mxu0 %v1857
        %2005 = vmatprep.subr.bf16.mxu0 0
        %2006 = vmatpush1.bf16.msra.mxu0 %v1858
        %2007 = vmatprep.subr.bf16.mxu0 0
        %2008 = vmatpush1.bf16.msra.mxu0 %v1859
        %2009 = vmatprep.subr.bf16.mxu0 0
        %2010 = vmatpush1.bf16.msra.mxu0 %v1860
        %2011 = vmatprep.subr.bf16.mxu0 0
        %2012 = vmatpush1.bf16.msra.mxu0 %v1861
        %2013 = vmatprep.subr.bf16.mxu0 0
        %2014 = vmatpush1.bf16.msra.mxu0 %v1862
        %2015 = vmatprep.mubr.bf16.mxu0 %v1528
        %2016 = vmatmul.mubr.bf16.gmra.mrb[0].mxu0 %v1527
        %v2017 = vpop.f32.mrb[0].mxu0
        %v2018 = vadd.f32 %v1962, %v2017
        %v2019 = vpop.f32.mrb[0].mxu0
        %v2020 = vpop.f32.mrb[0].mxu0
        %v2021 = vadd.f32 %v1965, %v2020
        %v2022 = vpop.f32.mrb[0].mxu0
        %2023 = vmatprep.mubr.bf16.mxu0 %v1534
        %2024 = vmatmul.mubr.bf16.gmra.mrb[0].mxu0 %v1533
        %v2025 = vpop.f32.mrb[0].mxu0
        %v2026 = vadd.f32 %v1970, %v2025
        %v2027 = vpop.f32.mrb[0].mxu0
        %v2028 = vpop.f32.mrb[0].mxu0
        %v2029 = vadd.f32 %v1973, %v2028
        %v2030 = vpop.f32.mrb[0].mxu0
        %2031 = vmatprep.mubr.bf16.mxu0 %v1540
        %2032 = vmatmul.mubr.bf16.gmra.mrb[0].mxu0 %v1539
        %v2033 = vpop.f32.mrb[0].mxu0
        %v2034 = vadd.f32 %v1978, %v2033
        %v2035 = vpop.f32.mrb[0].mxu0
        %v2036 = vpop.f32.mrb[0].mxu0
        %v2037 = vpop.f32.mrb[0].mxu0
        %2038 = vdwg.mxu0
        %2039 = vmatprep.subr.bf16.mxu0 0
        %2040 = vmatpush1.bf16.msra.mxu0 %v1863
        %2041 = vmatprep.subr.bf16.mxu0 0
        %2042 = vmatpush1.bf16.msra.mxu0 %v1864
        %2043 = vmatprep.subr.bf16.mxu0 0
        %2044 = vmatpush1.bf16.msra.mxu0 %v1865
        %2045 = vmatprep.subr.bf16.mxu0 0
        %2046 = vmatpush1.bf16.msra.mxu0 %v1866
        %2047 = vmatprep.subr.bf16.mxu0 0
        %2048 = vmatpush1.bf16.msra.mxu0 %v1867
        %2049 = vmatprep.subr.bf16.mxu0 0
        %2050 = vmatpush1.bf16.msra.mxu0 %v1868
        %2051 = vmatprep.subr.bf16.mxu0 0
        %2052 = vmatpush1.bf16.msra.mxu0 %v1869
        %2053 = vmatprep.subr.bf16.mxu0 0
        %2054 = vmatpush1.bf16.msra.mxu0 %v1870
        %2055 = vmatprep.subr.bf16.mxu0 0
        %2056 = vmatpush1.bf16.msra.mxu0 %v1871
        %2057 = vmatprep.subr.bf16.mxu0 0
        %2058 = vmatpush1.bf16.msra.mxu0 %v1872
        %2059 = vmatprep.subr.bf16.mxu0 0
        %2060 = vmatpush1.bf16.msra.mxu0 %v1873
        %2061 = vmatprep.subr.bf16.mxu0 0
        %2062 = vmatpush1.bf16.msra.mxu0 %v1874
        %2063 = vmatprep.subr.bf16.mxu0 0
        %2064 = vmatpush1.bf16.msra.mxu0 %v1875
        %2065 = vmatprep.subr.bf16.mxu0 0
        %2066 = vmatpush1.bf16.msra.mxu0 %v1876
        %2067 = vmatprep.subr.bf16.mxu0 0
        %2068 = vmatpush1.bf16.msra.mxu0 %v1877
        %2069 = vmatprep.subr.bf16.mxu0 0
        %2070 = vmatpush1.bf16.msra.mxu0 %v1878
        %2071 = vmatprep.mubr.bf16.mxu0 %v1530
        %2072 = vmatmul.mubr.bf16.gmra.mrb[0].mxu0 %v1529
        %v2073 = vpop.f32.mrb[0].mxu0
        %v2074 = vadd.f32 %v2018, %v2073
        %v2075 = vpop.f32.mrb[0].mxu0
        %v2076 = vpop.f32.mrb[0].mxu0
        %v2077 = vadd.f32 %v2021, %v2076
        %v2078 = vpop.f32.mrb[0].mxu0
        %2079 = vmatprep.mubr.bf16.mxu0 %v1536
        %2080 = vmatmul.mubr.bf16.gmra.mrb[0].mxu0 %v1535
        %v2081 = vpop.f32.mrb[0].mxu0
        %v2082 = vadd.f32 %v2026, %v2081
        %v2083 = vpop.f32.mrb[0].mxu0
        %v2084 = vpop.f32.mrb[0].mxu0
        %v2085 = vadd.f32 %v2029, %v2084
        %v2086 = vpop.f32.mrb[0].mxu0
        %2087 = vmatprep.mubr.bf16.mxu0 %v1542
        %2088 = vmatmul.mubr.bf16.gmra.mrb[0].mxu0 %v1541
        %v2089 = vpop.f32.mrb[0].mxu0
        %v2090 = vadd.f32 %v2034, %v2089
        %v2091 = vpop.f32.mrb[0].mxu0
        %v2092 = vpop.f32.mrb[0].mxu0
        %v2093 = vpop.f32.mrb[0].mxu0
        %2094 = vdwg.mxu0
        %v2095 = vld [vmem:[#allocation7] sm:$0xff]
        %v2096 = vld [vmem:[#allocation7 + $0x8] sm:$0xff]
        %v2097 = vld [vmem:[#allocation7 + $0x10] sm:$0xff]
        %v2098 = vld [vmem:[#allocation7 + $0x18] sm:$0xff]
        %v2099 = vld [vmem:[#allocation7 + $0x20] sm:$0xff]
        %v2100 = vadd.f32 %v2074, %v2095
        %v2101 = vadd.f32 %v2077, %v2096
        %v2102 = vadd.f32 %v2082, %v2097
        %v2103 = vadd.f32 %v2085, %v2098
        %v2104 = vadd.f32 %v2090, %v2099
        %vm2105 = vcmp.lt.s32.totalorder %v1203, 37
        %v2106 = vsel %vm2105, 0.0, -1e+30
        %vm2107 = vcmp.ge.s32.totalorder %v1203, 0
        %vm2108 = vcmp.lt.s32.totalorder %v1203, 32
        %vm2109 = vmand %vm2107, %vm2108
        %vm2110 = vcmp.ge.s32.totalorder %v1203, 32
        %vm2111 = vcmp.lt.s32.totalorder %v1203, 64
        %vm2112 = vmand %vm2110, %vm2111
        %vm2113 = vcmp.ge.s32.totalorder %v1203, 64
        %vm2114 = vcmp.lt.s32.totalorder %v1203, 96
        %vm2115 = vmand %vm2113, %vm2114
        %vm2116 = vcmp.ge.s32.totalorder %v1203, 96
        %vm2117 = vcmp.lt.s32.totalorder %v1203, 128
        %vm2118 = vmand %vm2116, %vm2117
        %v2119 = vsel %vm2109, 0.17677669, 0.0
        %v2120 = vpack.c.bf16 %v2119, %v2119
        %v2121 = vsel %vm2112, 0.17677669, 0.0
        %v2122 = vpack.c.bf16 %v2121, %v2121
        %v2123 = vsel %vm2115, 0.17677669, 0.0
        %v2124 = vpack.c.bf16 %v2123, %v2123
        %v2125 = vsel %vm2118, 0.17677669, 0.0
        %v2126 = vpack.c.bf16 %v2125, %v2125
        %v2127 = vsel %vm2109, 1, 0
        %v2128 = vcvt.s32.f32 %v2127
        %v2129 = vsel %vm2112, 1, 0
        %v2130 = vcvt.s32.f32 %v2129
        %v2131 = vsel %vm2115, 1, 0
        %v2132 = vcvt.s32.f32 %v2131
        %v2133 = vsel %vm2118, 1, 0
        %v2134 = vcvt.s32.f32 %v2133
        %v2135 = vld [vmem:[#allocation8] sm:$0x1]
        %v2136 = vld [vmem:[#allocation10] sm:$0x1]
        %2137 = vadd.xlane.f32.xlu0 %v2100
        %v2138 = vpop.xlane.xlu0 %2137
        %2139 = vadd.xlane.f32.xlu0 %v2101
        %v2140 = vpop.xlane.xlu0 %2139
        %2141 = vadd.xlane.f32.xlu0 %v2102
        %v2142 = vpop.xlane.xlu0 %2141
        %2143 = vadd.xlane.f32.xlu0 %v2103
        %v2144 = vpop.xlane.xlu0 %2143
        %2145 = vadd.xlane.f32.xlu0 %v2104
        %v2146 = vpop.xlane.xlu0 %2145
        %v2147 = vrcp.pop 128.0
        %v2148 = vmul.f32 %v2138, %v2147
        %v2149 = vmul.f32 %v2140, %v2147
        %v2150 = vmul.f32 %v2142, %v2147
        %v2151 = vmul.f32 %v2144, %v2147
        %v2152 = vmul.f32 %v2146, %v2147
        %v2153 = vsub.f32 %v2100, %v2148
        %v2154 = vsub.f32 %v2101, %v2149
        %v2155 = vsub.f32 %v2102, %v2150
        %v2156 = vsub.f32 %v2103, %v2151
        %v2157 = vsub.f32 %v2104, %v2152
        %v2158 = vmul.f32 %v2153, %v2153
        %v2159 = vmul.f32 %v2154, %v2154
        %v2160 = vmul.f32 %v2155, %v2155
        %v2161 = vmul.f32 %v2156, %v2156
        %v2162 = vmul.f32 %v2157, %v2157
        %2163 = vadd.xlane.f32.xlu0 %v2158
        %v2164 = vpop.xlane.xlu0 %2163
        %2165 = vadd.xlane.f32.xlu0 %v2159
        %v2166 = vpop.xlane.xlu0 %2165
        %2167 = vadd.xlane.f32.xlu0 %v2160
        %v2168 = vpop.xlane.xlu0 %2167
        %2169 = vadd.xlane.f32.xlu0 %v2161
        %v2170 = vpop.xlane.xlu0 %2169
        %2171 = vadd.xlane.f32.xlu0 %v2162
        %v2172 = vpop.xlane.xlu0 %2171
        %v2173 = vmul.f32 %v2164, %v2147
        %v2174 = vmul.f32 %v2166, %v2147
        %v2175 = vmul.f32 %v2168, %v2147
        %v2176 = vmul.f32 %v2170, %v2147
        %v2177 = vmul.f32 %v2172, %v2147
        %v2178 = vadd.f32 %v2173, 1e-06
        %v2179 = vadd.f32 %v2174, 1e-06
        %v2180 = vadd.f32 %v2175, 1e-06
        %v2181 = vadd.f32 %v2176, 1e-06
        %v2182 = vadd.f32 %v2177, 1e-06
        %v2183 = vrsqrt.pop %v2178
        %v2184 = vrsqrt.pop %v2179
        %v2185 = vrsqrt.pop %v2180
        %v2186 = vrsqrt.pop %v2181
        %v2187 = vrsqrt.pop %v2182
        %v2188 = vmul.f32 %v2153, %v2183
        %v2189 = vmul.f32 %v2154, %v2184
        %v2190 = vmul.f32 %v2155, %v2185
        %v2191 = vmul.f32 %v2156, %v2186
        %v2192 = vmul.f32 %v2157, %v2187
        %v2194 = vlaneseq
        %v2195 = vshrl.u32 %v2194, 7
        %v2196 = vsub.s32 0, %v2195
        %v2197 = vrot.slane %v2135, %v2196
        %v2199 = vmul.f32 %v2188, %v2197
        %v2200 = vmul.f32 %v2189, %v2197
        %v2201 = vmul.f32 %v2190, %v2197
        %v2202 = vmul.f32 %v2191, %v2197
        %v2203 = vmul.f32 %v2192, %v2197
        %v2205 = vlaneseq
        %v2206 = vshrl.u32 %v2205, 7
        %v2207 = vsub.s32 0, %v2206
        %v2208 = vrot.slane %v2136, %v2207
        %v2210 = vadd.f32 %v2199, %v2208
        %v2211 = vadd.f32 %v2200, %v2208
        %v2212 = vadd.f32 %v2201, %v2208
        %v2213 = vadd.f32 %v2202, %v2208
        %v2214 = vadd.f32 %v2203, %v2208
        %v2215 = vpack.c.bf16 %v2211, %v2210
        %v2216 = vpack.c.bf16 %v2213, %v2212
        %v2217 = vpack.c.bf16 %v2214, %v2214
        %v2218 = vld [vmem:[#allocation11] sm:$0xff]
        %v2219 = vld [vmem:[#allocation11 + $0x8] sm:$0xf]
        %v2220 = vld [vmem:[#allocation11 + $0xc] sm:$0xff]
        %v2221 = vld [vmem:[#allocation11 + $0x14] sm:$0xf]
        %v2222 = vld [vmem:[#allocation11 + $0x18] sm:$0xff]
        %v2223 = vld [vmem:[#allocation11 + $0x20] sm:$0xf]
        %v2224 = vld [vmem:[#allocation11 + $0x24] sm:$0xff]
        %v2225 = vld [vmem:[#allocation11 + $0x2c] sm:$0xf]
        %v2226 = vld [vmem:[#allocation11 + $0x30] sm:$0xff]
        %v2227 = vld [vmem:[#allocation11 + $0x38] sm:$0xf]
        %v2228 = vld [vmem:[#allocation11 + $0x3c] sm:$0xff]
        %v2229 = vld [vmem:[#allocation11 + $0x44] sm:$0xf]
        %v2230 = vld [vmem:[#allocation11 + $0x48] sm:$0xff]
        %v2231 = vld [vmem:[#allocation11 + $0x50] sm:$0xf]
        %v2232 = vld [vmem:[#allocation11 + $0x54] sm:$0xff]
        %v2233 = vld [vmem:[#allocation11 + $0x5c] sm:$0xf]
        %v2234 = vld [vmem:[#allocation11 + $0x60] sm:$0xff]
        %v2235 = vld [vmem:[#allocation11 + $0x68] sm:$0xf]
        %v2236 = vld [vmem:[#allocation11 + $0x6c] sm:$0xff]
        %v2237 = vld [vmem:[#allocation11 + $0x74] sm:$0xf]
        %v2238 = vld [vmem:[#allocation11 + $0x78] sm:$0xff]
        %v2239 = vld [vmem:[#allocation11 + $0x80] sm:$0xf]
        %v2240 = vld [vmem:[#allocation11 + $0x84] sm:$0xff]
        %v2241 = vld [vmem:[#allocation11 + $0x8c] sm:$0xf]
        %v2242 = vld [vmem:[#allocation11 + $0x90] sm:$0xff]
        %v2243 = vld [vmem:[#allocation11 + $0x98] sm:$0xf]
        %v2244 = vld [vmem:[#allocation11 + $0x9c] sm:$0xff]
        %v2245 = vld [vmem:[#allocation11 + $0xa4] sm:$0xf]
        %v2246 = vld [vmem:[#allocation11 + $0xa8] sm:$0xff]
        %v2247 = vld [vmem:[#allocation11 + $0xb0] sm:$0xf]
        %v2248 = vld [vmem:[#allocation11 + $0xb4] sm:$0xff]
        %v2249 = vld [vmem:[#allocation11 + $0xbc] sm:$0xf]
        %v2250 = vld [vmem:[#allocation13] sm:$0x7]
        %v2252 = vlaneseq
        %v2253 = vshrl.u32 %v2252, 7
        %v2254 = vsub.s32 0, %v2253
        %v2255 = vrot.slane %v2250, %v2254
        %v2256 = vlaneseq
        %v2257 = vshrl.u32 %v2256, 7
        %v2258 = vsub.s32 1, %v2257
        %v2259 = vrot.slane %v2250, %v2258
        %v2260 = vlaneseq
        %v2261 = vshrl.u32 %v2260, 7
        %v2262 = vsub.s32 2, %v2261
        %v2263 = vrot.slane %v2250, %v2262
        %v2299 = vunpack.c.l.b16 %v2218
        %v2300 = vunpack.c.h.b16 %v2218
        %v2301 = vunpack.c.l.b16 %v2219
        %v2302 = vunpack.c.l.b16 %v2220
        %v2303 = vunpack.c.h.b16 %v2220
        %v2304 = vunpack.c.l.b16 %v2221
        %v2305 = vunpack.c.l.b16 %v2222
        %v2306 = vunpack.c.h.b16 %v2222
        %v2307 = vunpack.c.l.b16 %v2223
        %v2308 = vunpack.c.l.b16 %v2224
        %v2309 = vunpack.c.h.b16 %v2224
        %v2310 = vunpack.c.l.b16 %v2225
        %v2311 = vunpack.c.l.b16 %v2226
        %v2312 = vunpack.c.h.b16 %v2226
        %v2313 = vunpack.c.l.b16 %v2227
        %v2314 = vunpack.c.l.b16 %v2228
        %v2315 = vunpack.c.h.b16 %v2228
        %v2316 = vunpack.c.l.b16 %v2229
        %v2317 = vunpack.c.l.b16 %v2230
        %v2318 = vunpack.c.h.b16 %v2230
        %v2319 = vunpack.c.l.b16 %v2231
        %v2320 = vunpack.c.l.b16 %v2232
        %v2321 = vunpack.c.h.b16 %v2232
        %v2322 = vunpack.c.l.b16 %v2233
        %v2323 = vunpack.c.l.b16 %v2234
        %v2324 = vunpack.c.h.b16 %v2234
        %v2325 = vunpack.c.l.b16 %v2235
        %v2326 = vunpack.c.l.b16 %v2236
        %v2327 = vunpack.c.h.b16 %v2236
        %v2328 = vunpack.c.l.b16 %v2237
        %v2329 = vunpack.c.l.b16 %v2238
        %v2330 = vunpack.c.h.b16 %v2238
        %v2331 = vunpack.c.l.b16 %v2239
        %v2332 = vunpack.c.l.b16 %v2240
        %v2333 = vunpack.c.h.b16 %v2240
        %v2334 = vunpack.c.l.b16 %v2241
        %v2335 = vunpack.c.l.b16 %v2242
        %v2336 = vunpack.c.h.b16 %v2242
        %v2337 = vunpack.c.l.b16 %v2243
        %v2338 = vunpack.c.l.b16 %v2244
        %v2339 = vunpack.c.h.b16 %v2244
        %v2340 = vunpack.c.l.b16 %v2245
        %v2341 = vunpack.c.l.b16 %v2246
        %v2342 = vunpack.c.h.b16 %v2246
        %v2343 = vunpack.c.l.b16 %v2247
        %v2344 = vunpack.c.l.b16 %v2248
        %v2345 = vunpack.c.h.b16 %v2248
        %v2346 = vunpack.c.l.b16 %v2249
        %v2347 = vpack.c.b16 %v2302, %v2299
        %v2348 = vpack.c.b16 %v2303, %v2300
        %v2349 = vpack.c.b16 %v2304, %v2301
        %v2350 = vpack.c.b16 %v2308, %v2305
        %v2351 = vpack.c.b16 %v2309, %v2306
        %v2352 = vpack.c.b16 %v2310, %v2307
        %v2353 = vpack.c.b16 %v2314, %v2311
        %v2354 = vpack.c.b16 %v2315, %v2312
        %v2355 = vpack.c.b16 %v2316, %v2313
        %v2356 = vpack.c.b16 %v2320, %v2317
        %v2357 = vpack.c.b16 %v2321, %v2318
        %v2358 = vpack.c.b16 %v2322, %v2319
        %v2359 = vpack.c.b16 %v2326, %v2323
        %v2360 = vpack.c.b16 %v2327, %v2324
        %v2361 = vpack.c.b16 %v2328, %v2325
        %v2362 = vpack.c.b16 %v2332, %v2329
        %v2363 = vpack.c.b16 %v2333, %v2330
        %v2364 = vpack.c.b16 %v2334, %v2331
        %v2365 = vpack.c.b16 %v2338, %v2335
        %v2366 = vpack.c.b16 %v2339, %v2336
        %v2367 = vpack.c.b16 %v2340, %v2337
        %v2368 = vpack.c.b16 %v2344, %v2341
        %v2369 = vpack.c.b16 %v2345, %v2342
        %v2370 = vpack.c.b16 %v2346, %v2343
        %2395 = vmatprep.subr.bf16.mxu0 %v2348
        %2396 = vmatpush1.bf16.msra.mxu0 %v2347
        %2397 = vmatprep.subr.bf16.mxu0 %v2351
        %2398 = vmatpush1.bf16.msra.mxu0 %v2350
        %2399 = vmatprep.subr.bf16.mxu0 %v2354
        %2400 = vmatpush1.bf16.msra.mxu0 %v2353
        %2401 = vmatprep.subr.bf16.mxu0 %v2357
        %2402 = vmatpush1.bf16.msra.mxu0 %v2356
        %2403 = vmatprep.subr.bf16.mxu0 %v2360
        %2404 = vmatpush1.bf16.msra.mxu0 %v2359
        %2405 = vmatprep.subr.bf16.mxu0 %v2363
        %2406 = vmatpush1.bf16.msra.mxu0 %v2362
        %2407 = vmatprep.subr.bf16.mxu0 %v2366
        %2408 = vmatpush1.bf16.msra.mxu0 %v2365
        %2409 = vmatprep.subr.bf16.mxu0 %v2369
        %2410 = vmatpush1.bf16.msra.mxu0 %v2368
        %2411 = vmatprep.subr.bf16.mxu0 0
        %2412 = vmatpush1.bf16.msra.mxu0 0
        %2413 = vmatprep.subr.bf16.mxu0 0
        %2414 = vmatpush1.bf16.msra.mxu0 0
        %2415 = vmatprep.subr.bf16.mxu0 0
        %2416 = vmatpush1.bf16.msra.mxu0 0
        %2417 = vmatprep.subr.bf16.mxu0 0
        %2418 = vmatpush1.bf16.msra.mxu0 0
        %2419 = vmatprep.subr.bf16.mxu0 0
        %2420 = vmatpush1.bf16.msra.mxu0 0
        %2421 = vmatprep.subr.bf16.mxu0 0
        %2422 = vmatpush1.bf16.msra.mxu0 0
        %2423 = vmatprep.subr.bf16.mxu0 0
        %2424 = vmatpush1.bf16.msra.mxu0 0
        %2425 = vmatprep.subr.bf16.mxu0 0
        %2426 = vmatpush1.bf16.msra.mxu0 0
        %2427 = vmatprep.mubr.bf16.mxu0 0
        %2428 = vmatmul.mubr.bf16.gmra.mrb[0].mxu0 %v2215
        %v2429 = vpop.f32.mrb[0].mxu0
        %v2430 = vadd.f32 %v2255, %v2429
        %v2431 = vpop.f32.mrb[0].mxu0
        %v2432 = vadd.f32 %v2259, %v2431
        %v2433 = vpop.f32.mrb[0].mxu0
        %v2434 = vadd.f32 %v2255, %v2433
        %v2435 = vpop.f32.mrb[0].mxu0
        %v2436 = vadd.f32 %v2259, %v2435
        %2437 = vmatprep.mubr.bf16.mxu0 0
        %2438 = vmatmul.mubr.bf16.gmra.mrb[0].mxu0 %v2216
        %v2439 = vpop.f32.mrb[0].mxu0
        %v2440 = vadd.f32 %v2255, %v2439
        %v2441 = vpop.f32.mrb[0].mxu0
        %v2442 = vadd.f32 %v2259, %v2441
        %v2443 = vpop.f32.mrb[0].mxu0
        %v2444 = vadd.f32 %v2255, %v2443
        %v2445 = vpop.f32.mrb[0].mxu0
        %v2446 = vadd.f32 %v2259, %v2445
        %2447 = vmatprep.mubr.bf16.mxu0 0
        %2448 = vmatmul.mubr.bf16.gmra.mrb[0].mxu0 %v2217
        %v2449 = vpop.f32.mrb[0].mxu0
        %v2450 = vadd.f32 %v2255, %v2449
        %v2451 = vpop.f32.mrb[0].mxu0
        %v2452 = vadd.f32 %v2259, %v2451
        %v2453 = vpop.f32.mrb[0].mxu0
        %v2454 = vpop.f32.mrb[0].mxu0
        %2455 = vdwg.mxu0
        %2456 = vmatprep.subr.bf16.mxu0 0
        %2457 = vmatpush1.bf16.msra.mxu0 %v2349
        %2458 = vmatprep.subr.bf16.mxu0 0
        %2459 = vmatpush1.bf16.msra.mxu0 %v2352
        %2460 = vmatprep.subr.bf16.mxu0 0
        %2461 = vmatpush1.bf16.msra.mxu0 %v2355
        %2462 = vmatprep.subr.bf16.mxu0 0
        %2463 = vmatpush1.bf16.msra.mxu0 %v2358
        %2464 = vmatprep.subr.bf16.mxu0 0
        %2465 = vmatpush1.bf16.msra.mxu0 %v2361
        %2466 = vmatprep.subr.bf16.mxu0 0
        %2467 = vmatpush1.bf16.msra.mxu0 %v2364
        %2468 = vmatprep.subr.bf16.mxu0 0
        %2469 = vmatpush1.bf16.msra.mxu0 %v2367
        %2470 = vmatprep.subr.bf16.mxu0 0
        %2471 = vmatpush1.bf16.msra.mxu0 %v2370
        %2472 = vmatprep.subr.bf16.mxu0 0
        %2473 = vmatpush1.bf16.msra.mxu0 0
        %2474 = vmatprep.subr.bf16.mxu0 0
        %2475 = vmatpush1.bf16.msra.mxu0 0
        %2476 = vmatprep.subr.bf16.mxu0 0
        %2477 = vmatpush1.bf16.msra.mxu0 0
        %2478 = vmatprep.subr.bf16.mxu0 0
        %2479 = vmatpush1.bf16.msra.mxu0 0
        %2480 = vmatprep.subr.bf16.mxu0 0
        %2481 = vmatpush1.bf16.msra.mxu0 0
        %2482 = vmatprep.subr.bf16.mxu0 0
        %2483 = vmatpush1.bf16.msra.mxu0 0
        %2484 = vmatprep.subr.bf16.mxu0 0
        %2485 = vmatpush1.bf16.msra.mxu0 0
        %2486 = vmatprep.subr.bf16.mxu0 0
        %2487 = vmatpush1.bf16.msra.mxu0 0
        %2488 = vmatprep.mubr.bf16.mxu0 0
        %2489 = vmatmul.mubr.bf16.gmra.mrb[0].mxu0 %v2215
        %v2490 = vpop.f32.mrb[0].mxu0
        %v2491 = vadd.f32 %v2263, %v2490
        %v2492 = vpop.f32.mrb[0].mxu0
        %v2493 = vpop.f32.mrb[0].mxu0
        %v2494 = vadd.f32 %v2263, %v2493
        %v2495 = vpop.f32.mrb[0].mxu0
        %2496 = vmatprep.mubr.bf16.mxu0 0
        %2497 = vmatmul.mubr.bf16.gmra.mrb[0].mxu0 %v2216
        %v2498 = vpop.f32.mrb[0].mxu0
        %v2499 = vadd.f32 %v2263, %v2498
        %v2500 = vpop.f32.mrb[0].mxu0
        %v2501 = vpop.f32.mrb[0].mxu0
        %v2502 = vadd.f32 %v2263, %v2501
        %v2503 = vpop.f32.mrb[0].mxu0
        %2504 = vmatprep.mubr.bf16.mxu0 0
        %2505 = vmatmul.mubr.bf16.gmra.mrb[0].mxu0 %v2217
        %v2506 = vpop.f32.mrb[0].mxu0
        %v2507 = vadd.f32 %v2263, %v2506
        %v2508 = vpop.f32.mrb[0].mxu0
        %v2509 = vpop.f32.mrb[0].mxu0
        %v2510 = vpop.f32.mrb[0].mxu0
        %2511 = vdwg.mxu0
        %v2512 = vpack.c.bf16 %v2434, %v2430
        %v2513 = vpack.c.bf16 %v2444, %v2440
        %v2514 = vpack.c.bf16 %v2450, %v2450
        %v2515 = vpack.c.bf16 %v2436, %v2432
        %v2516 = vpack.c.bf16 %v2446, %v2442
        %v2517 = vpack.c.bf16 %v2452, %v2452
        %v2518 = vpack.c.bf16 %v2494, %v2491
        %v2519 = vpack.c.bf16 %v2502, %v2499
        %v2520 = vpack.c.bf16 %v2507, %v2507
        %v2521 = vmul.bf16 %v2512, %v2120
        %v2522 = vmul.bf16 %v2513, %v2120
        %v2523 = vmul.bf16 %v2514, %v2120
        %v2524 = vmul.bf16 %v2512, %v2122
        %v2525 = vmul.bf16 %v2513, %v2122
        %v2526 = vmul.bf16 %v2514, %v2122
        %v2527 = vmul.bf16 %v2512, %v2124
        %v2528 = vmul.bf16 %v2513, %v2124
        %v2529 = vmul.bf16 %v2514, %v2124
        %v2530 = vmul.bf16 %v2512, %v2126
        %v2531 = vmul.bf16 %v2513, %v2126
        %v2532 = vmul.bf16 %v2514, %v2126
        %vm2536 = vcmask 1043456
        %v2537 = vrot.slane %v2524, 4
        %v2538 = vrot.slane %v2525, 4
        %v2539 = vsel %vm2536, %v2537, %v2538
        %v2540 = vrot.slane %v2526, 4
        %v2541 = vsel %vm2536, %v2538, %v2540
        %v2547 = vrot.slane %v2530, 4
        %v2548 = vrot.slane %v2531, 4
        %v2549 = vsel %vm2536, %v2547, %v2548
        %v2550 = vrot.slane %v2532, 4
        %v2551 = vsel %vm2536, %v2548, %v2550
        %vm2554 = vcmask 1043456
        %v2557 = vsel %vm2554, %v2523, %v2537
        %v2561 = vsel %vm2554, %v2529, %v2547
        %2563 = vmatprep.subr.bf16.mxu0 0
        %2564 = vmatpush1.bf16.xpose.msra.mxu0 %v2515
        %2565 = vmatprep.subr.bf16.mxu0 0
        %2566 = vmatpush1.bf16.xpose.msra.mxu0 %v2516
        %2567 = vmatprep.subr.bf16.mxu0 0
        %2568 = vmatpush1.bf16.xpose.msra.mxu0 %v2517
        %2569 = vmatprep.subr.bf16.mxu0 0
        %2570 = vmatpush1.bf16.xpose.msra.mxu0 0
        %2571 = vmatprep.subr.bf16.mxu0 0
        %2572 = vmatpush1.bf16.xpose.msra.mxu0 0
        %2573 = vmatprep.subr.bf16.mxu0 0
        %2574 = vmatpush1.bf16.xpose.msra.mxu0 0
        %2575 = vmatprep.subr.bf16.mxu0 0
        %2576 = vmatpush1.bf16.xpose.msra.mxu0 0
        %2577 = vmatprep.subr.bf16.mxu0 0
        %2578 = vmatpush1.bf16.xpose.msra.mxu0 0
        %2579 = vmatprep.subr.bf16.mxu0 0
        %2580 = vmatpush1.bf16.xpose.msra.mxu0 0
        %2581 = vmatprep.subr.bf16.mxu0 0
        %2582 = vmatpush1.bf16.xpose.msra.mxu0 0
        %2583 = vmatprep.subr.bf16.mxu0 0
        %2584 = vmatpush1.bf16.xpose.msra.mxu0 0
        %2585 = vmatprep.subr.bf16.mxu0 0
        %2586 = vmatpush1.bf16.xpose.msra.mxu0 0
        %2587 = vmatprep.subr.bf16.mxu0 0
        %2588 = vmatpush1.bf16.xpose.msra.mxu0 0
        %2589 = vmatprep.subr.bf16.mxu0 0
        %2590 = vmatpush1.bf16.xpose.msra.mxu0 0
        %2591 = vmatprep.subr.bf16.mxu0 0
        %2592 = vmatpush1.bf16.xpose.msra.mxu0 0
        %2593 = vmatprep.subr.bf16.mxu0 0
        %2594 = vmatpush1.bf16.xpose.msra.mxu0 0
        %2595 = vmatprep.mubr.bf16.mxu0 0
        %2596 = vmatmul.mubr.bf16.gmra.mrb[0].mxu0 %v2521
        %v2597 = vpop.f32.mrb[0].mxu0
        %v2598 = vadd.f32 %v2106, %v2597
        %v2599 = vpop.f32.mrb[0].mxu0
        %v2600 = vpop.f32.mrb[0].mxu0
        %v2601 = vadd.f32 %v2106, %v2600
        %v2602 = vpop.f32.mrb[0].mxu0
        %2603 = vmatprep.mubr.bf16.mxu0 0
        %2604 = vmatmul.mubr.bf16.gmra.mrb[0].mxu0 %v2522
        %v2605 = vpop.f32.mrb[0].mxu0
        %v2606 = vadd.f32 %v2106, %v2605
        %v2607 = vpop.f32.mrb[0].mxu0
        %v2608 = vpop.f32.mrb[0].mxu0
        %v2609 = vadd.f32 %v2106, %v2608
        %v2610 = vpop.f32.mrb[0].mxu0
        %2611 = vmatprep.mubr.bf16.mxu0 0
        %2612 = vmatmul.mubr.bf16.gmra.mrb[0].mxu0 %v2557
        %v2613 = vpop.f32.mrb[0].mxu0
        %v2614 = vadd.f32 %v2106, %v2613
        %v2615 = vpop.f32.mrb[0].mxu0
        %v2616 = vpop.f32.mrb[0].mxu0
        %v2617 = vadd.f32 %v2106, %v2616
        %v2618 = vpop.f32.mrb[0].mxu0
        %2619 = vmatprep.mubr.bf16.mxu0 0
        %2620 = vmatmul.mubr.bf16.gmra.mrb[0].mxu0 %v2539
        %v2621 = vpop.f32.mrb[0].mxu0
        %v2622 = vadd.f32 %v2106, %v2621
        %v2623 = vpop.f32.mrb[0].mxu0
        %v2624 = vpop.f32.mrb[0].mxu0
        %v2625 = vadd.f32 %v2106, %v2624
        %v2626 = vpop.f32.mrb[0].mxu0
        %2627 = vmatprep.mubr.bf16.mxu0 0
        %2628 = vmatmul.mubr.bf16.gmra.mrb[0].mxu0 %v2541
        %v2629 = vpop.f32.mrb[0].mxu0
        %v2630 = vadd.f32 %v2106, %v2629
        %v2631 = vpop.f32.mrb[0].mxu0
        %v2632 = vpop.f32.mrb[0].mxu0
        %v2633 = vadd.f32 %v2106, %v2632
        %v2634 = vpop.f32.mrb[0].mxu0
        %2635 = vmatprep.mubr.bf16.mxu0 0
        %2636 = vmatmul.mubr.bf16.gmra.mrb[0].mxu0 %v2527
        %v2637 = vpop.f32.mrb[0].mxu0
        %v2638 = vadd.f32 %v2106, %v2637
        %v2639 = vpop.f32.mrb[0].mxu0
        %v2640 = vpop.f32.mrb[0].mxu0
        %v2641 = vadd.f32 %v2106, %v2640
        %v2642 = vpop.f32.mrb[0].mxu0
        %2643 = vmatprep.mubr.bf16.mxu0 0
        %2644 = vmatmul.mubr.bf16.gmra.mrb[0].mxu0 %v2528
        %v2645 = vpop.f32.mrb[0].mxu0
        %v2646 = vadd.f32 %v2106, %v2645
        %v2647 = vpop.f32.mrb[0].mxu0
        %v2648 = vpop.f32.mrb[0].mxu0
        %v2649 = vadd.f32 %v2106, %v2648
        %v2650 = vpop.f32.mrb[0].mxu0
        %2651 = vmatprep.mubr.bf16.mxu0 0
        %2652 = vmatmul.mubr.bf16.gmra.mrb[0].mxu0 %v2561
        %v2653 = vpop.f32.mrb[0].mxu0
        %v2654 = vadd.f32 %v2106, %v2653
        %v2655 = vpop.f32.mrb[0].mxu0
        %v2656 = vpop.f32.mrb[0].mxu0
        %v2657 = vadd.f32 %v2106, %v2656
        %v2658 = vpop.f32.mrb[0].mxu0
        %2659 = vmatprep.mubr.bf16.mxu0 0
        %2660 = vmatmul.mubr.bf16.gmra.mrb[0].mxu0 %v2549
        %v2661 = vpop.f32.mrb[0].mxu0
        %v2662 = vadd.f32 %v2106, %v2661
        %v2663 = vpop.f32.mrb[0].mxu0
        %v2664 = vpop.f32.mrb[0].mxu0
        %v2665 = vadd.f32 %v2106, %v2664
        %v2666 = vpop.f32.mrb[0].mxu0
        %2667 = vmatprep.mubr.bf16.mxu0 0
        %2668 = vmatmul.mubr.bf16.gmra.mrb[0].mxu0 %v2551
        %v2669 = vpop.f32.mrb[0].mxu0
        %v2670 = vadd.f32 %v2106, %v2669
        %v2671 = vpop.f32.mrb[0].mxu0
        %v2672 = vpop.f32.mrb[0].mxu0
        %v2673 = vadd.f32 %v2106, %v2672
        %v2674 = vpop.f32.mrb[0].mxu0
        %2675 = vdwg.mxu0
        %vm2676 = vcmask 326656
        %v2677 = vsel %vm2676, %v2598, -inf
        %2678 = vmax.xlane.f32.xlu0 %v2677
        %v2679 = vpop.xlane.xlu0 %2678
        %v2680 = vsel %vm2676, %v2601, -inf
        %2681 = vmax.xlane.f32.xlu0 %v2680
        %v2682 = vpop.xlane.xlu0 %2681
        %v2683 = vsel %vm2676, %v2606, -inf
        %2684 = vmax.xlane.f32.xlu0 %v2683
        %v2685 = vpop.xlane.xlu0 %2684
        %v2686 = vsel %vm2676, %v2609, -inf
        %2687 = vmax.xlane.f32.xlu0 %v2686
        %v2688 = vpop.xlane.xlu0 %2687
        %v2689 = vsel %vm2676, %v2614, -inf
        %2690 = vmax.xlane.f32.xlu0 %v2689
        %v2691 = vpop.xlane.xlu0 %2690
        %v2692 = vsel %vm2676, %v2617, -inf
        %2693 = vmax.xlane.f32.xlu0 %v2692
        %v2694 = vpop.xlane.xlu0 %2693
        %v2695 = vsel %vm2676, %v2622, -inf
        %2696 = vmax.xlane.f32.xlu0 %v2695
        %v2697 = vpop.xlane.xlu0 %2696
        %v2698 = vsel %vm2676, %v2625, -inf
        %2699 = vmax.xlane.f32.xlu0 %v2698
        %v2700 = vpop.xlane.xlu0 %2699
        %v2701 = vsel %vm2676, %v2630, -inf
        %2702 = vmax.xlane.f32.xlu0 %v2701
        %v2703 = vpop.xlane.xlu0 %2702
        %v2704 = vsel %vm2676, %v2633, -inf
        %2705 = vmax.xlane.f32.xlu0 %v2704
        %v2706 = vpop.xlane.xlu0 %2705
        %v2707 = vsel %vm2676, %v2638, -inf
        %2708 = vmax.xlane.f32.xlu0 %v2707
        %v2709 = vpop.xlane.xlu0 %2708
        %v2710 = vsel %vm2676, %v2641, -inf
        %2711 = vmax.xlane.f32.xlu0 %v2710
        %v2712 = vpop.xlane.xlu0 %2711
        %v2713 = vsel %vm2676, %v2646, -inf
        %2714 = vmax.xlane.f32.xlu0 %v2713
        %v2715 = vpop.xlane.xlu0 %2714
        %v2716 = vsel %vm2676, %v2649, -inf
        %2717 = vmax.xlane.f32.xlu0 %v2716
        %v2718 = vpop.xlane.xlu0 %2717
        %v2719 = vsel %vm2676, %v2654, -inf
        %2720 = vmax.xlane.f32.xlu0 %v2719
        %v2721 = vpop.xlane.xlu0 %2720
        %v2722 = vsel %vm2676, %v2657, -inf
        %2723 = vmax.xlane.f32.xlu0 %v2722
        %v2724 = vpop.xlane.xlu0 %2723
        %v2725 = vsel %vm2676, %v2662, -inf
        %2726 = vmax.xlane.f32.xlu0 %v2725
        %v2727 = vpop.xlane.xlu0 %2726
        %v2728 = vsel %vm2676, %v2665, -inf
        %2729 = vmax.xlane.f32.xlu0 %v2728
        %v2730 = vpop.xlane.xlu0 %2729
        %v2731 = vsel %vm2676, %v2670, -inf
        %2732 = vmax.xlane.f32.xlu0 %v2731
        %v2733 = vpop.xlane.xlu0 %2732
        %v2734 = vsel %vm2676, %v2673, -inf
        %2735 = vmax.xlane.f32.xlu0 %v2734
        %v2736 = vpop.xlane.xlu0 %2735
        %v2737 = vsub.f32 %v2598, %v2679
        %v2738 = vsub.f32 %v2601, %v2682
        %v2739 = vsub.f32 %v2606, %v2685
        %v2740 = vsub.f32 %v2609, %v2688
        %v2741 = vsub.f32 %v2614, %v2691
        %v2742 = vsub.f32 %v2617, %v2694
        %v2743 = vsub.f32 %v2622, %v2697
        %v2744 = vsub.f32 %v2625, %v2700
        %v2745 = vsub.f32 %v2630, %v2703
        %v2746 = vsub.f32 %v2633, %v2706
        %v2747 = vsub.f32 %v2638, %v2709
        %v2748 = vsub.f32 %v2641, %v2712
        %v2749 = vsub.f32 %v2646, %v2715
        %v2750 = vsub.f32 %v2649, %v2718
        %v2751 = vsub.f32 %v2654, %v2721
        %v2752 = vsub.f32 %v2657, %v2724
        %v2753 = vsub.f32 %v2662, %v2727
        %v2754 = vsub.f32 %v2665, %v2730
        %v2755 = vsub.f32 %v2670, %v2733
        %v2756 = vsub.f32 %v2673, %v2736
        %v2757 = vmul.f32 %v2737, 1.442695
        %v2758 = vpow.pop %v2757
        %v2759 = vmul.f32 %v2738, 1.442695
        %v2760 = vpow.pop %v2759
        %v2761 = vmul.f32 %v2739, 1.442695
        %v2762 = vpow.pop %v2761
        %v2763 = vmul.f32 %v2740, 1.442695
        %v2764 = vpow.pop %v2763
        %v2765 = vmul.f32 %v2741, 1.442695
        %v2766 = vpow.pop %v2765
        %v2767 = vmul.f32 %v2742, 1.442695
        %v2768 = vpow.pop %v2767
        %v2769 = vmul.f32 %v2743, 1.442695
        %v2770 = vpow.pop %v2769
        %v2771 = vmul.f32 %v2744, 1.442695
        %v2772 = vpow.pop %v2771
        %v2773 = vmul.f32 %v2745, 1.442695
        %v2774 = vpow.pop %v2773
        %v2775 = vmul.f32 %v2746, 1.442695
        %v2776 = vpow.pop %v2775
        %v2777 = vmul.f32 %v2747, 1.442695
        %v2778 = vpow.pop %v2777
        %v2779 = vmul.f32 %v2748, 1.442695
        %v2780 = vpow.pop %v2779
        %v2781 = vmul.f32 %v2749, 1.442695
        %v2782 = vpow.pop %v2781
        %v2783 = vmul.f32 %v2750, 1.442695
        %v2784 = vpow.pop %v2783
        %v2785 = vmul.f32 %v2751, 1.442695
        %v2786 = vpow.pop %v2785
        %v2787 = vmul.f32 %v2752, 1.442695
        %v2788 = vpow.pop %v2787
        %v2789 = vmul.f32 %v2753, 1.442695
        %v2790 = vpow.pop %v2789
        %v2791 = vmul.f32 %v2754, 1.442695
        %v2792 = vpow.pop %v2791
        %v2793 = vmul.f32 %v2755, 1.442695
        %v2794 = vpow.pop %v2793
        %v2795 = vmul.f32 %v2756, 1.442695
        %v2796 = vpow.pop %v2795
        %v2797 = vsel %vm2676, %v2758, 0.0
        %2798 = vadd.xlane.f32.xlu0 %v2797
        %v2799 = vpop.xlane.xlu0 %2798
        %v2800 = vsel %vm2676, %v2760, 0.0
        %2801 = vadd.xlane.f32.xlu0 %v2800
        %v2802 = vpop.xlane.xlu0 %2801
        %v2803 = vsel %vm2676, %v2762, 0.0
        %2804 = vadd.xlane.f32.xlu0 %v2803
        %v2805 = vpop.xlane.xlu0 %2804
        %v2806 = vsel %vm2676, %v2764, 0.0
        %2807 = vadd.xlane.f32.xlu0 %v2806
        %v2808 = vpop.xlane.xlu0 %2807
        %v2809 = vsel %vm2676, %v2766, 0.0
        %2810 = vadd.xlane.f32.xlu0 %v2809
        %v2811 = vpop.xlane.xlu0 %2810
        %v2812 = vsel %vm2676, %v2768, 0.0
        %2813 = vadd.xlane.f32.xlu0 %v2812
        %v2814 = vpop.xlane.xlu0 %2813
        %v2815 = vsel %vm2676, %v2770, 0.0
        %2816 = vadd.xlane.f32.xlu0 %v2815
        %v2817 = vpop.xlane.xlu0 %2816
        %v2818 = vsel %vm2676, %v2772, 0.0
        %2819 = vadd.xlane.f32.xlu0 %v2818
        %v2820 = vpop.xlane.xlu0 %2819
        %v2821 = vsel %vm2676, %v2774, 0.0
        %2822 = vadd.xlane.f32.xlu0 %v2821
        %v2823 = vpop.xlane.xlu0 %2822
        %v2824 = vsel %vm2676, %v2776, 0.0
        %2825 = vadd.xlane.f32.xlu0 %v2824
        %v2826 = vpop.xlane.xlu0 %2825
        %v2827 = vsel %vm2676, %v2778, 0.0
        %2828 = vadd.xlane.f32.xlu0 %v2827
        %v2829 = vpop.xlane.xlu0 %2828
        %v2830 = vsel %vm2676, %v2780, 0.0
        %2831 = vadd.xlane.f32.xlu0 %v2830
        %v2832 = vpop.xlane.xlu0 %2831
        %v2833 = vsel %vm2676, %v2782, 0.0
        %2834 = vadd.xlane.f32.xlu0 %v2833
        %v2835 = vpop.xlane.xlu0 %2834
        %v2836 = vsel %vm2676, %v2784, 0.0
        %2837 = vadd.xlane.f32.xlu0 %v2836
        %v2838 = vpop.xlane.xlu0 %2837
        %v2839 = vsel %vm2676, %v2786, 0.0
        %2840 = vadd.xlane.f32.xlu0 %v2839
        %v2841 = vpop.xlane.xlu0 %2840
        %v2842 = vsel %vm2676, %v2788, 0.0
        %2843 = vadd.xlane.f32.xlu0 %v2842
        %v2844 = vpop.xlane.xlu0 %2843
        %v2845 = vsel %vm2676, %v2790, 0.0
        %2846 = vadd.xlane.f32.xlu0 %v2845
        %v2847 = vpop.xlane.xlu0 %2846
        %v2848 = vsel %vm2676, %v2792, 0.0
        %2849 = vadd.xlane.f32.xlu0 %v2848
        %v2850 = vpop.xlane.xlu0 %2849
        %v2851 = vsel %vm2676, %v2794, 0.0
        %2852 = vadd.xlane.f32.xlu0 %v2851
        %v2853 = vpop.xlane.xlu0 %2852
        %v2854 = vsel %vm2676, %v2796, 0.0
        %2855 = vadd.xlane.f32.xlu0 %v2854
        %v2856 = vpop.xlane.xlu0 %2855
        %v2857 = vrcp.pop %v2799
        %v2858 = vrcp.pop %v2802
        %v2859 = vrcp.pop %v2805
        %v2860 = vrcp.pop %v2808
        %v2861 = vrcp.pop %v2811
        %v2862 = vrcp.pop %v2814
        %v2863 = vrcp.pop %v2817
        %v2864 = vrcp.pop %v2820
        %v2865 = vrcp.pop %v2823
        %v2866 = vrcp.pop %v2826
        %v2867 = vrcp.pop %v2829
        %v2868 = vrcp.pop %v2832
        %v2869 = vrcp.pop %v2835
        %v2870 = vrcp.pop %v2838
        %v2871 = vrcp.pop %v2841
        %v2872 = vrcp.pop %v2844
        %v2873 = vrcp.pop %v2847
        %v2874 = vrcp.pop %v2850
        %v2875 = vrcp.pop %v2853
        %v2876 = vrcp.pop %v2856
        %v2877 = vmul.f32 %v2758, %v2857
        %v2878 = vmul.f32 %v2760, %v2858
        %v2879 = vmul.f32 %v2762, %v2859
        %v2880 = vmul.f32 %v2764, %v2860
        %v2881 = vmul.f32 %v2766, %v2861
        %v2882 = vmul.f32 %v2768, %v2862
        %v2883 = vmul.f32 %v2770, %v2863
        %v2884 = vmul.f32 %v2772, %v2864
        %v2885 = vmul.f32 %v2774, %v2865
        %v2886 = vmul.f32 %v2776, %v2866
        %v2887 = vmul.f32 %v2778, %v2867
        %v2888 = vmul.f32 %v2780, %v2868
        %v2889 = vmul.f32 %v2782, %v2869
        %v2890 = vmul.f32 %v2784, %v2870
        %v2891 = vmul.f32 %v2786, %v2871
        %v2892 = vmul.f32 %v2788, %v2872
        %v2893 = vmul.f32 %v2790, %v2873
        %v2894 = vmul.f32 %v2792, %v2874
        %v2895 = vmul.f32 %v2794, %v2875
        %v2896 = vmul.f32 %v2796, %v2876
        %v2897 = vpack.c.bf16 %v2878, %v2877
        %v2898 = vpack.c.bf16 %v2880, %v2879
        %v2899 = vpack.c.bf16 %v2882, %v2881
        %v2900 = vpack.c.bf16 %v2884, %v2883
        %v2901 = vpack.c.bf16 %v2886, %v2885
        %v2902 = vpack.c.bf16 %v2888, %v2887
        %v2903 = vpack.c.bf16 %v2890, %v2889
        %v2904 = vpack.c.bf16 %v2892, %v2891
        %v2905 = vpack.c.bf16 %v2894, %v2893
        %v2906 = vpack.c.bf16 %v2896, %v2895
        %v2908 = vsel %vm2676, %v2897, 0
        %v2911 = vsel %vm2676, %v2898, 0
        %v2914 = vsel %vm2676, %v2899, 0
        %v2917 = vsel %vm2676, %v2900, 0
        %v2920 = vsel %vm2676, %v2901, 0
        %v2923 = vsel %vm2676, %v2902, 0
        %v2926 = vsel %vm2676, %v2903, 0
        %v2929 = vsel %vm2676, %v2904, 0
        %v2932 = vsel %vm2676, %v2905, 0
        %v2935 = vsel %vm2676, %v2906, 0
        %v2938 = vsel %vm2554, %v2520, 0
        %2940 = vmatprep.subr.bf16.mxu0 0
        %2941 = vmatpush1.bf16.msra.mxu0 %v2518
        %2942 = vmatprep.subr.bf16.mxu0 0
        %2943 = vmatpush1.bf16.msra.mxu0 %v2519
        %2944 = vmatprep.subr.bf16.mxu0 0
        %2945 = vmatpush1.bf16.msra.mxu0 %v2938
        %2946 = vmatprep.subr.bf16.mxu0 0
        %2947 = vmatpush1.bf16.msra.mxu0 0
        %2948 = vmatprep.subr.bf16.mxu0 0
        %2949 = vmatpush1.bf16.msra.mxu0 0
        %2950 = vmatprep.subr.bf16.mxu0 0
        %2951 = vmatpush1.bf16.msra.mxu0 0
        %2952 = vmatprep.subr.bf16.mxu0 0
        %2953 = vmatpush1.bf16.msra.mxu0 0
        %2954 = vmatprep.subr.bf16.mxu0 0
        %2955 = vmatpush1.bf16.msra.mxu0 0
        %2956 = vmatprep.subr.bf16.mxu0 0
        %2957 = vmatpush1.bf16.msra.mxu0 0
        %2958 = vmatprep.subr.bf16.mxu0 0
        %2959 = vmatpush1.bf16.msra.mxu0 0
        %2960 = vmatprep.subr.bf16.mxu0 0
        %2961 = vmatpush1.bf16.msra.mxu0 0
        %2962 = vmatprep.subr.bf16.mxu0 0
        %2963 = vmatpush1.bf16.msra.mxu0 0
        %2964 = vmatprep.subr.bf16.mxu0 0
        %2965 = vmatpush1.bf16.msra.mxu0 0
        %2966 = vmatprep.subr.bf16.mxu0 0
        %2967 = vmatpush1.bf16.msra.mxu0 0
        %2968 = vmatprep.subr.bf16.mxu0 0
        %2969 = vmatpush1.bf16.msra.mxu0 0
        %2970 = vmatprep.subr.bf16.mxu0 0
        %2971 = vmatpush1.bf16.msra.mxu0 0
        %2972 = vmatprep.mubr.bf16.mxu0 0
        %2973 = vmatmul.mubr.bf16.gmra.mrb[0].mxu0 %v2908
        %v2974 = vpop.f32.mrb[0].mxu0
        %v2975 = vadd.f32 0.0, %v2974
        %v2976 = vpop.f32.mrb[0].mxu0
        %v2977 = vpop.f32.mrb[0].mxu0
        %v2978 = vadd.f32 0.0, %v2977
        %v2979 = vpop.f32.mrb[0].mxu0
        %2980 = vmatprep.mubr.bf16.mxu0 0
        %2981 = vmatmul.mubr.bf16.gmra.mrb[0].mxu0 %v2911
        %v2982 = vpop.f32.mrb[0].mxu0
        %v2983 = vadd.f32 0.0, %v2982
        %v2984 = vpop.f32.mrb[0].mxu0
        %v2985 = vpop.f32.mrb[0].mxu0
        %v2986 = vadd.f32 0.0, %v2985
        %v2987 = vpop.f32.mrb[0].mxu0
        %2988 = vmatprep.mubr.bf16.mxu0 0
        %2989 = vmatmul.mubr.bf16.gmra.mrb[0].mxu0 %v2914
        %v2990 = vpop.f32.mrb[0].mxu0
        %v2991 = vadd.f32 0.0, %v2990
        %v2992 = vpop.f32.mrb[0].mxu0
        %v2993 = vpop.f32.mrb[0].mxu0
        %v2994 = vadd.f32 0.0, %v2993
        %v2995 = vpop.f32.mrb[0].mxu0
        %2996 = vmatprep.mubr.bf16.mxu0 0
        %2997 = vmatmul.mubr.bf16.gmra.mrb[0].mxu0 %v2917
        %v2998 = vpop.f32.mrb[0].mxu0
        %v2999 = vadd.f32 0.0, %v2998
        %v3000 = vpop.f32.mrb[0].mxu0
        %v3001 = vpop.f32.mrb[0].mxu0
        %v3002 = vadd.f32 0.0, %v3001
        %v3003 = vpop.f32.mrb[0].mxu0
        %3004 = vmatprep.mubr.bf16.mxu0 0
        %3005 = vmatmul.mubr.bf16.gmra.mrb[0].mxu0 %v2920
        %v3006 = vpop.f32.mrb[0].mxu0
        %v3007 = vadd.f32 0.0, %v3006
        %v3008 = vpop.f32.mrb[0].mxu0
        %v3009 = vpop.f32.mrb[0].mxu0
        %v3010 = vadd.f32 0.0, %v3009
        %v3011 = vpop.f32.mrb[0].mxu0
        %3012 = vmatprep.mubr.bf16.mxu0 0
        %3013 = vmatmul.mubr.bf16.gmra.mrb[0].mxu0 %v2923
        %v3014 = vpop.f32.mrb[0].mxu0
        %v3015 = vadd.f32 0.0, %v3014
        %v3016 = vpop.f32.mrb[0].mxu0
        %v3017 = vpop.f32.mrb[0].mxu0
        %v3018 = vadd.f32 0.0, %v3017
        %v3019 = vpop.f32.mrb[0].mxu0
        %3020 = vmatprep.mubr.bf16.mxu0 0
        %3021 = vmatmul.mubr.bf16.gmra.mrb[0].mxu0 %v2926
        %v3022 = vpop.f32.mrb[0].mxu0
        %v3023 = vadd.f32 0.0, %v3022
        %v3024 = vpop.f32.mrb[0].mxu0
        %v3025 = vpop.f32.mrb[0].mxu0
        %v3026 = vadd.f32 0.0, %v3025
        %v3027 = vpop.f32.mrb[0].mxu0
        %3028 = vmatprep.mubr.bf16.mxu0 0
        %3029 = vmatmul.mubr.bf16.gmra.mrb[0].mxu0 %v2929
        %v3030 = vpop.f32.mrb[0].mxu0
        %v3031 = vadd.f32 0.0, %v3030
        %v3032 = vpop.f32.mrb[0].mxu0
        %v3033 = vpop.f32.mrb[0].mxu0
        %v3034 = vadd.f32 0.0, %v3033
        %v3035 = vpop.f32.mrb[0].mxu0
        %3036 = vmatprep.mubr.bf16.mxu0 0
        %3037 = vmatmul.mubr.bf16.gmra.mrb[0].mxu0 %v2932
        %v3038 = vpop.f32.mrb[0].mxu0
        %v3039 = vadd.f32 0.0, %v3038
        %v3040 = vpop.f32.mrb[0].mxu0
        %v3041 = vpop.f32.mrb[0].mxu0
        %v3042 = vadd.f32 0.0, %v3041
        %v3043 = vpop.f32.mrb[0].mxu0
        %3044 = vmatprep.mubr.bf16.mxu0 0
        %3045 = vmatmul.mubr.bf16.gmra.mrb[0].mxu0 %v2935
        %v3046 = vpop.f32.mrb[0].mxu0
        %v3047 = vadd.f32 0.0, %v3046
        %v3048 = vpop.f32.mrb[0].mxu0
        %v3049 = vpop.f32.mrb[0].mxu0
        %v3050 = vadd.f32 0.0, %v3049
        %v3051 = vpop.f32.mrb[0].mxu0
        %3052 = vdwg.mxu0
        %v3053 = vmul.f32 %v2975, %v2128
        %v3054 = vmul.f32 %v2978, %v2128
        %v3055 = vmul.f32 %v2983, %v2128
        %v3056 = vmul.f32 %v2986, %v2128
        %v3057 = vmul.f32 %v2991, %v2128
        %v3058 = vmul.f32 %v2994, %v2130
        %v3059 = vmul.f32 %v2999, %v2130
        %v3060 = vmul.f32 %v3002, %v2130
        %v3061 = vmul.f32 %v3007, %v2130
        %v3062 = vmul.f32 %v3010, %v2130
        %v3063 = vadd.f32 %v3053, %v3058
        %v3064 = vadd.f32 %v3054, %v3059
        %v3065 = vadd.f32 %v3055, %v3060
        %v3066 = vadd.f32 %v3056, %v3061
        %v3067 = vadd.f32 %v3057, %v3062
        %v3068 = vmul.f32 %v3015, %v2132
        %v3069 = vmul.f32 %v3018, %v2132
        %v3070 = vmul.f32 %v3023, %v2132
        %v3071 = vmul.f32 %v3026, %v2132
        %v3072 = vmul.f32 %v3031, %v2132
        %v3073 = vadd.f32 %v3063, %v3068
        %v3074 = vadd.f32 %v3064, %v3069
        %v3075 = vadd.f32 %v3065, %v3070
        %v3076 = vadd.f32 %v3066, %v3071
        %v3077 = vadd.f32 %v3067, %v3072
        %v3078 = vmul.f32 %v3034, %v2134
        %v3079 = vmul.f32 %v3039, %v2134
        %v3080 = vmul.f32 %v3042, %v2134
        %v3081 = vmul.f32 %v3047, %v2134
        %v3082 = vmul.f32 %v3050, %v2134
        %v3083 = vadd.f32 %v3073, %v3078
        %v3084 = vadd.f32 %v3074, %v3079
        %v3085 = vadd.f32 %v3075, %v3080
        %v3086 = vadd.f32 %v3076, %v3081
        %v3087 = vadd.f32 %v3077, %v3082
        %v3088 = vpack.c.bf16 %v3084, %v3083
        %v3089 = vpack.c.bf16 %v3086, %v3085
        %v3090 = vpack.c.bf16 %v3087, %v3087
        %v3091 = vld [vmem:[#allocation14] sm:$0xf]
        %v3092 = vld [vmem:[#allocation14 + $0x4] sm:$0xf]
        %v3093 = vld [vmem:[#allocation14 + $0x8] sm:$0xf]
        %v3094 = vld [vmem:[#allocation14 + $0xc] sm:$0xf]
        %v3095 = vld [vmem:[#allocation14 + $0x10] sm:$0xf]
        %v3096 = vld [vmem:[#allocation14 + $0x14] sm:$0xf]
        %v3097 = vld [vmem:[#allocation14 + $0x18] sm:$0xf]
        %v3098 = vld [vmem:[#allocation14 + $0x1c] sm:$0xf]
        %v3099 = vld [vmem:[#allocation14 + $0x20] sm:$0xf]
        %v3100 = vld [vmem:[#allocation14 + $0x24] sm:$0xf]
        %v3101 = vld [vmem:[#allocation14 + $0x28] sm:$0xf]
        %v3102 = vld [vmem:[#allocation14 + $0x2c] sm:$0xf]
        %v3103 = vld [vmem:[#allocation14 + $0x30] sm:$0xf]
        %v3104 = vld [vmem:[#allocation14 + $0x34] sm:$0xf]
        %v3105 = vld [vmem:[#allocation14 + $0x38] sm:$0xf]
        %v3106 = vld [vmem:[#allocation14 + $0x3c] sm:$0xf]
        %v3107 = vld [vmem:[#allocation16] sm:$0x1]
        %v3109 = vlaneseq
        %v3110 = vshrl.u32 %v3109, 7
        %v3111 = vsub.s32 0, %v3110
        %v3112 = vrot.slane %v3107, %v3111
        %v3130 = vunpack.c.l.b16 %v3091
        %v3131 = vunpack.c.l.b16 %v3092
        %v3132 = vunpack.c.l.b16 %v3093
        %v3133 = vunpack.c.l.b16 %v3094
        %v3134 = vunpack.c.l.b16 %v3095
        %v3135 = vunpack.c.l.b16 %v3096
        %v3136 = vunpack.c.l.b16 %v3097
        %v3137 = vunpack.c.l.b16 %v3098
        %v3138 = vunpack.c.l.b16 %v3099
        %v3139 = vunpack.c.l.b16 %v3100
        %v3140 = vunpack.c.l.b16 %v3101
        %v3141 = vunpack.c.l.b16 %v3102
        %v3142 = vunpack.c.l.b16 %v3103
        %v3143 = vunpack.c.l.b16 %v3104
        %v3144 = vunpack.c.l.b16 %v3105
        %v3145 = vunpack.c.l.b16 %v3106
        %v3146 = vpack.c.b16 %v3131, %v3130
        %v3147 = vpack.c.b16 %v3133, %v3132
        %v3148 = vpack.c.b16 %v3135, %v3134
        %v3149 = vpack.c.b16 %v3137, %v3136
        %v3150 = vpack.c.b16 %v3139, %v3138
        %v3151 = vpack.c.b16 %v3141, %v3140
        %v3152 = vpack.c.b16 %v3143, %v3142
        %v3153 = vpack.c.b16 %v3145, %v3144
        %3162 = vmatprep.subr.bf16.mxu0 0
        %3163 = vmatpush1.bf16.msra.mxu0 %v3146
        %3164 = vmatprep.subr.bf16.mxu0 0
        %3165 = vmatpush1.bf16.msra.mxu0 %v3147
        %3166 = vmatprep.subr.bf16.mxu0 0
        %3167 = vmatpush1.bf16.msra.mxu0 %v3148
        %3168 = vmatprep.subr.bf16.mxu0 0
        %3169 = vmatpush1.bf16.msra.mxu0 %v3149
        %3170 = vmatprep.subr.bf16.mxu0 0
        %3171 = vmatpush1.bf16.msra.mxu0 %v3150
        %3172 = vmatprep.subr.bf16.mxu0 0
        %3173 = vmatpush1.bf16.msra.mxu0 %v3151
        %3174 = vmatprep.subr.bf16.mxu0 0
        %3175 = vmatpush1.bf16.msra.mxu0 %v3152
        %3176 = vmatprep.subr.bf16.mxu0 0
        %3177 = vmatpush1.bf16.msra.mxu0 %v3153
        %3178 = vmatprep.subr.bf16.mxu0 0
        %3179 = vmatpush1.bf16.msra.mxu0 0
        %3180 = vmatprep.subr.bf16.mxu0 0
        %3181 = vmatpush1.bf16.msra.mxu0 0
        %3182 = vmatprep.subr.bf16.mxu0 0
        %3183 = vmatpush1.bf16.msra.mxu0 0
        %3184 = vmatprep.subr.bf16.mxu0 0
        %3185 = vmatpush1.bf16.msra.mxu0 0
        %3186 = vmatprep.subr.bf16.mxu0 0
        %3187 = vmatpush1.bf16.msra.mxu0 0
        %3188 = vmatprep.subr.bf16.mxu0 0
        %3189 = vmatpush1.bf16.msra.mxu0 0
        %3190 = vmatprep.subr.bf16.mxu0 0
        %3191 = vmatpush1.bf16.msra.mxu0 0
        %3192 = vmatprep.subr.bf16.mxu0 0
        %3193 = vmatpush1.bf16.msra.mxu0 0
        %3194 = vmatprep.mubr.bf16.mxu0 0
        %3195 = vmatmul.mubr.bf16.gmra.mrb[0].mxu0 %v3088
        %v3196 = vpop.f32.mrb[0].mxu0
        %v3197 = vadd.f32 %v3112, %v3196
        %v3198 = vpop.f32.mrb[0].mxu0
        %v3199 = vpop.f32.mrb[0].mxu0
        %v3200 = vadd.f32 %v3112, %v3199
        %v3201 = vpop.f32.mrb[0].mxu0
        %3202 = vmatprep.mubr.bf16.mxu0 0
        %3203 = vmatmul.mubr.bf16.gmra.mrb[0].mxu0 %v3089
        %v3204 = vpop.f32.mrb[0].mxu0
        %v3205 = vadd.f32 %v3112, %v3204
        %v3206 = vpop.f32.mrb[0].mxu0
        %v3207 = vpop.f32.mrb[0].mxu0
        %v3208 = vadd.f32 %v3112, %v3207
        %v3209 = vpop.f32.mrb[0].mxu0
        %3210 = vmatprep.mubr.bf16.mxu0 0
        %3211 = vmatmul.mubr.bf16.gmra.mrb[0].mxu0 %v3090
        %v3212 = vpop.f32.mrb[0].mxu0
        %v3213 = vadd.f32 %v3112, %v3212
        %v3214 = vpop.f32.mrb[0].mxu0
        %v3215 = vpop.f32.mrb[0].mxu0
        %v3216 = vpop.f32.mrb[0].mxu0
        %3217 = vdwg.mxu0
        %v3218 = vadd.f32 %v2100, %v3197
        %v3219 = vadd.f32 %v2101, %v3200
        %v3220 = vadd.f32 %v2102, %v3205
        %v3221 = vadd.f32 %v2103, %v3208
        %v3222 = vadd.f32 %v2104, %v3213
        %v3223 = vld [vmem:[#allocation17] sm:$0x1]
        %v3224 = vld [vmem:[#allocation19] sm:$0x1]
        %3225 = vadd.xlane.f32.xlu0 %v3218
        %v3226 = vpop.xlane.xlu0 %3225
        %3227 = vadd.xlane.f32.xlu0 %v3219
        %v3228 = vpop.xlane.xlu0 %3227
        %3229 = vadd.xlane.f32.xlu0 %v3220
        %v3230 = vpop.xlane.xlu0 %3229
        %3231 = vadd.xlane.f32.xlu0 %v3221
        %v3232 = vpop.xlane.xlu0 %3231
        %3233 = vadd.xlane.f32.xlu0 %v3222
        %v3234 = vpop.xlane.xlu0 %3233
        %v3235 = vmul.f32 %v3226, %v2147
        %v3236 = vmul.f32 %v3228, %v2147
        %v3237 = vmul.f32 %v3230, %v2147
        %v3238 = vmul.f32 %v3232, %v2147
        %v3239 = vmul.f32 %v3234, %v2147
        %v3240 = vsub.f32 %v3218, %v3235
        %v3241 = vsub.f32 %v3219, %v3236
        %v3242 = vsub.f32 %v3220, %v3237
        %v3243 = vsub.f32 %v3221, %v3238
        %v3244 = vsub.f32 %v3222, %v3239
        %v3245 = vmul.f32 %v3240, %v3240
        %v3246 = vmul.f32 %v3241, %v3241
        %v3247 = vmul.f32 %v3242, %v3242
        %v3248 = vmul.f32 %v3243, %v3243
        %v3249 = vmul.f32 %v3244, %v3244
        %3250 = vadd.xlane.f32.xlu0 %v3245
        %v3251 = vpop.xlane.xlu0 %3250
        %3252 = vadd.xlane.f32.xlu0 %v3246
        %v3253 = vpop.xlane.xlu0 %3252
        %3254 = vadd.xlane.f32.xlu0 %v3247
        %v3255 = vpop.xlane.xlu0 %3254
        %3256 = vadd.xlane.f32.xlu0 %v3248
        %v3257 = vpop.xlane.xlu0 %3256
        %3258 = vadd.xlane.f32.xlu0 %v3249
        %v3259 = vpop.xlane.xlu0 %3258
        %v3260 = vmul.f32 %v3251, %v2147
        %v3261 = vmul.f32 %v3253, %v2147
        %v3262 = vmul.f32 %v3255, %v2147
        %v3263 = vmul.f32 %v3257, %v2147
        %v3264 = vmul.f32 %v3259, %v2147
        %v3265 = vadd.f32 %v3260, 1e-06
        %v3266 = vadd.f32 %v3261, 1e-06
        %v3267 = vadd.f32 %v3262, 1e-06
        %v3268 = vadd.f32 %v3263, 1e-06
        %v3269 = vadd.f32 %v3264, 1e-06
        %v3270 = vrsqrt.pop %v3265
        %v3271 = vrsqrt.pop %v3266
        %v3272 = vrsqrt.pop %v3267
        %v3273 = vrsqrt.pop %v3268
        %v3274 = vrsqrt.pop %v3269
        %v3275 = vmul.f32 %v3240, %v3270
        %v3276 = vmul.f32 %v3241, %v3271
        %v3277 = vmul.f32 %v3242, %v3272
        %v3278 = vmul.f32 %v3243, %v3273
        %v3279 = vmul.f32 %v3244, %v3274
        %v3281 = vlaneseq
        %v3282 = vshrl.u32 %v3281, 7
        %v3283 = vsub.s32 0, %v3282
        %v3284 = vrot.slane %v3223, %v3283
        %v3286 = vmul.f32 %v3275, %v3284
        %v3287 = vmul.f32 %v3276, %v3284
        %v3288 = vmul.f32 %v3277, %v3284
        %v3289 = vmul.f32 %v3278, %v3284
        %v3290 = vmul.f32 %v3279, %v3284
        %v3292 = vlaneseq
        %v3293 = vshrl.u32 %v3292, 7
        %v3294 = vsub.s32 0, %v3293
        %v3295 = vrot.slane %v3224, %v3294
        %v3297 = vadd.f32 %v3286, %v3295
        %v3298 = vadd.f32 %v3287, %v3295
        %v3299 = vadd.f32 %v3288, %v3295
        %v3300 = vadd.f32 %v3289, %v3295
        %v3301 = vadd.f32 %v3290, %v3295
        %v3302 = vpack.c.bf16 %v3298, %v3297
        %v3303 = vpack.c.bf16 %v3300, %v3299
        %v3304 = vpack.c.bf16 %v3301, %v3301
        %v3305 = vld [vmem:[#allocation20] sm:$0xff]
        %v3306 = vld [vmem:[#allocation20 + $0x8] sm:$0xff]
        %v3307 = vld [vmem:[#allocation20 + $0x10] sm:$0xff]
        %v3308 = vld [vmem:[#allocation20 + $0x18] sm:$0xff]
        %v3309 = vld [vmem:[#allocation20 + $0x20] sm:$0xff]
        %v3310 = vld [vmem:[#allocation20 + $0x28] sm:$0xff]
        %v3311 = vld [vmem:[#allocation20 + $0x30] sm:$0xff]
        %v3312 = vld [vmem:[#allocation20 + $0x38] sm:$0xff]
        %v3313 = vld [vmem:[#allocation20 + $0x40] sm:$0xff]
        %v3314 = vld [vmem:[#allocation20 + $0x48] sm:$0xff]
        %v3315 = vld [vmem:[#allocation20 + $0x50] sm:$0xff]
        %v3316 = vld [vmem:[#allocation20 + $0x58] sm:$0xff]
        %v3317 = vld [vmem:[#allocation20 + $0x60] sm:$0xff]
        %v3318 = vld [vmem:[#allocation20 + $0x68] sm:$0xff]
        %v3319 = vld [vmem:[#allocation20 + $0x70] sm:$0xff]
        %v3320 = vld [vmem:[#allocation20 + $0x78] sm:$0xff]
        %v3321 = vld [vmem:[#allocation20 + $0x80] sm:$0xff]
        %v3322 = vld [vmem:[#allocation20 + $0x88] sm:$0xff]
        %v3323 = vld [vmem:[#allocation20 + $0x90] sm:$0xff]
        %v3324 = vld [vmem:[#allocation20 + $0x98] sm:$0xff]
        %v3325 = vld [vmem:[#allocation20 + $0xa0] sm:$0xff]
        %v3326 = vld [vmem:[#allocation20 + $0xa8] sm:$0xff]
        %v3327 = vld [vmem:[#allocation20 + $0xb0] sm:$0xff]
        %v3328 = vld [vmem:[#allocation20 + $0xb8] sm:$0xff]
        %v3329 = vld [vmem:[#allocation20 + $0xc0] sm:$0xff]
        %v3330 = vld [vmem:[#allocation20 + $0xc8] sm:$0xff]
        %v3331 = vld [vmem:[#allocation20 + $0xd0] sm:$0xff]
        %v3332 = vld [vmem:[#allocation20 + $0xd8] sm:$0xff]
        %v3333 = vld [vmem:[#allocation20 + $0xe0] sm:$0xff]
        %v3334 = vld [vmem:[#allocation20 + $0xe8] sm:$0xff]
        %v3335 = vld [vmem:[#allocation20 + $0xf0] sm:$0xff]
        %v3336 = vld [vmem:[#allocation20 + $0xf8] sm:$0xff]
        %v3337 = vld [vmem:[#allocation22] sm:$0xf]
        %v3339 = vlaneseq
        %v3340 = vshrl.u32 %v3339, 7
        %v3341 = vsub.s32 0, %v3340
        %v3342 = vrot.slane %v3337, %v3341
        %v3343 = vlaneseq
        %v3344 = vshrl.u32 %v3343, 7
        %v3345 = vsub.s32 1, %v3344
        %v3346 = vrot.slane %v3337, %v3345
        %v3347 = vlaneseq
        %v3348 = vshrl.u32 %v3347, 7
        %v3349 = vsub.s32 2, %v3348
        %v3350 = vrot.slane %v3337, %v3349
        %v3351 = vlaneseq
        %v3352 = vshrl.u32 %v3351, 7
        %v3353 = vsub.s32 3, %v3352
        %v3354 = vrot.slane %v3337, %v3353
        %v3391 = vunpack.c.l.b16 %v3305
        %v3392 = vunpack.c.h.b16 %v3305
        %v3393 = vunpack.c.l.b16 %v3306
        %v3394 = vunpack.c.h.b16 %v3306
        %v3395 = vunpack.c.l.b16 %v3307
        %v3396 = vunpack.c.h.b16 %v3307
        %v3397 = vunpack.c.l.b16 %v3308
        %v3398 = vunpack.c.h.b16 %v3308
        %v3399 = vunpack.c.l.b16 %v3309
        %v3400 = vunpack.c.h.b16 %v3309
        %v3401 = vunpack.c.l.b16 %v3310
        %v3402 = vunpack.c.h.b16 %v3310
        %v3403 = vunpack.c.l.b16 %v3311
        %v3404 = vunpack.c.h.b16 %v3311
        %v3405 = vunpack.c.l.b16 %v3312
        %v3406 = vunpack.c.h.b16 %v3312
        %v3407 = vunpack.c.l.b16 %v3313
        %v3408 = vunpack.c.h.b16 %v3313
        %v3409 = vunpack.c.l.b16 %v3314
        %v3410 = vunpack.c.h.b16 %v3314
        %v3411 = vunpack.c.l.b16 %v3315
        %v3412 = vunpack.c.h.b16 %v3315
        %v3413 = vunpack.c.l.b16 %v3316
        %v3414 = vunpack.c.h.b16 %v3316
        %v3415 = vunpack.c.l.b16 %v3317
        %v3416 = vunpack.c.h.b16 %v3317
        %v3417 = vunpack.c.l.b16 %v3318
        %v3418 = vunpack.c.h.b16 %v3318
        %v3419 = vunpack.c.l.b16 %v3319
        %v3420 = vunpack.c.h.b16 %v3319
        %v3421 = vunpack.c.l.b16 %v3320
        %v3422 = vunpack.c.h.b16 %v3320
        %v3423 = vunpack.c.l.b16 %v3321
        %v3424 = vunpack.c.h.b16 %v3321
        %v3425 = vunpack.c.l.b16 %v3322
        %v3426 = vunpack.c.h.b16 %v3322
        %v3427 = vunpack.c.l.b16 %v3323
        %v3428 = vunpack.c.h.b16 %v3323
        %v3429 = vunpack.c.l.b16 %v3324
        %v3430 = vunpack.c.h.b16 %v3324
        %v3431 = vunpack.c.l.b16 %v3325
        %v3432 = vunpack.c.h.b16 %v3325
        %v3433 = vunpack.c.l.b16 %v3326
        %v3434 = vunpack.c.h.b16 %v3326
        %v3435 = vunpack.c.l.b16 %v3327
        %v3436 = vunpack.c.h.b16 %v3327
        %v3437 = vunpack.c.l.b16 %v3328
        %v3438 = vunpack.c.h.b16 %v3328
        %v3439 = vunpack.c.l.b16 %v3329
        %v3440 = vunpack.c.h.b16 %v3329
        %v3441 = vunpack.c.l.b16 %v3330
        %v3442 = vunpack.c.h.b16 %v3330
        %v3443 = vunpack.c.l.b16 %v3331
        %v3444 = vunpack.c.h.b16 %v3331
        %v3445 = vunpack.c.l.b16 %v3332
        %v3446 = vunpack.c.h.b16 %v3332
        %v3447 = vunpack.c.l.b16 %v3333
        %v3448 = vunpack.c.h.b16 %v3333
        %v3449 = vunpack.c.l.b16 %v3334
        %v3450 = vunpack.c.h.b16 %v3334
        %v3451 = vunpack.c.l.b16 %v3335
        %v3452 = vunpack.c.h.b16 %v3335
        %v3453 = vunpack.c.l.b16 %v3336
        %v3454 = vunpack.c.h.b16 %v3336
        %v3455 = vpack.c.b16 %v3395, %v3391
        %v3456 = vpack.c.b16 %v3396, %v3392
        %v3457 = vpack.c.b16 %v3397, %v3393
        %v3458 = vpack.c.b16 %v3398, %v3394
        %v3459 = vpack.c.b16 %v3403, %v3399
        %v3460 = vpack.c.b16 %v3404, %v3400
        %v3461 = vpack.c.b16 %v3405, %v3401
        %v3462 = vpack.c.b16 %v3406, %v3402
        %v3463 = vpack.c.b16 %v3411, %v3407
        %v3464 = vpack.c.b16 %v3412, %v3408
        %v3465 = vpack.c.b16 %v3413, %v3409
        %v3466 = vpack.c.b16 %v3414, %v3410
        %v3467 = vpack.c.b16 %v3419, %v3415
        %v3468 = vpack.c.b16 %v3420, %v3416
        %v3469 = vpack.c.b16 %v3421, %v3417
        %v3470 = vpack.c.b16 %v3422, %v3418
        %v3471 = vpack.c.b16 %v3427, %v3423
        %v3472 = vpack.c.b16 %v3428, %v3424
        %v3473 = vpack.c.b16 %v3429, %v3425
        %v3474 = vpack.c.b16 %v3430, %v3426
        %v3475 = vpack.c.b16 %v3435, %v3431
        %v3476 = vpack.c.b16 %v3436, %v3432
        %v3477 = vpack.c.b16 %v3437, %v3433
        %v3478 = vpack.c.b16 %v3438, %v3434
        %v3479 = vpack.c.b16 %v3443, %v3439
        %v3480 = vpack.c.b16 %v3444, %v3440
        %v3481 = vpack.c.b16 %v3445, %v3441
        %v3482 = vpack.c.b16 %v3446, %v3442
        %v3483 = vpack.c.b16 %v3451, %v3447
        %v3484 = vpack.c.b16 %v3452, %v3448
        %v3485 = vpack.c.b16 %v3453, %v3449
        %v3486 = vpack.c.b16 %v3454, %v3450
        %3519 = vmatprep.subr.bf16.mxu0 %v3456
        %3520 = vmatpush1.bf16.msra.mxu0 %v3455
        %3521 = vmatprep.subr.bf16.mxu0 %v3460
        %3522 = vmatpush1.bf16.msra.mxu0 %v3459
        %3523 = vmatprep.subr.bf16.mxu0 %v3464
        %3524 = vmatpush1.bf16.msra.mxu0 %v3463
        %3525 = vmatprep.subr.bf16.mxu0 %v3468
        %3526 = vmatpush1.bf16.msra.mxu0 %v3467
        %3527 = vmatprep.subr.bf16.mxu0 %v3472
        %3528 = vmatpush1.bf16.msra.mxu0 %v3471
        %3529 = vmatprep.subr.bf16.mxu0 %v3476
        %3530 = vmatpush1.bf16.msra.mxu0 %v3475
        %3531 = vmatprep.subr.bf16.mxu0 %v3480
        %3532 = vmatpush1.bf16.msra.mxu0 %v3479
        %3533 = vmatprep.subr.bf16.mxu0 %v3484
        %3534 = vmatpush1.bf16.msra.mxu0 %v3483
        %3535 = vmatprep.subr.bf16.mxu0 0
        %3536 = vmatpush1.bf16.msra.mxu0 0
        %3537 = vmatprep.subr.bf16.mxu0 0
        %3538 = vmatpush1.bf16.msra.mxu0 0
        %3539 = vmatprep.subr.bf16.mxu0 0
        %3540 = vmatpush1.bf16.msra.mxu0 0
        %3541 = vmatprep.subr.bf16.mxu0 0
        %3542 = vmatpush1.bf16.msra.mxu0 0
        %3543 = vmatprep.subr.bf16.mxu0 0
        %3544 = vmatpush1.bf16.msra.mxu0 0
        %3545 = vmatprep.subr.bf16.mxu0 0
        %3546 = vmatpush1.bf16.msra.mxu0 0
        %3547 = vmatprep.subr.bf16.mxu0 0
        %3548 = vmatpush1.bf16.msra.mxu0 0
        %3549 = vmatprep.subr.bf16.mxu0 0
        %3550 = vmatpush1.bf16.msra.mxu0 0
        %3551 = vmatprep.mubr.bf16.mxu0 0
        %3552 = vmatmul.mubr.bf16.gmra.mrb[0].mxu0 %v3302
        %v3553 = vpop.f32.mrb[0].mxu0
        %v3554 = vadd.f32 %v3342, %v3553
        %v3555 = vpop.f32.mrb[0].mxu0
        %v3556 = vadd.f32 %v3346, %v3555
        %v3557 = vpop.f32.mrb[0].mxu0
        %v3558 = vadd.f32 %v3342, %v3557
        %v3559 = vpop.f32.mrb[0].mxu0
        %v3560 = vadd.f32 %v3346, %v3559
        %3561 = vmatprep.mubr.bf16.mxu0 0
        %3562 = vmatmul.mubr.bf16.gmra.mrb[0].mxu0 %v3303
        %v3563 = vpop.f32.mrb[0].mxu0
        %v3564 = vadd.f32 %v3342, %v3563
        %v3565 = vpop.f32.mrb[0].mxu0
        %v3566 = vadd.f32 %v3346, %v3565
        %v3567 = vpop.f32.mrb[0].mxu0
        %v3568 = vadd.f32 %v3342, %v3567
        %v3569 = vpop.f32.mrb[0].mxu0
        %v3570 = vadd.f32 %v3346, %v3569
        %3571 = vmatprep.mubr.bf16.mxu0 0
        %3572 = vmatmul.mubr.bf16.gmra.mrb[0].mxu0 %v3304
        %v3573 = vpop.f32.mrb[0].mxu0
        %v3574 = vadd.f32 %v3342, %v3573
        %v3575 = vpop.f32.mrb[0].mxu0
        %v3576 = vadd.f32 %v3346, %v3575
        %v3577 = vpop.f32.mrb[0].mxu0
        %v3578 = vpop.f32.mrb[0].mxu0
        %3579 = vdwg.mxu0
        %3580 = vmatprep.subr.bf16.mxu0 %v3458
        %3581 = vmatpush1.bf16.msra.mxu0 %v3457
        %3582 = vmatprep.subr.bf16.mxu0 %v3462
        %3583 = vmatpush1.bf16.msra.mxu0 %v3461
        %3584 = vmatprep.subr.bf16.mxu0 %v3466
        %3585 = vmatpush1.bf16.msra.mxu0 %v3465
        %3586 = vmatprep.subr.bf16.mxu0 %v3470
        %3587 = vmatpush1.bf16.msra.mxu0 %v3469
        %3588 = vmatprep.subr.bf16.mxu0 %v3474
        %3589 = vmatpush1.bf16.msra.mxu0 %v3473
        %3590 = vmatprep.subr.bf16.mxu0 %v3478
        %3591 = vmatpush1.bf16.msra.mxu0 %v3477
        %3592 = vmatprep.subr.bf16.mxu0 %v3482
        %3593 = vmatpush1.bf16.msra.mxu0 %v3481
        %3594 = vmatprep.subr.bf16.mxu0 %v3486
        %3595 = vmatpush1.bf16.msra.mxu0 %v3485
        %3596 = vmatprep.subr.bf16.mxu0 0
        %3597 = vmatpush1.bf16.msra.mxu0 0
        %3598 = vmatprep.subr.bf16.mxu0 0
        %3599 = vmatpush1.bf16.msra.mxu0 0
        %3600 = vmatprep.subr.bf16.mxu0 0
        %3601 = vmatpush1.bf16.msra.mxu0 0
        %3602 = vmatprep.subr.bf16.mxu0 0
        %3603 = vmatpush1.bf16.msra.mxu0 0
        %3604 = vmatprep.subr.bf16.mxu0 0
        %3605 = vmatpush1.bf16.msra.mxu0 0
        %3606 = vmatprep.subr.bf16.mxu0 0
        %3607 = vmatpush1.bf16.msra.mxu0 0
        %3608 = vmatprep.subr.bf16.mxu0 0
        %3609 = vmatpush1.bf16.msra.mxu0 0
        %3610 = vmatprep.subr.bf16.mxu0 0
        %3611 = vmatpush1.bf16.msra.mxu0 0
        %3612 = vmatprep.mubr.bf16.mxu0 0
        %3613 = vmatmul.mubr.bf16.gmra.mrb[0].mxu0 %v3302
        %v3614 = vpop.f32.mrb[0].mxu0
        %v3615 = vadd.f32 %v3350, %v3614
        %v3616 = vpop.f32.mrb[0].mxu0
        %v3617 = vadd.f32 %v3354, %v3616
        %v3618 = vpop.f32.mrb[0].mxu0
        %v3619 = vadd.f32 %v3350, %v3618
        %v3620 = vpop.f32.mrb[0].mxu0
        %v3621 = vadd.f32 %v3354, %v3620
        %3622 = vmatprep.mubr.bf16.mxu0 0
        %3623 = vmatmul.mubr.bf16.gmra.mrb[0].mxu0 %v3303
        %v3624 = vpop.f32.mrb[0].mxu0
        %v3625 = vadd.f32 %v3350, %v3624
        %v3626 = vpop.f32.mrb[0].mxu0
        %v3627 = vadd.f32 %v3354, %v3626
        %v3628 = vpop.f32.mrb[0].mxu0
        %v3629 = vadd.f32 %v3350, %v3628
        %v3630 = vpop.f32.mrb[0].mxu0
        %v3631 = vadd.f32 %v3354, %v3630
        %3632 = vmatprep.mubr.bf16.mxu0 0
        %3633 = vmatmul.mubr.bf16.gmra.mrb[0].mxu0 %v3304
        %v3634 = vpop.f32.mrb[0].mxu0
        %v3635 = vadd.f32 %v3350, %v3634
        %v3636 = vpop.f32.mrb[0].mxu0
        %v3637 = vadd.f32 %v3354, %v3636
        %v3638 = vpop.f32.mrb[0].mxu0
        %v3639 = vpop.f32.mrb[0].mxu0
        %3640 = vdwg.mxu0
        %v3641 = vmul.f32 %v3554, 0.5
        %v3642 = vmul.f32 %v3556, 0.5
        %v3643 = vmul.f32 %v3615, 0.5
        %v3644 = vmul.f32 %v3617, 0.5
        %v3645 = vmul.f32 %v3558, 0.5
        %v3646 = vmul.f32 %v3560, 0.5
        %v3647 = vmul.f32 %v3619, 0.5
        %v3648 = vmul.f32 %v3621, 0.5
        %v3649 = vmul.f32 %v3564, 0.5
        %v3650 = vmul.f32 %v3566, 0.5
        %v3651 = vmul.f32 %v3625, 0.5
        %v3652 = vmul.f32 %v3627, 0.5
        %v3653 = vmul.f32 %v3568, 0.5
        %v3654 = vmul.f32 %v3570, 0.5
        %v3655 = vmul.f32 %v3629, 0.5
        %v3656 = vmul.f32 %v3631, 0.5
        %v3657 = vmul.f32 %v3574, 0.5
        %v3658 = vmul.f32 %v3576, 0.5
        %v3659 = vmul.f32 %v3635, 0.5
        %v3660 = vmul.f32 %v3637, 0.5
        %v3661 = vmul.f32 %v3554, 0.044715
        %v3662 = vmul.f32 %v3556, 0.044715
        %v3663 = vmul.f32 %v3615, 0.044715
        %v3664 = vmul.f32 %v3617, 0.044715
        %v3665 = vmul.f32 %v3558, 0.044715
        %v3666 = vmul.f32 %v3560, 0.044715
        %v3667 = vmul.f32 %v3619, 0.044715
        %v3668 = vmul.f32 %v3621, 0.044715
        %v3669 = vmul.f32 %v3564, 0.044715
        %v3670 = vmul.f32 %v3566, 0.044715
        %v3671 = vmul.f32 %v3625, 0.044715
        %v3672 = vmul.f32 %v3627, 0.044715
        %v3673 = vmul.f32 %v3568, 0.044715
        %v3674 = vmul.f32 %v3570, 0.044715
        %v3675 = vmul.f32 %v3629, 0.044715
        %v3676 = vmul.f32 %v3631, 0.044715
        %v3677 = vmul.f32 %v3574, 0.044715
        %v3678 = vmul.f32 %v3576, 0.044715
        %v3679 = vmul.f32 %v3635, 0.044715
        %v3680 = vmul.f32 %v3637, 0.044715
        %v3681 = vmul.f32 %v3661, %v3554
        %v3682 = vmul.f32 %v3662, %v3556
        %v3683 = vmul.f32 %v3663, %v3615
        %v3684 = vmul.f32 %v3664, %v3617
        %v3685 = vmul.f32 %v3665, %v3558
        %v3686 = vmul.f32 %v3666, %v3560
        %v3687 = vmul.f32 %v3667, %v3619
        %v3688 = vmul.f32 %v3668, %v3621
        %v3689 = vmul.f32 %v3669, %v3564
        %v3690 = vmul.f32 %v3670, %v3566
        %v3691 = vmul.f32 %v3671, %v3625
        %v3692 = vmul.f32 %v3672, %v3627
        %v3693 = vmul.f32 %v3673, %v3568
        %v3694 = vmul.f32 %v3674, %v3570
        %v3695 = vmul.f32 %v3675, %v3629
        %v3696 = vmul.f32 %v3676, %v3631
        %v3697 = vmul.f32 %v3677, %v3574
        %v3698 = vmul.f32 %v3678, %v3576
        %v3699 = vmul.f32 %v3679, %v3635
        %v3700 = vmul.f32 %v3680, %v3637
        %v3701 = vmul.f32 %v3681, %v3554
        %v3702 = vmul.f32 %v3682, %v3556
        %v3703 = vmul.f32 %v3683, %v3615
        %v3704 = vmul.f32 %v3684, %v3617
        %v3705 = vmul.f32 %v3685, %v3558
        %v3706 = vmul.f32 %v3686, %v3560
        %v3707 = vmul.f32 %v3687, %v3619
        %v3708 = vmul.f32 %v3688, %v3621
        %v3709 = vmul.f32 %v3689, %v3564
        %v3710 = vmul.f32 %v3690, %v3566
        %v3711 = vmul.f32 %v3691, %v3625
        %v3712 = vmul.f32 %v3692, %v3627
        %v3713 = vmul.f32 %v3693, %v3568
        %v3714 = vmul.f32 %v3694, %v3570
        %v3715 = vmul.f32 %v3695, %v3629
        %v3716 = vmul.f32 %v3696, %v3631
        %v3717 = vmul.f32 %v3697, %v3574
        %v3718 = vmul.f32 %v3698, %v3576
        %v3719 = vmul.f32 %v3699, %v3635
        %v3720 = vmul.f32 %v3700, %v3637
        %v3721 = vadd.f32 %v3554, %v3701
        %v3722 = vadd.f32 %v3556, %v3702
        %v3723 = vadd.f32 %v3615, %v3703
        %v3724 = vadd.f32 %v3617, %v3704
        %v3725 = vadd.f32 %v3558, %v3705
        %v3726 = vadd.f32 %v3560, %v3706
        %v3727 = vadd.f32 %v3619, %v3707
        %v3728 = vadd.f32 %v3621, %v3708
        %v3729 = vadd.f32 %v3564, %v3709
        %v3730 = vadd.f32 %v3566, %v3710
        %v3731 = vadd.f32 %v3625, %v3711
        %v3732 = vadd.f32 %v3627, %v3712
        %v3733 = vadd.f32 %v3568, %v3713
        %v3734 = vadd.f32 %v3570, %v3714
        %v3735 = vadd.f32 %v3629, %v3715
        %v3736 = vadd.f32 %v3631, %v3716
        %v3737 = vadd.f32 %v3574, %v3717
        %v3738 = vadd.f32 %v3576, %v3718
        %v3739 = vadd.f32 %v3635, %v3719
        %v3740 = vadd.f32 %v3637, %v3720
        %v3741 = vmul.f32 %v3721, 0.7978846
        %v3742 = vmul.f32 %v3722, 0.7978846
        %v3743 = vmul.f32 %v3723, 0.7978846
        %v3744 = vmul.f32 %v3724, 0.7978846
        %v3745 = vmul.f32 %v3725, 0.7978846
        %v3746 = vmul.f32 %v3726, 0.7978846
        %v3747 = vmul.f32 %v3727, 0.7978846
        %v3748 = vmul.f32 %v3728, 0.7978846
        %v3749 = vmul.f32 %v3729, 0.7978846
        %v3750 = vmul.f32 %v3730, 0.7978846
        %v3751 = vmul.f32 %v3731, 0.7978846
        %v3752 = vmul.f32 %v3732, 0.7978846
        %v3753 = vmul.f32 %v3733, 0.7978846
        %v3754 = vmul.f32 %v3734, 0.7978846
        %v3755 = vmul.f32 %v3735, 0.7978846
        %v3756 = vmul.f32 %v3736, 0.7978846
        %v3757 = vmul.f32 %v3737, 0.7978846
        %v3758 = vmul.f32 %v3738, 0.7978846
        %v3759 = vmul.f32 %v3739, 0.7978846
        %v3760 = vmul.f32 %v3740, 0.7978846
        %v3761 = vtanh.pop %v3741
        %v3762 = vtanh.pop %v3742
        %v3763 = vtanh.pop %v3743
        %v3764 = vtanh.pop %v3744
        %v3765 = vtanh.pop %v3745
        %v3766 = vtanh.pop %v3746
        %v3767 = vtanh.pop %v3747
        %v3768 = vtanh.pop %v3748
        %v3769 = vtanh.pop %v3749
        %v3770 = vtanh.pop %v3750
        %v3771 = vtanh.pop %v3751
        %v3772 = vtanh.pop %v3752
        %v3773 = vtanh.pop %v3753
        %v3774 = vtanh.pop %v3754
        %v3775 = vtanh.pop %v3755
        %v3776 = vtanh.pop %v3756
        %v3777 = vtanh.pop %v3757
        %v3778 = vtanh.pop %v3758
        %v3779 = vtanh.pop %v3759
        %v3780 = vtanh.pop %v3760
        %v3781 = vadd.f32 %v3761, 1.0
        %v3782 = vadd.f32 %v3762, 1.0
        %v3783 = vadd.f32 %v3763, 1.0
        %v3784 = vadd.f32 %v3764, 1.0
        %v3785 = vadd.f32 %v3765, 1.0
        %v3786 = vadd.f32 %v3766, 1.0
        %v3787 = vadd.f32 %v3767, 1.0
        %v3788 = vadd.f32 %v3768, 1.0
        %v3789 = vadd.f32 %v3769, 1.0
        %v3790 = vadd.f32 %v3770, 1.0
        %v3791 = vadd.f32 %v3771, 1.0
        %v3792 = vadd.f32 %v3772, 1.0
        %v3793 = vadd.f32 %v3773, 1.0
        %v3794 = vadd.f32 %v3774, 1.0
        %v3795 = vadd.f32 %v3775, 1.0
        %v3796 = vadd.f32 %v3776, 1.0
        %v3797 = vadd.f32 %v3777, 1.0
        %v3798 = vadd.f32 %v3778, 1.0
        %v3799 = vadd.f32 %v3779, 1.0
        %v3800 = vadd.f32 %v3780, 1.0
        %v3801 = vmul.f32 %v3641, %v3781
        %v3802 = vmul.f32 %v3642, %v3782
        %v3803 = vmul.f32 %v3643, %v3783
        %v3804 = vmul.f32 %v3644, %v3784
        %v3805 = vmul.f32 %v3645, %v3785
        %v3806 = vmul.f32 %v3646, %v3786
        %v3807 = vmul.f32 %v3647, %v3787
        %v3808 = vmul.f32 %v3648, %v3788
        %v3809 = vmul.f32 %v3649, %v3789
        %v3810 = vmul.f32 %v3650, %v3790
        %v3811 = vmul.f32 %v3651, %v3791
        %v3812 = vmul.f32 %v3652, %v3792
        %v3813 = vmul.f32 %v3653, %v3793
        %v3814 = vmul.f32 %v3654, %v3794
        %v3815 = vmul.f32 %v3655, %v3795
        %v3816 = vmul.f32 %v3656, %v3796
        %v3817 = vmul.f32 %v3657, %v3797
        %v3818 = vmul.f32 %v3658, %v3798
        %v3819 = vmul.f32 %v3659, %v3799
        %v3820 = vmul.f32 %v3660, %v3800
        %v3821 = vpack.c.bf16 %v3805, %v3801
        %v3822 = vpack.c.bf16 %v3806, %v3802
        %v3823 = vpack.c.bf16 %v3807, %v3803
        %v3824 = vpack.c.bf16 %v3808, %v3804
        %v3825 = vpack.c.bf16 %v3813, %v3809
        %v3826 = vpack.c.bf16 %v3814, %v3810
        %v3827 = vpack.c.bf16 %v3815, %v3811
        %v3828 = vpack.c.bf16 %v3816, %v3812
        %v3829 = vpack.c.bf16 %v3817, %v3817
        %v3830 = vpack.c.bf16 %v3818, %v3818
        %v3831 = vpack.c.bf16 %v3819, %v3819
        %v3832 = vpack.c.bf16 %v3820, %v3820
        %v3833 = vld [vmem:[#allocation23] sm:$0xf]
        %v3834 = vld [vmem:[#allocation23 + $0x4] sm:$0xf]
        %v3835 = vld [vmem:[#allocation23 + $0x8] sm:$0xf]
        %v3836 = vld [vmem:[#allocation23 + $0xc] sm:$0xf]
        %v3837 = vld [vmem:[#allocation23 + $0x10] sm:$0xf]
        %v3838 = vld [vmem:[#allocation23 + $0x14] sm:$0xf]
        %v3839 = vld [vmem:[#allocation23 + $0x18] sm:$0xf]
        %v3840 = vld [vmem:[#allocation23 + $0x1c] sm:$0xf]
        %v3841 = vld [vmem:[#allocation23 + $0x20] sm:$0xf]
        %v3842 = vld [vmem:[#allocation23 + $0x24] sm:$0xf]
        %v3843 = vld [vmem:[#allocation23 + $0x28] sm:$0xf]
        %v3844 = vld [vmem:[#allocation23 + $0x2c] sm:$0xf]
        %v3845 = vld [vmem:[#allocation23 + $0x30] sm:$0xf]
        %v3846 = vld [vmem:[#allocation23 + $0x34] sm:$0xf]
        %v3847 = vld [vmem:[#allocation23 + $0x38] sm:$0xf]
        %v3848 = vld [vmem:[#allocation23 + $0x3c] sm:$0xf]
        %v3849 = vld [vmem:[#allocation23 + $0x40] sm:$0xf]
        %v3850 = vld [vmem:[#allocation23 + $0x44] sm:$0xf]
        %v3851 = vld [vmem:[#allocation23 + $0x48] sm:$0xf]
        %v3852 = vld [vmem:[#allocation23 + $0x4c] sm:$0xf]
        %v3853 = vld [vmem:[#allocation23 + $0x50] sm:$0xf]
        %v3854 = vld [vmem:[#allocation23 + $0x54] sm:$0xf]
        %v3855 = vld [vmem:[#allocation23 + $0x58] sm:$0xf]
        %v3856 = vld [vmem:[#allocation23 + $0x5c] sm:$0xf]
        %v3857 = vld [vmem:[#allocation23 + $0x60] sm:$0xf]
        %v3858 = vld [vmem:[#allocation23 + $0x64] sm:$0xf]
        %v3859 = vld [vmem:[#allocation23 + $0x68] sm:$0xf]
        %v3860 = vld [vmem:[#allocation23 + $0x6c] sm:$0xf]
        %v3861 = vld [vmem:[#allocation23 + $0x70] sm:$0xf]
        %v3862 = vld [vmem:[#allocation23 + $0x74] sm:$0xf]
        %v3863 = vld [vmem:[#allocation23 + $0x78] sm:$0xf]
        %v3864 = vld [vmem:[#allocation23 + $0x7c] sm:$0xf]
        %v3865 = vld [vmem:[#allocation23 + $0x80] sm:$0xf]
        %v3866 = vld [vmem:[#allocation23 + $0x84] sm:$0xf]
        %v3867 = vld [vmem:[#allocation23 + $0x88] sm:$0xf]
        %v3868 = vld [vmem:[#allocation23 + $0x8c] sm:$0xf]
        %v3869 = vld [vmem:[#allocation23 + $0x90] sm:$0xf]
        %v3870 = vld [vmem:[#allocation23 + $0x94] sm:$0xf]
        %v3871 = vld [vmem:[#allocation23 + $0x98] sm:$0xf]
        %v3872 = vld [vmem:[#allocation23 + $0x9c] sm:$0xf]
        %v3873 = vld [vmem:[#allocation23 + $0xa0] sm:$0xf]
        %v3874 = vld [vmem:[#allocation23 + $0xa4] sm:$0xf]
        %v3875 = vld [vmem:[#allocation23 + $0xa8] sm:$0xf]
        %v3876 = vld [vmem:[#allocation23 + $0xac] sm:$0xf]
        %v3877 = vld [vmem:[#allocation23 + $0xb0] sm:$0xf]
        %v3878 = vld [vmem:[#allocation23 + $0xb4] sm:$0xf]
        %v3879 = vld [vmem:[#allocation23 + $0xb8] sm:$0xf]
        %v3880 = vld [vmem:[#allocation23 + $0xbc] sm:$0xf]
        %v3881 = vld [vmem:[#allocation23 + $0xc0] sm:$0xf]
        %v3882 = vld [vmem:[#allocation23 + $0xc4] sm:$0xf]
        %v3883 = vld [vmem:[#allocation23 + $0xc8] sm:$0xf]
        %v3884 = vld [vmem:[#allocation23 + $0xcc] sm:$0xf]
        %v3885 = vld [vmem:[#allocation23 + $0xd0] sm:$0xf]
        %v3886 = vld [vmem:[#allocation23 + $0xd4] sm:$0xf]
        %v3887 = vld [vmem:[#allocation23 + $0xd8] sm:$0xf]
        %v3888 = vld [vmem:[#allocation23 + $0xdc] sm:$0xf]
        %v3889 = vld [vmem:[#allocation23 + $0xe0] sm:$0xf]
        %v3890 = vld [vmem:[#allocation23 + $0xe4] sm:$0xf]
        %v3891 = vld [vmem:[#allocation23 + $0xe8] sm:$0xf]
        %v3892 = vld [vmem:[#allocation23 + $0xec] sm:$0xf]
        %v3893 = vld [vmem:[#allocation23 + $0xf0] sm:$0xf]
        %v3894 = vld [vmem:[#allocation23 + $0xf4] sm:$0xf]
        %v3895 = vld [vmem:[#allocation23 + $0xf8] sm:$0xf]
        %v3896 = vld [vmem:[#allocation23 + $0xfc] sm:$0xf]
        %v3897 = vld [vmem:[#allocation25] sm:$0x1]
        %v3899 = vlaneseq
        %v3900 = vshrl.u32 %v3899, 7
        %v3901 = vsub.s32 0, %v3900
        %v3902 = vrot.slane %v3897, %v3901
        %v3968 = vunpack.c.l.b16 %v3833
        %v3969 = vunpack.c.l.b16 %v3834
        %v3970 = vunpack.c.l.b16 %v3835
        %v3971 = vunpack.c.l.b16 %v3836
        %v3972 = vunpack.c.l.b16 %v3837
        %v3973 = vunpack.c.l.b16 %v3838
        %v3974 = vunpack.c.l.b16 %v3839
        %v3975 = vunpack.c.l.b16 %v3840
        %v3976 = vunpack.c.l.b16 %v3841
        %v3977 = vunpack.c.l.b16 %v3842
        %v3978 = vunpack.c.l.b16 %v3843
        %v3979 = vunpack.c.l.b16 %v3844
        %v3980 = vunpack.c.l.b16 %v3845
        %v3981 = vunpack.c.l.b16 %v3846
        %v3982 = vunpack.c.l.b16 %v3847
        %v3983 = vunpack.c.l.b16 %v3848
        %v3984 = vunpack.c.l.b16 %v3849
        %v3985 = vunpack.c.l.b16 %v3850
        %v3986 = vunpack.c.l.b16 %v3851
        %v3987 = vunpack.c.l.b16 %v3852
        %v3988 = vunpack.c.l.b16 %v3853
        %v3989 = vunpack.c.l.b16 %v3854
        %v3990 = vunpack.c.l.b16 %v3855
        %v3991 = vunpack.c.l.b16 %v3856
        %v3992 = vunpack.c.l.b16 %v3857
        %v3993 = vunpack.c.l.b16 %v3858
        %v3994 = vunpack.c.l.b16 %v3859
        %v3995 = vunpack.c.l.b16 %v3860
        %v3996 = vunpack.c.l.b16 %v3861
        %v3997 = vunpack.c.l.b16 %v3862
        %v3998 = vunpack.c.l.b16 %v3863
        %v3999 = vunpack.c.l.b16 %v3864
        %v4000 = vunpack.c.l.b16 %v3865
        %v4001 = vunpack.c.l.b16 %v3866
        %v4002 = vunpack.c.l.b16 %v3867
        %v4003 = vunpack.c.l.b16 %v3868
        %v4004 = vunpack.c.l.b16 %v3869
        %v4005 = vunpack.c.l.b16 %v3870
        %v4006 = vunpack.c.l.b16 %v3871
        %v4007 = vunpack.c.l.b16 %v3872
        %v4008 = vunpack.c.l.b16 %v3873
        %v4009 = vunpack.c.l.b16 %v3874
        %v4010 = vunpack.c.l.b16 %v3875
        %v4011 = vunpack.c.l.b16 %v3876
        %v4012 = vunpack.c.l.b16 %v3877
        %v4013 = vunpack.c.l.b16 %v3878
        %v4014 = vunpack.c.l.b16 %v3879
        %v4015 = vunpack.c.l.b16 %v3880
        %v4016 = vunpack.c.l.b16 %v3881
        %v4017 = vunpack.c.l.b16 %v3882
        %v4018 = vunpack.c.l.b16 %v3883
        %v4019 = vunpack.c.l.b16 %v3884
        %v4020 = vunpack.c.l.b16 %v3885
        %v4021 = vunpack.c.l.b16 %v3886
        %v4022 = vunpack.c.l.b16 %v3887
        %v4023 = vunpack.c.l.b16 %v3888
        %v4024 = vunpack.c.l.b16 %v3889
        %v4025 = vunpack.c.l.b16 %v3890
        %v4026 = vunpack.c.l.b16 %v3891
        %v4027 = vunpack.c.l.b16 %v3892
        %v4028 = vunpack.c.l.b16 %v3893
        %v4029 = vunpack.c.l.b16 %v3894
        %v4030 = vunpack.c.l.b16 %v3895
        %v4031 = vunpack.c.l.b16 %v3896
        %v4032 = vpack.c.b16 %v3969, %v3968
        %v4033 = vpack.c.b16 %v3971, %v3970
        %v4034 = vpack.c.b16 %v3973, %v3972
        %v4035 = vpack.c.b16 %v3975, %v3974
        %v4036 = vpack.c.b16 %v3977, %v3976
        %v4037 = vpack.c.b16 %v3979, %v3978
        %v4038 = vpack.c.b16 %v3981, %v3980
        %v4039 = vpack.c.b16 %v3983, %v3982
        %v4040 = vpack.c.b16 %v3985, %v3984
        %v4041 = vpack.c.b16 %v3987, %v3986
        %v4042 = vpack.c.b16 %v3989, %v3988
        %v4043 = vpack.c.b16 %v3991, %v3990
        %v4044 = vpack.c.b16 %v3993, %v3992
        %v4045 = vpack.c.b16 %v3995, %v3994
        %v4046 = vpack.c.b16 %v3997, %v3996
        %v4047 = vpack.c.b16 %v3999, %v3998
        %v4048 = vpack.c.b16 %v4001, %v4000
        %v4049 = vpack.c.b16 %v4003, %v4002
        %v4050 = vpack.c.b16 %v4005, %v4004
        %v4051 = vpack.c.b16 %v4007, %v4006
        %v4052 = vpack.c.b16 %v4009, %v4008
        %v4053 = vpack.c.b16 %v4011, %v4010
        %v4054 = vpack.c.b16 %v4013, %v4012
        %v4055 = vpack.c.b16 %v4015, %v4014
        %v4056 = vpack.c.b16 %v4017, %v4016
        %v4057 = vpack.c.b16 %v4019, %v4018
        %v4058 = vpack.c.b16 %v4021, %v4020
        %v4059 = vpack.c.b16 %v4023, %v4022
        %v4060 = vpack.c.b16 %v4025, %v4024
        %v4061 = vpack.c.b16 %v4027, %v4026
        %v4062 = vpack.c.b16 %v4029, %v4028
        %v4063 = vpack.c.b16 %v4031, %v4030
        %4096 = vmatprep.subr.bf16.mxu0 0
        %4097 = vmatpush1.bf16.msra.mxu0 %v4032
        %4098 = vmatprep.subr.bf16.mxu0 0
        %4099 = vmatpush1.bf16.msra.mxu0 %v4033
        %4100 = vmatprep.subr.bf16.mxu0 0
        %4101 = vmatpush1.bf16.msra.mxu0 %v4034
        %4102 = vmatprep.subr.bf16.mxu0 0
        %4103 = vmatpush1.bf16.msra.mxu0 %v4035
        %4104 = vmatprep.subr.bf16.mxu0 0
        %4105 = vmatpush1.bf16.msra.mxu0 %v4036
        %4106 = vmatprep.subr.bf16.mxu0 0
        %4107 = vmatpush1.bf16.msra.mxu0 %v4037
        %4108 = vmatprep.subr.bf16.mxu0 0
        %4109 = vmatpush1.bf16.msra.mxu0 %v4038
        %4110 = vmatprep.subr.bf16.mxu0 0
        %4111 = vmatpush1.bf16.msra.mxu0 %v4039
        %4112 = vmatprep.subr.bf16.mxu0 0
        %4113 = vmatpush1.bf16.msra.mxu0 %v4040
        %4114 = vmatprep.subr.bf16.mxu0 0
        %4115 = vmatpush1.bf16.msra.mxu0 %v4041
        %4116 = vmatprep.subr.bf16.mxu0 0
        %4117 = vmatpush1.bf16.msra.mxu0 %v4042
        %4118 = vmatprep.subr.bf16.mxu0 0
        %4119 = vmatpush1.bf16.msra.mxu0 %v4043
        %4120 = vmatprep.subr.bf16.mxu0 0
        %4121 = vmatpush1.bf16.msra.mxu0 %v4044
        %4122 = vmatprep.subr.bf16.mxu0 0
        %4123 = vmatpush1.bf16.msra.mxu0 %v4045
        %4124 = vmatprep.subr.bf16.mxu0 0
        %4125 = vmatpush1.bf16.msra.mxu0 %v4046
        %4126 = vmatprep.subr.bf16.mxu0 0
        %4127 = vmatpush1.bf16.msra.mxu0 %v4047
        %4128 = vmatprep.mubr.bf16.mxu0 %v3822
        %4129 = vmatmul.mubr.bf16.gmra.mrb[0].mxu0 %v3821
        %v4130 = vpop.f32.mrb[0].mxu0
        %v4131 = vadd.f32 %v3902, %v4130
        %v4132 = vpop.f32.mrb[0].mxu0
        %v4133 = vpop.f32.mrb[0].mxu0
        %v4134 = vadd.f32 %v3902, %v4133
        %v4135 = vpop.f32.mrb[0].mxu0
        %4136 = vmatprep.mubr.bf16.mxu0 %v3826
        %4137 = vmatmul.mubr.bf16.gmra.mrb[0].mxu0 %v3825
        %v4138 = vpop.f32.mrb[0].mxu0
        %v4139 = vadd.f32 %v3902, %v4138
        %v4140 = vpop.f32.mrb[0].mxu0
        %v4141 = vpop.f32.mrb[0].mxu0
        %v4142 = vadd.f32 %v3902, %v4141
        %v4143 = vpop.f32.mrb[0].mxu0
        %4144 = vmatprep.mubr.bf16.mxu0 %v3830
        %4145 = vmatmul.mubr.bf16.gmra.mrb[0].mxu0 %v3829
        %v4146 = vpop.f32.mrb[0].mxu0
        %v4147 = vadd.f32 %v3902, %v4146
        %v4148 = vpop.f32.mrb[0].mxu0
        %v4149 = vpop.f32.mrb[0].mxu0
        %v4150 = vpop.f32.mrb[0].mxu0
        %4151 = vdwg.mxu0
        %4152 = vmatprep.subr.bf16.mxu0 0
        %4153 = vmatpush1.bf16.msra.mxu0 %v4048
        %4154 = vmatprep.subr.bf16.mxu0 0
        %4155 = vmatpush1.bf16.msra.mxu0 %v4049
        %4156 = vmatprep.subr.bf16.mxu0 0
        %4157 = vmatpush1.bf16.msra.mxu0 %v4050
        %4158 = vmatprep.subr.bf16.mxu0 0
        %4159 = vmatpush1.bf16.msra.mxu0 %v4051
        %4160 = vmatprep.subr.bf16.mxu0 0
        %4161 = vmatpush1.bf16.msra.mxu0 %v4052
        %4162 = vmatprep.subr.bf16.mxu0 0
        %4163 = vmatpush1.bf16.msra.mxu0 %v4053
        %4164 = vmatprep.subr.bf16.mxu0 0
        %4165 = vmatpush1.bf16.msra.mxu0 %v4054
        %4166 = vmatprep.subr.bf16.mxu0 0
        %4167 = vmatpush1.bf16.msra.mxu0 %v4055
        %4168 = vmatprep.subr.bf16.mxu0 0
        %4169 = vmatpush1.bf16.msra.mxu0 %v4056
        %4170 = vmatprep.subr.bf16.mxu0 0
        %4171 = vmatpush1.bf16.msra.mxu0 %v4057
        %4172 = vmatprep.subr.bf16.mxu0 0
        %4173 = vmatpush1.bf16.msra.mxu0 %v4058
        %4174 = vmatprep.subr.bf16.mxu0 0
        %4175 = vmatpush1.bf16.msra.mxu0 %v4059
        %4176 = vmatprep.subr.bf16.mxu0 0
        %4177 = vmatpush1.bf16.msra.mxu0 %v4060
        %4178 = vmatprep.subr.bf16.mxu0 0
        %4179 = vmatpush1.bf16.msra.mxu0 %v4061
        %4180 = vmatprep.subr.bf16.mxu0 0
        %4181 = vmatpush1.bf16.msra.mxu0 %v4062
        %4182 = vmatprep.subr.bf16.mxu0 0
        %4183 = vmatpush1.bf16.msra.mxu0 %v4063
        %4184 = vmatprep.mubr.bf16.mxu0 %v3824
        %4185 = vmatmul.mubr.bf16.gmra.mrb[0].mxu0 %v3823
        %v4186 = vpop.f32.mrb[0].mxu0
        %v4187 = vadd.f32 %v4131, %v4186
        %v4188 = vpop.f32.mrb[0].mxu0
        %v4189 = vpop.f32.mrb[0].mxu0
        %v4190 = vadd.f32 %v4134, %v4189
        %v4191 = vpop.f32.mrb[0].mxu0
        %4192 = vmatprep.mubr.bf16.mxu0 %v3828
        %4193 = vmatmul.mubr.bf16.gmra.mrb[0].mxu0 %v3827
        %v4194 = vpop.f32.mrb[0].mxu0
        %v4195 = vadd.f32 %v4139, %v4194
        %v4196 = vpop.f32.mrb[0].mxu0
        %v4197 = vpop.f32.mrb[0].mxu0
        %v4198 = vadd.f32 %v4142, %v4197
        %v4199 = vpop.f32.mrb[0].mxu0
        %4200 = vmatprep.mubr.bf16.mxu0 %v3832
        %4201 = vmatmul.mubr.bf16.gmra.mrb[0].mxu0 %v3831
        %v4202 = vpop.f32.mrb[0].mxu0
        %v4203 = vadd.f32 %v4147, %v4202
        %v4204 = vpop.f32.mrb[0].mxu0
        %v4205 = vpop.f32.mrb[0].mxu0
        %v4206 = vpop.f32.mrb[0].mxu0
        %4207 = vdwg.mxu0
        %v4208 = vadd.f32 %v3218, %v4187
        %v4209 = vadd.f32 %v3219, %v4190
        %v4210 = vadd.f32 %v3220, %v4195
        %v4211 = vadd.f32 %v3221, %v4198
        %v4212 = vadd.f32 %v3222, %v4203
        %s4213 = scalar_lea.vmem [#allocation8], 1
        %v4214 = vld [vmem:[%s4213] sm:$0x1]
        %s4215 = scalar_lea.vmem [#allocation10], 1
        %v4216 = vld [vmem:[%s4215] sm:$0x1]
        %4217 = vadd.xlane.f32.xlu0 %v4208
        %v4218 = vpop.xlane.xlu0 %4217
        %4219 = vadd.xlane.f32.xlu0 %v4209
        %v4220 = vpop.xlane.xlu0 %4219
        %4221 = vadd.xlane.f32.xlu0 %v4210
        %v4222 = vpop.xlane.xlu0 %4221
        %4223 = vadd.xlane.f32.xlu0 %v4211
        %v4224 = vpop.xlane.xlu0 %4223
        %4225 = vadd.xlane.f32.xlu0 %v4212
        %v4226 = vpop.xlane.xlu0 %4225
        %v4227 = vmul.f32 %v4218, %v2147
        %v4228 = vmul.f32 %v4220, %v2147
        %v4229 = vmul.f32 %v4222, %v2147
        %v4230 = vmul.f32 %v4224, %v2147
        %v4231 = vmul.f32 %v4226, %v2147
        %v4232 = vsub.f32 %v4208, %v4227
        %v4233 = vsub.f32 %v4209, %v4228
        %v4234 = vsub.f32 %v4210, %v4229
        %v4235 = vsub.f32 %v4211, %v4230
        %v4236 = vsub.f32 %v4212, %v4231
        %v4237 = vmul.f32 %v4232, %v4232
        %v4238 = vmul.f32 %v4233, %v4233
        %v4239 = vmul.f32 %v4234, %v4234
        %v4240 = vmul.f32 %v4235, %v4235
        %v4241 = vmul.f32 %v4236, %v4236
        %4242 = vadd.xlane.f32.xlu0 %v4237
        %v4243 = vpop.xlane.xlu0 %4242
        %4244 = vadd.xlane.f32.xlu0 %v4238
        %v4245 = vpop.xlane.xlu0 %4244
        %4246 = vadd.xlane.f32.xlu0 %v4239
        %v4247 = vpop.xlane.xlu0 %4246
        %4248 = vadd.xlane.f32.xlu0 %v4240
        %v4249 = vpop.xlane.xlu0 %4248
        %4250 = vadd.xlane.f32.xlu0 %v4241
        %v4251 = vpop.xlane.xlu0 %4250
        %v4252 = vmul.f32 %v4243, %v2147
        %v4253 = vmul.f32 %v4245, %v2147
        %v4254 = vmul.f32 %v4247, %v2147
        %v4255 = vmul.f32 %v4249, %v2147
        %v4256 = vmul.f32 %v4251, %v2147
        %v4257 = vadd.f32 %v4252, 1e-06
        %v4258 = vadd.f32 %v4253, 1e-06
        %v4259 = vadd.f32 %v4254, 1e-06
        %v4260 = vadd.f32 %v4255, 1e-06
        %v4261 = vadd.f32 %v4256, 1e-06
        %v4262 = vrsqrt.pop %v4257
        %v4263 = vrsqrt.pop %v4258
        %v4264 = vrsqrt.pop %v4259
        %v4265 = vrsqrt.pop %v4260
        %v4266 = vrsqrt.pop %v4261
        %v4267 = vmul.f32 %v4232, %v4262
        %v4268 = vmul.f32 %v4233, %v4263
        %v4269 = vmul.f32 %v4234, %v4264
        %v4270 = vmul.f32 %v4235, %v4265
        %v4271 = vmul.f32 %v4236, %v4266
        %v4273 = vlaneseq
        %v4274 = vshrl.u32 %v4273, 7
        %v4275 = vsub.s32 0, %v4274
        %v4276 = vrot.slane %v4214, %v4275
        %v4278 = vmul.f32 %v4267, %v4276
        %v4279 = vmul.f32 %v4268, %v4276
        %v4280 = vmul.f32 %v4269, %v4276
        %v4281 = vmul.f32 %v4270, %v4276
        %v4282 = vmul.f32 %v4271, %v4276
        %v4284 = vlaneseq
        %v4285 = vshrl.u32 %v4284, 7
        %v4286 = vsub.s32 0, %v4285
        %v4287 = vrot.slane %v4216, %v4286
        %v4289 = vadd.f32 %v4278, %v4287
        %v4290 = vadd.f32 %v4279, %v4287
        %v4291 = vadd.f32 %v4280, %v4287
        %v4292 = vadd.f32 %v4281, %v4287
        %v4293 = vadd.f32 %v4282, %v4287
        %v4294 = vpack.c.bf16 %v4290, %v4289
        %v4295 = vpack.c.bf16 %v4292, %v4291
        %v4296 = vpack.c.bf16 %v4293, %v4293
        %s4297 = scalar_lea.vmem [#allocation11], 192
        %v4298 = vld [vmem:[%s4297] sm:$0xff]
        %v4299 = vld [vmem:[%s4297 + $0x8] sm:$0xf]
        %v4300 = vld [vmem:[%s4297 + $0xc] sm:$0xff]
        %v4301 = vld [vmem:[%s4297 + $0x14] sm:$0xf]
        %v4302 = vld [vmem:[%s4297 + $0x18] sm:$0xff]
        %v4303 = vld [vmem:[%s4297 + $0x20] sm:$0xf]
        %v4304 = vld [vmem:[%s4297 + $0x24] sm:$0xff]
        %v4305 = vld [vmem:[%s4297 + $0x2c] sm:$0xf]
        %v4306 = vld [vmem:[%s4297 + $0x30] sm:$0xff]
        %v4307 = vld [vmem:[%s4297 + $0x38] sm:$0xf]
        %v4308 = vld [vmem:[%s4297 + $0x3c] sm:$0xff]
        %v4309 = vld [vmem:[%s4297 + $0x44] sm:$0xf]
        %v4310 = vld [vmem:[%s4297 + $0x48] sm:$0xff]
        %v4311 = vld [vmem:[%s4297 + $0x50] sm:$0xf]
        %v4312 = vld [vmem:[%s4297 + $0x54] sm:$0xff]
        %v4313 = vld [vmem:[%s4297 + $0x5c] sm:$0xf]
        %v4314 = vld [vmem:[%s4297 + $0x60] sm:$0xff]
        %v4315 = vld [vmem:[%s4297 + $0x68] sm:$0xf]
        %v4316 = vld [vmem:[%s4297 + $0x6c] sm:$0xff]
        %v4317 = vld [vmem:[%s4297 + $0x74] sm:$0xf]
        %v4318 = vld [vmem:[%s4297 + $0x78] sm:$0xff]
        %v4319 = vld [vmem:[%s4297 + $0x80] sm:$0xf]
        %v4320 = vld [vmem:[%s4297 + $0x84] sm:$0xff]
        %v4321 = vld [vmem:[%s4297 + $0x8c] sm:$0xf]
        %v4322 = vld [vmem:[%s4297 + $0x90] sm:$0xff]
        %v4323 = vld [vmem:[%s4297 + $0x98] sm:$0xf]
        %v4324 = vld [vmem:[%s4297 + $0x9c] sm:$0xff]
        %v4325 = vld [vmem:[%s4297 + $0xa4] sm:$0xf]
        %v4326 = vld [vmem:[%s4297 + $0xa8] sm:$0xff]
        %v4327 = vld [vmem:[%s4297 + $0xb0] sm:$0xf]
        %v4328 = vld [vmem:[%s4297 + $0xb4] sm:$0xff]
        %v4329 = vld [vmem:[%s4297 + $0xbc] sm:$0xf]
        %s4330 = scalar_lea.vmem [#allocation13], 3
        %v4331 = vld [vmem:[%s4330] sm:$0x7]
        %v4333 = vlaneseq
        %v4334 = vshrl.u32 %v4333, 7
        %v4335 = vsub.s32 0, %v4334
        %v4336 = vrot.slane %v4331, %v4335
        %v4337 = vlaneseq
        %v4338 = vshrl.u32 %v4337, 7
        %v4339 = vsub.s32 1, %v4338
        %v4340 = vrot.slane %v4331, %v4339
        %v4341 = vlaneseq
        %v4342 = vshrl.u32 %v4341, 7
        %v4343 = vsub.s32 2, %v4342
        %v4344 = vrot.slane %v4331, %v4343
        %v4380 = vunpack.c.l.b16 %v4298
        %v4381 = vunpack.c.h.b16 %v4298
        %v4382 = vunpack.c.l.b16 %v4299
        %v4383 = vunpack.c.l.b16 %v4300
        %v4384 = vunpack.c.h.b16 %v4300
        %v4385 = vunpack.c.l.b16 %v4301
        %v4386 = vunpack.c.l.b16 %v4302
        %v4387 = vunpack.c.h.b16 %v4302
        %v4388 = vunpack.c.l.b16 %v4303
        %v4389 = vunpack.c.l.b16 %v4304
        %v4390 = vunpack.c.h.b16 %v4304
        %v4391 = vunpack.c.l.b16 %v4305
        %v4392 = vunpack.c.l.b16 %v4306
        %v4393 = vunpack.c.h.b16 %v4306
        %v4394 = vunpack.c.l.b16 %v4307
        %v4395 = vunpack.c.l.b16 %v4308
        %v4396 = vunpack.c.h.b16 %v4308
        %v4397 = vunpack.c.l.b16 %v4309
        %v4398 = vunpack.c.l.b16 %v4310
        %v4399 = vunpack.c.h.b16 %v4310
        %v4400 = vunpack.c.l.b16 %v4311
        %v4401 = vunpack.c.l.b16 %v4312
        %v4402 = vunpack.c.h.b16 %v4312
        %v4403 = vunpack.c.l.b16 %v4313
        %v4404 = vunpack.c.l.b16 %v4314
        %v4405 = vunpack.c.h.b16 %v4314
        %v4406 = vunpack.c.l.b16 %v4315
        %v4407 = vunpack.c.l.b16 %v4316
        %v4408 = vunpack.c.h.b16 %v4316
        %v4409 = vunpack.c.l.b16 %v4317
        %v4410 = vunpack.c.l.b16 %v4318
        %v4411 = vunpack.c.h.b16 %v4318
        %v4412 = vunpack.c.l.b16 %v4319
        %v4413 = vunpack.c.l.b16 %v4320
        %v4414 = vunpack.c.h.b16 %v4320
        %v4415 = vunpack.c.l.b16 %v4321
        %v4416 = vunpack.c.l.b16 %v4322
        %v4417 = vunpack.c.h.b16 %v4322
        %v4418 = vunpack.c.l.b16 %v4323
        %v4419 = vunpack.c.l.b16 %v4324
        %v4420 = vunpack.c.h.b16 %v4324
        %v4421 = vunpack.c.l.b16 %v4325
        %v4422 = vunpack.c.l.b16 %v4326
        %v4423 = vunpack.c.h.b16 %v4326
        %v4424 = vunpack.c.l.b16 %v4327
        %v4425 = vunpack.c.l.b16 %v4328
        %v4426 = vunpack.c.h.b16 %v4328
        %v4427 = vunpack.c.l.b16 %v4329
        %v4428 = vpack.c.b16 %v4383, %v4380
        %v4429 = vpack.c.b16 %v4384, %v4381
        %v4430 = vpack.c.b16 %v4385, %v4382
        %v4431 = vpack.c.b16 %v4389, %v4386
        %v4432 = vpack.c.b16 %v4390, %v4387
        %v4433 = vpack.c.b16 %v4391, %v4388
        %v4434 = vpack.c.b16 %v4395, %v4392
        %v4435 = vpack.c.b16 %v4396, %v4393
        %v4436 = vpack.c.b16 %v4397, %v4394
        %v4437 = vpack.c.b16 %v4401, %v4398
        %v4438 = vpack.c.b16 %v4402, %v4399
        %v4439 = vpack.c.b16 %v4403, %v4400
        %v4440 = vpack.c.b16 %v4407, %v4404
        %v4441 = vpack.c.b16 %v4408, %v4405
        %v4442 = vpack.c.b16 %v4409, %v4406
        %v4443 = vpack.c.b16 %v4413, %v4410
        %v4444 = vpack.c.b16 %v4414, %v4411
        %v4445 = vpack.c.b16 %v4415, %v4412
        %v4446 = vpack.c.b16 %v4419, %v4416
        %v4447 = vpack.c.b16 %v4420, %v4417
        %v4448 = vpack.c.b16 %v4421, %v4418
        %v4449 = vpack.c.b16 %v4425, %v4422
        %v4450 = vpack.c.b16 %v4426, %v4423
        %v4451 = vpack.c.b16 %v4427, %v4424
        %4476 = vmatprep.subr.bf16.mxu0 %v4429
        %4477 = vmatpush1.bf16.msra.mxu0 %v4428
        %4478 = vmatprep.subr.bf16.mxu0 %v4432
        %4479 = vmatpush1.bf16.msra.mxu0 %v4431
        %4480 = vmatprep.subr.bf16.mxu0 %v4435
        %4481 = vmatpush1.bf16.msra.mxu0 %v4434
        %4482 = vmatprep.subr.bf16.mxu0 %v4438
        %4483 = vmatpush1.bf16.msra.mxu0 %v4437
        %4484 = vmatprep.subr.bf16.mxu0 %v4441
        %4485 = vmatpush1.bf16.msra.mxu0 %v4440
        %4486 = vmatprep.subr.bf16.mxu0 %v4444
        %4487 = vmatpush1.bf16.msra.mxu0 %v4443
        %4488 = vmatprep.subr.bf16.mxu0 %v4447
        %4489 = vmatpush1.bf16.msra.mxu0 %v4446
        %4490 = vmatprep.subr.bf16.mxu0 %v4450
        %4491 = vmatpush1.bf16.msra.mxu0 %v4449
        %4492 = vmatprep.subr.bf16.mxu0 0
        %4493 = vmatpush1.bf16.msra.mxu0 0
        %4494 = vmatprep.subr.bf16.mxu0 0
        %4495 = vmatpush1.bf16.msra.mxu0 0
        %4496 = vmatprep.subr.bf16.mxu0 0
        %4497 = vmatpush1.bf16.msra.mxu0 0
        %4498 = vmatprep.subr.bf16.mxu0 0
        %4499 = vmatpush1.bf16.msra.mxu0 0
        %4500 = vmatprep.subr.bf16.mxu0 0
        %4501 = vmatpush1.bf16.msra.mxu0 0
        %4502 = vmatprep.subr.bf16.mxu0 0
        %4503 = vmatpush1.bf16.msra.mxu0 0
        %4504 = vmatprep.subr.bf16.mxu0 0
        %4505 = vmatpush1.bf16.msra.mxu0 0
        %4506 = vmatprep.subr.bf16.mxu0 0
        %4507 = vmatpush1.bf16.msra.mxu0 0
        %4508 = vmatprep.mubr.bf16.mxu0 0
        %4509 = vmatmul.mubr.bf16.gmra.mrb[0].mxu0 %v4294
        %v4510 = vpop.f32.mrb[0].mxu0
        %v4511 = vadd.f32 %v4336, %v4510
        %v4512 = vpop.f32.mrb[0].mxu0
        %v4513 = vadd.f32 %v4340, %v4512
        %v4514 = vpop.f32.mrb[0].mxu0
        %v4515 = vadd.f32 %v4336, %v4514
        %v4516 = vpop.f32.mrb[0].mxu0
        %v4517 = vadd.f32 %v4340, %v4516
        %4518 = vmatprep.mubr.bf16.mxu0 0
        %4519 = vmatmul.mubr.bf16.gmra.mrb[0].mxu0 %v4295
        %v4520 = vpop.f32.mrb[0].mxu0
        %v4521 = vadd.f32 %v4336, %v4520
        %v4522 = vpop.f32.mrb[0].mxu0
        %v4523 = vadd.f32 %v4340, %v4522
        %v4524 = vpop.f32.mrb[0].mxu0
        %v4525 = vadd.f32 %v4336, %v4524
        %v4526 = vpop.f32.mrb[0].mxu0
        %v4527 = vadd.f32 %v4340, %v4526
        %4528 = vmatprep.mubr.bf16.mxu0 0
        %4529 = vmatmul.mubr.bf16.gmra.mrb[0].mxu0 %v4296
        %v4530 = vpop.f32.mrb[0].mxu0
        %v4531 = vadd.f32 %v4336, %v4530
        %v4532 = vpop.f32.mrb[0].mxu0
        %v4533 = vadd.f32 %v4340, %v4532
        %v4534 = vpop.f32.mrb[0].mxu0
        %v4535 = vpop.f32.mrb[0].mxu0
        %4536 = vdwg.mxu0
        %4537 = vmatprep.subr.bf16.mxu0 0
        %4538 = vmatpush1.bf16.msra.mxu0 %v4430
        %4539 = vmatprep.subr.bf16.mxu0 0
        %4540 = vmatpush1.bf16.msra.mxu0 %v4433
        %4541 = vmatprep.subr.bf16.mxu0 0
        %4542 = vmatpush1.bf16.msra.mxu0 %v4436
        %4543 = vmatprep.subr.bf16.mxu0 0
        %4544 = vmatpush1.bf16.msra.mxu0 %v4439
        %4545 = vmatprep.subr.bf16.mxu0 0
        %4546 = vmatpush1.bf16.msra.mxu0 %v4442
        %4547 = vmatprep.subr.bf16.mxu0 0
        %4548 = vmatpush1.bf16.msra.mxu0 %v4445
        %4549 = vmatprep.subr.bf16.mxu0 0
        %4550 = vmatpush1.bf16.msra.mxu0 %v4448
        %4551 = vmatprep.subr.bf16.mxu0 0
        %4552 = vmatpush1.bf16.msra.mxu0 %v4451
        %4553 = vmatprep.subr.bf16.mxu0 0
        %4554 = vmatpush1.bf16.msra.mxu0 0
        %4555 = vmatprep.subr.bf16.mxu0 0
        %4556 = vmatpush1.bf16.msra.mxu0 0
        %4557 = vmatprep.subr.bf16.mxu0 0
        %4558 = vmatpush1.bf16.msra.mxu0 0
        %4559 = vmatprep.subr.bf16.mxu0 0
        %4560 = vmatpush1.bf16.msra.mxu0 0
        %4561 = vmatprep.subr.bf16.mxu0 0
        %4562 = vmatpush1.bf16.msra.mxu0 0
        %4563 = vmatprep.subr.bf16.mxu0 0
        %4564 = vmatpush1.bf16.msra.mxu0 0
        %4565 = vmatprep.subr.bf16.mxu0 0
        %4566 = vmatpush1.bf16.msra.mxu0 0
        %4567 = vmatprep.subr.bf16.mxu0 0
        %4568 = vmatpush1.bf16.msra.mxu0 0
        %4569 = vmatprep.mubr.bf16.mxu0 0
        %4570 = vmatmul.mubr.bf16.gmra.mrb[0].mxu0 %v4294
        %v4571 = vpop.f32.mrb[0].mxu0
        %v4572 = vadd.f32 %v4344, %v4571
        %v4573 = vpop.f32.mrb[0].mxu0
        %v4574 = vpop.f32.mrb[0].mxu0
        %v4575 = vadd.f32 %v4344, %v4574
        %v4576 = vpop.f32.mrb[0].mxu0
        %4577 = vmatprep.mubr.bf16.mxu0 0
        %4578 = vmatmul.mubr.bf16.gmra.mrb[0].mxu0 %v4295
        %v4579 = vpop.f32.mrb[0].mxu0
        %v4580 = vadd.f32 %v4344, %v4579
        %v4581 = vpop.f32.mrb[0].mxu0
        %v4582 = vpop.f32.mrb[0].mxu0
        %v4583 = vadd.f32 %v4344, %v4582
        %v4584 = vpop.f32.mrb[0].mxu0
        %4585 = vmatprep.mubr.bf16.mxu0 0
        %4586 = vmatmul.mubr.bf16.gmra.mrb[0].mxu0 %v4296
        %v4587 = vpop.f32.mrb[0].mxu0
        %v4588 = vadd.f32 %v4344, %v4587
        %v4589 = vpop.f32.mrb[0].mxu0
        %v4590 = vpop.f32.mrb[0].mxu0
        %v4591 = vpop.f32.mrb[0].mxu0
        %4592 = vdwg.mxu0
        %v4593 = vpack.c.bf16 %v4515, %v4511
        %v4594 = vpack.c.bf16 %v4525, %v4521
        %v4595 = vpack.c.bf16 %v4531, %v4531
        %v4596 = vpack.c.bf16 %v4517, %v4513
        %v4597 = vpack.c.bf16 %v4527, %v4523
        %v4598 = vpack.c.bf16 %v4533, %v4533
        %v4599 = vpack.c.bf16 %v4575, %v4572
        %v4600 = vpack.c.bf16 %v4583, %v4580
        %v4601 = vpack.c.bf16 %v4588, %v4588
        %v4602 = vmul.bf16 %v4593, %v2120
        %v4603 = vmul.bf16 %v4594, %v2120
        %v4604 = vmul.bf16 %v4595, %v2120
        %v4605 = vmul.bf16 %v4593, %v2122
        %v4606 = vmul.bf16 %v4594, %v2122
        %v4607 = vmul.bf16 %v4595, %v2122
        %v4608 = vmul.bf16 %v4593, %v2124
        %v4609 = vmul.bf16 %v4594, %v2124
        %v4610 = vmul.bf16 %v4595, %v2124
        %v4611 = vmul.bf16 %v4593, %v2126
        %v4612 = vmul.bf16 %v4594, %v2126
        %v4613 = vmul.bf16 %v4595, %v2126
        %v4617 = vrot.slane %v4605, 4
        %v4618 = vrot.slane %v4606, 4
        %v4619 = vsel %vm2536, %v4617, %v4618
        %v4620 = vrot.slane %v4607, 4
        %v4621 = vsel %vm2536, %v4618, %v4620
        %v4627 = vrot.slane %v4611, 4
        %v4628 = vrot.slane %v4612, 4
        %v4629 = vsel %vm2536, %v4627, %v4628
        %v4630 = vrot.slane %v4613, 4
        %v4631 = vsel %vm2536, %v4628, %v4630
        %v4636 = vsel %vm2554, %v4604, %v4617
        %v4640 = vsel %vm2554, %v4610, %v4627
        %4642 = vmatprep.subr.bf16.mxu0 0
        %4643 = vmatpush1.bf16.xpose.msra.mxu0 %v4596
        %4644 = vmatprep.subr.bf16.mxu0 0
        %4645 = vmatpush1.bf16.xpose.msra.mxu0 %v4597
        %4646 = vmatprep.subr.bf16.mxu0 0
        %4647 = vmatpush1.bf16.xpose.msra.mxu0 %v4598
        %4648 = vmatprep.subr.bf16.mxu0 0
        %4649 = vmatpush1.bf16.xpose.msra.mxu0 0
        %4650 = vmatprep.subr.bf16.mxu0 0
        %4651 = vmatpush1.bf16.xpose.msra.mxu0 0
        %4652 = vmatprep.subr.bf16.mxu0 0
        %4653 = vmatpush1.bf16.xpose.msra.mxu0 0
        %4654 = vmatprep.subr.bf16.mxu0 0
        %4655 = vmatpush1.bf16.xpose.msra.mxu0 0
        %4656 = vmatprep.subr.bf16.mxu0 0
        %4657 = vmatpush1.bf16.xpose.msra.mxu0 0
        %4658 = vmatprep.subr.bf16.mxu0 0
        %4659 = vmatpush1.bf16.xpose.msra.mxu0 0
        %4660 = vmatprep.subr.bf16.mxu0 0
        %4661 = vmatpush1.bf16.xpose.msra.mxu0 0
        %4662 = vmatprep.subr.bf16.mxu0 0
        %4663 = vmatpush1.bf16.xpose.msra.mxu0 0
        %4664 = vmatprep.subr.bf16.mxu0 0
        %4665 = vmatpush1.bf16.xpose.msra.mxu0 0
        %4666 = vmatprep.subr.bf16.mxu0 0
        %4667 = vmatpush1.bf16.xpose.msra.mxu0 0
        %4668 = vmatprep.subr.bf16.mxu0 0
        %4669 = vmatpush1.bf16.xpose.msra.mxu0 0
        %4670 = vmatprep.subr.bf16.mxu0 0
        %4671 = vmatpush1.bf16.xpose.msra.mxu0 0
        %4672 = vmatprep.subr.bf16.mxu0 0
        %4673 = vmatpush1.bf16.xpose.msra.mxu0 0
        %4674 = vmatprep.mubr.bf16.mxu0 0
        %4675 = vmatmul.mubr.bf16.gmra.mrb[0].mxu0 %v4602
        %v4676 = vpop.f32.mrb[0].mxu0
        %v4677 = vadd.f32 %v2106, %v4676
        %v4678 = vpop.f32.mrb[0].mxu0
        %v4679 = vpop.f32.mrb[0].mxu0
        %v4680 = vadd.f32 %v2106, %v4679
        %v4681 = vpop.f32.mrb[0].mxu0
        %4682 = vmatprep.mubr.bf16.mxu0 0
        %4683 = vmatmul.mubr.bf16.gmra.mrb[0].mxu0 %v4603
        %v4684 = vpop.f32.mrb[0].mxu0
        %v4685 = vadd.f32 %v2106, %v4684
        %v4686 = vpop.f32.mrb[0].mxu0
        %v4687 = vpop.f32.mrb[0].mxu0
        %v4688 = vadd.f32 %v2106, %v4687
        %v4689 = vpop.f32.mrb[0].mxu0
        %4690 = vmatprep.mubr.bf16.mxu0 0
        %4691 = vmatmul.mubr.bf16.gmra.mrb[0].mxu0 %v4636
        %v4692 = vpop.f32.mrb[0].mxu0
        %v4693 = vadd.f32 %v2106, %v4692
        %v4694 = vpop.f32.mrb[0].mxu0
        %v4695 = vpop.f32.mrb[0].mxu0
        %v4696 = vadd.f32 %v2106, %v4695
        %v4697 = vpop.f32.mrb[0].mxu0
        %4698 = vmatprep.mubr.bf16.mxu0 0
        %4699 = vmatmul.mubr.bf16.gmra.mrb[0].mxu0 %v4619
        %v4700 = vpop.f32.mrb[0].mxu0
        %v4701 = vadd.f32 %v2106, %v4700
        %v4702 = vpop.f32.mrb[0].mxu0
        %v4703 = vpop.f32.mrb[0].mxu0
        %v4704 = vadd.f32 %v2106, %v4703
        %v4705 = vpop.f32.mrb[0].mxu0
        %4706 = vmatprep.mubr.bf16.mxu0 0
        %4707 = vmatmul.mubr.bf16.gmra.mrb[0].mxu0 %v4621
        %v4708 = vpop.f32.mrb[0].mxu0
        %v4709 = vadd.f32 %v2106, %v4708
        %v4710 = vpop.f32.mrb[0].mxu0
        %v4711 = vpop.f32.mrb[0].mxu0
        %v4712 = vadd.f32 %v2106, %v4711
        %v4713 = vpop.f32.mrb[0].mxu0
        %4714 = vmatprep.mubr.bf16.mxu0 0
        %4715 = vmatmul.mubr.bf16.gmra.mrb[0].mxu0 %v4608
        %v4716 = vpop.f32.mrb[0].mxu0
        %v4717 = vadd.f32 %v2106, %v4716
        %v4718 = vpop.f32.mrb[0].mxu0
        %v4719 = vpop.f32.mrb[0].mxu0
        %v4720 = vadd.f32 %v2106, %v4719
        %v4721 = vpop.f32.mrb[0].mxu0
        %4722 = vmatprep.mubr.bf16.mxu0 0
        %4723 = vmatmul.mubr.bf16.gmra.mrb[0].mxu0 %v4609
        %v4724 = vpop.f32.mrb[0].mxu0
        %v4725 = vadd.f32 %v2106, %v4724
        %v4726 = vpop.f32.mrb[0].mxu0
        %v4727 = vpop.f32.mrb[0].mxu0
        %v4728 = vadd.f32 %v2106, %v4727
        %v4729 = vpop.f32.mrb[0].mxu0
        %4730 = vmatprep.mubr.bf16.mxu0 0
        %4731 = vmatmul.mubr.bf16.gmra.mrb[0].mxu0 %v4640
        %v4732 = vpop.f32.mrb[0].mxu0
        %v4733 = vadd.f32 %v2106, %v4732
        %v4734 = vpop.f32.mrb[0].mxu0
        %v4735 = vpop.f32.mrb[0].mxu0
        %v4736 = vadd.f32 %v2106, %v4735
        %v4737 = vpop.f32.mrb[0].mxu0
        %4738 = vmatprep.mubr.bf16.mxu0 0
        %4739 = vmatmul.mubr.bf16.gmra.mrb[0].mxu0 %v4629
        %v4740 = vpop.f32.mrb[0].mxu0
        %v4741 = vadd.f32 %v2106, %v4740
        %v4742 = vpop.f32.mrb[0].mxu0
        %v4743 = vpop.f32.mrb[0].mxu0
        %v4744 = vadd.f32 %v2106, %v4743
        %v4745 = vpop.f32.mrb[0].mxu0
        %4746 = vmatprep.mubr.bf16.mxu0 0
        %4747 = vmatmul.mubr.bf16.gmra.mrb[0].mxu0 %v4631
        %v4748 = vpop.f32.mrb[0].mxu0
        %v4749 = vadd.f32 %v2106, %v4748
        %v4750 = vpop.f32.mrb[0].mxu0
        %v4751 = vpop.f32.mrb[0].mxu0
        %v4752 = vadd.f32 %v2106, %v4751
        %v4753 = vpop.f32.mrb[0].mxu0
        %4754 = vdwg.mxu0
        %v4755 = vsel %vm2676, %v4677, -inf
        %4756 = vmax.xlane.f32.xlu0 %v4755
        %v4757 = vpop.xlane.xlu0 %4756
        %v4758 = vsel %vm2676, %v4680, -inf
        %4759 = vmax.xlane.f32.xlu0 %v4758
        %v4760 = vpop.xlane.xlu0 %4759
        %v4761 = vsel %vm2676, %v4685, -inf
        %4762 = vmax.xlane.f32.xlu0 %v4761
        %v4763 = vpop.xlane.xlu0 %4762
        %v4764 = vsel %vm2676, %v4688, -inf
        %4765 = vmax.xlane.f32.xlu0 %v4764
        %v4766 = vpop.xlane.xlu0 %4765
        %v4767 = vsel %vm2676, %v4693, -inf
        %4768 = vmax.xlane.f32.xlu0 %v4767
        %v4769 = vpop.xlane.xlu0 %4768
        %v4770 = vsel %vm2676, %v4696, -inf
        %4771 = vmax.xlane.f32.xlu0 %v4770
        %v4772 = vpop.xlane.xlu0 %4771
        %v4773 = vsel %vm2676, %v4701, -inf
        %4774 = vmax.xlane.f32.xlu0 %v4773
        %v4775 = vpop.xlane.xlu0 %4774
        %v4776 = vsel %vm2676, %v4704, -inf
        %4777 = vmax.xlane.f32.xlu0 %v4776
        %v4778 = vpop.xlane.xlu0 %4777
        %v4779 = vsel %vm2676, %v4709, -inf
        %4780 = vmax.xlane.f32.xlu0 %v4779
        %v4781 = vpop.xlane.xlu0 %4780
        %v4782 = vsel %vm2676, %v4712, -inf
        %4783 = vmax.xlane.f32.xlu0 %v4782
        %v4784 = vpop.xlane.xlu0 %4783
        %v4785 = vsel %vm2676, %v4717, -inf
        %4786 = vmax.xlane.f32.xlu0 %v4785
        %v4787 = vpop.xlane.xlu0 %4786
        %v4788 = vsel %vm2676, %v4720, -inf
        %4789 = vmax.xlane.f32.xlu0 %v4788
        %v4790 = vpop.xlane.xlu0 %4789
        %v4791 = vsel %vm2676, %v4725, -inf
        %4792 = vmax.xlane.f32.xlu0 %v4791
        %v4793 = vpop.xlane.xlu0 %4792
        %v4794 = vsel %vm2676, %v4728, -inf
        %4795 = vmax.xlane.f32.xlu0 %v4794
        %v4796 = vpop.xlane.xlu0 %4795
        %v4797 = vsel %vm2676, %v4733, -inf
        %4798 = vmax.xlane.f32.xlu0 %v4797
        %v4799 = vpop.xlane.xlu0 %4798
        %v4800 = vsel %vm2676, %v4736, -inf
        %4801 = vmax.xlane.f32.xlu0 %v4800
        %v4802 = vpop.xlane.xlu0 %4801
        %v4803 = vsel %vm2676, %v4741, -inf
        %4804 = vmax.xlane.f32.xlu0 %v4803
        %v4805 = vpop.xlane.xlu0 %4804
        %v4806 = vsel %vm2676, %v4744, -inf
        %4807 = vmax.xlane.f32.xlu0 %v4806
        %v4808 = vpop.xlane.xlu0 %4807
        %v4809 = vsel %vm2676, %v4749, -inf
        %4810 = vmax.xlane.f32.xlu0 %v4809
        %v4811 = vpop.xlane.xlu0 %4810
        %v4812 = vsel %vm2676, %v4752, -inf
        %4813 = vmax.xlane.f32.xlu0 %v4812
        %v4814 = vpop.xlane.xlu0 %4813
        %v4815 = vsub.f32 %v4677, %v4757
        %v4816 = vsub.f32 %v4680, %v4760
        %v4817 = vsub.f32 %v4685, %v4763
        %v4818 = vsub.f32 %v4688, %v4766
        %v4819 = vsub.f32 %v4693, %v4769
        %v4820 = vsub.f32 %v4696, %v4772
        %v4821 = vsub.f32 %v4701, %v4775
        %v4822 = vsub.f32 %v4704, %v4778
        %v4823 = vsub.f32 %v4709, %v4781
        %v4824 = vsub.f32 %v4712, %v4784
        %v4825 = vsub.f32 %v4717, %v4787
        %v4826 = vsub.f32 %v4720, %v4790
        %v4827 = vsub.f32 %v4725, %v4793
        %v4828 = vsub.f32 %v4728, %v4796
        %v4829 = vsub.f32 %v4733, %v4799
        %v4830 = vsub.f32 %v4736, %v4802
        %v4831 = vsub.f32 %v4741, %v4805
        %v4832 = vsub.f32 %v4744, %v4808
        %v4833 = vsub.f32 %v4749, %v4811
        %v4834 = vsub.f32 %v4752, %v4814
        %v4835 = vmul.f32 %v4815, 1.442695
        %v4836 = vpow.pop %v4835
        %v4837 = vmul.f32 %v4816, 1.442695
        %v4838 = vpow.pop %v4837
        %v4839 = vmul.f32 %v4817, 1.442695
        %v4840 = vpow.pop %v4839
        %v4841 = vmul.f32 %v4818, 1.442695
        %v4842 = vpow.pop %v4841
        %v4843 = vmul.f32 %v4819, 1.442695
        %v4844 = vpow.pop %v4843
        %v4845 = vmul.f32 %v4820, 1.442695
        %v4846 = vpow.pop %v4845
        %v4847 = vmul.f32 %v4821, 1.442695
        %v4848 = vpow.pop %v4847
        %v4849 = vmul.f32 %v4822, 1.442695
        %v4850 = vpow.pop %v4849
        %v4851 = vmul.f32 %v4823, 1.442695
        %v4852 = vpow.pop %v4851
        %v4853 = vmul.f32 %v4824, 1.442695
        %v4854 = vpow.pop %v4853
        %v4855 = vmul.f32 %v4825, 1.442695
        %v4856 = vpow.pop %v4855
        %v4857 = vmul.f32 %v4826, 1.442695
        %v4858 = vpow.pop %v4857
        %v4859 = vmul.f32 %v4827, 1.442695
        %v4860 = vpow.pop %v4859
        %v4861 = vmul.f32 %v4828, 1.442695
        %v4862 = vpow.pop %v4861
        %v4863 = vmul.f32 %v4829, 1.442695
        %v4864 = vpow.pop %v4863
        %v4865 = vmul.f32 %v4830, 1.442695
        %v4866 = vpow.pop %v4865
        %v4867 = vmul.f32 %v4831, 1.442695
        %v4868 = vpow.pop %v4867
        %v4869 = vmul.f32 %v4832, 1.442695
        %v4870 = vpow.pop %v4869
        %v4871 = vmul.f32 %v4833, 1.442695
        %v4872 = vpow.pop %v4871
        %v4873 = vmul.f32 %v4834, 1.442695
        %v4874 = vpow.pop %v4873
        %v4875 = vsel %vm2676, %v4836, 0.0
        %4876 = vadd.xlane.f32.xlu0 %v4875
        %v4877 = vpop.xlane.xlu0 %4876
        %v4878 = vsel %vm2676, %v4838, 0.0
        %4879 = vadd.xlane.f32.xlu0 %v4878
        %v4880 = vpop.xlane.xlu0 %4879
        %v4881 = vsel %vm2676, %v4840, 0.0
        %4882 = vadd.xlane.f32.xlu0 %v4881
        %v4883 = vpop.xlane.xlu0 %4882
        %v4884 = vsel %vm2676, %v4842, 0.0
        %4885 = vadd.xlane.f32.xlu0 %v4884
        %v4886 = vpop.xlane.xlu0 %4885
        %v4887 = vsel %vm2676, %v4844, 0.0
        %4888 = vadd.xlane.f32.xlu0 %v4887
        %v4889 = vpop.xlane.xlu0 %4888
        %v4890 = vsel %vm2676, %v4846, 0.0
        %4891 = vadd.xlane.f32.xlu0 %v4890
        %v4892 = vpop.xlane.xlu0 %4891
        %v4893 = vsel %vm2676, %v4848, 0.0
        %4894 = vadd.xlane.f32.xlu0 %v4893
        %v4895 = vpop.xlane.xlu0 %4894
        %v4896 = vsel %vm2676, %v4850, 0.0
        %4897 = vadd.xlane.f32.xlu0 %v4896
        %v4898 = vpop.xlane.xlu0 %4897
        %v4899 = vsel %vm2676, %v4852, 0.0
        %4900 = vadd.xlane.f32.xlu0 %v4899
        %v4901 = vpop.xlane.xlu0 %4900
        %v4902 = vsel %vm2676, %v4854, 0.0
        %4903 = vadd.xlane.f32.xlu0 %v4902
        %v4904 = vpop.xlane.xlu0 %4903
        %v4905 = vsel %vm2676, %v4856, 0.0
        %4906 = vadd.xlane.f32.xlu0 %v4905
        %v4907 = vpop.xlane.xlu0 %4906
        %v4908 = vsel %vm2676, %v4858, 0.0
        %4909 = vadd.xlane.f32.xlu0 %v4908
        %v4910 = vpop.xlane.xlu0 %4909
        %v4911 = vsel %vm2676, %v4860, 0.0
        %4912 = vadd.xlane.f32.xlu0 %v4911
        %v4913 = vpop.xlane.xlu0 %4912
        %v4914 = vsel %vm2676, %v4862, 0.0
        %4915 = vadd.xlane.f32.xlu0 %v4914
        %v4916 = vpop.xlane.xlu0 %4915
        %v4917 = vsel %vm2676, %v4864, 0.0
        %4918 = vadd.xlane.f32.xlu0 %v4917
        %v4919 = vpop.xlane.xlu0 %4918
        %v4920 = vsel %vm2676, %v4866, 0.0
        %4921 = vadd.xlane.f32.xlu0 %v4920
        %v4922 = vpop.xlane.xlu0 %4921
        %v4923 = vsel %vm2676, %v4868, 0.0
        %4924 = vadd.xlane.f32.xlu0 %v4923
        %v4925 = vpop.xlane.xlu0 %4924
        %v4926 = vsel %vm2676, %v4870, 0.0
        %4927 = vadd.xlane.f32.xlu0 %v4926
        %v4928 = vpop.xlane.xlu0 %4927
        %v4929 = vsel %vm2676, %v4872, 0.0
        %4930 = vadd.xlane.f32.xlu0 %v4929
        %v4931 = vpop.xlane.xlu0 %4930
        %v4932 = vsel %vm2676, %v4874, 0.0
        %4933 = vadd.xlane.f32.xlu0 %v4932
        %v4934 = vpop.xlane.xlu0 %4933
        %v4935 = vrcp.pop %v4877
        %v4936 = vrcp.pop %v4880
        %v4937 = vrcp.pop %v4883
        %v4938 = vrcp.pop %v4886
        %v4939 = vrcp.pop %v4889
        %v4940 = vrcp.pop %v4892
        %v4941 = vrcp.pop %v4895
        %v4942 = vrcp.pop %v4898
        %v4943 = vrcp.pop %v4901
        %v4944 = vrcp.pop %v4904
        %v4945 = vrcp.pop %v4907
        %v4946 = vrcp.pop %v4910
        %v4947 = vrcp.pop %v4913
        %v4948 = vrcp.pop %v4916
        %v4949 = vrcp.pop %v4919
        %v4950 = vrcp.pop %v4922
        %v4951 = vrcp.pop %v4925
        %v4952 = vrcp.pop %v4928
        %v4953 = vrcp.pop %v4931
        %v4954 = vrcp.pop %v4934
        %v4955 = vmul.f32 %v4836, %v4935
        %v4956 = vmul.f32 %v4838, %v4936
        %v4957 = vmul.f32 %v4840, %v4937
        %v4958 = vmul.f32 %v4842, %v4938
        %v4959 = vmul.f32 %v4844, %v4939
        %v4960 = vmul.f32 %v4846, %v4940
        %v4961 = vmul.f32 %v4848, %v4941
        %v4962 = vmul.f32 %v4850, %v4942
        %v4963 = vmul.f32 %v4852, %v4943
        %v4964 = vmul.f32 %v4854, %v4944
        %v4965 = vmul.f32 %v4856, %v4945
        %v4966 = vmul.f32 %v4858, %v4946
        %v4967 = vmul.f32 %v4860, %v4947
        %v4968 = vmul.f32 %v4862, %v4948
        %v4969 = vmul.f32 %v4864, %v4949
        %v4970 = vmul.f32 %v4866, %v4950
        %v4971 = vmul.f32 %v4868, %v4951
        %v4972 = vmul.f32 %v4870, %v4952
        %v4973 = vmul.f32 %v4872, %v4953
        %v4974 = vmul.f32 %v4874, %v4954
        %v4975 = vpack.c.bf16 %v4956, %v4955
        %v4976 = vpack.c.bf16 %v4958, %v4957
        %v4977 = vpack.c.bf16 %v4960, %v4959
        %v4978 = vpack.c.bf16 %v4962, %v4961
        %v4979 = vpack.c.bf16 %v4964, %v4963
        %v4980 = vpack.c.bf16 %v4966, %v4965
        %v4981 = vpack.c.bf16 %v4968, %v4967
        %v4982 = vpack.c.bf16 %v4970, %v4969
        %v4983 = vpack.c.bf16 %v4972, %v4971
        %v4984 = vpack.c.bf16 %v4974, %v4973
        %v4986 = vsel %vm2676, %v4975, 0
        %v4989 = vsel %vm2676, %v4976, 0
        %v4992 = vsel %vm2676, %v4977, 0
        %v4995 = vsel %vm2676, %v4978, 0
        %v4998 = vsel %vm2676, %v4979, 0
        %v5001 = vsel %vm2676, %v4980, 0
        %v5004 = vsel %vm2676, %v4981, 0
        %v5007 = vsel %vm2676, %v4982, 0
        %v5010 = vsel %vm2676, %v4983, 0
        %v5013 = vsel %vm2676, %v4984, 0
        %v5016 = vsel %vm2554, %v4601, 0
        %5018 = vmatprep.subr.bf16.mxu0 0
        %5019 = vmatpush1.bf16.msra.mxu0 %v4599
        %5020 = vmatprep.subr.bf16.mxu0 0
        %5021 = vmatpush1.bf16.msra.mxu0 %v4600
        %5022 = vmatprep.subr.bf16.mxu0 0
        %5023 = vmatpush1.bf16.msra.mxu0 %v5016
        %5024 = vmatprep.subr.bf16.mxu0 0
        %5025 = vmatpush1.bf16.msra.mxu0 0
        %5026 = vmatprep.subr.bf16.mxu0 0
        %5027 = vmatpush1.bf16.msra.mxu0 0
        %5028 = vmatprep.subr.bf16.mxu0 0
        %5029 = vmatpush1.bf16.msra.mxu0 0
        %5030 = vmatprep.subr.bf16.mxu0 0
        %5031 = vmatpush1.bf16.msra.mxu0 0
        %5032 = vmatprep.subr.bf16.mxu0 0
        %5033 = vmatpush1.bf16.msra.mxu0 0
        %5034 = vmatprep.subr.bf16.mxu0 0
        %5035 = vmatpush1.bf16.msra.mxu0 0
        %5036 = vmatprep.subr.bf16.mxu0 0
        %5037 = vmatpush1.bf16.msra.mxu0 0
        %5038 = vmatprep.subr.bf16.mxu0 0
        %5039 = vmatpush1.bf16.msra.mxu0 0
        %5040 = vmatprep.subr.bf16.mxu0 0
        %5041 = vmatpush1.bf16.msra.mxu0 0
        %5042 = vmatprep.subr.bf16.mxu0 0
        %5043 = vmatpush1.bf16.msra.mxu0 0
        %5044 = vmatprep.subr.bf16.mxu0 0
        %5045 = vmatpush1.bf16.msra.mxu0 0
        %5046 = vmatprep.subr.bf16.mxu0 0
        %5047 = vmatpush1.bf16.msra.mxu0 0
        %5048 = vmatprep.subr.bf16.mxu0 0
        %5049 = vmatpush1.bf16.msra.mxu0 0
        %5050 = vmatprep.mubr.bf16.mxu0 0
        %5051 = vmatmul.mubr.bf16.gmra.mrb[0].mxu0 %v4986
        %v5052 = vpop.f32.mrb[0].mxu0
        %v5053 = vadd.f32 0.0, %v5052
        %v5054 = vpop.f32.mrb[0].mxu0
        %v5055 = vpop.f32.mrb[0].mxu0
        %v5056 = vadd.f32 0.0, %v5055
        %v5057 = vpop.f32.mrb[0].mxu0
        %5058 = vmatprep.mubr.bf16.mxu0 0
        %5059 = vmatmul.mubr.bf16.gmra.mrb[0].mxu0 %v4989
        %v5060 = vpop.f32.mrb[0].mxu0
        %v5061 = vadd.f32 0.0, %v5060
        %v5062 = vpop.f32.mrb[0].mxu0
        %v5063 = vpop.f32.mrb[0].mxu0
        %v5064 = vadd.f32 0.0, %v5063
        %v5065 = vpop.f32.mrb[0].mxu0
        %5066 = vmatprep.mubr.bf16.mxu0 0
        %5067 = vmatmul.mubr.bf16.gmra.mrb[0].mxu0 %v4992
        %v5068 = vpop.f32.mrb[0].mxu0
        %v5069 = vadd.f32 0.0, %v5068
        %v5070 = vpop.f32.mrb[0].mxu0
        %v5071 = vpop.f32.mrb[0].mxu0
        %v5072 = vadd.f32 0.0, %v5071
        %v5073 = vpop.f32.mrb[0].mxu0
        %5074 = vmatprep.mubr.bf16.mxu0 0
        %5075 = vmatmul.mubr.bf16.gmra.mrb[0].mxu0 %v4995
        %v5076 = vpop.f32.mrb[0].mxu0
        %v5077 = vadd.f32 0.0, %v5076
        %v5078 = vpop.f32.mrb[0].mxu0
        %v5079 = vpop.f32.mrb[0].mxu0
        %v5080 = vadd.f32 0.0, %v5079
        %v5081 = vpop.f32.mrb[0].mxu0
        %5082 = vmatprep.mubr.bf16.mxu0 0
        %5083 = vmatmul.mubr.bf16.gmra.mrb[0].mxu0 %v4998
        %v5084 = vpop.f32.mrb[0].mxu0
        %v5085 = vadd.f32 0.0, %v5084
        %v5086 = vpop.f32.mrb[0].mxu0
        %v5087 = vpop.f32.mrb[0].mxu0
        %v5088 = vadd.f32 0.0, %v5087
        %v5089 = vpop.f32.mrb[0].mxu0
        %5090 = vmatprep.mubr.bf16.mxu0 0
        %5091 = vmatmul.mubr.bf16.gmra.mrb[0].mxu0 %v5001
        %v5092 = vpop.f32.mrb[0].mxu0
        %v5093 = vadd.f32 0.0, %v5092
        %v5094 = vpop.f32.mrb[0].mxu0
        %v5095 = vpop.f32.mrb[0].mxu0
        %v5096 = vadd.f32 0.0, %v5095
        %v5097 = vpop.f32.mrb[0].mxu0
        %5098 = vmatprep.mubr.bf16.mxu0 0
        %5099 = vmatmul.mubr.bf16.gmra.mrb[0].mxu0 %v5004
        %v5100 = vpop.f32.mrb[0].mxu0
        %v5101 = vadd.f32 0.0, %v5100
        %v5102 = vpop.f32.mrb[0].mxu0
        %v5103 = vpop.f32.mrb[0].mxu0
        %v5104 = vadd.f32 0.0, %v5103
        %v5105 = vpop.f32.mrb[0].mxu0
        %5106 = vmatprep.mubr.bf16.mxu0 0
        %5107 = vmatmul.mubr.bf16.gmra.mrb[0].mxu0 %v5007
        %v5108 = vpop.f32.mrb[0].mxu0
        %v5109 = vadd.f32 0.0, %v5108
        %v5110 = vpop.f32.mrb[0].mxu0
        %v5111 = vpop.f32.mrb[0].mxu0
        %v5112 = vadd.f32 0.0, %v5111
        %v5113 = vpop.f32.mrb[0].mxu0
        %5114 = vmatprep.mubr.bf16.mxu0 0
        %5115 = vmatmul.mubr.bf16.gmra.mrb[0].mxu0 %v5010
        %v5116 = vpop.f32.mrb[0].mxu0
        %v5117 = vadd.f32 0.0, %v5116
        %v5118 = vpop.f32.mrb[0].mxu0
        %v5119 = vpop.f32.mrb[0].mxu0
        %v5120 = vadd.f32 0.0, %v5119
        %v5121 = vpop.f32.mrb[0].mxu0
        %5122 = vmatprep.mubr.bf16.mxu0 0
        %5123 = vmatmul.mubr.bf16.gmra.mrb[0].mxu0 %v5013
        %v5124 = vpop.f32.mrb[0].mxu0
        %v5125 = vadd.f32 0.0, %v5124
        %v5126 = vpop.f32.mrb[0].mxu0
        %v5127 = vpop.f32.mrb[0].mxu0
        %v5128 = vadd.f32 0.0, %v5127
        %v5129 = vpop.f32.mrb[0].mxu0
        %5130 = vdwg.mxu0
        %v5131 = vmul.f32 %v5053, %v2128
        %v5132 = vmul.f32 %v5056, %v2128
        %v5133 = vmul.f32 %v5061, %v2128
        %v5134 = vmul.f32 %v5064, %v2128
        %v5135 = vmul.f32 %v5069, %v2128
        %v5136 = vmul.f32 %v5072, %v2130
        %v5137 = vmul.f32 %v5077, %v2130
        %v5138 = vmul.f32 %v5080, %v2130
        %v5139 = vmul.f32 %v5085, %v2130
        %v5140 = vmul.f32 %v5088, %v2130
        %v5141 = vadd.f32 %v5131, %v5136
        %v5142 = vadd.f32 %v5132, %v5137
        %v5143 = vadd.f32 %v5133, %v5138
        %v5144 = vadd.f32 %v5134, %v5139
        %v5145 = vadd.f32 %v5135, %v5140
        %v5146 = vmul.f32 %v5093, %v2132
        %v5147 = vmul.f32 %v5096, %v2132
        %v5148 = vmul.f32 %v5101, %v2132
        %v5149 = vmul.f32 %v5104, %v2132
        %v5150 = vmul.f32 %v5109, %v2132
        %v5151 = vadd.f32 %v5141, %v5146
        %v5152 = vadd.f32 %v5142, %v5147
        %v5153 = vadd.f32 %v5143, %v5148
        %v5154 = vadd.f32 %v5144, %v5149
        %v5155 = vadd.f32 %v5145, %v5150
        %v5156 = vmul.f32 %v5112, %v2134
        %v5157 = vmul.f32 %v5117, %v2134
        %v5158 = vmul.f32 %v5120, %v2134
        %v5159 = vmul.f32 %v5125, %v2134
        %v5160 = vmul.f32 %v5128, %v2134
        %v5161 = vadd.f32 %v5151, %v5156
        %v5162 = vadd.f32 %v5152, %v5157
        %v5163 = vadd.f32 %v5153, %v5158
        %v5164 = vadd.f32 %v5154, %v5159
        %v5165 = vadd.f32 %v5155, %v5160
        %v5166 = vpack.c.bf16 %v5162, %v5161
        %v5167 = vpack.c.bf16 %v5164, %v5163
        %v5168 = vpack.c.bf16 %v5165, %v5165
        %s5169 = scalar_lea.vmem [#allocation14], 64
        %v5170 = vld [vmem:[%s5169] sm:$0xf]
        %v5171 = vld [vmem:[%s5169 + $0x4] sm:$0xf]
        %v5172 = vld [vmem:[%s5169 + $0x8] sm:$0xf]
        %v5173 = vld [vmem:[%s5169 + $0xc] sm:$0xf]
        %v5174 = vld [vmem:[%s5169 + $0x10] sm:$0xf]
        %v5175 = vld [vmem:[%s5169 + $0x14] sm:$0xf]
        %v5176 = vld [vmem:[%s5169 + $0x18] sm:$0xf]
        %v5177 = vld [vmem:[%s5169 + $0x1c] sm:$0xf]
        %v5178 = vld [vmem:[%s5169 + $0x20] sm:$0xf]
        %v5179 = vld [vmem:[%s5169 + $0x24] sm:$0xf]
        %v5180 = vld [vmem:[%s5169 + $0x28] sm:$0xf]
        %v5181 = vld [vmem:[%s5169 + $0x2c] sm:$0xf]
        %v5182 = vld [vmem:[%s5169 + $0x30] sm:$0xf]
        %v5183 = vld [vmem:[%s5169 + $0x34] sm:$0xf]
        %v5184 = vld [vmem:[%s5169 + $0x38] sm:$0xf]
        %v5185 = vld [vmem:[%s5169 + $0x3c] sm:$0xf]
        %s5186 = scalar_lea.vmem [#allocation16], 1
        %v5187 = vld [vmem:[%s5186] sm:$0x1]
        %v5189 = vlaneseq
        %v5190 = vshrl.u32 %v5189, 7
        %v5191 = vsub.s32 0, %v5190
        %v5192 = vrot.slane %v5187, %v5191
        %v5210 = vunpack.c.l.b16 %v5170
        %v5211 = vunpack.c.l.b16 %v5171
        %v5212 = vunpack.c.l.b16 %v5172
        %v5213 = vunpack.c.l.b16 %v5173
        %v5214 = vunpack.c.l.b16 %v5174
        %v5215 = vunpack.c.l.b16 %v5175
        %v5216 = vunpack.c.l.b16 %v5176
        %v5217 = vunpack.c.l.b16 %v5177
        %v5218 = vunpack.c.l.b16 %v5178
        %v5219 = vunpack.c.l.b16 %v5179
        %v5220 = vunpack.c.l.b16 %v5180
        %v5221 = vunpack.c.l.b16 %v5181
        %v5222 = vunpack.c.l.b16 %v5182
        %v5223 = vunpack.c.l.b16 %v5183
        %v5224 = vunpack.c.l.b16 %v5184
        %v5225 = vunpack.c.l.b16 %v5185
        %v5226 = vpack.c.b16 %v5211, %v5210
        %v5227 = vpack.c.b16 %v5213, %v5212
        %v5228 = vpack.c.b16 %v5215, %v5214
        %v5229 = vpack.c.b16 %v5217, %v5216
        %v5230 = vpack.c.b16 %v5219, %v5218
        %v5231 = vpack.c.b16 %v5221, %v5220
        %v5232 = vpack.c.b16 %v5223, %v5222
        %v5233 = vpack.c.b16 %v5225, %v5224
        %5242 = vmatprep.subr.bf16.mxu0 0
        %5243 = vmatpush1.bf16.msra.mxu0 %v5226
        %5244 = vmatprep.subr.bf16.mxu0 0
        %5245 = vmatpush1.bf16.msra.mxu0 %v5227
        %5246 = vmatprep.subr.bf16.mxu0 0
        %5247 = vmatpush1.bf16.msra.mxu0 %v5228
        %5248 = vmatprep.subr.bf16.mxu0 0
        %5249 = vmatpush1.bf16.msra.mxu0 %v5229
        %5250 = vmatprep.subr.bf16.mxu0 0
        %5251 = vmatpush1.bf16.msra.mxu0 %v5230
        %5252 = vmatprep.subr.bf16.mxu0 0
        %5253 = vmatpush1.bf16.msra.mxu0 %v5231
        %5254 = vmatprep.subr.bf16.mxu0 0
        %5255 = vmatpush1.bf16.msra.mxu0 %v5232
        %5256 = vmatprep.subr.bf16.mxu0 0
        %5257 = vmatpush1.bf16.msra.mxu0 %v5233
        %5258 = vmatprep.subr.bf16.mxu0 0
        %5259 = vmatpush1.bf16.msra.mxu0 0
        %5260 = vmatprep.subr.bf16.mxu0 0
        %5261 = vmatpush1.bf16.msra.mxu0 0
        %5262 = vmatprep.subr.bf16.mxu0 0
        %5263 = vmatpush1.bf16.msra.mxu0 0
        %5264 = vmatprep.subr.bf16.mxu0 0
        %5265 = vmatpush1.bf16.msra.mxu0 0
        %5266 = vmatprep.subr.bf16.mxu0 0
        %5267 = vmatpush1.bf16.msra.mxu0 0
        %5268 = vmatprep.subr.bf16.mxu0 0
        %5269 = vmatpush1.bf16.msra.mxu0 0
        %5270 = vmatprep.subr.bf16.mxu0 0
        %5271 = vmatpush1.bf16.msra.mxu0 0
        %5272 = vmatprep.subr.bf16.mxu0 0
        %5273 = vmatpush1.bf16.msra.mxu0 0
        %5274 = vmatprep.mubr.bf16.mxu0 0
        %5275 = vmatmul.mubr.bf16.gmra.mrb[0].mxu0 %v5166
        %v5276 = vpop.f32.mrb[0].mxu0
        %v5277 = vadd.f32 %v5192, %v5276
        %v5278 = vpop.f32.mrb[0].mxu0
        %v5279 = vpop.f32.mrb[0].mxu0
        %v5280 = vadd.f32 %v5192, %v5279
        %v5281 = vpop.f32.mrb[0].mxu0
        %5282 = vmatprep.mubr.bf16.mxu0 0
        %5283 = vmatmul.mubr.bf16.gmra.mrb[0].mxu0 %v5167
        %v5284 = vpop.f32.mrb[0].mxu0
        %v5285 = vadd.f32 %v5192, %v5284
        %v5286 = vpop.f32.mrb[0].mxu0
        %v5287 = vpop.f32.mrb[0].mxu0
        %v5288 = vadd.f32 %v5192, %v5287
        %v5289 = vpop.f32.mrb[0].mxu0
        %5290 = vmatprep.mubr.bf16.mxu0 0
        %5291 = vmatmul.mubr.bf16.gmra.mrb[0].mxu0 %v5168
        %v5292 = vpop.f32.mrb[0].mxu0
        %v5293 = vadd.f32 %v5192, %v5292
        %v5294 = vpop.f32.mrb[0].mxu0
        %v5295 = vpop.f32.mrb[0].mxu0
        %v5296 = vpop.f32.mrb[0].mxu0
        %5297 = vdwg.mxu0
        %v5298 = vadd.f32 %v4208, %v5277
        %v5299 = vadd.f32 %v4209, %v5280
        %v5300 = vadd.f32 %v4210, %v5285
        %v5301 = vadd.f32 %v4211, %v5288
        %v5302 = vadd.f32 %v4212, %v5293
        %s5303 = scalar_lea.vmem [#allocation17], 1
        %v5304 = vld [vmem:[%s5303] sm:$0x1]
        %s5305 = scalar_lea.vmem [#allocation19], 1
        %v5306 = vld [vmem:[%s5305] sm:$0x1]
        %5307 = vadd.xlane.f32.xlu0 %v5298
        %v5308 = vpop.xlane.xlu0 %5307
        %5309 = vadd.xlane.f32.xlu0 %v5299
        %v5310 = vpop.xlane.xlu0 %5309
        %5311 = vadd.xlane.f32.xlu0 %v5300
        %v5312 = vpop.xlane.xlu0 %5311
        %5313 = vadd.xlane.f32.xlu0 %v5301
        %v5314 = vpop.xlane.xlu0 %5313
        %5315 = vadd.xlane.f32.xlu0 %v5302
        %v5316 = vpop.xlane.xlu0 %5315
        %v5317 = vmul.f32 %v5308, %v2147
        %v5318 = vmul.f32 %v5310, %v2147
        %v5319 = vmul.f32 %v5312, %v2147
        %v5320 = vmul.f32 %v5314, %v2147
        %v5321 = vmul.f32 %v5316, %v2147
        %v5322 = vsub.f32 %v5298, %v5317
        %v5323 = vsub.f32 %v5299, %v5318
        %v5324 = vsub.f32 %v5300, %v5319
        %v5325 = vsub.f32 %v5301, %v5320
        %v5326 = vsub.f32 %v5302, %v5321
        %v5327 = vmul.f32 %v5322, %v5322
        %v5328 = vmul.f32 %v5323, %v5323
        %v5329 = vmul.f32 %v5324, %v5324
        %v5330 = vmul.f32 %v5325, %v5325
        %v5331 = vmul.f32 %v5326, %v5326
        %5332 = vadd.xlane.f32.xlu0 %v5327
        %v5333 = vpop.xlane.xlu0 %5332
        %5334 = vadd.xlane.f32.xlu0 %v5328
        %v5335 = vpop.xlane.xlu0 %5334
        %5336 = vadd.xlane.f32.xlu0 %v5329
        %v5337 = vpop.xlane.xlu0 %5336
        %5338 = vadd.xlane.f32.xlu0 %v5330
        %v5339 = vpop.xlane.xlu0 %5338
        %5340 = vadd.xlane.f32.xlu0 %v5331
        %v5341 = vpop.xlane.xlu0 %5340
        %v5342 = vmul.f32 %v5333, %v2147
        %v5343 = vmul.f32 %v5335, %v2147
        %v5344 = vmul.f32 %v5337, %v2147
        %v5345 = vmul.f32 %v5339, %v2147
        %v5346 = vmul.f32 %v5341, %v2147
        %v5347 = vadd.f32 %v5342, 1e-06
        %v5348 = vadd.f32 %v5343, 1e-06
        %v5349 = vadd.f32 %v5344, 1e-06
        %v5350 = vadd.f32 %v5345, 1e-06
        %v5351 = vadd.f32 %v5346, 1e-06
        %v5352 = vrsqrt.pop %v5347
        %v5353 = vrsqrt.pop %v5348
        %v5354 = vrsqrt.pop %v5349
        %v5355 = vrsqrt.pop %v5350
        %v5356 = vrsqrt.pop %v5351
        %v5357 = vmul.f32 %v5322, %v5352
        %v5358 = vmul.f32 %v5323, %v5353
        %v5359 = vmul.f32 %v5324, %v5354
        %v5360 = vmul.f32 %v5325, %v5355
        %v5361 = vmul.f32 %v5326, %v5356
        %v5363 = vlaneseq
        %v5364 = vshrl.u32 %v5363, 7
        %v5365 = vsub.s32 0, %v5364
        %v5366 = vrot.slane %v5304, %v5365
        %v5368 = vmul.f32 %v5357, %v5366
        %v5369 = vmul.f32 %v5358, %v5366
        %v5370 = vmul.f32 %v5359, %v5366
        %v5371 = vmul.f32 %v5360, %v5366
        %v5372 = vmul.f32 %v5361, %v5366
        %v5374 = vlaneseq
        %v5375 = vshrl.u32 %v5374, 7
        %v5376 = vsub.s32 0, %v5375
        %v5377 = vrot.slane %v5306, %v5376
        %v5379 = vadd.f32 %v5368, %v5377
        %v5380 = vadd.f32 %v5369, %v5377
        %v5381 = vadd.f32 %v5370, %v5377
        %v5382 = vadd.f32 %v5371, %v5377
        %v5383 = vadd.f32 %v5372, %v5377
        %v5384 = vpack.c.bf16 %v5380, %v5379
        %v5385 = vpack.c.bf16 %v5382, %v5381
        %v5386 = vpack.c.bf16 %v5383, %v5383
        %s5387 = scalar_lea.vmem [#allocation20], 256
        %v5388 = vld [vmem:[%s5387] sm:$0xff]
        %v5389 = vld [vmem:[%s5387 + $0x8] sm:$0xff]
        %v5390 = vld [vmem:[%s5387 + $0x10] sm:$0xff]
        %v5391 = vld [vmem:[%s5387 + $0x18] sm:$0xff]
        %v5392 = vld [vmem:[%s5387 + $0x20] sm:$0xff]
        %v5393 = vld [vmem:[%s5387 + $0x28] sm:$0xff]
        %v5394 = vld [vmem:[%s5387 + $0x30] sm:$0xff]
        %v5395 = vld [vmem:[%s5387 + $0x38] sm:$0xff]
        %v5396 = vld [vmem:[%s5387 + $0x40] sm:$0xff]
        %v5397 = vld [vmem:[%s5387 + $0x48] sm:$0xff]
        %v5398 = vld [vmem:[%s5387 + $0x50] sm:$0xff]
        %v5399 = vld [vmem:[%s5387 + $0x58] sm:$0xff]
        %v5400 = vld [vmem:[%s5387 + $0x60] sm:$0xff]
        %v5401 = vld [vmem:[%s5387 + $0x68] sm:$0xff]
        %v5402 = vld [vmem:[%s5387 + $0x70] sm:$0xff]
        %v5403 = vld [vmem:[%s5387 + $0x78] sm:$0xff]
        %v5404 = vld [vmem:[%s5387 + $0x80] sm:$0xff]
        %v5405 = vld [vmem:[%s5387 + $0x88] sm:$0xff]
        %v5406 = vld [vmem:[%s5387 + $0x90] sm:$0xff]
        %v5407 = vld [vmem:[%s5387 + $0x98] sm:$0xff]
        %v5408 = vld [vmem:[%s5387 + $0xa0] sm:$0xff]
        %v5409 = vld [vmem:[%s5387 + $0xa8] sm:$0xff]
        %v5410 = vld [vmem:[%s5387 + $0xb0] sm:$0xff]
        %v5411 = vld [vmem:[%s5387 + $0xb8] sm:$0xff]
        %v5412 = vld [vmem:[%s5387 + $0xc0] sm:$0xff]
        %v5413 = vld [vmem:[%s5387 + $0xc8] sm:$0xff]
        %v5414 = vld [vmem:[%s5387 + $0xd0] sm:$0xff]
        %v5415 = vld [vmem:[%s5387 + $0xd8] sm:$0xff]
        %v5416 = vld [vmem:[%s5387 + $0xe0] sm:$0xff]
        %v5417 = vld [vmem:[%s5387 + $0xe8] sm:$0xff]
        %v5418 = vld [vmem:[%s5387 + $0xf0] sm:$0xff]
        %v5419 = vld [vmem:[%s5387 + $0xf8] sm:$0xff]
        %s5420 = scalar_lea.vmem [#allocation22], 4
        %v5421 = vld [vmem:[%s5420] sm:$0xf]
        %v5423 = vlaneseq
        %v5424 = vshrl.u32 %v5423, 7
        %v5425 = vsub.s32 0, %v5424
        %v5426 = vrot.slane %v5421, %v5425
        %v5427 = vlaneseq
        %v5428 = vshrl.u32 %v5427, 7
        %v5429 = vsub.s32 1, %v5428
        %v5430 = vrot.slane %v5421, %v5429
        %v5431 = vlaneseq
        %v5432 = vshrl.u32 %v5431, 7
        %v5433 = vsub.s32 2, %v5432
        %v5434 = vrot.slane %v5421, %v5433
        %v5435 = vlaneseq
        %v5436 = vshrl.u32 %v5435, 7
        %v5437 = vsub.s32 3, %v5436
        %v5438 = vrot.slane %v5421, %v5437
        %v5475 = vunpack.c.l.b16 %v5388
        %v5476 = vunpack.c.h.b16 %v5388
        %v5477 = vunpack.c.l.b16 %v5389
        %v5478 = vunpack.c.h.b16 %v5389
        %v5479 = vunpack.c.l.b16 %v5390
        %v5480 = vunpack.c.h.b16 %v5390
        %v5481 = vunpack.c.l.b16 %v5391
        %v5482 = vunpack.c.h.b16 %v5391
        %v5483 = vunpack.c.l.b16 %v5392
        %v5484 = vunpack.c.h.b16 %v5392
        %v5485 = vunpack.c.l.b16 %v5393
        %v5486 = vunpack.c.h.b16 %v5393
        %v5487 = vunpack.c.l.b16 %v5394
        %v5488 = vunpack.c.h.b16 %v5394
        %v5489 = vunpack.c.l.b16 %v5395
        %v5490 = vunpack.c.h.b16 %v5395
        %v5491 = vunpack.c.l.b16 %v5396
        %v5492 = vunpack.c.h.b16 %v5396
        %v5493 = vunpack.c.l.b16 %v5397
        %v5494 = vunpack.c.h.b16 %v5397
        %v5495 = vunpack.c.l.b16 %v5398
        %v5496 = vunpack.c.h.b16 %v5398
        %v5497 = vunpack.c.l.b16 %v5399
        %v5498 = vunpack.c.h.b16 %v5399
        %v5499 = vunpack.c.l.b16 %v5400
        %v5500 = vunpack.c.h.b16 %v5400
        %v5501 = vunpack.c.l.b16 %v5401
        %v5502 = vunpack.c.h.b16 %v5401
        %v5503 = vunpack.c.l.b16 %v5402
        %v5504 = vunpack.c.h.b16 %v5402
        %v5505 = vunpack.c.l.b16 %v5403
        %v5506 = vunpack.c.h.b16 %v5403
        %v5507 = vunpack.c.l.b16 %v5404
        %v5508 = vunpack.c.h.b16 %v5404
        %v5509 = vunpack.c.l.b16 %v5405
        %v5510 = vunpack.c.h.b16 %v5405
        %v5511 = vunpack.c.l.b16 %v5406
        %v5512 = vunpack.c.h.b16 %v5406
        %v5513 = vunpack.c.l.b16 %v5407
        %v5514 = vunpack.c.h.b16 %v5407
        %v5515 = vunpack.c.l.b16 %v5408
        %v5516 = vunpack.c.h.b16 %v5408
        %v5517 = vunpack.c.l.b16 %v5409
        %v5518 = vunpack.c.h.b16 %v5409
        %v5519 = vunpack.c.l.b16 %v5410
        %v5520 = vunpack.c.h.b16 %v5410
        %v5521 = vunpack.c.l.b16 %v5411
        %v5522 = vunpack.c.h.b16 %v5411
        %v5523 = vunpack.c.l.b16 %v5412
        %v5524 = vunpack.c.h.b16 %v5412
        %v5525 = vunpack.c.l.b16 %v5413
        %v5526 = vunpack.c.h.b16 %v5413
        %v5527 = vunpack.c.l.b16 %v5414
        %v5528 = vunpack.c.h.b16 %v5414
        %v5529 = vunpack.c.l.b16 %v5415
        %v5530 = vunpack.c.h.b16 %v5415
        %v5531 = vunpack.c.l.b16 %v5416
        %v5532 = vunpack.c.h.b16 %v5416
        %v5533 = vunpack.c.l.b16 %v5417
        %v5534 = vunpack.c.h.b16 %v5417
        %v5535 = vunpack.c.l.b16 %v5418
        %v5536 = vunpack.c.h.b16 %v5418
        %v5537 = vunpack.c.l.b16 %v5419
        %v5538 = vunpack.c.h.b16 %v5419
        %v5539 = vpack.c.b16 %v5479, %v5475
        %v5540 = vpack.c.b16 %v5480, %v5476
        %v5541 = vpack.c.b16 %v5481, %v5477
        %v5542 = vpack.c.b16 %v5482, %v5478
        %v5543 = vpack.c.b16 %v5487, %v5483
        %v5544 = vpack.c.b16 %v5488, %v5484
        %v5545 = vpack.c.b16 %v5489, %v5485
        %v5546 = vpack.c.b16 %v5490, %v5486
        %v5547 = vpack.c.b16 %v5495, %v5491
        %v5548 = vpack.c.b16 %v5496, %v5492
        %v5549 = vpack.c.b16 %v5497, %v5493
        %v5550 = vpack.c.b16 %v5498, %v5494
        %v5551 = vpack.c.b16 %v5503, %v5499
        %v5552 = vpack.c.b16 %v5504, %v5500
        %v5553 = vpack.c.b16 %v5505, %v5501
        %v5554 = vpack.c.b16 %v5506, %v5502
        %v5555 = vpack.c.b16 %v5511, %v5507
        %v5556 = vpack.c.b16 %v5512, %v5508
        %v5557 = vpack.c.b16 %v5513, %v5509
        %v5558 = vpack.c.b16 %v5514, %v5510
        %v5559 = vpack.c.b16 %v5519, %v5515
        %v5560 = vpack.c.b16 %v5520, %v5516
        %v5561 = vpack.c.b16 %v5521, %v5517
        %v5562 = vpack.c.b16 %v5522, %v5518
        %v5563 = vpack.c.b16 %v5527, %v5523
        %v5564 = vpack.c.b16 %v5528, %v5524
        %v5565 = vpack.c.b16 %v5529, %v5525
        %v5566 = vpack.c.b16 %v5530, %v5526
        %v5567 = vpack.c.b16 %v5535, %v5531
        %v5568 = vpack.c.b16 %v5536, %v5532
        %v5569 = vpack.c.b16 %v5537, %v5533
        %v5570 = vpack.c.b16 %v5538, %v5534
        %5603 = vmatprep.subr.bf16.mxu0 %v5540
        %5604 = vmatpush1.bf16.msra.mxu0 %v5539
        %5605 = vmatprep.subr.bf16.mxu0 %v5544
        %5606 = vmatpush1.bf16.msra.mxu0 %v5543
        %5607 = vmatprep.subr.bf16.mxu0 %v5548
        %5608 = vmatpush1.bf16.msra.mxu0 %v5547
        %5609 = vmatprep.subr.bf16.mxu0 %v5552
        %5610 = vmatpush1.bf16.msra.mxu0 %v5551
        %5611 = vmatprep.subr.bf16.mxu0 %v5556
        %5612 = vmatpush1.bf16.msra.mxu0 %v5555
        %5613 = vmatprep.subr.bf16.mxu0 %v5560
        %5614 = vmatpush1.bf16.msra.mxu0 %v5559
        %5615 = vmatprep.subr.bf16.mxu0 %v5564
        %5616 = vmatpush1.bf16.msra.mxu0 %v5563
        %5617 = vmatprep.subr.bf16.mxu0 %v5568
        %5618 = vmatpush1.bf16.msra.mxu0 %v5567
        %5619 = vmatprep.subr.bf16.mxu0 0
        %5620 = vmatpush1.bf16.msra.mxu0 0
        %5621 = vmatprep.subr.bf16.mxu0 0
        %5622 = vmatpush1.bf16.msra.mxu0 0
        %5623 = vmatprep.subr.bf16.mxu0 0
        %5624 = vmatpush1.bf16.msra.mxu0 0
        %5625 = vmatprep.subr.bf16.mxu0 0
        %5626 = vmatpush1.bf16.msra.mxu0 0
        %5627 = vmatprep.subr.bf16.mxu0 0
        %5628 = vmatpush1.bf16.msra.mxu0 0
        %5629 = vmatprep.subr.bf16.mxu0 0
        %5630 = vmatpush1.bf16.msra.mxu0 0
        %5631 = vmatprep.subr.bf16.mxu0 0
        %5632 = vmatpush1.bf16.msra.mxu0 0
        %5633 = vmatprep.subr.bf16.mxu0 0
        %5634 = vmatpush1.bf16.msra.mxu0 0
        %5635 = vmatprep.mubr.bf16.mxu0 0
        %5636 = vmatmul.mubr.bf16.gmra.mrb[0].mxu0 %v5384
        %v5637 = vpop.f32.mrb[0].mxu0
        %v5638 = vadd.f32 %v5426, %v5637
        %v5639 = vpop.f32.mrb[0].mxu0
        %v5640 = vadd.f32 %v5430, %v5639
        %v5641 = vpop.f32.mrb[0].mxu0
        %v5642 = vadd.f32 %v5426, %v5641
        %v5643 = vpop.f32.mrb[0].mxu0
        %v5644 = vadd.f32 %v5430, %v5643
        %5645 = vmatprep.mubr.bf16.mxu0 0
        %5646 = vmatmul.mubr.bf16.gmra.mrb[0].mxu0 %v5385
        %v5647 = vpop.f32.mrb[0].mxu0
        %v5648 = vadd.f32 %v5426, %v5647
        %v5649 = vpop.f32.mrb[0].mxu0
        %v5650 = vadd.f32 %v5430, %v5649
        %v5651 = vpop.f32.mrb[0].mxu0
        %v5652 = vadd.f32 %v5426, %v5651
        %v5653 = vpop.f32.mrb[0].mxu0
        %v5654 = vadd.f32 %v5430, %v5653
        %5655 = vmatprep.mubr.bf16.mxu0 0
        %5656 = vmatmul.mubr.bf16.gmra.mrb[0].mxu0 %v5386
        %v5657 = vpop.f32.mrb[0].mxu0
        %v5658 = vadd.f32 %v5426, %v5657
        %v5659 = vpop.f32.mrb[0].mxu0
        %v5660 = vadd.f32 %v5430, %v5659
        %v5661 = vpop.f32.mrb[0].mxu0
        %v5662 = vpop.f32.mrb[0].mxu0
        %5663 = vdwg.mxu0
        %5664 = vmatprep.subr.bf16.mxu0 %v5542
        %5665 = vmatpush1.bf16.msra.mxu0 %v5541
        %5666 = vmatprep.subr.bf16.mxu0 %v5546
        %5667 = vmatpush1.bf16.msra.mxu0 %v5545
        %5668 = vmatprep.subr.bf16.mxu0 %v5550
        %5669 = vmatpush1.bf16.msra.mxu0 %v5549
        %5670 = vmatprep.subr.bf16.mxu0 %v5554
        %5671 = vmatpush1.bf16.msra.mxu0 %v5553
        %5672 = vmatprep.subr.bf16.mxu0 %v5558
        %5673 = vmatpush1.bf16.msra.mxu0 %v5557
        %5674 = vmatprep.subr.bf16.mxu0 %v5562
        %5675 = vmatpush1.bf16.msra.mxu0 %v5561
        %5676 = vmatprep.subr.bf16.mxu0 %v5566
        %5677 = vmatpush1.bf16.msra.mxu0 %v5565
        %5678 = vmatprep.subr.bf16.mxu0 %v5570
        %5679 = vmatpush1.bf16.msra.mxu0 %v5569
        %5680 = vmatprep.subr.bf16.mxu0 0
        %5681 = vmatpush1.bf16.msra.mxu0 0
        %5682 = vmatprep.subr.bf16.mxu0 0
        %5683 = vmatpush1.bf16.msra.mxu0 0
        %5684 = vmatprep.subr.bf16.mxu0 0
        %5685 = vmatpush1.bf16.msra.mxu0 0
        %5686 = vmatprep.subr.bf16.mxu0 0
        %5687 = vmatpush1.bf16.msra.mxu0 0
        %5688 = vmatprep.subr.bf16.mxu0 0
        %5689 = vmatpush1.bf16.msra.mxu0 0
        %5690 = vmatprep.subr.bf16.mxu0 0
        %5691 = vmatpush1.bf16.msra.mxu0 0
        %5692 = vmatprep.subr.bf16.mxu0 0
        %5693 = vmatpush1.bf16.msra.mxu0 0
        %5694 = vmatprep.subr.bf16.mxu0 0
        %5695 = vmatpush1.bf16.msra.mxu0 0
        %5696 = vmatprep.mubr.bf16.mxu0 0
        %5697 = vmatmul.mubr.bf16.gmra.mrb[0].mxu0 %v5384
        %v5698 = vpop.f32.mrb[0].mxu0
        %v5699 = vadd.f32 %v5434, %v5698
        %v5700 = vpop.f32.mrb[0].mxu0
        %v5701 = vadd.f32 %v5438, %v5700
        %v5702 = vpop.f32.mrb[0].mxu0
        %v5703 = vadd.f32 %v5434, %v5702
        %v5704 = vpop.f32.mrb[0].mxu0
        %v5705 = vadd.f32 %v5438, %v5704
        %5706 = vmatprep.mubr.bf16.mxu0 0
        %5707 = vmatmul.mubr.bf16.gmra.mrb[0].mxu0 %v5385
        %v5708 = vpop.f32.mrb[0].mxu0
        %v5709 = vadd.f32 %v5434, %v5708
        %v5710 = vpop.f32.mrb[0].mxu0
        %v5711 = vadd.f32 %v5438, %v5710
        %v5712 = vpop.f32.mrb[0].mxu0
        %v5713 = vadd.f32 %v5434, %v5712
        %v5714 = vpop.f32.mrb[0].mxu0
        %v5715 = vadd.f32 %v5438, %v5714
        %5716 = vmatprep.mubr.bf16.mxu0 0
        %5717 = vmatmul.mubr.bf16.gmra.mrb[0].mxu0 %v5386
        %v5718 = vpop.f32.mrb[0].mxu0
        %v5719 = vadd.f32 %v5434, %v5718
        %v5720 = vpop.f32.mrb[0].mxu0
        %v5721 = vadd.f32 %v5438, %v5720
        %v5722 = vpop.f32.mrb[0].mxu0
        %v5723 = vpop.f32.mrb[0].mxu0
        %5724 = vdwg.mxu0
        %v5725 = vmul.f32 %v5638, 0.5
        %v5726 = vmul.f32 %v5640, 0.5
        %v5727 = vmul.f32 %v5699, 0.5
        %v5728 = vmul.f32 %v5701, 0.5
        %v5729 = vmul.f32 %v5642, 0.5
        %v5730 = vmul.f32 %v5644, 0.5
        %v5731 = vmul.f32 %v5703, 0.5
        %v5732 = vmul.f32 %v5705, 0.5
        %v5733 = vmul.f32 %v5648, 0.5
        %v5734 = vmul.f32 %v5650, 0.5
        %v5735 = vmul.f32 %v5709, 0.5
        %v5736 = vmul.f32 %v5711, 0.5
        %v5737 = vmul.f32 %v5652, 0.5
        %v5738 = vmul.f32 %v5654, 0.5
        %v5739 = vmul.f32 %v5713, 0.5
        %v5740 = vmul.f32 %v5715, 0.5
        %v5741 = vmul.f32 %v5658, 0.5
        %v5742 = vmul.f32 %v5660, 0.5
        %v5743 = vmul.f32 %v5719, 0.5
        %v5744 = vmul.f32 %v5721, 0.5
        %v5745 = vmul.f32 %v5638, 0.044715
        %v5746 = vmul.f32 %v5640, 0.044715
        %v5747 = vmul.f32 %v5699, 0.044715
        %v5748 = vmul.f32 %v5701, 0.044715
        %v5749 = vmul.f32 %v5642, 0.044715
        %v5750 = vmul.f32 %v5644, 0.044715
        %v5751 = vmul.f32 %v5703, 0.044715
        %v5752 = vmul.f32 %v5705, 0.044715
        %v5753 = vmul.f32 %v5648, 0.044715
        %v5754 = vmul.f32 %v5650, 0.044715
        %v5755 = vmul.f32 %v5709, 0.044715
        %v5756 = vmul.f32 %v5711, 0.044715
        %v5757 = vmul.f32 %v5652, 0.044715
        %v5758 = vmul.f32 %v5654, 0.044715
        %v5759 = vmul.f32 %v5713, 0.044715
        %v5760 = vmul.f32 %v5715, 0.044715
        %v5761 = vmul.f32 %v5658, 0.044715
        %v5762 = vmul.f32 %v5660, 0.044715
        %v5763 = vmul.f32 %v5719, 0.044715
        %v5764 = vmul.f32 %v5721, 0.044715
        %v5765 = vmul.f32 %v5745, %v5638
        %v5766 = vmul.f32 %v5746, %v5640
        %v5767 = vmul.f32 %v5747, %v5699
        %v5768 = vmul.f32 %v5748, %v5701
        %v5769 = vmul.f32 %v5749, %v5642
        %v5770 = vmul.f32 %v5750, %v5644
        %v5771 = vmul.f32 %v5751, %v5703
        %v5772 = vmul.f32 %v5752, %v5705
        %v5773 = vmul.f32 %v5753, %v5648
        %v5774 = vmul.f32 %v5754, %v5650
        %v5775 = vmul.f32 %v5755, %v5709
        %v5776 = vmul.f32 %v5756, %v5711
        %v5777 = vmul.f32 %v5757, %v5652
        %v5778 = vmul.f32 %v5758, %v5654
        %v5779 = vmul.f32 %v5759, %v5713
        %v5780 = vmul.f32 %v5760, %v5715
        %v5781 = vmul.f32 %v5761, %v5658
        %v5782 = vmul.f32 %v5762, %v5660
        %v5783 = vmul.f32 %v5763, %v5719
        %v5784 = vmul.f32 %v5764, %v5721
        %v5785 = vmul.f32 %v5765, %v5638
        %v5786 = vmul.f32 %v5766, %v5640
        %v5787 = vmul.f32 %v5767, %v5699
        %v5788 = vmul.f32 %v5768, %v5701
        %v5789 = vmul.f32 %v5769, %v5642
        %v5790 = vmul.f32 %v5770, %v5644
        %v5791 = vmul.f32 %v5771, %v5703
        %v5792 = vmul.f32 %v5772, %v5705
        %v5793 = vmul.f32 %v5773, %v5648
        %v5794 = vmul.f32 %v5774, %v5650
        %v5795 = vmul.f32 %v5775, %v5709
        %v5796 = vmul.f32 %v5776, %v5711
        %v5797 = vmul.f32 %v5777, %v5652
        %v5798 = vmul.f32 %v5778, %v5654
        %v5799 = vmul.f32 %v5779, %v5713
        %v5800 = vmul.f32 %v5780, %v5715
        %v5801 = vmul.f32 %v5781, %v5658
        %v5802 = vmul.f32 %v5782, %v5660
        %v5803 = vmul.f32 %v5783, %v5719
        %v5804 = vmul.f32 %v5784, %v5721
        %v5805 = vadd.f32 %v5638, %v5785
        %v5806 = vadd.f32 %v5640, %v5786
        %v5807 = vadd.f32 %v5699, %v5787
        %v5808 = vadd.f32 %v5701, %v5788
        %v5809 = vadd.f32 %v5642, %v5789
        %v5810 = vadd.f32 %v5644, %v5790
        %v5811 = vadd.f32 %v5703, %v5791
        %v5812 = vadd.f32 %v5705, %v5792
        %v5813 = vadd.f32 %v5648, %v5793
        %v5814 = vadd.f32 %v5650, %v5794
        %v5815 = vadd.f32 %v5709, %v5795
        %v5816 = vadd.f32 %v5711, %v5796
        %v5817 = vadd.f32 %v5652, %v5797
        %v5818 = vadd.f32 %v5654, %v5798
        %v5819 = vadd.f32 %v5713, %v5799
        %v5820 = vadd.f32 %v5715, %v5800
        %v5821 = vadd.f32 %v5658, %v5801
        %v5822 = vadd.f32 %v5660, %v5802
        %v5823 = vadd.f32 %v5719, %v5803
        %v5824 = vadd.f32 %v5721, %v5804
        %v5825 = vmul.f32 %v5805, 0.7978846
        %v5826 = vmul.f32 %v5806, 0.7978846
        %v5827 = vmul.f32 %v5807, 0.7978846
        %v5828 = vmul.f32 %v5808, 0.7978846
        %v5829 = vmul.f32 %v5809, 0.7978846
        %v5830 = vmul.f32 %v5810, 0.7978846
        %v5831 = vmul.f32 %v5811, 0.7978846
        %v5832 = vmul.f32 %v5812, 0.7978846
        %v5833 = vmul.f32 %v5813, 0.7978846
        %v5834 = vmul.f32 %v5814, 0.7978846
        %v5835 = vmul.f32 %v5815, 0.7978846
        %v5836 = vmul.f32 %v5816, 0.7978846
        %v5837 = vmul.f32 %v5817, 0.7978846
        %v5838 = vmul.f32 %v5818, 0.7978846
        %v5839 = vmul.f32 %v5819, 0.7978846
        %v5840 = vmul.f32 %v5820, 0.7978846
        %v5841 = vmul.f32 %v5821, 0.7978846
        %v5842 = vmul.f32 %v5822, 0.7978846
        %v5843 = vmul.f32 %v5823, 0.7978846
        %v5844 = vmul.f32 %v5824, 0.7978846
        %v5845 = vtanh.pop %v5825
        %v5846 = vtanh.pop %v5826
        %v5847 = vtanh.pop %v5827
        %v5848 = vtanh.pop %v5828
        %v5849 = vtanh.pop %v5829
        %v5850 = vtanh.pop %v5830
        %v5851 = vtanh.pop %v5831
        %v5852 = vtanh.pop %v5832
        %v5853 = vtanh.pop %v5833
        %v5854 = vtanh.pop %v5834
        %v5855 = vtanh.pop %v5835
        %v5856 = vtanh.pop %v5836
        %v5857 = vtanh.pop %v5837
        %v5858 = vtanh.pop %v5838
        %v5859 = vtanh.pop %v5839
        %v5860 = vtanh.pop %v5840
        %v5861 = vtanh.pop %v5841
        %v5862 = vtanh.pop %v5842
        %v5863 = vtanh.pop %v5843
        %v5864 = vtanh.pop %v5844
        %v5865 = vadd.f32 %v5845, 1.0
        %v5866 = vadd.f32 %v5846, 1.0
        %v5867 = vadd.f32 %v5847, 1.0
        %v5868 = vadd.f32 %v5848, 1.0
        %v5869 = vadd.f32 %v5849, 1.0
        %v5870 = vadd.f32 %v5850, 1.0
        %v5871 = vadd.f32 %v5851, 1.0
        %v5872 = vadd.f32 %v5852, 1.0
        %v5873 = vadd.f32 %v5853, 1.0
        %v5874 = vadd.f32 %v5854, 1.0
        %v5875 = vadd.f32 %v5855, 1.0
        %v5876 = vadd.f32 %v5856, 1.0
        %v5877 = vadd.f32 %v5857, 1.0
        %v5878 = vadd.f32 %v5858, 1.0
        %v5879 = vadd.f32 %v5859, 1.0
        %v5880 = vadd.f32 %v5860, 1.0
        %v5881 = vadd.f32 %v5861, 1.0
        %v5882 = vadd.f32 %v5862, 1.0
        %v5883 = vadd.f32 %v5863, 1.0
        %v5884 = vadd.f32 %v5864, 1.0
        %v5885 = vmul.f32 %v5725, %v5865
        %v5886 = vmul.f32 %v5726, %v5866
        %v5887 = vmul.f32 %v5727, %v5867
        %v5888 = vmul.f32 %v5728, %v5868
        %v5889 = vmul.f32 %v5729, %v5869
        %v5890 = vmul.f32 %v5730, %v5870
        %v5891 = vmul.f32 %v5731, %v5871
        %v5892 = vmul.f32 %v5732, %v5872
        %v5893 = vmul.f32 %v5733, %v5873
        %v5894 = vmul.f32 %v5734, %v5874
        %v5895 = vmul.f32 %v5735, %v5875
        %v5896 = vmul.f32 %v5736, %v5876
        %v5897 = vmul.f32 %v5737, %v5877
        %v5898 = vmul.f32 %v5738, %v5878
        %v5899 = vmul.f32 %v5739, %v5879
        %v5900 = vmul.f32 %v5740, %v5880
        %v5901 = vmul.f32 %v5741, %v5881
        %v5902 = vmul.f32 %v5742, %v5882
        %v5903 = vmul.f32 %v5743, %v5883
        %v5904 = vmul.f32 %v5744, %v5884
        %v5905 = vpack.c.bf16 %v5889, %v5885
        %v5906 = vpack.c.bf16 %v5890, %v5886
        %v5907 = vpack.c.bf16 %v5891, %v5887
        %v5908 = vpack.c.bf16 %v5892, %v5888
        %v5909 = vpack.c.bf16 %v5897, %v5893
        %v5910 = vpack.c.bf16 %v5898, %v5894
        %v5911 = vpack.c.bf16 %v5899, %v5895
        %v5912 = vpack.c.bf16 %v5900, %v5896
        %v5913 = vpack.c.bf16 %v5901, %v5901
        %v5914 = vpack.c.bf16 %v5902, %v5902
        %v5915 = vpack.c.bf16 %v5903, %v5903
        %v5916 = vpack.c.bf16 %v5904, %v5904
        %s5917 = scalar_lea.vmem [#allocation23], 256
        %v5918 = vld [vmem:[%s5917] sm:$0xf]
        %v5919 = vld [vmem:[%s5917 + $0x4] sm:$0xf]
        %v5920 = vld [vmem:[%s5917 + $0x8] sm:$0xf]
        %v5921 = vld [vmem:[%s5917 + $0xc] sm:$0xf]
        %v5922 = vld [vmem:[%s5917 + $0x10] sm:$0xf]
        %v5923 = vld [vmem:[%s5917 + $0x14] sm:$0xf]
        %v5924 = vld [vmem:[%s5917 + $0x18] sm:$0xf]
        %v5925 = vld [vmem:[%s5917 + $0x1c] sm:$0xf]
        %v5926 = vld [vmem:[%s5917 + $0x20] sm:$0xf]
        %v5927 = vld [vmem:[%s5917 + $0x24] sm:$0xf]
        %v5928 = vld [vmem:[%s5917 + $0x28] sm:$0xf]
        %v5929 = vld [vmem:[%s5917 + $0x2c] sm:$0xf]
        %v5930 = vld [vmem:[%s5917 + $0x30] sm:$0xf]
        %v5931 = vld [vmem:[%s5917 + $0x34] sm:$0xf]
        %v5932 = vld [vmem:[%s5917 + $0x38] sm:$0xf]
        %v5933 = vld [vmem:[%s5917 + $0x3c] sm:$0xf]
        %v5934 = vld [vmem:[%s5917 + $0x40] sm:$0xf]
        %v5935 = vld [vmem:[%s5917 + $0x44] sm:$0xf]
        %v5936 = vld [vmem:[%s5917 + $0x48] sm:$0xf]
        %v5937 = vld [vmem:[%s5917 + $0x4c] sm:$0xf]
        %v5938 = vld [vmem:[%s5917 + $0x50] sm:$0xf]
        %v5939 = vld [vmem:[%s5917 + $0x54] sm:$0xf]
        %v5940 = vld [vmem:[%s5917 + $0x58] sm:$0xf]
        %v5941 = vld [vmem:[%s5917 + $0x5c] sm:$0xf]
        %v5942 = vld [vmem:[%s5917 + $0x60] sm:$0xf]
        %v5943 = vld [vmem:[%s5917 + $0x64] sm:$0xf]
        %v5944 = vld [vmem:[%s5917 + $0x68] sm:$0xf]
        %v5945 = vld [vmem:[%s5917 + $0x6c] sm:$0xf]
        %v5946 = vld [vmem:[%s5917 + $0x70] sm:$0xf]
        %v5947 = vld [vmem:[%s5917 + $0x74] sm:$0xf]
        %v5948 = vld [vmem:[%s5917 + $0x78] sm:$0xf]
        %v5949 = vld [vmem:[%s5917 + $0x7c] sm:$0xf]
        %v5950 = vld [vmem:[%s5917 + $0x80] sm:$0xf]
        %v5951 = vld [vmem:[%s5917 + $0x84] sm:$0xf]
        %v5952 = vld [vmem:[%s5917 + $0x88] sm:$0xf]
        %v5953 = vld [vmem:[%s5917 + $0x8c] sm:$0xf]
        %v5954 = vld [vmem:[%s5917 + $0x90] sm:$0xf]
        %v5955 = vld [vmem:[%s5917 + $0x94] sm:$0xf]
        %v5956 = vld [vmem:[%s5917 + $0x98] sm:$0xf]
        %v5957 = vld [vmem:[%s5917 + $0x9c] sm:$0xf]
        %v5958 = vld [vmem:[%s5917 + $0xa0] sm:$0xf]
        %v5959 = vld [vmem:[%s5917 + $0xa4] sm:$0xf]
        %v5960 = vld [vmem:[%s5917 + $0xa8] sm:$0xf]
        %v5961 = vld [vmem:[%s5917 + $0xac] sm:$0xf]
        %v5962 = vld [vmem:[%s5917 + $0xb0] sm:$0xf]
        %v5963 = vld [vmem:[%s5917 + $0xb4] sm:$0xf]
        %v5964 = vld [vmem:[%s5917 + $0xb8] sm:$0xf]
        %v5965 = vld [vmem:[%s5917 + $0xbc] sm:$0xf]
        %v5966 = vld [vmem:[%s5917 + $0xc0] sm:$0xf]
        %v5967 = vld [vmem:[%s5917 + $0xc4] sm:$0xf]
        %v5968 = vld [vmem:[%s5917 + $0xc8] sm:$0xf]
        %v5969 = vld [vmem:[%s5917 + $0xcc] sm:$0xf]
        %v5970 = vld [vmem:[%s5917 + $0xd0] sm:$0xf]
        %v5971 = vld [vmem:[%s5917 + $0xd4] sm:$0xf]
        %v5972 = vld [vmem:[%s5917 + $0xd8] sm:$0xf]
        %v5973 = vld [vmem:[%s5917 + $0xdc] sm:$0xf]
        %v5974 = vld [vmem:[%s5917 + $0xe0] sm:$0xf]
        %v5975 = vld [vmem:[%s5917 + $0xe4] sm:$0xf]
        %v5976 = vld [vmem:[%s5917 + $0xe8] sm:$0xf]
        %v5977 = vld [vmem:[%s5917 + $0xec] sm:$0xf]
        %v5978 = vld [vmem:[%s5917 + $0xf0] sm:$0xf]
        %v5979 = vld [vmem:[%s5917 + $0xf4] sm:$0xf]
        %v5980 = vld [vmem:[%s5917 + $0xf8] sm:$0xf]
        %v5981 = vld [vmem:[%s5917 + $0xfc] sm:$0xf]
        %s5982 = scalar_lea.vmem [#allocation25], 1
        %v5983 = vld [vmem:[%s5982] sm:$0x1]
        %v5985 = vlaneseq
        %v5986 = vshrl.u32 %v5985, 7
        %v5987 = vsub.s32 0, %v5986
        %v5988 = vrot.slane %v5983, %v5987
        %v6054 = vunpack.c.l.b16 %v5918
        %v6055 = vunpack.c.l.b16 %v5919
        %v6056 = vunpack.c.l.b16 %v5920
        %v6057 = vunpack.c.l.b16 %v5921
        %v6058 = vunpack.c.l.b16 %v5922
        %v6059 = vunpack.c.l.b16 %v5923
        %v6060 = vunpack.c.l.b16 %v5924
        %v6061 = vunpack.c.l.b16 %v5925
        %v6062 = vunpack.c.l.b16 %v5926
        %v6063 = vunpack.c.l.b16 %v5927
        %v6064 = vunpack.c.l.b16 %v5928
        %v6065 = vunpack.c.l.b16 %v5929
        %v6066 = vunpack.c.l.b16 %v5930
        %v6067 = vunpack.c.l.b16 %v5931
        %v6068 = vunpack.c.l.b16 %v5932
        %v6069 = vunpack.c.l.b16 %v5933
        %v6070 = vunpack.c.l.b16 %v5934
        %v6071 = vunpack.c.l.b16 %v5935
        %v6072 = vunpack.c.l.b16 %v5936
        %v6073 = vunpack.c.l.b16 %v5937
        %v6074 = vunpack.c.l.b16 %v5938
        %v6075 = vunpack.c.l.b16 %v5939
        %v6076 = vunpack.c.l.b16 %v5940
        %v6077 = vunpack.c.l.b16 %v5941
        %v6078 = vunpack.c.l.b16 %v5942
        %v6079 = vunpack.c.l.b16 %v5943
        %v6080 = vunpack.c.l.b16 %v5944
        %v6081 = vunpack.c.l.b16 %v5945
        %v6082 = vunpack.c.l.b16 %v5946
        %v6083 = vunpack.c.l.b16 %v5947
        %v6084 = vunpack.c.l.b16 %v5948
        %v6085 = vunpack.c.l.b16 %v5949
        %v6086 = vunpack.c.l.b16 %v5950
        %v6087 = vunpack.c.l.b16 %v5951
        %v6088 = vunpack.c.l.b16 %v5952
        %v6089 = vunpack.c.l.b16 %v5953
        %v6090 = vunpack.c.l.b16 %v5954
        %v6091 = vunpack.c.l.b16 %v5955
        %v6092 = vunpack.c.l.b16 %v5956
        %v6093 = vunpack.c.l.b16 %v5957
        %v6094 = vunpack.c.l.b16 %v5958
        %v6095 = vunpack.c.l.b16 %v5959
        %v6096 = vunpack.c.l.b16 %v5960
        %v6097 = vunpack.c.l.b16 %v5961
        %v6098 = vunpack.c.l.b16 %v5962
        %v6099 = vunpack.c.l.b16 %v5963
        %v6100 = vunpack.c.l.b16 %v5964
        %v6101 = vunpack.c.l.b16 %v5965
        %v6102 = vunpack.c.l.b16 %v5966
        %v6103 = vunpack.c.l.b16 %v5967
        %v6104 = vunpack.c.l.b16 %v5968
        %v6105 = vunpack.c.l.b16 %v5969
        %v6106 = vunpack.c.l.b16 %v5970
        %v6107 = vunpack.c.l.b16 %v5971
        %v6108 = vunpack.c.l.b16 %v5972
        %v6109 = vunpack.c.l.b16 %v5973
        %v6110 = vunpack.c.l.b16 %v5974
        %v6111 = vunpack.c.l.b16 %v5975
        %v6112 = vunpack.c.l.b16 %v5976
        %v6113 = vunpack.c.l.b16 %v5977
        %v6114 = vunpack.c.l.b16 %v5978
        %v6115 = vunpack.c.l.b16 %v5979
        %v6116 = vunpack.c.l.b16 %v5980
        %v6117 = vunpack.c.l.b16 %v5981
        %v6118 = vpack.c.b16 %v6055, %v6054
        %v6119 = vpack.c.b16 %v6057, %v6056
        %v6120 = vpack.c.b16 %v6059, %v6058
        %v6121 = vpack.c.b16 %v6061, %v6060
        %v6122 = vpack.c.b16 %v6063, %v6062
        %v6123 = vpack.c.b16 %v6065, %v6064
        %v6124 = vpack.c.b16 %v6067, %v6066
        %v6125 = vpack.c.b16 %v6069, %v6068
        %v6126 = vpack.c.b16 %v6071, %v6070
        %v6127 = vpack.c.b16 %v6073, %v6072
        %v6128 = vpack.c.b16 %v6075, %v6074
        %v6129 = vpack.c.b16 %v6077, %v6076
        %v6130 = vpack.c.b16 %v6079, %v6078
        %v6131 = vpack.c.b16 %v6081, %v6080
        %v6132 = vpack.c.b16 %v6083, %v6082
        %v6133 = vpack.c.b16 %v6085, %v6084
        %v6134 = vpack.c.b16 %v6087, %v6086
        %v6135 = vpack.c.b16 %v6089, %v6088
        %v6136 = vpack.c.b16 %v6091, %v6090
        %v6137 = vpack.c.b16 %v6093, %v6092
        %v6138 = vpack.c.b16 %v6095, %v6094
        %v6139 = vpack.c.b16 %v6097, %v6096
        %v6140 = vpack.c.b16 %v6099, %v6098
        %v6141 = vpack.c.b16 %v6101, %v6100
        %v6142 = vpack.c.b16 %v6103, %v6102
        %v6143 = vpack.c.b16 %v6105, %v6104
        %v6144 = vpack.c.b16 %v6107, %v6106
        %v6145 = vpack.c.b16 %v6109, %v6108
        %v6146 = vpack.c.b16 %v6111, %v6110
        %v6147 = vpack.c.b16 %v6113, %v6112
        %v6148 = vpack.c.b16 %v6115, %v6114
        %v6149 = vpack.c.b16 %v6117, %v6116
        %6182 = vmatprep.subr.bf16.mxu0 0
        %6183 = vmatpush1.bf16.msra.mxu0 %v6118
        %6184 = vmatprep.subr.bf16.mxu0 0
        %6185 = vmatpush1.bf16.msra.mxu0 %v6119
        %6186 = vmatprep.subr.bf16.mxu0 0
        %6187 = vmatpush1.bf16.msra.mxu0 %v6120
        %6188 = vmatprep.subr.bf16.mxu0 0
        %6189 = vmatpush1.bf16.msra.mxu0 %v6121
        %6190 = vmatprep.subr.bf16.mxu0 0
        %6191 = vmatpush1.bf16.msra.mxu0 %v6122
        %6192 = vmatprep.subr.bf16.mxu0 0
        %6193 = vmatpush1.bf16.msra.mxu0 %v6123
        %6194 = vmatprep.subr.bf16.mxu0 0
        %6195 = vmatpush1.bf16.msra.mxu0 %v6124
        %6196 = vmatprep.subr.bf16.mxu0 0
        %6197 = vmatpush1.bf16.msra.mxu0 %v6125
        %6198 = vmatprep.subr.bf16.mxu0 0
        %6199 = vmatpush1.bf16.msra.mxu0 %v6126
        %6200 = vmatprep.subr.bf16.mxu0 0
        %6201 = vmatpush1.bf16.msra.mxu0 %v6127
        %6202 = vmatprep.subr.bf16.mxu0 0
        %6203 = vmatpush1.bf16.msra.mxu0 %v6128
        %6204 = vmatprep.subr.bf16.mxu0 0
        %6205 = vmatpush1.bf16.msra.mxu0 %v6129
        %6206 = vmatprep.subr.bf16.mxu0 0
        %6207 = vmatpush1.bf16.msra.mxu0 %v6130
        %6208 = vmatprep.subr.bf16.mxu0 0
        %6209 = vmatpush1.bf16.msra.mxu0 %v6131
        %6210 = vmatprep.subr.bf16.mxu0 0
        %6211 = vmatpush1.bf16.msra.mxu0 %v6132
        %6212 = vmatprep.subr.bf16.mxu0 0
        %6213 = vmatpush1.bf16.msra.mxu0 %v6133
        %6214 = vmatprep.mubr.bf16.mxu0 %v5906
        %6215 = vmatmul.mubr.bf16.gmra.mrb[0].mxu0 %v5905
        %v6216 = vpop.f32.mrb[0].mxu0
        %v6217 = vadd.f32 %v5988, %v6216
        %v6218 = vpop.f32.mrb[0].mxu0
        %v6219 = vpop.f32.mrb[0].mxu0
        %v6220 = vpop.f32.mrb[0].mxu0
        %6221 = vmatprep.mubr.bf16.mxu0 %v5910
        %6222 = vmatmul.mubr.bf16.gmra.mrb[0].mxu0 %v5909
        %v6223 = vpop.f32.mrb[0].mxu0
        %v6224 = vpop.f32.mrb[0].mxu0
        %v6225 = vpop.f32.mrb[0].mxu0
        %v6226 = vpop.f32.mrb[0].mxu0
        %6227 = vmatprep.mubr.bf16.mxu0 %v5914
        %6228 = vmatmul.mubr.bf16.gmra.mrb[0].mxu0 %v5913
        %v6229 = vpop.f32.mrb[0].mxu0
        %v6230 = vpop.f32.mrb[0].mxu0
        %v6231 = vpop.f32.mrb[0].mxu0
        %v6232 = vpop.f32.mrb[0].mxu0
        %6233 = vdwg.mxu0
        %6234 = vmatprep.subr.bf16.mxu0 0
        %6235 = vmatpush1.bf16.msra.mxu0 %v6134
        %6236 = vmatprep.subr.bf16.mxu0 0
        %6237 = vmatpush1.bf16.msra.mxu0 %v6135
        %6238 = vmatprep.subr.bf16.mxu0 0
        %6239 = vmatpush1.bf16.msra.mxu0 %v6136
        %6240 = vmatprep.subr.bf16.mxu0 0
        %6241 = vmatpush1.bf16.msra.mxu0 %v6137
        %6242 = vmatprep.subr.bf16.mxu0 0
        %6243 = vmatpush1.bf16.msra.mxu0 %v6138
        %6244 = vmatprep.subr.bf16.mxu0 0
        %6245 = vmatpush1.bf16.msra.mxu0 %v6139
        %6246 = vmatprep.subr.bf16.mxu0 0
        %6247 = vmatpush1.bf16.msra.mxu0 %v6140
        %6248 = vmatprep.subr.bf16.mxu0 0
        %6249 = vmatpush1.bf16.msra.mxu0 %v6141
        %6250 = vmatprep.subr.bf16.mxu0 0
        %6251 = vmatpush1.bf16.msra.mxu0 %v6142
        %6252 = vmatprep.subr.bf16.mxu0 0
        %6253 = vmatpush1.bf16.msra.mxu0 %v6143
        %6254 = vmatprep.subr.bf16.mxu0 0
        %6255 = vmatpush1.bf16.msra.mxu0 %v6144
        %6256 = vmatprep.subr.bf16.mxu0 0
        %6257 = vmatpush1.bf16.msra.mxu0 %v6145
        %6258 = vmatprep.subr.bf16.mxu0 0
        %6259 = vmatpush1.bf16.msra.mxu0 %v6146
        %6260 = vmatprep.subr.bf16.mxu0 0
        %6261 = vmatpush1.bf16.msra.mxu0 %v6147
        %6262 = vmatprep.subr.bf16.mxu0 0
        %6263 = vmatpush1.bf16.msra.mxu0 %v6148
        %6264 = vmatprep.subr.bf16.mxu0 0
        %6265 = vmatpush1.bf16.msra.mxu0 %v6149
        %6266 = vmatprep.mubr.bf16.mxu0 %v5908
        %6267 = vmatmul.mubr.bf16.gmra.mrb[0].mxu0 %v5907
        %v6268 = vpop.f32.mrb[0].mxu0
        %v6269 = vadd.f32 %v6217, %v6268
        %v6270 = vpop.f32.mrb[0].mxu0
        %v6271 = vpop.f32.mrb[0].mxu0
        %v6272 = vpop.f32.mrb[0].mxu0
        %6273 = vmatprep.mubr.bf16.mxu0 %v5912
        %6274 = vmatmul.mubr.bf16.gmra.mrb[0].mxu0 %v5911
        %v6275 = vpop.f32.mrb[0].mxu0
        %v6276 = vpop.f32.mrb[0].mxu0
        %v6277 = vpop.f32.mrb[0].mxu0
        %v6278 = vpop.f32.mrb[0].mxu0
        %6279 = vmatprep.mubr.bf16.mxu0 %v5916
        %6280 = vmatmul.mubr.bf16.gmra.mrb[0].mxu0 %v5915
        %v6281 = vpop.f32.mrb[0].mxu0
        %v6282 = vpop.f32.mrb[0].mxu0
        %v6283 = vpop.f32.mrb[0].mxu0
        %v6284 = vpop.f32.mrb[0].mxu0
        %6285 = vdwg.mxu0
        %v6286 = vadd.f32 %v5298, %v6269
        %v6287 = vld [vmem:[#allocation26] sm:$0x1]
        %v6288 = vld [vmem:[#allocation28] sm:$0x1]
        %6289 = vadd.xlane.f32.xlu0 %v6286
        %v6290 = vpop.xlane.xlu0 %6289
        %v6291 = vmul.f32 %v6290, %v2147
        %v6292 = vsub.f32 %v6286, %v6291
        %v6293 = vmul.f32 %v6292, %v6292
        %6294 = vadd.xlane.f32.xlu0 %v6293
        %v6295 = vpop.xlane.xlu0 %6294
        %v6296 = vmul.f32 %v6295, %v2147
        %v6297 = vadd.f32 %v6296, 1e-06
        %v6298 = vrsqrt.pop %v6297
        %v6299 = vmul.f32 %v6292, %v6298
        %v6301 = vlaneseq
        %v6302 = vshrl.u32 %v6301, 7
        %v6303 = vsub.s32 0, %v6302
        %v6304 = vrot.slane %v6287, %v6303
        %v6306 = vmul.f32 %v6299, %v6304
        %v6308 = vlaneseq
        %v6309 = vshrl.u32 %v6308, 7
        %v6310 = vsub.s32 0, %v6309
        %v6311 = vrot.slane %v6288, %v6310
        %v6313 = vadd.f32 %v6306, %v6311
        %v6314 = vpack.c.bf16 %v6313, %v6313
        %v6315 = vld [vmem:[#allocation29] sm:$0xff]
        %v6316 = vld [vmem:[#allocation29 + $0x8] sm:$0xff]
        %v6317 = vld [vmem:[#allocation29 + $0x10] sm:$0xff]
        %v6318 = vld [vmem:[#allocation29 + $0x18] sm:$0xff]
        %v6319 = vld [vmem:[#allocation29 + $0x20] sm:$0xff]
        %v6320 = vld [vmem:[#allocation29 + $0x28] sm:$0xff]
        %v6321 = vld [vmem:[#allocation29 + $0x30] sm:$0xff]
        %v6322 = vld [vmem:[#allocation29 + $0x38] sm:$0xff]
        %v6323 = vld [vmem:[#allocation29 + $0x40] sm:$0xff]
        %v6324 = vld [vmem:[#allocation29 + $0x48] sm:$0xff]
        %v6325 = vld [vmem:[#allocation29 + $0x50] sm:$0xff]
        %v6326 = vld [vmem:[#allocation29 + $0x58] sm:$0xff]
        %v6327 = vld [vmem:[#allocation29 + $0x60] sm:$0xff]
        %v6328 = vld [vmem:[#allocation29 + $0x68] sm:$0xff]
        %v6329 = vld [vmem:[#allocation29 + $0x70] sm:$0xff]
        %v6330 = vld [vmem:[#allocation29 + $0x78] sm:$0xff]
        %v6331 = vld [vmem:[#allocation29 + $0x80] sm:$0xff]
        %v6332 = vld [vmem:[#allocation29 + $0x88] sm:$0xff]
        %v6333 = vld [vmem:[#allocation29 + $0x90] sm:$0xff]
        %v6334 = vld [vmem:[#allocation29 + $0x98] sm:$0xff]
        %v6335 = vld [vmem:[#allocation29 + $0xa0] sm:$0xff]
        %v6336 = vld [vmem:[#allocation29 + $0xa8] sm:$0xff]
        %v6337 = vld [vmem:[#allocation29 + $0xb0] sm:$0xff]
        %v6338 = vld [vmem:[#allocation29 + $0xb8] sm:$0xff]
        %v6339 = vld [vmem:[#allocation29 + $0xc0] sm:$0xff]
        %v6340 = vld [vmem:[#allocation29 + $0xc8] sm:$0xff]
        %v6341 = vld [vmem:[#allocation29 + $0xd0] sm:$0xff]
        %v6342 = vld [vmem:[#allocation29 + $0xd8] sm:$0xff]
        %v6343 = vld [vmem:[#allocation29 + $0xe0] sm:$0xff]
        %v6344 = vld [vmem:[#allocation29 + $0xe8] sm:$0xff]
        %v6345 = vld [vmem:[#allocation29 + $0xf0] sm:$0xff]
        %v6346 = vld [vmem:[#allocation29 + $0xf8] sm:$0xff]
        %v6347 = vld [vmem:[#allocation31] sm:$0xf]
        %v6380 = vunpack.c.l.b16 %v6315
        %v6381 = vunpack.c.h.b16 %v6315
        %v6382 = vunpack.c.l.b16 %v6316
        %v6383 = vunpack.c.h.b16 %v6316
        %v6384 = vunpack.c.l.b16 %v6317
        %v6385 = vunpack.c.h.b16 %v6317
        %v6386 = vunpack.c.l.b16 %v6318
        %v6387 = vunpack.c.h.b16 %v6318
        %v6388 = vunpack.c.l.b16 %v6319
        %v6389 = vunpack.c.h.b16 %v6319
        %v6390 = vunpack.c.l.b16 %v6320
        %v6391 = vunpack.c.h.b16 %v6320
        %v6392 = vunpack.c.l.b16 %v6321
        %v6393 = vunpack.c.h.b16 %v6321
        %v6394 = vunpack.c.l.b16 %v6322
        %v6395 = vunpack.c.h.b16 %v6322
        %v6396 = vunpack.c.l.b16 %v6323
        %v6397 = vunpack.c.h.b16 %v6323
        %v6398 = vunpack.c.l.b16 %v6324
        %v6399 = vunpack.c.h.b16 %v6324
        %v6400 = vunpack.c.l.b16 %v6325
        %v6401 = vunpack.c.h.b16 %v6325
        %v6402 = vunpack.c.l.b16 %v6326
        %v6403 = vunpack.c.h.b16 %v6326
        %v6404 = vunpack.c.l.b16 %v6327
        %v6405 = vunpack.c.h.b16 %v6327
        %v6406 = vunpack.c.l.b16 %v6328
        %v6407 = vunpack.c.h.b16 %v6328
        %v6408 = vunpack.c.l.b16 %v6329
        %v6409 = vunpack.c.h.b16 %v6329
        %v6410 = vunpack.c.l.b16 %v6330
        %v6411 = vunpack.c.h.b16 %v6330
        %v6412 = vunpack.c.l.b16 %v6331
        %v6413 = vunpack.c.h.b16 %v6331
        %v6414 = vunpack.c.l.b16 %v6332
        %v6415 = vunpack.c.h.b16 %v6332
        %v6416 = vunpack.c.l.b16 %v6333
        %v6417 = vunpack.c.h.b16 %v6333
        %v6418 = vunpack.c.l.b16 %v6334
        %v6419 = vunpack.c.h.b16 %v6334
        %v6420 = vunpack.c.l.b16 %v6335
        %v6421 = vunpack.c.h.b16 %v6335
        %v6422 = vunpack.c.l.b16 %v6336
        %v6423 = vunpack.c.h.b16 %v6336
        %v6424 = vunpack.c.l.b16 %v6337
        %v6425 = vunpack.c.h.b16 %v6337
        %v6426 = vunpack.c.l.b16 %v6338
        %v6427 = vunpack.c.h.b16 %v6338
        %v6428 = vunpack.c.l.b16 %v6339
        %v6429 = vunpack.c.h.b16 %v6339
        %v6430 = vunpack.c.l.b16 %v6340
        %v6431 = vunpack.c.h.b16 %v6340
        %v6432 = vunpack.c.l.b16 %v6341
        %v6433 = vunpack.c.h.b16 %v6341
        %v6434 = vunpack.c.l.b16 %v6342
        %v6435 = vunpack.c.h.b16 %v6342
        %v6436 = vunpack.c.l.b16 %v6343
        %v6437 = vunpack.c.h.b16 %v6343
        %v6438 = vunpack.c.l.b16 %v6344
        %v6439 = vunpack.c.h.b16 %v6344
        %v6440 = vunpack.c.l.b16 %v6345
        %v6441 = vunpack.c.h.b16 %v6345
        %v6442 = vunpack.c.l.b16 %v6346
        %v6443 = vunpack.c.h.b16 %v6346
        %v6444 = vpack.c.b16 %v6384, %v6380
        %v6445 = vpack.c.b16 %v6385, %v6381
        %v6446 = vpack.c.b16 %v6386, %v6382
        %v6447 = vpack.c.b16 %v6387, %v6383
        %v6448 = vpack.c.b16 %v6392, %v6388
        %v6449 = vpack.c.b16 %v6393, %v6389
        %v6450 = vpack.c.b16 %v6394, %v6390
        %v6451 = vpack.c.b16 %v6395, %v6391
        %v6452 = vpack.c.b16 %v6400, %v6396
        %v6453 = vpack.c.b16 %v6401, %v6397
        %v6454 = vpack.c.b16 %v6402, %v6398
        %v6455 = vpack.c.b16 %v6403, %v6399
        %v6456 = vpack.c.b16 %v6408, %v6404
        %v6457 = vpack.c.b16 %v6409, %v6405
        %v6458 = vpack.c.b16 %v6410, %v6406
        %v6459 = vpack.c.b16 %v6411, %v6407
        %v6460 = vpack.c.b16 %v6416, %v6412
        %v6461 = vpack.c.b16 %v6417, %v6413
        %v6462 = vpack.c.b16 %v6418, %v6414
        %v6463 = vpack.c.b16 %v6419, %v6415
        %v6464 = vpack.c.b16 %v6424, %v6420
        %v6465 = vpack.c.b16 %v6425, %v6421
        %v6466 = vpack.c.b16 %v6426, %v6422
        %v6467 = vpack.c.b16 %v6427, %v6423
        %v6468 = vpack.c.b16 %v6432, %v6428
        %v6469 = vpack.c.b16 %v6433, %v6429
        %v6470 = vpack.c.b16 %v6434, %v6430
        %v6471 = vpack.c.b16 %v6435, %v6431
        %v6472 = vpack.c.b16 %v6440, %v6436
        %v6473 = vpack.c.b16 %v6441, %v6437
        %v6474 = vpack.c.b16 %v6442, %v6438
        %v6475 = vpack.c.b16 %v6443, %v6439
        %v6509 = vlaneseq
        %v6510 = vshrl.u32 %v6509, 7
        %v6511 = vsub.s32 0, %v6510
        %v6512 = vrot.slane %v6347, %v6511
        %v6513 = vlaneseq
        %v6514 = vshrl.u32 %v6513, 7
        %v6515 = vsub.s32 1, %v6514
        %v6516 = vrot.slane %v6347, %v6515
        %v6517 = vlaneseq
        %v6518 = vshrl.u32 %v6517, 7
        %v6519 = vsub.s32 2, %v6518
        %v6520 = vrot.slane %v6347, %v6519
        %v6521 = vlaneseq
        %v6522 = vshrl.u32 %v6521, 7
        %v6523 = vsub.s32 3, %v6522
        %v6524 = vrot.slane %v6347, %v6523
        %6529 = vmatprep.subr.bf16.mxu0 %v6445
        %6530 = vmatpush1.bf16.msra.mxu0 %v6444
        %6531 = vmatprep.subr.bf16.mxu0 %v6449
        %6532 = vmatpush1.bf16.msra.mxu0 %v6448
        %6533 = vmatprep.subr.bf16.mxu0 %v6453
        %6534 = vmatpush1.bf16.msra.mxu0 %v6452
        %6535 = vmatprep.subr.bf16.mxu0 %v6457
        %6536 = vmatpush1.bf16.msra.mxu0 %v6456
        %6537 = vmatprep.subr.bf16.mxu0 %v6461
        %6538 = vmatpush1.bf16.msra.mxu0 %v6460
        %6539 = vmatprep.subr.bf16.mxu0 %v6465
        %6540 = vmatpush1.bf16.msra.mxu0 %v6464
        %6541 = vmatprep.subr.bf16.mxu0 %v6469
        %6542 = vmatpush1.bf16.msra.mxu0 %v6468
        %6543 = vmatprep.subr.bf16.mxu0 %v6473
        %6544 = vmatpush1.bf16.msra.mxu0 %v6472
        %6545 = vmatprep.subr.bf16.mxu0 0
        %6546 = vmatpush1.bf16.msra.mxu0 0
        %6547 = vmatprep.subr.bf16.mxu0 0
        %6548 = vmatpush1.bf16.msra.mxu0 0
        %6549 = vmatprep.subr.bf16.mxu0 0
        %6550 = vmatpush1.bf16.msra.mxu0 0
        %6551 = vmatprep.subr.bf16.mxu0 0
        %6552 = vmatpush1.bf16.msra.mxu0 0
        %6553 = vmatprep.subr.bf16.mxu0 0
        %6554 = vmatpush1.bf16.msra.mxu0 0
        %6555 = vmatprep.subr.bf16.mxu0 0
        %6556 = vmatpush1.bf16.msra.mxu0 0
        %6557 = vmatprep.subr.bf16.mxu0 0
        %6558 = vmatpush1.bf16.msra.mxu0 0
        %6559 = vmatprep.subr.bf16.mxu0 0
        %6560 = vmatpush1.bf16.msra.mxu0 0
        %6561 = vmatprep.mubr.bf16.mxu0 0
        %6562 = vmatmul.mubr.bf16.gmra.mrb[0].mxu0 %v6314
        %v6563 = vpop.f32.mrb[0].mxu0
        %v6564 = vadd.f32 %v6512, %v6563
        %v6565 = vpop.f32.mrb[0].mxu0
        %v6566 = vadd.f32 %v6516, %v6565
        %v6567 = vpop.f32.mrb[0].mxu0
        %v6568 = vpop.f32.mrb[0].mxu0
        %6569 = vdwg.mxu0
        %6570 = vmatprep.subr.bf16.mxu0 %v6447
        %6571 = vmatpush1.bf16.msra.mxu0 %v6446
        %6572 = vmatprep.subr.bf16.mxu0 %v6451
        %6573 = vmatpush1.bf16.msra.mxu0 %v6450
        %6574 = vmatprep.subr.bf16.mxu0 %v6455
        %6575 = vmatpush1.bf16.msra.mxu0 %v6454
        %6576 = vmatprep.subr.bf16.mxu0 %v6459
        %6577 = vmatpush1.bf16.msra.mxu0 %v6458
        %6578 = vmatprep.subr.bf16.mxu0 %v6463
        %6579 = vmatpush1.bf16.msra.mxu0 %v6462
        %6580 = vmatprep.subr.bf16.mxu0 %v6467
        %6581 = vmatpush1.bf16.msra.mxu0 %v6466
        %6582 = vmatprep.subr.bf16.mxu0 %v6471
        %6583 = vmatpush1.bf16.msra.mxu0 %v6470
        %6584 = vmatprep.subr.bf16.mxu0 %v6475
        %6585 = vmatpush1.bf16.msra.mxu0 %v6474
        %6586 = vmatprep.subr.bf16.mxu0 0
        %6587 = vmatpush1.bf16.msra.mxu0 0
        %6588 = vmatprep.subr.bf16.mxu0 0
        %6589 = vmatpush1.bf16.msra.mxu0 0
        %6590 = vmatprep.subr.bf16.mxu0 0
        %6591 = vmatpush1.bf16.msra.mxu0 0
        %6592 = vmatprep.subr.bf16.mxu0 0
        %6593 = vmatpush1.bf16.msra.mxu0 0
        %6594 = vmatprep.subr.bf16.mxu0 0
        %6595 = vmatpush1.bf16.msra.mxu0 0
        %6596 = vmatprep.subr.bf16.mxu0 0
        %6597 = vmatpush1.bf16.msra.mxu0 0
        %6598 = vmatprep.subr.bf16.mxu0 0
        %6599 = vmatpush1.bf16.msra.mxu0 0
        %6600 = vmatprep.subr.bf16.mxu0 0
        %6601 = vmatpush1.bf16.msra.mxu0 0
        %6602 = vmatprep.mubr.bf16.mxu0 0
        %6603 = vmatmul.mubr.bf16.gmra.mrb[0].mxu0 %v6314
        %v6604 = vpop.f32.mrb[0].mxu0
        %v6605 = vadd.f32 %v6520, %v6604
        %v6606 = vpop.f32.mrb[0].mxu0
        %v6607 = vadd.f32 %v6524, %v6606
        %v6608 = vpop.f32.mrb[0].mxu0
        %v6609 = vpop.f32.mrb[0].mxu0
        %6610 = vdwg.mxu0
        %v6611 = vld [vmem:[#allocation32] sm:$0xf]
        %v6613 = vlaneseq
        %v6614 = vshrl.u32 %v6613, 7
        %v6615 = vsub.s32 0, %v6614
        %v6616 = vrot.slane %v6611, %v6615
        %v6617 = vlaneseq
        %v6618 = vshrl.u32 %v6617, 7
        %v6619 = vsub.s32 1, %v6618
        %v6620 = vrot.slane %v6611, %v6619
        %v6621 = vlaneseq
        %v6622 = vshrl.u32 %v6621, 7
        %v6623 = vsub.s32 2, %v6622
        %v6624 = vrot.slane %v6611, %v6623
        %v6625 = vlaneseq
        %v6626 = vshrl.u32 %v6625, 7
        %v6627 = vsub.s32 3, %v6626
        %v6628 = vrot.slane %v6611, %v6627
        %v6633 = vmul.f32 %v6564, %v6616
        %v6634 = vmul.f32 %v6566, %v6620
        %v6635 = vmul.f32 %v6605, %v6624
        %v6636 = vmul.f32 %v6607, %v6628
        %v6637 = vld [vmem:[#allocation34] sm:$0xf]
        %v6639 = vlaneseq
        %v6640 = vshrl.u32 %v6639, 7
        %v6641 = vsub.s32 0, %v6640
        %v6642 = vrot.slane %v6637, %v6641
        %v6643 = vlaneseq
        %v6644 = vshrl.u32 %v6643, 7
        %v6645 = vsub.s32 1, %v6644
        %v6646 = vrot.slane %v6637, %v6645
        %v6647 = vlaneseq
        %v6648 = vshrl.u32 %v6647, 7
        %v6649 = vsub.s32 2, %v6648
        %v6650 = vrot.slane %v6637, %v6649
        %v6651 = vlaneseq
        %v6652 = vshrl.u32 %v6651, 7
        %v6653 = vsub.s32 3, %v6652
        %v6654 = vrot.slane %v6637, %v6653
        %v6659 = vadd.f32 %v6633, %v6642
        %v6660 = vadd.f32 %v6634, %v6646
        %v6661 = vadd.f32 %v6635, %v6650
        %v6662 = vadd.f32 %v6636, %v6654
        %v6663 = vmul.f32 %v6659, 0.5
        %v6664 = vmul.f32 %v6660, 0.5
        %v6665 = vmul.f32 %v6661, 0.5
        %v6666 = vmul.f32 %v6662, 0.5
        %v6667 = vmul.f32 %v6659, 0.044715
        %v6668 = vmul.f32 %v6660, 0.044715
        %v6669 = vmul.f32 %v6661, 0.044715
        %v6670 = vmul.f32 %v6662, 0.044715
        %v6671 = vmul.f32 %v6667, %v6659
        %v6672 = vmul.f32 %v6668, %v6660
        %v6673 = vmul.f32 %v6669, %v6661
        %v6674 = vmul.f32 %v6670, %v6662
        %v6675 = vmul.f32 %v6671, %v6659
        %v6676 = vmul.f32 %v6672, %v6660
        %v6677 = vmul.f32 %v6673, %v6661
        %v6678 = vmul.f32 %v6674, %v6662
        %v6679 = vadd.f32 %v6659, %v6675
        %v6680 = vadd.f32 %v6660, %v6676
        %v6681 = vadd.f32 %v6661, %v6677
        %v6682 = vadd.f32 %v6662, %v6678
        %v6683 = vmul.f32 %v6679, 0.7978846
        %v6684 = vmul.f32 %v6680, 0.7978846
        %v6685 = vmul.f32 %v6681, 0.7978846
        %v6686 = vmul.f32 %v6682, 0.7978846
        %v6687 = vtanh.pop %v6683
        %v6688 = vtanh.pop %v6684
        %v6689 = vtanh.pop %v6685
        %v6690 = vtanh.pop %v6686
        %v6691 = vadd.f32 %v6687, 1.0
        %v6692 = vadd.f32 %v6688, 1.0
        %v6693 = vadd.f32 %v6689, 1.0
        %v6694 = vadd.f32 %v6690, 1.0
        %v6695 = vmul.f32 %v6663, %v6691
        %v6696 = vmul.f32 %v6664, %v6692
        %v6697 = vmul.f32 %v6665, %v6693
        %v6698 = vmul.f32 %v6666, %v6694
        %v6699 = vpack.c.bf16 %v6695, %v6695
        %v6700 = vpack.c.bf16 %v6696, %v6696
        %v6701 = vpack.c.bf16 %v6697, %v6697
        %v6702 = vpack.c.bf16 %v6698, %v6698
        %v6703 = vld [vmem:[#allocation35] sm:$0xff]
        %v6704 = vld [vmem:[#allocation35 + $0x8] sm:$0xff]
        %v6705 = vld [vmem:[#allocation35 + $0x10] sm:$0xff]
        %v6706 = vld [vmem:[#allocation35 + $0x18] sm:$0xff]
        %v6707 = vld [vmem:[#allocation35 + $0x20] sm:$0xff]
        %v6708 = vld [vmem:[#allocation35 + $0x28] sm:$0xff]
        %v6709 = vld [vmem:[#allocation35 + $0x30] sm:$0xff]
        %v6710 = vld [vmem:[#allocation35 + $0x38] sm:$0xff]
        %v6711 = vld [vmem:[#allocation35 + $0x40] sm:$0xff]
        %v6712 = vld [vmem:[#allocation35 + $0x48] sm:$0xff]
        %v6713 = vld [vmem:[#allocation35 + $0x50] sm:$0xff]
        %v6714 = vld [vmem:[#allocation35 + $0x58] sm:$0xff]
        %v6715 = vld [vmem:[#allocation35 + $0x60] sm:$0xff]
        %v6716 = vld [vmem:[#allocation35 + $0x68] sm:$0xff]
        %v6717 = vld [vmem:[#allocation35 + $0x70] sm:$0xff]
        %v6718 = vld [vmem:[#allocation35 + $0x78] sm:$0xff]
        %v6719 = vld [vmem:[#allocation35 + $0x80] sm:$0xff]
        %v6720 = vld [vmem:[#allocation35 + $0x88] sm:$0xff]
        %v6721 = vld [vmem:[#allocation35 + $0x90] sm:$0xff]
        %v6722 = vld [vmem:[#allocation35 + $0x98] sm:$0xff]
        %v6723 = vld [vmem:[#allocation35 + $0xa0] sm:$0xff]
        %v6724 = vld [vmem:[#allocation35 + $0xa8] sm:$0xff]
        %v6725 = vld [vmem:[#allocation35 + $0xb0] sm:$0xff]
        %v6726 = vld [vmem:[#allocation35 + $0xb8] sm:$0xff]
        %v6727 = vld [vmem:[#allocation35 + $0xc0] sm:$0xff]
        %v6728 = vld [vmem:[#allocation35 + $0xc8] sm:$0xff]
        %v6729 = vld [vmem:[#allocation35 + $0xd0] sm:$0xff]
        %v6730 = vld [vmem:[#allocation35 + $0xd8] sm:$0xff]
        %v6731 = vld [vmem:[#allocation35 + $0xe0] sm:$0xff]
        %v6732 = vld [vmem:[#allocation35 + $0xe8] sm:$0xff]
        %v6733 = vld [vmem:[#allocation35 + $0xf0] sm:$0xff]
        %v6734 = vld [vmem:[#allocation35 + $0xf8] sm:$0xff]
        %v6735 = vld [vmem:[#allocation35 + $0x100] sm:$0xff]
        %v6736 = vld [vmem:[#allocation35 + $0x108] sm:$0xff]
        %v6737 = vld [vmem:[#allocation35 + $0x110] sm:$0xff]
        %v6738 = vld [vmem:[#allocation35 + $0x118] sm:$0xff]
        %v6739 = vld [vmem:[#allocation35 + $0x120] sm:$0xff]
        %v6740 = vld [vmem:[#allocation35 + $0x128] sm:$0xff]
        %v6741 = vld [vmem:[#allocation35 + $0x130] sm:$0xff]
        %v6742 = vld [vmem:[#allocation35 + $0x138] sm:$0xff]
        %v6743 = vld [vmem:[#allocation35 + $0x140] sm:$0xff]
        %v6744 = vld [vmem:[#allocation35 + $0x148] sm:$0xff]
        %v6745 = vld [vmem:[#allocation35 + $0x150] sm:$0xff]
        %v6746 = vld [vmem:[#allocation35 + $0x158] sm:$0xff]
        %v6747 = vld [vmem:[#allocation35 + $0x160] sm:$0xff]
        %v6748 = vld [vmem:[#allocation35 + $0x168] sm:$0xff]
        %v6749 = vld [vmem:[#allocation35 + $0x170] sm:$0xff]
        %v6750 = vld [vmem:[#allocation35 + $0x178] sm:$0xff]
        %v6751 = vld [vmem:[#allocation35 + $0x180] sm:$0xff]
        %v6752 = vld [vmem:[#allocation35 + $0x188] sm:$0xff]
        %v6753 = vld [vmem:[#allocation35 + $0x190] sm:$0xff]
        %v6754 = vld [vmem:[#allocation35 + $0x198] sm:$0xff]
        %v6755 = vld [vmem:[#allocation35 + $0x1a0] sm:$0xff]
        %v6756 = vld [vmem:[#allocation35 + $0x1a8] sm:$0xff]
        %v6757 = vld [vmem:[#allocation35 + $0x1b0] sm:$0xff]
        %v6758 = vld [vmem:[#allocation35 + $0x1b8] sm:$0xff]
        %v6759 = vld [vmem:[#allocation35 + $0x1c0] sm:$0xff]
        %v6760 = vld [vmem:[#allocation35 + $0x1c8] sm:$0xff]
        %v6761 = vld [vmem:[#allocation35 + $0x1d0] sm:$0xff]
        %v6762 = vld [vmem:[#allocation35 + $0x1d8] sm:$0xff]
        %v6763 = vld [vmem:[#allocation35 + $0x1e0] sm:$0xff]
        %v6764 = vld [vmem:[#allocation35 + $0x1e8] sm:$0xff]
        %v6765 = vld [vmem:[#allocation35 + $0x1f0] sm:$0xff]
        %v6766 = vld [vmem:[#allocation35 + $0x1f8] sm:$0xff]
        %v6767 = vld [vmem:[#allocation37] sm:$0x3]
        %v6832 = vunpack.c.l.b16 %v6703
        %v6833 = vunpack.c.h.b16 %v6703
        %v6834 = vunpack.c.l.b16 %v6704
        %v6835 = vunpack.c.h.b16 %v6704
        %v6836 = vunpack.c.l.b16 %v6705
        %v6837 = vunpack.c.h.b16 %v6705
        %v6838 = vunpack.c.l.b16 %v6706
        %v6839 = vunpack.c.h.b16 %v6706
        %v6840 = vunpack.c.l.b16 %v6707
        %v6841 = vunpack.c.h.b16 %v6707
        %v6842 = vunpack.c.l.b16 %v6708
        %v6843 = vunpack.c.h.b16 %v6708
        %v6844 = vunpack.c.l.b16 %v6709
        %v6845 = vunpack.c.h.b16 %v6709
        %v6846 = vunpack.c.l.b16 %v6710
        %v6847 = vunpack.c.h.b16 %v6710
        %v6848 = vunpack.c.l.b16 %v6711
        %v6849 = vunpack.c.h.b16 %v6711
        %v6850 = vunpack.c.l.b16 %v6712
        %v6851 = vunpack.c.h.b16 %v6712
        %v6852 = vunpack.c.l.b16 %v6713
        %v6853 = vunpack.c.h.b16 %v6713
        %v6854 = vunpack.c.l.b16 %v6714
        %v6855 = vunpack.c.h.b16 %v6714
        %v6856 = vunpack.c.l.b16 %v6715
        %v6857 = vunpack.c.h.b16 %v6715
        %v6858 = vunpack.c.l.b16 %v6716
        %v6859 = vunpack.c.h.b16 %v6716
        %v6860 = vunpack.c.l.b16 %v6717
        %v6861 = vunpack.c.h.b16 %v6717
        %v6862 = vunpack.c.l.b16 %v6718
        %v6863 = vunpack.c.h.b16 %v6718
        %v6864 = vunpack.c.l.b16 %v6719
        %v6865 = vunpack.c.h.b16 %v6719
        %v6866 = vunpack.c.l.b16 %v6720
        %v6867 = vunpack.c.h.b16 %v6720
        %v6868 = vunpack.c.l.b16 %v6721
        %v6869 = vunpack.c.h.b16 %v6721
        %v6870 = vunpack.c.l.b16 %v6722
        %v6871 = vunpack.c.h.b16 %v6722
        %v6872 = vunpack.c.l.b16 %v6723
        %v6873 = vunpack.c.h.b16 %v6723
        %v6874 = vunpack.c.l.b16 %v6724
        %v6875 = vunpack.c.h.b16 %v6724
        %v6876 = vunpack.c.l.b16 %v6725
        %v6877 = vunpack.c.h.b16 %v6725
        %v6878 = vunpack.c.l.b16 %v6726
        %v6879 = vunpack.c.h.b16 %v6726
        %v6880 = vunpack.c.l.b16 %v6727
        %v6881 = vunpack.c.h.b16 %v6727
        %v6882 = vunpack.c.l.b16 %v6728
        %v6883 = vunpack.c.h.b16 %v6728
        %v6884 = vunpack.c.l.b16 %v6729
        %v6885 = vunpack.c.h.b16 %v6729
        %v6886 = vunpack.c.l.b16 %v6730
        %v6887 = vunpack.c.h.b16 %v6730
        %v6888 = vunpack.c.l.b16 %v6731
        %v6889 = vunpack.c.h.b16 %v6731
        %v6890 = vunpack.c.l.b16 %v6732
        %v6891 = vunpack.c.h.b16 %v6732
        %v6892 = vunpack.c.l.b16 %v6733
        %v6893 = vunpack.c.h.b16 %v6733
        %v6894 = vunpack.c.l.b16 %v6734
        %v6895 = vunpack.c.h.b16 %v6734
        %v6896 = vunpack.c.l.b16 %v6735
        %v6897 = vunpack.c.h.b16 %v6735
        %v6898 = vunpack.c.l.b16 %v6736
        %v6899 = vunpack.c.h.b16 %v6736
        %v6900 = vunpack.c.l.b16 %v6737
        %v6901 = vunpack.c.h.b16 %v6737
        %v6902 = vunpack.c.l.b16 %v6738
        %v6903 = vunpack.c.h.b16 %v6738
        %v6904 = vunpack.c.l.b16 %v6739
        %v6905 = vunpack.c.h.b16 %v6739
        %v6906 = vunpack.c.l.b16 %v6740
        %v6907 = vunpack.c.h.b16 %v6740
        %v6908 = vunpack.c.l.b16 %v6741
        %v6909 = vunpack.c.h.b16 %v6741
        %v6910 = vunpack.c.l.b16 %v6742
        %v6911 = vunpack.c.h.b16 %v6742
        %v6912 = vunpack.c.l.b16 %v6743
        %v6913 = vunpack.c.h.b16 %v6743
        %v6914 = vunpack.c.l.b16 %v6744
        %v6915 = vunpack.c.h.b16 %v6744
        %v6916 = vunpack.c.l.b16 %v6745
        %v6917 = vunpack.c.h.b16 %v6745
        %v6918 = vunpack.c.l.b16 %v6746
        %v6919 = vunpack.c.h.b16 %v6746
        %v6920 = vunpack.c.l.b16 %v6747
        %v6921 = vunpack.c.h.b16 %v6747
        %v6922 = vunpack.c.l.b16 %v6748
        %v6923 = vunpack.c.h.b16 %v6748
        %v6924 = vunpack.c.l.b16 %v6749
        %v6925 = vunpack.c.h.b16 %v6749
        %v6926 = vunpack.c.l.b16 %v6750
        %v6927 = vunpack.c.h.b16 %v6750
        %v6928 = vunpack.c.l.b16 %v6751
        %v6929 = vunpack.c.h.b16 %v6751
        %v6930 = vunpack.c.l.b16 %v6752
        %v6931 = vunpack.c.h.b16 %v6752
        %v6932 = vunpack.c.l.b16 %v6753
        %v6933 = vunpack.c.h.b16 %v6753
        %v6934 = vunpack.c.l.b16 %v6754
        %v6935 = vunpack.c.h.b16 %v6754
        %v6936 = vunpack.c.l.b16 %v6755
        %v6937 = vunpack.c.h.b16 %v6755
        %v6938 = vunpack.c.l.b16 %v6756
        %v6939 = vunpack.c.h.b16 %v6756
        %v6940 = vunpack.c.l.b16 %v6757
        %v6941 = vunpack.c.h.b16 %v6757
        %v6942 = vunpack.c.l.b16 %v6758
        %v6943 = vunpack.c.h.b16 %v6758
        %v6944 = vunpack.c.l.b16 %v6759
        %v6945 = vunpack.c.h.b16 %v6759
        %v6946 = vunpack.c.l.b16 %v6760
        %v6947 = vunpack.c.h.b16 %v6760
        %v6948 = vunpack.c.l.b16 %v6761
        %v6949 = vunpack.c.h.b16 %v6761
        %v6950 = vunpack.c.l.b16 %v6762
        %v6951 = vunpack.c.h.b16 %v6762
        %v6952 = vunpack.c.l.b16 %v6763
        %v6953 = vunpack.c.h.b16 %v6763
        %v6954 = vunpack.c.l.b16 %v6764
        %v6955 = vunpack.c.h.b16 %v6764
        %v6956 = vunpack.c.l.b16 %v6765
        %v6957 = vunpack.c.h.b16 %v6765
        %v6958 = vunpack.c.l.b16 %v6766
        %v6959 = vunpack.c.h.b16 %v6766
        %v6960 = vpack.c.b16 %v6834, %v6832
        %v6961 = vpack.c.b16 %v6835, %v6833
        %v6962 = vpack.c.b16 %v6838, %v6836
        %v6963 = vpack.c.b16 %v6839, %v6837
        %v6964 = vpack.c.b16 %v6842, %v6840
        %v6965 = vpack.c.b16 %v6843, %v6841
        %v6966 = vpack.c.b16 %v6846, %v6844
        %v6967 = vpack.c.b16 %v6847, %v6845
        %v6968 = vpack.c.b16 %v6850, %v6848
        %v6969 = vpack.c.b16 %v6851, %v6849
        %v6970 = vpack.c.b16 %v6854, %v6852
        %v6971 = vpack.c.b16 %v6855, %v6853
        %v6972 = vpack.c.b16 %v6858, %v6856
        %v6973 = vpack.c.b16 %v6859, %v6857
        %v6974 = vpack.c.b16 %v6862, %v6860
        %v6975 = vpack.c.b16 %v6863, %v6861
        %v6976 = vpack.c.b16 %v6866, %v6864
        %v6977 = vpack.c.b16 %v6867, %v6865
        %v6978 = vpack.c.b16 %v6870, %v6868
        %v6979 = vpack.c.b16 %v6871, %v6869
        %v6980 = vpack.c.b16 %v6874, %v6872
        %v6981 = vpack.c.b16 %v6875, %v6873
        %v6982 = vpack.c.b16 %v6878, %v6876
        %v6983 = vpack.c.b16 %v6879, %v6877
        %v6984 = vpack.c.b16 %v6882, %v6880
        %v6985 = vpack.c.b16 %v6883, %v6881
        %v6986 = vpack.c.b16 %v6886, %v6884
        %v6987 = vpack.c.b16 %v6887, %v6885
        %v6988 = vpack.c.b16 %v6890, %v6888
        %v6989 = vpack.c.b16 %v6891, %v6889
        %v6990 = vpack.c.b16 %v6894, %v6892
        %v6991 = vpack.c.b16 %v6895, %v6893
        %v6992 = vpack.c.b16 %v6898, %v6896
        %v6993 = vpack.c.b16 %v6899, %v6897
        %v6994 = vpack.c.b16 %v6902, %v6900
        %v6995 = vpack.c.b16 %v6903, %v6901
        %v6996 = vpack.c.b16 %v6906, %v6904
        %v6997 = vpack.c.b16 %v6907, %v6905
        %v6998 = vpack.c.b16 %v6910, %v6908
        %v6999 = vpack.c.b16 %v6911, %v6909
        %v7000 = vpack.c.b16 %v6914, %v6912
        %v7001 = vpack.c.b16 %v6915, %v6913
        %v7002 = vpack.c.b16 %v6918, %v6916
        %v7003 = vpack.c.b16 %v6919, %v6917
        %v7004 = vpack.c.b16 %v6922, %v6920
        %v7005 = vpack.c.b16 %v6923, %v6921
        %v7006 = vpack.c.b16 %v6926, %v6924
        %v7007 = vpack.c.b16 %v6927, %v6925
        %v7008 = vpack.c.b16 %v6930, %v6928
        %v7009 = vpack.c.b16 %v6931, %v6929
        %v7010 = vpack.c.b16 %v6934, %v6932
        %v7011 = vpack.c.b16 %v6935, %v6933
        %v7012 = vpack.c.b16 %v6938, %v6936
        %v7013 = vpack.c.b16 %v6939, %v6937
        %v7014 = vpack.c.b16 %v6942, %v6940
        %v7015 = vpack.c.b16 %v6943, %v6941
        %v7016 = vpack.c.b16 %v6946, %v6944
        %v7017 = vpack.c.b16 %v6947, %v6945
        %v7018 = vpack.c.b16 %v6950, %v6948
        %v7019 = vpack.c.b16 %v6951, %v6949
        %v7020 = vpack.c.b16 %v6954, %v6952
        %v7021 = vpack.c.b16 %v6955, %v6953
        %v7022 = vpack.c.b16 %v6958, %v6956
        %v7023 = vpack.c.b16 %v6959, %v6957
        %v7089 = vlaneseq
        %v7090 = vshrl.u32 %v7089, 7
        %v7091 = vsub.s32 0, %v7090
        %v7092 = vrot.slane %v6767, %v7091
        %v7093 = vlaneseq
        %v7094 = vshrl.u32 %v7093, 7
        %v7095 = vsub.s32 1, %v7094
        %v7096 = vrot.slane %v6767, %v7095
        %7099 = vmatprep.subr.bf16.mxu0 %v6961
        %7100 = vmatpush1.bf16.msra.mxu0 %v6960
        %7101 = vmatprep.subr.bf16.mxu0 %v6963
        %7102 = vmatpush1.bf16.msra.mxu0 %v6962
        %7103 = vmatprep.subr.bf16.mxu0 %v6965
        %7104 = vmatpush1.bf16.msra.mxu0 %v6964
        %7105 = vmatprep.subr.bf16.mxu0 %v6967
        %7106 = vmatpush1.bf16.msra.mxu0 %v6966
        %7107 = vmatprep.subr.bf16.mxu0 %v6969
        %7108 = vmatpush1.bf16.msra.mxu0 %v6968
        %7109 = vmatprep.subr.bf16.mxu0 %v6971
        %7110 = vmatpush1.bf16.msra.mxu0 %v6970
        %7111 = vmatprep.subr.bf16.mxu0 %v6973
        %7112 = vmatpush1.bf16.msra.mxu0 %v6972
        %7113 = vmatprep.subr.bf16.mxu0 %v6975
        %7114 = vmatpush1.bf16.msra.mxu0 %v6974
        %7115 = vmatprep.subr.bf16.mxu0 %v6977
        %7116 = vmatpush1.bf16.msra.mxu0 %v6976
        %7117 = vmatprep.subr.bf16.mxu0 %v6979
        %7118 = vmatpush1.bf16.msra.mxu0 %v6978
        %7119 = vmatprep.subr.bf16.mxu0 %v6981
        %7120 = vmatpush1.bf16.msra.mxu0 %v6980
        %7121 = vmatprep.subr.bf16.mxu0 %v6983
        %7122 = vmatpush1.bf16.msra.mxu0 %v6982
        %7123 = vmatprep.subr.bf16.mxu0 %v6985
        %7124 = vmatpush1.bf16.msra.mxu0 %v6984
        %7125 = vmatprep.subr.bf16.mxu0 %v6987
        %7126 = vmatpush1.bf16.msra.mxu0 %v6986
        %7127 = vmatprep.subr.bf16.mxu0 %v6989
        %7128 = vmatpush1.bf16.msra.mxu0 %v6988
        %7129 = vmatprep.subr.bf16.mxu0 %v6991
        %7130 = vmatpush1.bf16.msra.mxu0 %v6990
        %7131 = vmatprep.mubr.bf16.mxu0 %v6700
        %7132 = vmatmul.mubr.bf16.gmra.mrb[0].mxu0 %v6699
        %v7133 = vpop.f32.mrb[0].mxu0
        %v7134 = vadd.f32 %v7092, %v7133
        %v7135 = vpop.f32.mrb[0].mxu0
        %v7136 = vadd.f32 %v7096, %v7135
        %v7137 = vpop.f32.mrb[0].mxu0
        %v7138 = vpop.f32.mrb[0].mxu0
        %7139 = vdwg.mxu0
        %7140 = vmatprep.subr.bf16.mxu0 %v6993
        %7141 = vmatpush1.bf16.msra.mxu0 %v6992
        %7142 = vmatprep.subr.bf16.mxu0 %v6995
        %7143 = vmatpush1.bf16.msra.mxu0 %v6994
        %7144 = vmatprep.subr.bf16.mxu0 %v6997
        %7145 = vmatpush1.bf16.msra.mxu0 %v6996
        %7146 = vmatprep.subr.bf16.mxu0 %v6999
        %7147 = vmatpush1.bf16.msra.mxu0 %v6998
        %7148 = vmatprep.subr.bf16.mxu0 %v7001
        %7149 = vmatpush1.bf16.msra.mxu0 %v7000
        %7150 = vmatprep.subr.bf16.mxu0 %v7003
        %7151 = vmatpush1.bf16.msra.mxu0 %v7002
        %7152 = vmatprep.subr.bf16.mxu0 %v7005
        %7153 = vmatpush1.bf16.msra.mxu0 %v7004
        %7154 = vmatprep.subr.bf16.mxu0 %v7007
        %7155 = vmatpush1.bf16.msra.mxu0 %v7006
        %7156 = vmatprep.subr.bf16.mxu0 %v7009
        %7157 = vmatpush1.bf16.msra.mxu0 %v7008
        %7158 = vmatprep.subr.bf16.mxu0 %v7011
        %7159 = vmatpush1.bf16.msra.mxu0 %v7010
        %7160 = vmatprep.subr.bf16.mxu0 %v7013
        %7161 = vmatpush1.bf16.msra.mxu0 %v7012
        %7162 = vmatprep.subr.bf16.mxu0 %v7015
        %7163 = vmatpush1.bf16.msra.mxu0 %v7014
        %7164 = vmatprep.subr.bf16.mxu0 %v7017
        %7165 = vmatpush1.bf16.msra.mxu0 %v7016
        %7166 = vmatprep.subr.bf16.mxu0 %v7019
        %7167 = vmatpush1.bf16.msra.mxu0 %v7018
        %7168 = vmatprep.subr.bf16.mxu0 %v7021
        %7169 = vmatpush1.bf16.msra.mxu0 %v7020
        %7170 = vmatprep.subr.bf16.mxu0 %v7023
        %7171 = vmatpush1.bf16.msra.mxu0 %v7022
        %7172 = vmatprep.mubr.bf16.mxu0 %v6702
        %7173 = vmatmul.mubr.bf16.gmra.mrb[0].mxu0 %v6701
        %v7174 = vpop.f32.mrb[0].mxu0
        %v7175 = vadd.f32 %v7134, %v7174
        %v7176 = vpop.f32.mrb[0].mxu0
        %v7177 = vadd.f32 %v7136, %v7176
        %v7178 = vpop.f32.mrb[0].mxu0
        %v7179 = vpop.f32.mrb[0].mxu0
        %7180 = vdwg.mxu0
        %v7181 = vld [vmem:[#allocation38] sm:$0x3]
        %v7183 = vlaneseq
        %v7184 = vshrl.u32 %v7183, 7
        %v7185 = vsub.s32 0, %v7184
        %v7186 = vrot.slane %v7181, %v7185
        %v7187 = vlaneseq
        %v7188 = vshrl.u32 %v7187, 7
        %v7189 = vsub.s32 1, %v7188
        %v7190 = vrot.slane %v7181, %v7189
        %v7193 = vmul.f32 %v7175, %v7186
        %v7194 = vmul.f32 %v7177, %v7190
        %v7195 = vld [vmem:[#allocation40] sm:$0x3]
        %v7197 = vlaneseq
        %v7198 = vshrl.u32 %v7197, 7
        %v7199 = vsub.s32 0, %v7198
        %v7200 = vrot.slane %v7195, %v7199
        %v7201 = vlaneseq
        %v7202 = vshrl.u32 %v7201, 7
        %v7203 = vsub.s32 1, %v7202
        %v7204 = vrot.slane %v7195, %v7203
        %v7207 = vadd.f32 %v7193, %v7200
        %v7208 = vadd.f32 %v7194, %v7204
        %v7209 = vmul.f32 %v7207, 0.5
        %v7210 = vmul.f32 %v7208, 0.5
        %v7211 = vmul.f32 %v7207, 0.044715
        %v7212 = vmul.f32 %v7208, 0.044715
        %v7213 = vmul.f32 %v7211, %v7207
        %v7214 = vmul.f32 %v7212, %v7208
        %v7215 = vmul.f32 %v7213, %v7207
        %v7216 = vmul.f32 %v7214, %v7208
        %v7217 = vadd.f32 %v7207, %v7215
        %v7218 = vadd.f32 %v7208, %v7216
        %v7219 = vmul.f32 %v7217, 0.7978846
        %v7220 = vmul.f32 %v7218, 0.7978846
        %v7221 = vtanh.pop %v7219
        %v7222 = vtanh.pop %v7220
        %v7223 = vadd.f32 %v7221, 1.0
        %v7224 = vadd.f32 %v7222, 1.0
        %v7225 = vmul.f32 %v7209, %v7223
        %v7226 = vmul.f32 %v7210, %v7224
        %v7227 = vpack.c.bf16 %v7225, %v7225
        %v7228 = vpack.c.bf16 %v7226, %v7226
        %v7229 = vld [vmem:[#allocation41] sm:$0xf]
        %v7230 = vld [vmem:[#allocation41 + $0x4] sm:$0xf]
        %v7231 = vld [vmem:[#allocation41 + $0x8] sm:$0xf]
        %v7232 = vld [vmem:[#allocation41 + $0xc] sm:$0xf]
        %v7233 = vld [vmem:[#allocation41 + $0x10] sm:$0xf]
        %v7234 = vld [vmem:[#allocation41 + $0x14] sm:$0xf]
        %v7235 = vld [vmem:[#allocation41 + $0x18] sm:$0xf]
        %v7236 = vld [vmem:[#allocation41 + $0x1c] sm:$0xf]
        %v7237 = vld [vmem:[#allocation41 + $0x20] sm:$0xf]
        %v7238 = vld [vmem:[#allocation41 + $0x24] sm:$0xf]
        %v7239 = vld [vmem:[#allocation41 + $0x28] sm:$0xf]
        %v7240 = vld [vmem:[#allocation41 + $0x2c] sm:$0xf]
        %v7241 = vld [vmem:[#allocation41 + $0x30] sm:$0xf]
        %v7242 = vld [vmem:[#allocation41 + $0x34] sm:$0xf]
        %v7243 = vld [vmem:[#allocation41 + $0x38] sm:$0xf]
        %v7244 = vld [vmem:[#allocation41 + $0x3c] sm:$0xf]
        %v7245 = vld [vmem:[#allocation41 + $0x40] sm:$0xf]
        %v7246 = vld [vmem:[#allocation41 + $0x44] sm:$0xf]
        %v7247 = vld [vmem:[#allocation41 + $0x48] sm:$0xf]
        %v7248 = vld [vmem:[#allocation41 + $0x4c] sm:$0xf]
        %v7249 = vld [vmem:[#allocation41 + $0x50] sm:$0xf]
        %v7250 = vld [vmem:[#allocation41 + $0x54] sm:$0xf]
        %v7251 = vld [vmem:[#allocation41 + $0x58] sm:$0xf]
        %v7252 = vld [vmem:[#allocation41 + $0x5c] sm:$0xf]
        %v7253 = vld [vmem:[#allocation41 + $0x60] sm:$0xf]
        %v7254 = vld [vmem:[#allocation41 + $0x64] sm:$0xf]
        %v7255 = vld [vmem:[#allocation41 + $0x68] sm:$0xf]
        %v7256 = vld [vmem:[#allocation41 + $0x6c] sm:$0xf]
        %v7257 = vld [vmem:[#allocation41 + $0x70] sm:$0xf]
        %v7258 = vld [vmem:[#allocation41 + $0x74] sm:$0xf]
        %v7259 = vld [vmem:[#allocation41 + $0x78] sm:$0xf]
        %v7260 = vld [vmem:[#allocation41 + $0x7c] sm:$0xf]
        %v7261 = vld [vmem:[#allocation43] sm:$0x1]
        %v7294 = vunpack.c.l.b16 %v7229
        %v7295 = vunpack.c.l.b16 %v7230
        %v7296 = vunpack.c.l.b16 %v7231
        %v7297 = vunpack.c.l.b16 %v7232
        %v7298 = vunpack.c.l.b16 %v7233
        %v7299 = vunpack.c.l.b16 %v7234
        %v7300 = vunpack.c.l.b16 %v7235
        %v7301 = vunpack.c.l.b16 %v7236
        %v7302 = vunpack.c.l.b16 %v7237
        %v7303 = vunpack.c.l.b16 %v7238
        %v7304 = vunpack.c.l.b16 %v7239
        %v7305 = vunpack.c.l.b16 %v7240
        %v7306 = vunpack.c.l.b16 %v7241
        %v7307 = vunpack.c.l.b16 %v7242
        %v7308 = vunpack.c.l.b16 %v7243
        %v7309 = vunpack.c.l.b16 %v7244
        %v7310 = vunpack.c.l.b16 %v7245
        %v7311 = vunpack.c.l.b16 %v7246
        %v7312 = vunpack.c.l.b16 %v7247
        %v7313 = vunpack.c.l.b16 %v7248
        %v7314 = vunpack.c.l.b16 %v7249
        %v7315 = vunpack.c.l.b16 %v7250
        %v7316 = vunpack.c.l.b16 %v7251
        %v7317 = vunpack.c.l.b16 %v7252
        %v7318 = vunpack.c.l.b16 %v7253
        %v7319 = vunpack.c.l.b16 %v7254
        %v7320 = vunpack.c.l.b16 %v7255
        %v7321 = vunpack.c.l.b16 %v7256
        %v7322 = vunpack.c.l.b16 %v7257
        %v7323 = vunpack.c.l.b16 %v7258
        %v7324 = vunpack.c.l.b16 %v7259
        %v7325 = vunpack.c.l.b16 %v7260
        %v7326 = vpack.c.b16 %v7295, %v7294
        %v7327 = vpack.c.b16 %v7297, %v7296
        %v7328 = vpack.c.b16 %v7299, %v7298
        %v7329 = vpack.c.b16 %v7301, %v7300
        %v7330 = vpack.c.b16 %v7303, %v7302
        %v7331 = vpack.c.b16 %v7305, %v7304
        %v7332 = vpack.c.b16 %v7307, %v7306
        %v7333 = vpack.c.b16 %v7309, %v7308
        %v7334 = vpack.c.b16 %v7311, %v7310
        %v7335 = vpack.c.b16 %v7313, %v7312
        %v7336 = vpack.c.b16 %v7315, %v7314
        %v7337 = vpack.c.b16 %v7317, %v7316
        %v7338 = vpack.c.b16 %v7319, %v7318
        %v7339 = vpack.c.b16 %v7321, %v7320
        %v7340 = vpack.c.b16 %v7323, %v7322
        %v7341 = vpack.c.b16 %v7325, %v7324
        %7358 = vmatprep.subr.bf16.mxu0 0
        %7359 = vmatpush1.bf16.msra.mxu0 %v7326
        %7360 = vmatprep.subr.bf16.mxu0 0
        %7361 = vmatpush1.bf16.msra.mxu0 %v7327
        %7362 = vmatprep.subr.bf16.mxu0 0
        %7363 = vmatpush1.bf16.msra.mxu0 %v7328
        %7364 = vmatprep.subr.bf16.mxu0 0
        %7365 = vmatpush1.bf16.msra.mxu0 %v7329
        %7366 = vmatprep.subr.bf16.mxu0 0
        %7367 = vmatpush1.bf16.msra.mxu0 %v7330
        %7368 = vmatprep.subr.bf16.mxu0 0
        %7369 = vmatpush1.bf16.msra.mxu0 %v7331
        %7370 = vmatprep.subr.bf16.mxu0 0
        %7371 = vmatpush1.bf16.msra.mxu0 %v7332
        %7372 = vmatprep.subr.bf16.mxu0 0
        %7373 = vmatpush1.bf16.msra.mxu0 %v7333
        %7374 = vmatprep.subr.bf16.mxu0 0
        %7375 = vmatpush1.bf16.msra.mxu0 %v7334
        %7376 = vmatprep.subr.bf16.mxu0 0
        %7377 = vmatpush1.bf16.msra.mxu0 %v7335
        %7378 = vmatprep.subr.bf16.mxu0 0
        %7379 = vmatpush1.bf16.msra.mxu0 %v7336
        %7380 = vmatprep.subr.bf16.mxu0 0
        %7381 = vmatpush1.bf16.msra.mxu0 %v7337
        %7382 = vmatprep.subr.bf16.mxu0 0
        %7383 = vmatpush1.bf16.msra.mxu0 %v7338
        %7384 = vmatprep.subr.bf16.mxu0 0
        %7385 = vmatpush1.bf16.msra.mxu0 %v7339
        %7386 = vmatprep.subr.bf16.mxu0 0
        %7387 = vmatpush1.bf16.msra.mxu0 %v7340
        %7388 = vmatprep.subr.bf16.mxu0 0
        %7389 = vmatpush1.bf16.msra.mxu0 %v7341
        %7390 = vmatprep.mubr.bf16.mxu0 %v7228
        %7391 = vmatmul.mubr.bf16.gmra.mrb[0].mxu0 %v7227
        %v7392 = vpop.f32.mrb[0].mxu0
        %v7393 = vadd.f32 %v7261, %v7392
        %v7394 = vpop.f32.mrb[0].mxu0
        %v7395 = vpop.f32.mrb[0].mxu0
        %v7396 = vpop.f32.mrb[0].mxu0
        %7397 = vdwg.mxu0
        %7398 = vst [vmem:[%s1194] sm:$0x1] %v7393
        %s7399 = sand.u32 %s637, 1
        %s7400 = scalar_lea.sflag [#allocation4], %s7399
        %s7401 = sand.u32 %s637, 1
        %s7402 = scalar_lea.vmem [#allocation44], %s7401
        // Predicated region
        $region237: #{emotion_forward.1} parent=127 // pred_check
          %p7403 = pneg %p647
        $region238: #{emotion_forward.1} parent=127 // pred_check_branch
          %7405 = sbr.rel (%p7403) target = $region240
        $region239: #{emotion_forward.1} parent=127 // pred_region
          %s7407 = ssub.s32 16, 16
          %7408 = vsyncadd %s7400, %s7407
          %s7409 = smul.addr %s57, 16
          %s7410 = scalar_lea.hbm %s27, %s7409
          %s7412 = sshll.u32 %s7402, 4
          %s7413 = int_to_ptr.vmem [resolvable:$true] %s7412
          %7415 = dma.vmem_to_hbm [thread:$0]  %s7413, 16, %s7410, %s7400
        $region240: #{emotion_forward.1} parent=127 // pred_fallthru
          _
      $region128: #{emotion_forward.1} parent=5 // pred_fallthru
        _
      %p7416 = scmp.le.s32.totalorder 2, %s52
      // Predicated region
      $region241: #{emotion_forward.1} parent=5 // pred_check
        %p7417 = pneg %p7416
      $region242: #{emotion_forward.1} parent=5 // pred_check_branch
        %7419 = sbr.rel (%p7417) target = $region244
      $region243: #{emotion_forward.1} parent=5 // pred_region
        %s7420 = ssub.s32 %s52, 2
        // Predicated region
        $region245: #{emotion_forward.1} parent=243 // pred_check
          %p7421 = pneg %p653
        $region246: #{emotion_forward.1} parent=243 // pred_check_branch
          %7423 = sbr.rel (%p7421) target = $region248
        $region247: #{emotion_forward.1} parent=243 // pred_region
          %s7424 = sand.u32 %s638, 1
          %s7425 = scalar_lea.sflag [#allocation4], %s7424
          %s7426 = sand.u32 %s638, 1
          %s7427 = scalar_lea.vmem [#allocation44], %s7426
          %7428 = dma.done %s7425, 16
        $region248: #{emotion_forward.1} parent=243 // pred_fallthru
          _
      $region244: #{emotion_forward.1} parent=5 // pred_fallthru
        _
    $region6: #{emotion_forward.1} parent=1 // loop_footer
      %s56 = sadd.s32 1, %s52
    $region7: #{emotion_forward.1} parent=1 // loop_footer_branch
      %51 = sbr.rel target = $region3
    $region8: #{emotion_forward.1} parent=1 // loop_exit
      _
    %7429 = vsyncpa [#allocation3], 1
    %s7430 = scalar_lea.sflag [#allocation3], 1
    %7431 = vsyncpa %s7430, 1
    %7432 = vsyncpa [#allocation6], 1
    %7433 = vsyncpa [#allocation9], 1
    %7434 = vsyncpa [#allocation12], 1
    %7435 = vsyncpa [#allocation15], 1
    %7436 = vsyncpa [#allocation18], 1
    %7437 = vsyncpa [#allocation21], 1
    %7438 = vsyncpa [#allocation24], 1
    %7439 = vsyncpa [#allocation27], 1
    %7440 = vsyncpa [#allocation30], 1
    %7441 = vsyncpa [#allocation33], 1
    %7442 = vsyncpa [#allocation36], 1
    %7443 = vsyncpa [#allocation39], 1
    %7444 = vsyncpa [#allocation42], 1
    %7445 = vsyncpa [#allocation4], 1
    %s7446 = scalar_lea.sflag [#allocation4], 1
    %7447 = vsyncpa %s7446, 1

</llo_original>
